<compile_context>
chip_gen: v7x
topology: tpu7x:2x2x1
jax: 0.10.0
libtpu: 0.0.40
codegen_flags: <defaults>
</compile_context>

<pallas_src>
import jax
import jax.numpy as jnp
from jax.experimental import pallas as pl
from jax.experimental.pallas import tpu as pltpu


_LPAD = 8  # interior starts at an 8-aligned sublane (W) offset in the scratch


def _round_up(x, m):
    return (x + m - 1) // m * m


def _rows_per_chunk(H, W):
    # Keep the per-chunk matmul M dim (= rows * W) around 256-512 so the f32
    # accumulator stays small and the MXU M dim stays in its sweet spot.
    return max(1, min(H, 512 // max(W, 1)))


def _vmem_capacity_bytes():
    # Per-generation physical VMEM (128 MiB on v5e/v6e, 64 MiB/core on v7x).
    try:
        info = pltpu.get_tpu_info()
        for attr in ("vmem_capacity_bytes", "vmem_bytes", "vmem_size_bytes"):
            cap = getattr(info, attr, None)
            if cap:
                return int(cap)
    except Exception:
        pass
    return 64 * 1024 * 1024  # conservative fallback (v7x per-TensorCore)


# ----------------------------------------------------------------------------
# Fused Pallas kernel:  (pad + concat) -> conv3x3 -> BN -> ReLU
#                                      -> conv3x3 -> BN -> ReLU
# One grid step = one batch element (NHWC, channels on the lane axis).
# ----------------------------------------------------------------------------
def up_doubleconv_kernel(x2_ref, x1_ref, w1_ref, w2_ref,
                         s1_ref, b1_ref, s2_ref, b2_ref, o_ref,
                         xcat_pad, mid_pad, slab1, slab2):
    # x2_ref : (1, H, W, C2)        bf16  skip connection (NHWC)
    # x1_ref : (1, H, W, C1)        bf16  upsampled x1 (NHWC)
    # w1_ref : (3, 3, C2+C1, Cmid)  bf16  conv1 weights (HWIO, concat folded)
    # w2_ref : (3, 3, Cmid, Cout)   bf16  conv2 weights
    # s*/b*  : (1, C)               f32   folded BatchNorm scale / bias
    # o_ref  : (1, H, W, Cout)      bf16
    # xcat_pad/mid_pad : (H+2, Wpad, C) bf16 scratch, interior at [1:H+1, LP:LP+W]
    # slab1/slab2      : (3, H+2, W, C) bf16 kx-shifted slabs
    H, W = o_ref.shape[1], o_ref.shape[2]
    C2 = x2_ref.shape[3]
    C1 = x1_ref.shape[3]
    Ccat = C1 + C2
    Cmid = w2_ref.shape[2]
    Cout = o_ref.shape[3]
    LP = _LPAD

    # 1) Zero ONLY the 1-px halo border the taps actually read.  The scratch
    #    persists across grid steps and the interior is fully rewritten each
    #    step, so full memsets are wasted vst bandwidth; a pid==0-guarded
    #    memset would break if the batch axis were sharded across cores.
    def zero_border(ref, c):
        ref[0:1, LP - 1:LP + W + 1, :] = jnp.zeros((1, W + 2, c), ref.dtype)
        ref[H + 1:H + 2, LP - 1:LP + W + 1, :] = jnp.zeros((1, W + 2, c), ref.dtype)
        ref[1:H + 1, LP - 1:LP, :] = jnp.zeros((H, 1, c), ref.dtype)
        ref[1:H + 1, LP + W:LP + W + 1, :] = jnp.zeros((H, 1, c), ref.dtype)

    zero_border(xcat_pad, Ccat)
    zero_border(mid_pad, Cmid)

    # 2) Fold the channel concat: both groups land in ONE padded scratch so
    #    every conv1 tap is a single dot with K = C1 + C2.
    xcat_pad[1:H + 1, LP:LP + W, 0:C2] = x2_ref[0]
    xcat_pad[1:H + 1, LP:LP + W, C2:Ccat] = x1_ref[0]

    # 3) Hoist the kx shift: 3 kx-shifted slabs per conv stage; ky taps then
    #    become contiguous leading-dim slices (no per-tap slice copies).
    def build_slabs(src_pad, slab_ref):
        for kx in range(3):
            slab_ref[kx] = src_pad[:, LP - 1 + kx:LP - 1 + kx + W, :]

    # 4) conv3x3 + folded-BN + ReLU, accumulated per row chunk.
    def conv_bn_relu(slab_ref, w_ref, s_ref, b_ref, cin, cout, store):
        rc = _rows_per_chunk(H, W)
        for r0 in range(0, H, rc):
            rows = min(rc, H - r0)
            acc = jnp.zeros((rows * W, cout), jnp.float32)
            for ky in range(3):
                for kx in range(3):
                    lhs = slab_ref[kx, r0 + ky:r0 + ky + rows].reshape(rows * W, cin)
                    acc = acc + jnp.dot(lhs, w_ref[ky, kx],
                                        preferred_element_type=jnp.float32)
            y = jnp.maximum(acc * s_ref[...] + b_ref[...], 0.0)
            store(r0, rows, y)

    # ---- conv1 + BN1 + ReLU : mid activation stays in VMEM (bf16, halo'd) --
    build_slabs(xcat_pad, slab1)

    def store_mid(r0, rows, y):
        mid_pad[1 + r0:1 + r0 + rows, LP:LP + W, :] = (
            y.reshape(rows, W, Cmid).astype(mid_pad.dtype))

    conv_bn_relu(slab1, w1_ref, s1_ref, b1_ref, Ccat, Cmid, store_mid)

    # ---- conv2 + BN2 + ReLU : write the bf16 output block ------------------
    build_slabs(mid_pad, slab2)

    def store_out(r0, rows, y):
        o_ref[0, r0:r0 + rows, :, :] = y.reshape(rows, W, Cout).astype(o_ref.dtype)

    conv_bn_relu(slab2, w2_ref, s2_ref, b2_ref, Cmid, Cout, store_out)


def up_doubleconv(x2_nhwc, x1u_nhwc, params, out_dtype=jnp.bfloat16):
    """Fused Doubleconv on concat([x2, x1u], channel). NHWC in, NHWC out."""
    N, H, W, C2 = x2_nhwc.shape
    C1 = x1u_nhwc.shape[3]
    Ccat = C1 + C2
    w1 = params["w1"].astype(jnp.bfloat16)          # (3, 3, Ccat, Cmid) HWIO
    w2 = params["w2"].astype(jnp.bfloat16)          # (3, 3, Cmid, Cout)
    Cmid, Cout = w2.shape[2], w2.shape[3]
    assert w1.shape == (3, 3, Ccat, Cmid), w1.shape

    s1 = params["s1"].reshape(1, Cmid).astype(jnp.float32)
    b1 = params["b1"].reshape(1, Cmid).astype(jnp.float32)
    s2 = params["s2"].reshape(1, Cout).astype(jnp.float32)
    b2 = params["b2"].reshape(1, Cout).astype(jnp.float32)

    x2b = x2_nhwc.astype(jnp.bfloat16)
    x1b = x1u_nhwc.astype(jnp.bfloat16)

    Wpad = _round_up(_LPAD + W + 1, 8)
    rc = _rows_per_chunk(H, W)

    flops = 2 * N * H * W * 9 * (Ccat * Cmid + Cmid * Cout)
    out_bpe = jnp.dtype(out_dtype).itemsize
    bytes_accessed = (2 * (x2b.size + x1b.size + w1.size + w2.size)
                      + 4 * (s1.size + b1.size + s2.size + b2.size)
                      + out_bpe * N * H * W * Cout)

    # Per-step VMEM: double-buffered in/out blocks + weights, persistent
    # padded/slab scratches, and the f32 per-chunk temporaries.
    vmem_need = (
        2 * 2 * H * W * Ccat                              # input blocks (bf16, dbuf)
        + 2 * out_bpe * H * W * Cout                      # output block (dbuf)
        + 2 * 2 * (w1.size + w2.size)                     # weights (dbuf)
        + 2 * 4 * (s1.size + b1.size + s2.size + b2.size)
        + 2 * (H + 2) * Wpad * (Ccat + Cmid)              # padded concat/mid scratch
        + 2 * 3 * (H + 2) * W * (Ccat + Cmid)             # kx-shifted slabs
        + 4 * rc * W * (Ccat + 2 * Cmid + Cout)           # f32 chunk acc/operands
    )
    vmem_limit = int(min(max(2 * vmem_need, 32 * 1024 * 1024),
                         int(0.75 * _vmem_capacity_bytes())))

    return pl.pallas_call(
        up_doubleconv_kernel,
        out_shape=jax.ShapeDtypeStruct((N, H, W, Cout), out_dtype),
        grid=(N,),
        in_specs=[
            pl.BlockSpec((1, H, W, C2), lambda n: (n, 0, 0, 0)),
            pl.BlockSpec((1, H, W, C1), lambda n: (n, 0, 0, 0)),
            pl.BlockSpec((3, 3, Ccat, Cmid), lambda n: (0, 0, 0, 0)),
            pl.BlockSpec((3, 3, Cmid, Cout), lambda n: (0, 0, 0, 0)),
            pl.BlockSpec((1, Cmid), lambda n: (0, 0)),
            pl.BlockSpec((1, Cmid), lambda n: (0, 0)),
            pl.BlockSpec((1, Cout), lambda n: (0, 0)),
            pl.BlockSpec((1, Cout), lambda n: (0, 0)),
        ],
        out_specs=pl.BlockSpec((1, H, W, Cout), lambda n: (n, 0, 0, 0)),
        scratch_shapes=[
            pltpu.VMEM((H + 2, Wpad, Ccat), jnp.bfloat16),   # padded concat
            pltpu.VMEM((H + 2, Wpad, Cmid), jnp.bfloat16),   # padded mid act
            pltpu.VMEM((3, H + 2, W, Ccat), jnp.bfloat16),   # kx slabs, conv1
            pltpu.VMEM((3, H + 2, W, Cmid), jnp.bfloat16),   # kx slabs, conv2
        ],
        compiler_params=pltpu.CompilerParams(
            dimension_semantics=("parallel",),
            vmem_limit_bytes=vmem_limit),
        cost_estimate=pl.CostEstimate(
            flops=flops, transcendentals=0, bytes_accessed=bytes_accessed),
    )(x2b, x1b, w1, w2, s1, b1, s2, b2)


# ----------------------------------------------------------------------------
# Plain-JAX glue (NHWC): bilinear x2 upsample (align_corners=True), pad/crop
# ----------------------------------------------------------------------------
def upsample_bilinear_2x_align_corners_nhwc(x):
    """x: (N, H, W, C) -> (N, 2H, 2W, C); matches nn.Upsample(2, 'bilinear',
    align_corners=True)."""
    N, H, W, C = x.shape
    OH, OW = 2 * H, 2 * W

    def coords(out_size, in_size):
        if in_size == 1:
            src = jnp.zeros((out_size,), jnp.float32)
        else:
            src = jnp.arange(out_size, dtype=jnp.float32) * (
                (in_size - 1) / (out_size - 1))
        i0 = jnp.floor(src).astype(jnp.int32)
        i1 = jnp.minimum(i0 + 1, in_size - 1)
        frac = src - i0.astype(jnp.float32)
        return i0, i1, frac

    y0, y1, wy = coords(OH, H)
    x0, x1, wx = coords(OW, W)

    r0 = x[:, y0, :, :]
    r1 = x[:, y1, :, :]
    r = r0 * (1.0 - wy)[:, None, None] + r1 * wy[:, None, None]   # lerp along H
    c0 = r[:, :, x0, :]
    c1 = r[:, :, x1, :]
    return c0 * (1.0 - wx)[:, None] + c1 * wx[:, None]            # lerp along W


def _pad_or_crop_axis(v, d, axis):
    """Match F.pad's [lo, hi] = [d//2, d - d//2] along `axis` (negative crops)."""
    if d == 0:
        return v
    lo, hi = d // 2, d - d // 2
    if d > 0:
        pads = [(0, 0)] * v.ndim
        pads[axis] = (lo, hi)
        return jnp.pad(v, pads)
    new_size = v.shape[axis] + d
    return jax.lax.slice_in_dim(v, -lo, -lo + new_size, axis=axis)


def fold_bn(gamma, beta, running_mean, running_var, eps=1e-5):
    scale = gamma / jnp.sqrt(running_var + eps)
    bias = beta - running_mean * scale
    return scale, bias


def up_forward(params, x1, x2):
    """Up.forward: x1, x2 NCHW float32; returns NCHW float32."""
    # One layout change per tensor; everything downstream stays NHWC.
    x1n = jnp.transpose(x1, (0, 2, 3, 1))
    x2n = jnp.transpose(x2, (0, 2, 3, 1))

    # Upsample is XLA glue (math in f32) but emitted in bf16 so the 2H x 2W
    # tensor only round-trips HBM at half width; see TODO for full fusion.
    x1u = upsample_bilinear_2x_align_corners_nhwc(x1n).astype(jnp.bfloat16)
    diff_y = x2n.shape[1] - x1u.shape[1]
    diff_x = x2n.shape[2] - x1u.shape[2]
    x1u = _pad_or_crop_axis(x1u, diff_y, axis=1)
    x1u = _pad_or_crop_axis(x1u, diff_x, axis=2)

    # concat + pad + double conv + BN + ReLU all happen inside the one kernel.
    out_nhwc = up_doubleconv(x2n, x1u, params)                     # bf16 NHWC
    # Cast back to f32 fused with the exit transpose (module contract is f32).
    return jnp.transpose(out_nhwc, (0, 3, 1, 2)).astype(jnp.float32)


def init_up_params(key, in_channels, out_channels):
    mid_channels = in_channels // 2
    k1, k2 = jax.random.split(key)
    # PyTorch conv weight layout is (Cout, Cin, 3, 3); convert to HWIO.
    w1_oihw = 0.1 * jax.random.normal(
        k1, (mid_channels, in_channels, 3, 3), jnp.float32)
    w2_oihw = 0.1 * jax.random.normal(
        k2, (out_channels, mid_channels, 3, 3), jnp.float32)
    w1 = jnp.transpose(w1_oihw, (2, 3, 1, 0))       # (3, 3, Cin, Cout)
    w2 = jnp.transpose(w2_oihw, (2, 3, 1, 0))

    # BatchNorm in eval mode with default stats (mean=0, var=1), gamma=1, beta=0.
    g1 = jnp.ones((mid_channels,), jnp.float32)
    be1 = jnp.zeros((mid_channels,), jnp.float32)
    g2 = jnp.ones((out_channels,), jnp.float32)
    be2 = jnp.zeros((out_channels,), jnp.float32)
    s1, b1 = fold_bn(g1, be1, jnp.zeros_like(g1), jnp.ones_like(g1))
    s2, b2 = fold_bn(g2, be2, jnp.zeros_like(g2), jnp.ones_like(g2))
    return {"w1": w1, "s1": s1, "b1": b1, "w2": w2, "s2": s2, "b2": b2}


if __name__ == "__main__":
    key = jax.random.PRNGKey(0)
    k_x1, k_x2, k_p = jax.random.split(key, 3)

    # Typical U-Net decoder step: x1 is the coarser feature map (half spatial),
    # x2 is the skip connection. in_channels = C(x1) + C(x2) = 8.
    x1 = jax.random.normal(k_x1, (2, 4, 8, 8), jnp.float32)    # (N, C, H, W)
    x2 = jax.random.normal(k_x2, (2, 4, 16, 16), jnp.float32)  # (N, C, 2H, 2W)

    params = init_up_params(k_p, in_channels=8, out_channels=4)

    out = jax.jit(up_forward)(params, x1, x2)
    out = jax.block_until_ready(out)
    assert out.shape == (2, 4, 16, 16), out.shape
    assert bool(jnp.all(jnp.isfinite(out)))
    print("KERNEL_OK")
</pallas_src>

<mosaic_0001>
module attributes {stable_mosaic.version = 11 : i64} {
  func.func @up_doubleconv_kernel(%arg0: i32, %arg1: memref<1x16x16x4xbf16, #tpu.memory_space<vmem>>, %arg2: memref<1x16x16x4xbf16, #tpu.memory_space<vmem>>, %arg3: memref<3x3x8x4xbf16, #tpu.memory_space<vmem>>, %arg4: memref<3x3x4x4xbf16, #tpu.memory_space<vmem>>, %arg5: memref<1x4xf32, #tpu.memory_space<vmem>>, %arg6: memref<1x4xf32, #tpu.memory_space<vmem>>, %arg7: memref<1x4xf32, #tpu.memory_space<vmem>>, %arg8: memref<1x4xf32, #tpu.memory_space<vmem>>, %arg9: memref<1x16x16x4xbf16, #tpu.memory_space<vmem>>, %arg10: memref<18x32x8xbf16, #tpu.memory_space<vmem>>, %arg11: memref<18x32x4xbf16, #tpu.memory_space<vmem>>, %arg12: memref<3x18x16x8xbf16, #tpu.memory_space<vmem>>, %arg13: memref<3x18x16x4xbf16, #tpu.memory_space<vmem>>) attributes {dimension_semantics = [#tpu.dimension_semantics<parallel>], iteration_bounds = array<i64: 2>, scalar_prefetch = 0 : i64, scratch_operands = 4 : i64, tpu.core_type = #tpu.core_type<tc>, window_params = [{transform_indices = @transform_0, window_bounds = array<i64: 1, 16, 16, 4>}, {transform_indices = @transform_1, window_bounds = array<i64: 1, 16, 16, 4>}, {pipeline_mode = #tpu.pipeline_mode<synchronous>, transform_indices = @transform_2, window_bounds = array<i64: 3, 3, 8, 4>}, {pipeline_mode = #tpu.pipeline_mode<synchronous>, transform_indices = @transform_3, window_bounds = array<i64: 3, 3, 4, 4>}, {pipeline_mode = #tpu.pipeline_mode<synchronous>, transform_indices = @transform_4, window_bounds = array<i64: 1, 4>}, {pipeline_mode = #tpu.pipeline_mode<synchronous>, transform_indices = @transform_5, window_bounds = array<i64: 1, 4>}, {pipeline_mode = #tpu.pipeline_mode<synchronous>, transform_indices = @transform_6, window_bounds = array<i64: 1, 4>}, {pipeline_mode = #tpu.pipeline_mode<synchronous>, transform_indices = @transform_7, window_bounds = array<i64: 1, 4>}, {transform_indices = @transform_8, window_bounds = array<i64: 1, 16, 16, 4>}]} {
    %cst = arith.constant 0.000000e+00 : bf16
    %0 = vector.broadcast %cst : bf16 to vector<1x18x8xbf16>
    %c0 = arith.constant 0 : index
    %c7 = arith.constant 7 : index
    %c0_0 = arith.constant 0 : index
    %1 = vector.load %arg10[%c0, %c7, %c0_0] : memref<18x32x8xbf16, #tpu.memory_space<vmem>>, vector<1x18x8xbf16>
    tpu.vector_store %arg10[%c0, %c7, %c0_0], %0 {strides = array<i32>} : memref<18x32x8xbf16, #tpu.memory_space<vmem>>, vector<1x18x8xbf16>,
    %cst_1 = arith.constant 0.000000e+00 : bf16
    %2 = vector.broadcast %cst_1 : bf16 to vector<1x18x8xbf16>
    %c17 = arith.constant 17 : index
    %c7_2 = arith.constant 7 : index
    %c0_3 = arith.constant 0 : index
    %3 = vector.load %arg10[%c17, %c7_2, %c0_3] : memref<18x32x8xbf16, #tpu.memory_space<vmem>>, vector<1x18x8xbf16>
    tpu.vector_store %arg10[%c17, %c7_2, %c0_3], %2 {strides = array<i32>} : memref<18x32x8xbf16, #tpu.memory_space<vmem>>, vector<1x18x8xbf16>,
    %cst_4 = arith.constant 0.000000e+00 : bf16
    %4 = vector.broadcast %cst_4 : bf16 to vector<16x1x8xbf16>
    %c1 = arith.constant 1 : index
    %c7_5 = arith.constant 7 : index
    %c0_6 = arith.constant 0 : index
    %5 = vector.load %arg10[%c1, %c7_5, %c0_6] : memref<18x32x8xbf16, #tpu.memory_space<vmem>>, vector<16x1x8xbf16>
    tpu.vector_store %arg10[%c1, %c7_5, %c0_6], %4 {strides = array<i32>} : memref<18x32x8xbf16, #tpu.memory_space<vmem>>, vector<16x1x8xbf16>,
    %cst_7 = arith.constant 0.000000e+00 : bf16
    %6 = vector.broadcast %cst_7 : bf16 to vector<16x1x8xbf16>
    %c1_8 = arith.constant 1 : index
    %c24 = arith.constant 24 : index
    %c0_9 = arith.constant 0 : index
    %7 = vector.load %arg10[%c1_8, %c24, %c0_9] : memref<18x32x8xbf16, #tpu.memory_space<vmem>>, vector<16x1x8xbf16>
    tpu.vector_store %arg10[%c1_8, %c24, %c0_9], %6 {strides = array<i32>} : memref<18x32x8xbf16, #tpu.memory_space<vmem>>, vector<16x1x8xbf16>,
    %cst_10 = arith.constant 0.000000e+00 : bf16
    %8 = vector.broadcast %cst_10 : bf16 to vector<1x18x4xbf16>
    %c0_11 = arith.constant 0 : index
    %c7_12 = arith.constant 7 : index
    %c0_13 = arith.constant 0 : index
    %9 = vector.load %arg11[%c0_11, %c7_12, %c0_13] : memref<18x32x4xbf16, #tpu.memory_space<vmem>>, vector<1x18x4xbf16>
    tpu.vector_store %arg11[%c0_11, %c7_12, %c0_13], %8 {strides = array<i32>} : memref<18x32x4xbf16, #tpu.memory_space<vmem>>, vector<1x18x4xbf16>,
    %cst_14 = arith.constant 0.000000e+00 : bf16
    %10 = vector.broadcast %cst_14 : bf16 to vector<1x18x4xbf16>
    %c17_15 = arith.constant 17 : index
    %c7_16 = arith.constant 7 : index
    %c0_17 = arith.constant 0 : index
    %11 = vector.load %arg11[%c17_15, %c7_16, %c0_17] : memref<18x32x4xbf16, #tpu.memory_space<vmem>>, vector<1x18x4xbf16>
    tpu.vector_store %arg11[%c17_15, %c7_16, %c0_17], %10 {strides = array<i32>} : memref<18x32x4xbf16, #tpu.memory_space<vmem>>, vector<1x18x4xbf16>,
    %cst_18 = arith.constant 0.000000e+00 : bf16
    %12 = vector.broadcast %cst_18 : bf16 to vector<16x1x4xbf16>
    %c1_19 = arith.constant 1 : index
    %c7_20 = arith.constant 7 : index
    %c0_21 = arith.constant 0 : index
    %13 = vector.load %arg11[%c1_19, %c7_20, %c0_21] : memref<18x32x4xbf16, #tpu.memory_space<vmem>>, vector<16x1x4xbf16>
    tpu.vector_store %arg11[%c1_19, %c7_20, %c0_21], %12 {strides = array<i32>} : memref<18x32x4xbf16, #tpu.memory_space<vmem>>, vector<16x1x4xbf16>,
    %cst_22 = arith.constant 0.000000e+00 : bf16
    %14 = vector.broadcast %cst_22 : bf16 to vector<16x1x4xbf16>
    %c1_23 = arith.constant 1 : index
    %c24_24 = arith.constant 24 : index
    %c0_25 = arith.constant 0 : index
    %15 = vector.load %arg11[%c1_23, %c24_24, %c0_25] : memref<18x32x4xbf16, #tpu.memory_space<vmem>>, vector<16x1x4xbf16>
    tpu.vector_store %arg11[%c1_23, %c24_24, %c0_25], %14 {strides = array<i32>} : memref<18x32x4xbf16, #tpu.memory_space<vmem>>, vector<16x1x4xbf16>,
    %c0_26 = arith.constant 0 : index
    %c0_27 = arith.constant 0 : index
    %c0_28 = arith.constant 0 : index
    %c0_29 = arith.constant 0 : index
    %16 = vector.load %arg1[%c0_26, %c0_27, %c0_28, %c0_29] : memref<1x16x16x4xbf16, #tpu.memory_space<vmem>>, vector<1x16x16x4xbf16>
    %17 = vector.shape_cast %16 : vector<1x16x16x4xbf16> to vector<16x16x4xbf16>
    %c1_30 = arith.constant 1 : index
    %c8 = arith.constant 8 : index
    %c0_31 = arith.constant 0 : index
    %18 = vector.load %arg10[%c1_30, %c8, %c0_31] : memref<18x32x8xbf16, #tpu.memory_space<vmem>>, vector<16x16x4xbf16>
    tpu.vector_store %arg10[%c1_30, %c8, %c0_31], %17 {strides = array<i32>} : memref<18x32x8xbf16, #tpu.memory_space<vmem>>, vector<16x16x4xbf16>,
    %c0_32 = arith.constant 0 : index
    %c0_33 = arith.constant 0 : index
    %c0_34 = arith.constant 0 : index
    %c0_35 = arith.constant 0 : index
    %19 = vector.load %arg2[%c0_32, %c0_33, %c0_34, %c0_35] : memref<1x16x16x4xbf16, #tpu.memory_space<vmem>>, vector<1x16x16x4xbf16>
    %20 = vector.shape_cast %19 : vector<1x16x16x4xbf16> to vector<16x16x4xbf16>
    %c1_36 = arith.constant 1 : index
    %c8_37 = arith.constant 8 : index
    %c4 = arith.constant 4 : index
    %21 = vector.load %arg10[%c1_36, %c8_37, %c4] : memref<18x32x8xbf16, #tpu.memory_space<vmem>>, vector<16x16x4xbf16>
    tpu.vector_store %arg10[%c1_36, %c8_37, %c4], %20 {strides = array<i32>} : memref<18x32x8xbf16, #tpu.memory_space<vmem>>, vector<16x16x4xbf16>,
    %c0_38 = arith.constant 0 : index
    %c7_39 = arith.constant 7 : index
    %c0_40 = arith.constant 0 : index
    %22 = vector.load %arg10[%c0_38, %c7_39, %c0_40] : memref<18x32x8xbf16, #tpu.memory_space<vmem>>, vector<18x16x8xbf16>
    %c0_41 = arith.constant 0 : index
    %c0_42 = arith.constant 0 : index
    %c0_43 = arith.constant 0 : index
    %c0_44 = arith.constant 0 : index
    %23 = vector.load %arg12[%c0_41, %c0_42, %c0_43, %c0_44] : memref<3x18x16x8xbf16, #tpu.memory_space<vmem>>, vector<1x18x16x8xbf16>
    %24 = vector.shape_cast %23 : vector<1x18x16x8xbf16> to vector<18x16x8xbf16>
    %25 = vector.shape_cast %22 : vector<18x16x8xbf16> to vector<1x18x16x8xbf16>
    tpu.vector_store %arg12[%c0_41, %c0_42, %c0_43, %c0_44], %25 {strides = array<i32>} : memref<3x18x16x8xbf16, #tpu.memory_space<vmem>>, vector<1x18x16x8xbf16>,
    %c0_45 = arith.constant 0 : index
    %c8_46 = arith.constant 8 : index
    %c0_47 = arith.constant 0 : index
    %26 = vector.load %arg10[%c0_45, %c8_46, %c0_47] : memref<18x32x8xbf16, #tpu.memory_space<vmem>>, vector<18x16x8xbf16>
    %c1_48 = arith.constant 1 : index
    %c0_49 = arith.constant 0 : index
    %c0_50 = arith.constant 0 : index
    %c0_51 = arith.constant 0 : index
    %27 = vector.load %arg12[%c1_48, %c0_49, %c0_50, %c0_51] : memref<3x18x16x8xbf16, #tpu.memory_space<vmem>>, vector<1x18x16x8xbf16>
    %28 = vector.shape_cast %27 : vector<1x18x16x8xbf16> to vector<18x16x8xbf16>
    %29 = vector.shape_cast %26 : vector<18x16x8xbf16> to vector<1x18x16x8xbf16>
    tpu.vector_store %arg12[%c1_48, %c0_49, %c0_50, %c0_51], %29 {strides = array<i32>} : memref<3x18x16x8xbf16, #tpu.memory_space<vmem>>, vector<1x18x16x8xbf16>,
    %c0_52 = arith.constant 0 : index
    %c9 = arith.constant 9 : index
    %c0_53 = arith.constant 0 : index
    %30 = vector.load %arg10[%c0_52, %c9, %c0_53] : memref<18x32x8xbf16, #tpu.memory_space<vmem>>, vector<18x16x8xbf16>
    %c2 = arith.constant 2 : index
    %c0_54 = arith.constant 0 : index
    %c0_55 = arith.constant 0 : index
    %c0_56 = arith.constant 0 : index
    %31 = vector.load %arg12[%c2, %c0_54, %c0_55, %c0_56] : memref<3x18x16x8xbf16, #tpu.memory_space<vmem>>, vector<1x18x16x8xbf16>
    %32 = vector.shape_cast %31 : vector<1x18x16x8xbf16> to vector<18x16x8xbf16>
    %33 = vector.shape_cast %30 : vector<18x16x8xbf16> to vector<1x18x16x8xbf16>
    tpu.vector_store %arg12[%c2, %c0_54, %c0_55, %c0_56], %33 {strides = array<i32>} : memref<3x18x16x8xbf16, #tpu.memory_space<vmem>>, vector<1x18x16x8xbf16>,
    %cst_57 = arith.constant 0.000000e+00 : f32
    %34 = vector.broadcast %cst_57 : f32 to vector<256x4xf32>
    %c0_58 = arith.constant 0 : index
    %c0_59 = arith.constant 0 : index
    %c0_60 = arith.constant 0 : index
    %c0_61 = arith.constant 0 : index
    %35 = vector.load %arg12[%c0_58, %c0_59, %c0_60, %c0_61] : memref<3x18x16x8xbf16, #tpu.memory_space<vmem>>, vector<1x16x16x8xbf16>
    %36 = vector.shape_cast %35 : vector<1x16x16x8xbf16> to vector<16x16x8xbf16>
    %37 = vector.shape_cast %36 : vector<16x16x8xbf16> to vector<256x8xbf16>
    %c0_62 = arith.constant 0 : index
    %c0_63 = arith.constant 0 : index
    %c0_64 = arith.constant 0 : index
    %c0_65 = arith.constant 0 : index
    %38 = vector.load %arg3[%c0_62, %c0_63, %c0_64, %c0_65] : memref<3x3x8x4xbf16, #tpu.memory_space<vmem>>, vector<1x1x8x4xbf16>
    %39 = vector.shape_cast %38 : vector<1x1x8x4xbf16> to vector<8x4xbf16>
    %cst_66 = arith.constant dense<0.000000e+00> : vector<256x4xf32>
    %40 = tpu.matmul %37, %39, %cst_66 {dimension_numbers = #tpu.dot_dimension_numbers<[1], [0], [0], [1], [0, 0, 1, 1], [], []>} : vector<256x8xbf16>, vector<8x4xbf16>, vector<256x4xf32> -> vector<256x4xf32>
    %41 = arith.addf %34, %40 : vector<256x4xf32>
    %c1_67 = arith.constant 1 : index
    %c0_68 = arith.constant 0 : index
    %c0_69 = arith.constant 0 : index
    %c0_70 = arith.constant 0 : index
    %42 = vector.load %arg12[%c1_67, %c0_68, %c0_69, %c0_70] : memref<3x18x16x8xbf16, #tpu.memory_space<vmem>>, vector<1x16x16x8xbf16>
    %43 = vector.shape_cast %42 : vector<1x16x16x8xbf16> to vector<16x16x8xbf16>
    %44 = vector.shape_cast %43 : vector<16x16x8xbf16> to vector<256x8xbf16>
    %c0_71 = arith.constant 0 : index
    %c1_72 = arith.constant 1 : index
    %c0_73 = arith.constant 0 : index
    %c0_74 = arith.constant 0 : index
    %45 = vector.load %arg3[%c0_71, %c1_72, %c0_73, %c0_74] : memref<3x3x8x4xbf16, #tpu.memory_space<vmem>>, vector<1x1x8x4xbf16>
    %46 = vector.shape_cast %45 : vector<1x1x8x4xbf16> to vector<8x4xbf16>
    %cst_75 = arith.constant dense<0.000000e+00> : vector<256x4xf32>
    %47 = tpu.matmul %44, %46, %cst_75 {dimension_numbers = #tpu.dot_dimension_numbers<[1], [0], [0], [1], [0, 0, 1, 1], [], []>} : vector<256x8xbf16>, vector<8x4xbf16>, vector<256x4xf32> -> vector<256x4xf32>
    %48 = arith.addf %41, %47 : vector<256x4xf32>
    %c2_76 = arith.constant 2 : index
    %c0_77 = arith.constant 0 : index
    %c0_78 = arith.constant 0 : index
    %c0_79 = arith.constant 0 : index
    %49 = vector.load %arg12[%c2_76, %c0_77, %c0_78, %c0_79] : memref<3x18x16x8xbf16, #tpu.memory_space<vmem>>, vector<1x16x16x8xbf16>
    %50 = vector.shape_cast %49 : vector<1x16x16x8xbf16> to vector<16x16x8xbf16>
    %51 = vector.shape_cast %50 : vector<16x16x8xbf16> to vector<256x8xbf16>
    %c0_80 = arith.constant 0 : index
    %c2_81 = arith.constant 2 : index
    %c0_82 = arith.constant 0 : index
    %c0_83 = arith.constant 0 : index
    %52 = vector.load %arg3[%c0_80, %c2_81, %c0_82, %c0_83] : memref<3x3x8x4xbf16, #tpu.memory_space<vmem>>, vector<1x1x8x4xbf16>
    %53 = vector.shape_cast %52 : vector<1x1x8x4xbf16> to vector<8x4xbf16>
    %cst_84 = arith.constant dense<0.000000e+00> : vector<256x4xf32>
    %54 = tpu.matmul %51, %53, %cst_84 {dimension_numbers = #tpu.dot_dimension_numbers<[1], [0], [0], [1], [0, 0, 1, 1], [], []>} : vector<256x8xbf16>, vector<8x4xbf16>, vector<256x4xf32> -> vector<256x4xf32>
    %55 = arith.addf %48, %54 : vector<256x4xf32>
    %c0_85 = arith.constant 0 : index
    %c1_86 = arith.constant 1 : index
    %c0_87 = arith.constant 0 : index
    %c0_88 = arith.constant 0 : index
    %56 = vector.load %arg12[%c0_85, %c1_86, %c0_87, %c0_88] : memref<3x18x16x8xbf16, #tpu.memory_space<vmem>>, vector<1x16x16x8xbf16>
    %57 = vector.shape_cast %56 : vector<1x16x16x8xbf16> to vector<16x16x8xbf16>
    %58 = vector.shape_cast %57 : vector<16x16x8xbf16> to vector<256x8xbf16>
    %c1_89 = arith.constant 1 : index
    %c0_90 = arith.constant 0 : index
    %c0_91 = arith.constant 0 : index
    %c0_92 = arith.constant 0 : index
    %59 = vector.load %arg3[%c1_89, %c0_90, %c0_91, %c0_92] : memref<3x3x8x4xbf16, #tpu.memory_space<vmem>>, vector<1x1x8x4xbf16>
    %60 = vector.shape_cast %59 : vector<1x1x8x4xbf16> to vector<8x4xbf16>
    %cst_93 = arith.constant dense<0.000000e+00> : vector<256x4xf32>
    %61 = tpu.matmul %58, %60, %cst_93 {dimension_numbers = #tpu.dot_dimension_numbers<[1], [0], [0], [1], [0, 0, 1, 1], [], []>} : vector<256x8xbf16>, vector<8x4xbf16>, vector<256x4xf32> -> vector<256x4xf32>
    %62 = arith.addf %55, %61 : vector<256x4xf32>
    %c1_94 = arith.constant 1 : index
    %c1_95 = arith.constant 1 : index
    %c0_96 = arith.constant 0 : index
    %c0_97 = arith.constant 0 : index
    %63 = vector.load %arg12[%c1_94, %c1_95, %c0_96, %c0_97] : memref<3x18x16x8xbf16, #tpu.memory_space<vmem>>, vector<1x16x16x8xbf16>
    %64 = vector.shape_cast %63 : vector<1x16x16x8xbf16> to vector<16x16x8xbf16>
    %65 = vector.shape_cast %64 : vector<16x16x8xbf16> to vector<256x8xbf16>
    %c1_98 = arith.constant 1 : index
    %c1_99 = arith.constant 1 : index
    %c0_100 = arith.constant 0 : index
    %c0_101 = arith.constant 0 : index
    %66 = vector.load %arg3[%c1_98, %c1_99, %c0_100, %c0_101] : memref<3x3x8x4xbf16, #tpu.memory_space<vmem>>, vector<1x1x8x4xbf16>
    %67 = vector.shape_cast %66 : vector<1x1x8x4xbf16> to vector<8x4xbf16>
    %cst_102 = arith.constant dense<0.000000e+00> : vector<256x4xf32>
    %68 = tpu.matmul %65, %67, %cst_102 {dimension_numbers = #tpu.dot_dimension_numbers<[1], [0], [0], [1], [0, 0, 1, 1], [], []>} : vector<256x8xbf16>, vector<8x4xbf16>, vector<256x4xf32> -> vector<256x4xf32>
    %69 = arith.addf %62, %68 : vector<256x4xf32>
    %c2_103 = arith.constant 2 : index
    %c1_104 = arith.constant 1 : index
    %c0_105 = arith.constant 0 : index
    %c0_106 = arith.constant 0 : index
    %70 = vector.load %arg12[%c2_103, %c1_104, %c0_105, %c0_106] : memref<3x18x16x8xbf16, #tpu.memory_space<vmem>>, vector<1x16x16x8xbf16>
    %71 = vector.shape_cast %70 : vector<1x16x16x8xbf16> to vector<16x16x8xbf16>
    %72 = vector.shape_cast %71 : vector<16x16x8xbf16> to vector<256x8xbf16>
    %c1_107 = arith.constant 1 : index
    %c2_108 = arith.constant 2 : index
    %c0_109 = arith.constant 0 : index
    %c0_110 = arith.constant 0 : index
    %73 = vector.load %arg3[%c1_107, %c2_108, %c0_109, %c0_110] : memref<3x3x8x4xbf16, #tpu.memory_space<vmem>>, vector<1x1x8x4xbf16>
    %74 = vector.shape_cast %73 : vector<1x1x8x4xbf16> to vector<8x4xbf16>
    %cst_111 = arith.constant dense<0.000000e+00> : vector<256x4xf32>
    %75 = tpu.matmul %72, %74, %cst_111 {dimension_numbers = #tpu.dot_dimension_numbers<[1], [0], [0], [1], [0, 0, 1, 1], [], []>} : vector<256x8xbf16>, vector<8x4xbf16>, vector<256x4xf32> -> vector<256x4xf32>
    %76 = arith.addf %69, %75 : vector<256x4xf32>
    %c0_112 = arith.constant 0 : index
    %c2_113 = arith.constant 2 : index
    %c0_114 = arith.constant 0 : index
    %c0_115 = arith.constant 0 : index
    %77 = vector.load %arg12[%c0_112, %c2_113, %c0_114, %c0_115] : memref<3x18x16x8xbf16, #tpu.memory_space<vmem>>, vector<1x16x16x8xbf16>
    %78 = vector.shape_cast %77 : vector<1x16x16x8xbf16> to vector<16x16x8xbf16>
    %79 = vector.shape_cast %78 : vector<16x16x8xbf16> to vector<256x8xbf16>
    %c2_116 = arith.constant 2 : index
    %c0_117 = arith.constant 0 : index
    %c0_118 = arith.constant 0 : index
    %c0_119 = arith.constant 0 : index
    %80 = vector.load %arg3[%c2_116, %c0_117, %c0_118, %c0_119] : memref<3x3x8x4xbf16, #tpu.memory_space<vmem>>, vector<1x1x8x4xbf16>
    %81 = vector.shape_cast %80 : vector<1x1x8x4xbf16> to vector<8x4xbf16>
    %cst_120 = arith.constant dense<0.000000e+00> : vector<256x4xf32>
    %82 = tpu.matmul %79, %81, %cst_120 {dimension_numbers = #tpu.dot_dimension_numbers<[1], [0], [0], [1], [0, 0, 1, 1], [], []>} : vector<256x8xbf16>, vector<8x4xbf16>, vector<256x4xf32> -> vector<256x4xf32>
    %83 = arith.addf %76, %82 : vector<256x4xf32>
    %c1_121 = arith.constant 1 : index
    %c2_122 = arith.constant 2 : index
    %c0_123 = arith.constant 0 : index
    %c0_124 = arith.constant 0 : index
    %84 = vector.load %arg12[%c1_121, %c2_122, %c0_123, %c0_124] : memref<3x18x16x8xbf16, #tpu.memory_space<vmem>>, vector<1x16x16x8xbf16>
    %85 = vector.shape_cast %84 : vector<1x16x16x8xbf16> to vector<16x16x8xbf16>
    %86 = vector.shape_cast %85 : vector<16x16x8xbf16> to vector<256x8xbf16>
    %c2_125 = arith.constant 2 : index
    %c1_126 = arith.constant 1 : index
    %c0_127 = arith.constant 0 : index
    %c0_128 = arith.constant 0 : index
    %87 = vector.load %arg3[%c2_125, %c1_126, %c0_127, %c0_128] : memref<3x3x8x4xbf16, #tpu.memory_space<vmem>>, vector<1x1x8x4xbf16>
    %88 = vector.shape_cast %87 : vector<1x1x8x4xbf16> to vector<8x4xbf16>
    %cst_129 = arith.constant dense<0.000000e+00> : vector<256x4xf32>
    %89 = tpu.matmul %86, %88, %cst_129 {dimension_numbers = #tpu.dot_dimension_numbers<[1], [0], [0], [1], [0, 0, 1, 1], [], []>} : vector<256x8xbf16>, vector<8x4xbf16>, vector<256x4xf32> -> vector<256x4xf32>
    %90 = arith.addf %83, %89 : vector<256x4xf32>
    %c2_130 = arith.constant 2 : index
    %c2_131 = arith.constant 2 : index
    %c0_132 = arith.constant 0 : index
    %c0_133 = arith.constant 0 : index
    %91 = vector.load %arg12[%c2_130, %c2_131, %c0_132, %c0_133] : memref<3x18x16x8xbf16, #tpu.memory_space<vmem>>, vector<1x16x16x8xbf16>
    %92 = vector.shape_cast %91 : vector<1x16x16x8xbf16> to vector<16x16x8xbf16>
    %93 = vector.shape_cast %92 : vector<16x16x8xbf16> to vector<256x8xbf16>
    %c2_134 = arith.constant 2 : index
    %c2_135 = arith.constant 2 : index
    %c0_136 = arith.constant 0 : index
    %c0_137 = arith.constant 0 : index
    %94 = vector.load %arg3[%c2_134, %c2_135, %c0_136, %c0_137] : memref<3x3x8x4xbf16, #tpu.memory_space<vmem>>, vector<1x1x8x4xbf16>
    %95 = vector.shape_cast %94 : vector<1x1x8x4xbf16> to vector<8x4xbf16>
    %cst_138 = arith.constant dense<0.000000e+00> : vector<256x4xf32>
    %96 = tpu.matmul %93, %95, %cst_138 {dimension_numbers = #tpu.dot_dimension_numbers<[1], [0], [0], [1], [0, 0, 1, 1], [], []>} : vector<256x8xbf16>, vector<8x4xbf16>, vector<256x4xf32> -> vector<256x4xf32>
    %97 = arith.addf %90, %96 : vector<256x4xf32>
    %c0_139 = arith.constant 0 : index
    %c0_140 = arith.constant 0 : index
    %98 = vector.load %arg5[%c0_139, %c0_140] : memref<1x4xf32, #tpu.memory_space<vmem>>, vector<1x4xf32>
    %99 = vector.broadcast %98 : vector<1x4xf32> to vector<256x4xf32>
    %100 = arith.mulf %97, %99 : vector<256x4xf32>
    %c0_141 = arith.constant 0 : index
    %c0_142 = arith.constant 0 : index
    %101 = vector.load %arg6[%c0_141, %c0_142] : memref<1x4xf32, #tpu.memory_space<vmem>>, vector<1x4xf32>
    %102 = vector.broadcast %101 : vector<1x4xf32> to vector<256x4xf32>
    %103 = arith.addf %100, %102 : vector<256x4xf32>
    %cst_143 = arith.constant 0.000000e+00 : f32
    %104 = vector.broadcast %cst_143 : f32 to vector<256x4xf32>
    %105 = arith.maximumf %103, %104 : vector<256x4xf32>
    %106 = vector.shape_cast %105 : vector<256x4xf32> to vector<16x16x4xf32>
    %107 = arith.truncf %106 : vector<16x16x4xf32> to vector<16x16x4xbf16>
    %c1_144 = arith.constant 1 : index
    %c8_145 = arith.constant 8 : index
    %c0_146 = arith.constant 0 : index
    %108 = vector.load %arg11[%c1_144, %c8_145, %c0_146] : memref<18x32x4xbf16, #tpu.memory_space<vmem>>, vector<16x16x4xbf16>
    tpu.vector_store %arg11[%c1_144, %c8_145, %c0_146], %107 {strides = array<i32>} : memref<18x32x4xbf16, #tpu.memory_space<vmem>>, vector<16x16x4xbf16>,
    %c0_147 = arith.constant 0 : index
    %c7_148 = arith.constant 7 : index
    %c0_149 = arith.constant 0 : index
    %109 = vector.load %arg11[%c0_147, %c7_148, %c0_149] : memref<18x32x4xbf16, #tpu.memory_space<vmem>>, vector<18x16x4xbf16>
    %c0_150 = arith.constant 0 : index
    %c0_151 = arith.constant 0 : index
    %c0_152 = arith.constant 0 : index
    %c0_153 = arith.constant 0 : index
    %110 = vector.load %arg13[%c0_150, %c0_151, %c0_152, %c0_153] : memref<3x18x16x4xbf16, #tpu.memory_space<vmem>>, vector<1x18x16x4xbf16>
    %111 = vector.shape_cast %110 : vector<1x18x16x4xbf16> to vector<18x16x4xbf16>
    %112 = vector.shape_cast %109 : vector<18x16x4xbf16> to vector<1x18x16x4xbf16>
    tpu.vector_store %arg13[%c0_150, %c0_151, %c0_152, %c0_153], %112 {strides = array<i32>} : memref<3x18x16x4xbf16, #tpu.memory_space<vmem>>, vector<1x18x16x4xbf16>,
    %c0_154 = arith.constant 0 : index
    %c8_155 = arith.constant 8 : index
    %c0_156 = arith.constant 0 : index
    %113 = vector.load %arg11[%c0_154, %c8_155, %c0_156] : memref<18x32x4xbf16, #tpu.memory_space<vmem>>, vector<18x16x4xbf16>
    %c1_157 = arith.constant 1 : index
    %c0_158 = arith.constant 0 : index
    %c0_159 = arith.constant 0 : index
    %c0_160 = arith.constant 0 : index
    %114 = vector.load %arg13[%c1_157, %c0_158, %c0_159, %c0_160] : memref<3x18x16x4xbf16, #tpu.memory_space<vmem>>, vector<1x18x16x4xbf16>
    %115 = vector.shape_cast %114 : vector<1x18x16x4xbf16> to vector<18x16x4xbf16>
    %116 = vector.shape_cast %113 : vector<18x16x4xbf16> to vector<1x18x16x4xbf16>
    tpu.vector_store %arg13[%c1_157, %c0_158, %c0_159, %c0_160], %116 {strides = array<i32>} : memref<3x18x16x4xbf16, #tpu.memory_space<vmem>>, vector<1x18x16x4xbf16>,
    %c0_161 = arith.constant 0 : index
    %c9_162 = arith.constant 9 : index
    %c0_163 = arith.constant 0 : index
    %117 = vector.load %arg11[%c0_161, %c9_162, %c0_163] : memref<18x32x4xbf16, #tpu.memory_space<vmem>>, vector<18x16x4xbf16>
    %c2_164 = arith.constant 2 : index
    %c0_165 = arith.constant 0 : index
    %c0_166 = arith.constant 0 : index
    %c0_167 = arith.constant 0 : index
    %118 = vector.load %arg13[%c2_164, %c0_165, %c0_166, %c0_167] : memref<3x18x16x4xbf16, #tpu.memory_space<vmem>>, vector<1x18x16x4xbf16>
    %119 = vector.shape_cast %118 : vector<1x18x16x4xbf16> to vector<18x16x4xbf16>
    %120 = vector.shape_cast %117 : vector<18x16x4xbf16> to vector<1x18x16x4xbf16>
    tpu.vector_store %arg13[%c2_164, %c0_165, %c0_166, %c0_167], %120 {strides = array<i32>} : memref<3x18x16x4xbf16, #tpu.memory_space<vmem>>, vector<1x18x16x4xbf16>,
    %cst_168 = arith.constant 0.000000e+00 : f32
    %121 = vector.broadcast %cst_168 : f32 to vector<256x4xf32>
    %c0_169 = arith.constant 0 : index
    %c0_170 = arith.constant 0 : index
    %c0_171 = arith.constant 0 : index
    %c0_172 = arith.constant 0 : index
    %122 = vector.load %arg13[%c0_169, %c0_170, %c0_171, %c0_172] : memref<3x18x16x4xbf16, #tpu.memory_space<vmem>>, vector<1x16x16x4xbf16>
    %123 = vector.shape_cast %122 : vector<1x16x16x4xbf16> to vector<16x16x4xbf16>
    %124 = vector.shape_cast %123 : vector<16x16x4xbf16> to vector<256x4xbf16>
    %c0_173 = arith.constant 0 : index
    %c0_174 = arith.constant 0 : index
    %c0_175 = arith.constant 0 : index
    %c0_176 = arith.constant 0 : index
    %125 = vector.load %arg4[%c0_173, %c0_174, %c0_175, %c0_176] : memref<3x3x4x4xbf16, #tpu.memory_space<vmem>>, vector<1x1x4x4xbf16>
    %126 = vector.shape_cast %125 : vector<1x1x4x4xbf16> to vector<4x4xbf16>
    %cst_177 = arith.constant dense<0.000000e+00> : vector<256x4xf32>
    %127 = tpu.matmul %124, %126, %cst_177 {dimension_numbers = #tpu.dot_dimension_numbers<[1], [0], [0], [1], [0, 0, 1, 1], [], []>} : vector<256x4xbf16>, vector<4x4xbf16>, vector<256x4xf32> -> vector<256x4xf32>
    %128 = arith.addf %121, %127 : vector<256x4xf32>
    %c1_178 = arith.constant 1 : index
    %c0_179 = arith.constant 0 : index
    %c0_180 = arith.constant 0 : index
    %c0_181 = arith.constant 0 : index
    %129 = vector.load %arg13[%c1_178, %c0_179, %c0_180, %c0_181] : memref<3x18x16x4xbf16, #tpu.memory_space<vmem>>, vector<1x16x16x4xbf16>
    %130 = vector.shape_cast %129 : vector<1x16x16x4xbf16> to vector<16x16x4xbf16>
    %131 = vector.shape_cast %130 : vector<16x16x4xbf16> to vector<256x4xbf16>
    %c0_182 = arith.constant 0 : index
    %c1_183 = arith.constant 1 : index
    %c0_184 = arith.constant 0 : index
    %c0_185 = arith.constant 0 : index
    %132 = vector.load %arg4[%c0_182, %c1_183, %c0_184, %c0_185] : memref<3x3x4x4xbf16, #tpu.memory_space<vmem>>, vector<1x1x4x4xbf16>
    %133 = vector.shape_cast %132 : vector<1x1x4x4xbf16> to vector<4x4xbf16>
    %cst_186 = arith.constant dense<0.000000e+00> : vector<256x4xf32>
    %134 = tpu.matmul %131, %133, %cst_186 {dimension_numbers = #tpu.dot_dimension_numbers<[1], [0], [0], [1], [0, 0, 1, 1], [], []>} : vector<256x4xbf16>, vector<4x4xbf16>, vector<256x4xf32> -> vector<256x4xf32>
    %135 = arith.addf %128, %134 : vector<256x4xf32>
    %c2_187 = arith.constant 2 : index
    %c0_188 = arith.constant 0 : index
    %c0_189 = arith.constant 0 : index
    %c0_190 = arith.constant 0 : index
    %136 = vector.load %arg13[%c2_187, %c0_188, %c0_189, %c0_190] : memref<3x18x16x4xbf16, #tpu.memory_space<vmem>>, vector<1x16x16x4xbf16>
    %137 = vector.shape_cast %136 : vector<1x16x16x4xbf16> to vector<16x16x4xbf16>
    %138 = vector.shape_cast %137 : vector<16x16x4xbf16> to vector<256x4xbf16>
    %c0_191 = arith.constant 0 : index
    %c2_192 = arith.constant 2 : index
    %c0_193 = arith.constant 0 : index
    %c0_194 = arith.constant 0 : index
    %139 = vector.load %arg4[%c0_191, %c2_192, %c0_193, %c0_194] : memref<3x3x4x4xbf16, #tpu.memory_space<vmem>>, vector<1x1x4x4xbf16>
    %140 = vector.shape_cast %139 : vector<1x1x4x4xbf16> to vector<4x4xbf16>
    %cst_195 = arith.constant dense<0.000000e+00> : vector<256x4xf32>
    %141 = tpu.matmul %138, %140, %cst_195 {dimension_numbers = #tpu.dot_dimension_numbers<[1], [0], [0], [1], [0, 0, 1, 1], [], []>} : vector<256x4xbf16>, vector<4x4xbf16>, vector<256x4xf32> -> vector<256x4xf32>
    %142 = arith.addf %135, %141 : vector<256x4xf32>
    %c0_196 = arith.constant 0 : index
    %c1_197 = arith.constant 1 : index
    %c0_198 = arith.constant 0 : index
    %c0_199 = arith.constant 0 : index
    %143 = vector.load %arg13[%c0_196, %c1_197, %c0_198, %c0_199] : memref<3x18x16x4xbf16, #tpu.memory_space<vmem>>, vector<1x16x16x4xbf16>
    %144 = vector.shape_cast %143 : vector<1x16x16x4xbf16> to vector<16x16x4xbf16>
    %145 = vector.shape_cast %144 : vector<16x16x4xbf16> to vector<256x4xbf16>
    %c1_200 = arith.constant 1 : index
    %c0_201 = arith.constant 0 : index
    %c0_202 = arith.constant 0 : index
    %c0_203 = arith.constant 0 : index
    %146 = vector.load %arg4[%c1_200, %c0_201, %c0_202, %c0_203] : memref<3x3x4x4xbf16, #tpu.memory_space<vmem>>, vector<1x1x4x4xbf16>
    %147 = vector.shape_cast %146 : vector<1x1x4x4xbf16> to vector<4x4xbf16>
    %cst_204 = arith.constant dense<0.000000e+00> : vector<256x4xf32>
    %148 = tpu.matmul %145, %147, %cst_204 {dimension_numbers = #tpu.dot_dimension_numbers<[1], [0], [0], [1], [0, 0, 1, 1], [], []>} : vector<256x4xbf16>, vector<4x4xbf16>, vector<256x4xf32> -> vector<256x4xf32>
    %149 = arith.addf %142, %148 : vector<256x4xf32>
    %c1_205 = arith.constant 1 : index
    %c1_206 = arith.constant 1 : index
    %c0_207 = arith.constant 0 : index
    %c0_208 = arith.constant 0 : index
    %150 = vector.load %arg13[%c1_205, %c1_206, %c0_207, %c0_208] : memref<3x18x16x4xbf16, #tpu.memory_space<vmem>>, vector<1x16x16x4xbf16>
    %151 = vector.shape_cast %150 : vector<1x16x16x4xbf16> to vector<16x16x4xbf16>
    %152 = vector.shape_cast %151 : vector<16x16x4xbf16> to vector<256x4xbf16>
    %c1_209 = arith.constant 1 : index
    %c1_210 = arith.constant 1 : index
    %c0_211 = arith.constant 0 : index
    %c0_212 = arith.constant 0 : index
    %153 = vector.load %arg4[%c1_209, %c1_210, %c0_211, %c0_212] : memref<3x3x4x4xbf16, #tpu.memory_space<vmem>>, vector<1x1x4x4xbf16>
    %154 = vector.shape_cast %153 : vector<1x1x4x4xbf16> to vector<4x4xbf16>
    %cst_213 = arith.constant dense<0.000000e+00> : vector<256x4xf32>
    %155 = tpu.matmul %152, %154, %cst_213 {dimension_numbers = #tpu.dot_dimension_numbers<[1], [0], [0], [1], [0, 0, 1, 1], [], []>} : vector<256x4xbf16>, vector<4x4xbf16>, vector<256x4xf32> -> vector<256x4xf32>
    %156 = arith.addf %149, %155 : vector<256x4xf32>
    %c2_214 = arith.constant 2 : index
    %c1_215 = arith.constant 1 : index
    %c0_216 = arith.constant 0 : index
    %c0_217 = arith.constant 0 : index
    %157 = vector.load %arg13[%c2_214, %c1_215, %c0_216, %c0_217] : memref<3x18x16x4xbf16, #tpu.memory_space<vmem>>, vector<1x16x16x4xbf16>
    %158 = vector.shape_cast %157 : vector<1x16x16x4xbf16> to vector<16x16x4xbf16>
    %159 = vector.shape_cast %158 : vector<16x16x4xbf16> to vector<256x4xbf16>
    %c1_218 = arith.constant 1 : index
    %c2_219 = arith.constant 2 : index
    %c0_220 = arith.constant 0 : index
    %c0_221 = arith.constant 0 : index
    %160 = vector.load %arg4[%c1_218, %c2_219, %c0_220, %c0_221] : memref<3x3x4x4xbf16, #tpu.memory_space<vmem>>, vector<1x1x4x4xbf16>
    %161 = vector.shape_cast %160 : vector<1x1x4x4xbf16> to vector<4x4xbf16>
    %cst_222 = arith.constant dense<0.000000e+00> : vector<256x4xf32>
    %162 = tpu.matmul %159, %161, %cst_222 {dimension_numbers = #tpu.dot_dimension_numbers<[1], [0], [0], [1], [0, 0, 1, 1], [], []>} : vector<256x4xbf16>, vector<4x4xbf16>, vector<256x4xf32> -> vector<256x4xf32>
    %163 = arith.addf %156, %162 : vector<256x4xf32>
    %c0_223 = arith.constant 0 : index
    %c2_224 = arith.constant 2 : index
    %c0_225 = arith.constant 0 : index
    %c0_226 = arith.constant 0 : index
    %164 = vector.load %arg13[%c0_223, %c2_224, %c0_225, %c0_226] : memref<3x18x16x4xbf16, #tpu.memory_space<vmem>>, vector<1x16x16x4xbf16>
    %165 = vector.shape_cast %164 : vector<1x16x16x4xbf16> to vector<16x16x4xbf16>
    %166 = vector.shape_cast %165 : vector<16x16x4xbf16> to vector<256x4xbf16>
    %c2_227 = arith.constant 2 : index
    %c0_228 = arith.constant 0 : index
    %c0_229 = arith.constant 0 : index
    %c0_230 = arith.constant 0 : index
    %167 = vector.load %arg4[%c2_227, %c0_228, %c0_229, %c0_230] : memref<3x3x4x4xbf16, #tpu.memory_space<vmem>>, vector<1x1x4x4xbf16>
    %168 = vector.shape_cast %167 : vector<1x1x4x4xbf16> to vector<4x4xbf16>
    %cst_231 = arith.constant dense<0.000000e+00> : vector<256x4xf32>
    %169 = tpu.matmul %166, %168, %cst_231 {dimension_numbers = #tpu.dot_dimension_numbers<[1], [0], [0], [1], [0, 0, 1, 1], [], []>} : vector<256x4xbf16>, vector<4x4xbf16>, vector<256x4xf32> -> vector<256x4xf32>
    %170 = arith.addf %163, %169 : vector<256x4xf32>
    %c1_232 = arith.constant 1 : index
    %c2_233 = arith.constant 2 : index
    %c0_234 = arith.constant 0 : index
    %c0_235 = arith.constant 0 : index
    %171 = vector.load %arg13[%c1_232, %c2_233, %c0_234, %c0_235] : memref<3x18x16x4xbf16, #tpu.memory_space<vmem>>, vector<1x16x16x4xbf16>
    %172 = vector.shape_cast %171 : vector<1x16x16x4xbf16> to vector<16x16x4xbf16>
    %173 = vector.shape_cast %172 : vector<16x16x4xbf16> to vector<256x4xbf16>
    %c2_236 = arith.constant 2 : index
    %c1_237 = arith.constant 1 : index
    %c0_238 = arith.constant 0 : index
    %c0_239 = arith.constant 0 : index
    %174 = vector.load %arg4[%c2_236, %c1_237, %c0_238, %c0_239] : memref<3x3x4x4xbf16, #tpu.memory_space<vmem>>, vector<1x1x4x4xbf16>
    %175 = vector.shape_cast %174 : vector<1x1x4x4xbf16> to vector<4x4xbf16>
    %cst_240 = arith.constant dense<0.000000e+00> : vector<256x4xf32>
    %176 = tpu.matmul %173, %175, %cst_240 {dimension_numbers = #tpu.dot_dimension_numbers<[1], [0], [0], [1], [0, 0, 1, 1], [], []>} : vector<256x4xbf16>, vector<4x4xbf16>, vector<256x4xf32> -> vector<256x4xf32>
    %177 = arith.addf %170, %176 : vector<256x4xf32>
    %c2_241 = arith.constant 2 : index
    %c2_242 = arith.constant 2 : index
    %c0_243 = arith.constant 0 : index
    %c0_244 = arith.constant 0 : index
    %178 = vector.load %arg13[%c2_241, %c2_242, %c0_243, %c0_244] : memref<3x18x16x4xbf16, #tpu.memory_space<vmem>>, vector<1x16x16x4xbf16>
    %179 = vector.shape_cast %178 : vector<1x16x16x4xbf16> to vector<16x16x4xbf16>
    %180 = vector.shape_cast %179 : vector<16x16x4xbf16> to vector<256x4xbf16>
    %c2_245 = arith.constant 2 : index
    %c2_246 = arith.constant 2 : index
    %c0_247 = arith.constant 0 : index
    %c0_248 = arith.constant 0 : index
    %181 = vector.load %arg4[%c2_245, %c2_246, %c0_247, %c0_248] : memref<3x3x4x4xbf16, #tpu.memory_space<vmem>>, vector<1x1x4x4xbf16>
    %182 = vector.shape_cast %181 : vector<1x1x4x4xbf16> to vector<4x4xbf16>
    %cst_249 = arith.constant dense<0.000000e+00> : vector<256x4xf32>
    %183 = tpu.matmul %180, %182, %cst_249 {dimension_numbers = #tpu.dot_dimension_numbers<[1], [0], [0], [1], [0, 0, 1, 1], [], []>} : vector<256x4xbf16>, vector<4x4xbf16>, vector<256x4xf32> -> vector<256x4xf32>
    %184 = arith.addf %177, %183 : vector<256x4xf32>
    %c0_250 = arith.constant 0 : index
    %c0_251 = arith.constant 0 : index
    %185 = vector.load %arg7[%c0_250, %c0_251] : memref<1x4xf32, #tpu.memory_space<vmem>>, vector<1x4xf32>
    %186 = vector.broadcast %185 : vector<1x4xf32> to vector<256x4xf32>
    %187 = arith.mulf %184, %186 : vector<256x4xf32>
    %c0_252 = arith.constant 0 : index
    %c0_253 = arith.constant 0 : index
    %188 = vector.load %arg8[%c0_252, %c0_253] : memref<1x4xf32, #tpu.memory_space<vmem>>, vector<1x4xf32>
    %189 = vector.broadcast %188 : vector<1x4xf32> to vector<256x4xf32>
    %190 = arith.addf %187, %189 : vector<256x4xf32>
    %cst_254 = arith.constant 0.000000e+00 : f32
    %191 = vector.broadcast %cst_254 : f32 to vector<256x4xf32>
    %192 = arith.maximumf %190, %191 : vector<256x4xf32>
    %193 = vector.shape_cast %192 : vector<256x4xf32> to vector<16x16x4xf32>
    %194 = arith.truncf %193 : vector<16x16x4xf32> to vector<16x16x4xbf16>
    %c0_255 = arith.constant 0 : index
    %c0_256 = arith.constant 0 : index
    %c0_257 = arith.constant 0 : index
    %c0_258 = arith.constant 0 : index
    %195 = vector.load %arg9[%c0_255, %c0_256, %c0_257, %c0_258] : memref<1x16x16x4xbf16, #tpu.memory_space<vmem>>, vector<1x16x16x4xbf16>
    %196 = vector.shape_cast %195 : vector<1x16x16x4xbf16> to vector<16x16x4xbf16>
    %197 = vector.shape_cast %194 : vector<16x16x4xbf16> to vector<1x16x16x4xbf16>
    tpu.vector_store %arg9[%c0_255, %c0_256, %c0_257, %c0_258], %197 {strides = array<i32>} : memref<1x16x16x4xbf16, #tpu.memory_space<vmem>>, vector<1x16x16x4xbf16>,
    return
  }
  func.func @transform_0(%arg0: i32) -> (i32, i32, i32, i32) {
    %c0_i32 = arith.constant 0 : i32
    %c0_i32_0 = arith.constant 0 : i32
    %c0_i32_1 = arith.constant 0 : i32
    %c0_i32_2 = arith.constant 0 : i32
    return %arg0, %c0_i32, %c0_i32_0, %c0_i32_1 : i32, i32, i32, i32
  }
  func.func @transform_1(%arg0: i32) -> (i32, i32, i32, i32) {
    %c0_i32 = arith.constant 0 : i32
    %c0_i32_0 = arith.constant 0 : i32
    %c0_i32_1 = arith.constant 0 : i32
    %c0_i32_2 = arith.constant 0 : i32
    return %arg0, %c0_i32, %c0_i32_0, %c0_i32_1 : i32, i32, i32, i32
  }
  func.func @transform_2(%arg0: i32) -> (i32, i32, i32, i32) {
    %c0_i32 = arith.constant 0 : i32
    %c0_i32_0 = arith.constant 0 : i32
    %c0_i32_1 = arith.constant 0 : i32
    %c0_i32_2 = arith.constant 0 : i32
    %c0_i32_3 = arith.constant 0 : i32
    return %c0_i32, %c0_i32_0, %c0_i32_1, %c0_i32_2 : i32, i32, i32, i32
  }
  func.func @transform_3(%arg0: i32) -> (i32, i32, i32, i32) {
    %c0_i32 = arith.constant 0 : i32
    %c0_i32_0 = arith.constant 0 : i32
    %c0_i32_1 = arith.constant 0 : i32
    %c0_i32_2 = arith.constant 0 : i32
    %c0_i32_3 = arith.constant 0 : i32
    return %c0_i32, %c0_i32_0, %c0_i32_1, %c0_i32_2 : i32, i32, i32, i32
  }
  func.func @transform_4(%arg0: i32) -> (i32, i32) {
    %c0_i32 = arith.constant 0 : i32
    %c0_i32_0 = arith.constant 0 : i32
    %c0_i32_1 = arith.constant 0 : i32
    return %c0_i32, %c0_i32_0 : i32, i32
  }
  func.func @transform_5(%arg0: i32) -> (i32, i32) {
    %c0_i32 = arith.constant 0 : i32
    %c0_i32_0 = arith.constant 0 : i32
    %c0_i32_1 = arith.constant 0 : i32
    return %c0_i32, %c0_i32_0 : i32, i32
  }
  func.func @transform_6(%arg0: i32) -> (i32, i32) {
    %c0_i32 = arith.constant 0 : i32
    %c0_i32_0 = arith.constant 0 : i32
    %c0_i32_1 = arith.constant 0 : i32
    return %c0_i32, %c0_i32_0 : i32, i32
  }
  func.func @transform_7(%arg0: i32) -> (i32, i32) {
    %c0_i32 = arith.constant 0 : i32
    %c0_i32_0 = arith.constant 0 : i32
    %c0_i32_1 = arith.constant 0 : i32
    return %c0_i32, %c0_i32_0 : i32, i32
  }
  func.func @transform_8(%arg0: i32) -> (i32, i32, i32, i32) {
    %c0_i32 = arith.constant 0 : i32
    %c0_i32_0 = arith.constant 0 : i32
    %c0_i32_1 = arith.constant 0 : i32
    %c0_i32_2 = arith.constant 0 : i32
    return %arg0, %c0_i32, %c0_i32_0, %c0_i32_1 : i32, i32, i32, i32
  }
}

</mosaic_0001>

<llo_original>
// kernel: up_forward.1
$region0: #{up_forward.1}
  #allocation0 [shape = 'u32[]', space=smem, size = 0x4, offset = 0x4, fixed_abs, tag = 'smem constant byte address 0x4 - core index']
  #allocation1 [shape = 'u32[144,128]{1,0:T(1,128)}', space=vmem, size = 0x12000, scoped, tag = 'internal scratch']
  #allocation2 [shape = 'bf16[18,32,8]{2,1,0:T(16,128)(2,1)}', space=vmem, size = 0x24000, scoped, tag = 'scratch operand']
  #allocation3 [shape = 'bf16[18,32,4]{2,1,0:T(16,128)(2,1)}', space=vmem, size = 0x24000, scoped, tag = 'scratch operand']
  #allocation4 [shape = 'bf16[3,18,16,8]{3,2,1,0:T(16,128)(2,1)}', space=vmem, size = 0x36000, scoped, tag = 'scratch operand']
  #allocation5 [shape = 'bf16[3,18,16,4]{3,2,1,0:T(16,128)(2,1)}', space=vmem, size = 0x36000, scoped, tag = 'scratch operand']
  %s0 = inlined_call_operand.vmem [shape: bf16[2,16,16,4], index: 0, kind: input, shape index: {}]
  %s1 = inlined_call_operand.vmem [shape: bf16[2,16,16,4], index: 1, kind: input, shape index: {}]
  %s2 = inlined_call_operand.vmem [shape: bf16[3,3,8,4], index: 2, kind: input, shape index: {}]
  %s3 = inlined_call_operand.vmem [shape: bf16[3,3,4,4], index: 3, kind: input, shape index: {}]
  %s4 = inlined_call_operand.vmem [shape: f32[1,4], index: 4, kind: input, shape index: {}]
  %s5 = inlined_call_operand.vmem [shape: f32[1,4], index: 5, kind: input, shape index: {}]
  %s6 = inlined_call_operand.vmem [shape: f32[1,4], index: 6, kind: input, shape index: {}]
  %s7 = inlined_call_operand.vmem [shape: f32[1,4], index: 7, kind: input, shape index: {}]
  %s8 = inlined_call_operand.vmem [shape: bf16[2,16,16,4], index: 8, kind: output, shape index: {}]
  %s9 = sld [smem:[#allocation0]]
  $region65: #{up_forward.1} parent=0
    _
  %s11 = ssub.s32 1, %s9
  %s12 = scalar_select 0, %s11, %s9
  loop: start=0, step=1, limit=4
  $region2: #{up_forward.1} parent=0 // loop_pre_header
    _
  $region3: #{up_forward.1} parent=0 // loop_header
    %s14 = sphi 0, %s18
    %p15 = scmp.ge.s32.totalorder %s14, 4
    %s24 = sphi 0, %s26
    %s27 = sphi 0, %s24
    %s28 = sphi 0, %s27
    %s44 = sphi 0, %s28
    %s50 = sphi 0, %s52
    %s53 = sphi 0, %s50
    %s54 = sphi 0, %s53
    %s70 = sphi 0, %s54
    %s74 = sphi 0, %s74
    %s76 = sphi 0, %s74
    %s77 = sphi 0, %s76
    %s91 = sphi 0, %s77
    %s95 = sphi 0, %s95
    %s97 = sphi 0, %s95
    %s98 = sphi 0, %s97
    %s112 = sphi 0, %s98
    %s116 = sphi 0, %s116
    %s118 = sphi 0, %s116
    %s119 = sphi 0, %s118
    %s133 = sphi 0, %s119
    %s137 = sphi 0, %s137
    %s139 = sphi 0, %s137
    %s140 = sphi 0, %s139
    %s154 = sphi 0, %s140
    %s158 = sphi 0, %s158
    %s160 = sphi 0, %s158
    %s161 = sphi 0, %s160
    %s175 = sphi 0, %s161
    %s179 = sphi 0, %s179
    %s181 = sphi 0, %s179
    %s182 = sphi 0, %s181
    %s196 = sphi 0, %s182
    %s202 = sphi 0, %s204
    %s205 = sphi 0, %s202
    %s206 = sphi 0, %s205
    %s222 = sphi 0, %s206
  $region4: #{up_forward.1} parent=0 // loop_header_branch
    %17 = sbr.rel (%p15) target = $region8
  $region5: #{up_forward.1} parent=0 // loop_body
    %s19 = ssub.s32 %s14, 1
    %s20 = ssub.s32 %s14, 2
    %s21 = sadd.s32 %s14, 1
    %s22 = ssub.s32 %s14, %s21
    %p23 = scmp.eq.s32.totalorder %s22, 0
    %s25 = sadd.s32 %s24, 1
    %s26 = scalar_select %p23, %s24, %s25
    %p29 = pneg %p23
    %p30 = scmp.eq.s32.totalorder %s14, 1
    %p31 = por %p29, %p30
    %p32 = scmp.ne.s32.totalorder %s24, %s27
    %p33 = scmp.eq.s32.totalorder %s14, 0
    %p34 = por %p32, %p33
    %p35 = scmp.ne.s32.totalorder %s24, %s27
    %p36 = scmp.eq.s32.totalorder %s19, 1
    %p37 = por %p35, %p36
    %p38 = scmp.ne.s32.totalorder %s27, %s28
    %p39 = scmp.eq.s32.totalorder %s19, 0
    %p40 = por %p38, %p39
    %p41 = scmp.ne.s32.totalorder %s27, %s28
    %p42 = scmp.eq.s32.totalorder %s20, 1
    %p43 = por %p41, %p42
    %p45 = scmp.ne.s32.totalorder %s28, %s44
    %p46 = scmp.eq.s32.totalorder %s20, 0
    %p47 = por %p45, %p46
    %s48 = ssub.s32 %s14, %s21
    %p49 = scmp.eq.s32.totalorder %s48, 0
    %s51 = sadd.s32 %s50, 1
    %s52 = scalar_select %p49, %s50, %s51
    %p55 = pneg %p49
    %p56 = scmp.eq.s32.totalorder %s14, 1
    %p57 = por %p55, %p56
    %p58 = scmp.ne.s32.totalorder %s50, %s53
    %p59 = scmp.eq.s32.totalorder %s14, 0
    %p60 = por %p58, %p59
    %p61 = scmp.ne.s32.totalorder %s50, %s53
    %p62 = scmp.eq.s32.totalorder %s19, 1
    %p63 = por %p61, %p62
    %p64 = scmp.ne.s32.totalorder %s53, %s54
    %p65 = scmp.eq.s32.totalorder %s19, 0
    %p66 = por %p64, %p65
    %p67 = scmp.ne.s32.totalorder %s53, %s54
    %p68 = scmp.eq.s32.totalorder %s20, 1
    %p69 = por %p67, %p68
    %p71 = scmp.ne.s32.totalorder %s54, %s70
    %p72 = scmp.eq.s32.totalorder %s20, 0
    %p73 = por %p71, %p72
    %s75 = sadd.s32 %s74, 1
    %p78 = scmp.eq.s32.totalorder %s14, 1
    %p79 = scmp.ne.s32.totalorder %s74, %s76
    %p80 = scmp.eq.s32.totalorder %s14, 0
    %p81 = por %p79, %p80
    %p82 = scmp.ne.s32.totalorder %s74, %s76
    %p83 = scmp.eq.s32.totalorder %s19, 1
    %p84 = por %p82, %p83
    %p85 = scmp.ne.s32.totalorder %s76, %s77
    %p86 = scmp.eq.s32.totalorder %s19, 0
    %p87 = por %p85, %p86
    %p88 = scmp.ne.s32.totalorder %s76, %s77
    %p89 = scmp.eq.s32.totalorder %s20, 1
    %p90 = por %p88, %p89
    %p92 = scmp.ne.s32.totalorder %s77, %s91
    %p93 = scmp.eq.s32.totalorder %s20, 0
    %p94 = por %p92, %p93
    %s96 = sadd.s32 %s95, 1
    %p99 = scmp.eq.s32.totalorder %s14, 1
    %p100 = scmp.ne.s32.totalorder %s95, %s97
    %p101 = scmp.eq.s32.totalorder %s14, 0
    %p102 = por %p100, %p101
    %p103 = scmp.ne.s32.totalorder %s95, %s97
    %p104 = scmp.eq.s32.totalorder %s19, 1
    %p105 = por %p103, %p104
    %p106 = scmp.ne.s32.totalorder %s97, %s98
    %p107 = scmp.eq.s32.totalorder %s19, 0
    %p108 = por %p106, %p107
    %p109 = scmp.ne.s32.totalorder %s97, %s98
    %p110 = scmp.eq.s32.totalorder %s20, 1
    %p111 = por %p109, %p110
    %p113 = scmp.ne.s32.totalorder %s98, %s112
    %p114 = scmp.eq.s32.totalorder %s20, 0
    %p115 = por %p113, %p114
    %s117 = sadd.s32 %s116, 1
    %p120 = scmp.eq.s32.totalorder %s14, 1
    %p121 = scmp.ne.s32.totalorder %s116, %s118
    %p122 = scmp.eq.s32.totalorder %s14, 0
    %p123 = por %p121, %p122
    %p124 = scmp.ne.s32.totalorder %s116, %s118
    %p125 = scmp.eq.s32.totalorder %s19, 1
    %p126 = por %p124, %p125
    %p127 = scmp.ne.s32.totalorder %s118, %s119
    %p128 = scmp.eq.s32.totalorder %s19, 0
    %p129 = por %p127, %p128
    %p130 = scmp.ne.s32.totalorder %s118, %s119
    %p131 = scmp.eq.s32.totalorder %s20, 1
    %p132 = por %p130, %p131
    %p134 = scmp.ne.s32.totalorder %s119, %s133
    %p135 = scmp.eq.s32.totalorder %s20, 0
    %p136 = por %p134, %p135
    %s138 = sadd.s32 %s137, 1
    %p141 = scmp.eq.s32.totalorder %s14, 1
    %p142 = scmp.ne.s32.totalorder %s137, %s139
    %p143 = scmp.eq.s32.totalorder %s14, 0
    %p144 = por %p142, %p143
    %p145 = scmp.ne.s32.totalorder %s137, %s139
    %p146 = scmp.eq.s32.totalorder %s19, 1
    %p147 = por %p145, %p146
    %p148 = scmp.ne.s32.totalorder %s139, %s140
    %p149 = scmp.eq.s32.totalorder %s19, 0
    %p150 = por %p148, %p149
    %p151 = scmp.ne.s32.totalorder %s139, %s140
    %p152 = scmp.eq.s32.totalorder %s20, 1
    %p153 = por %p151, %p152
    %p155 = scmp.ne.s32.totalorder %s140, %s154
    %p156 = scmp.eq.s32.totalorder %s20, 0
    %p157 = por %p155, %p156
    %s159 = sadd.s32 %s158, 1
    %p162 = scmp.eq.s32.totalorder %s14, 1
    %p163 = scmp.ne.s32.totalorder %s158, %s160
    %p164 = scmp.eq.s32.totalorder %s14, 0
    %p165 = por %p163, %p164
    %p166 = scmp.ne.s32.totalorder %s158, %s160
    %p167 = scmp.eq.s32.totalorder %s19, 1
    %p168 = por %p166, %p167
    %p169 = scmp.ne.s32.totalorder %s160, %s161
    %p170 = scmp.eq.s32.totalorder %s19, 0
    %p171 = por %p169, %p170
    %p172 = scmp.ne.s32.totalorder %s160, %s161
    %p173 = scmp.eq.s32.totalorder %s20, 1
    %p174 = por %p172, %p173
    %p176 = scmp.ne.s32.totalorder %s161, %s175
    %p177 = scmp.eq.s32.totalorder %s20, 0
    %p178 = por %p176, %p177
    %s180 = sadd.s32 %s179, 1
    %p183 = scmp.eq.s32.totalorder %s14, 1
    %p184 = scmp.ne.s32.totalorder %s179, %s181
    %p185 = scmp.eq.s32.totalorder %s14, 0
    %p186 = por %p184, %p185
    %p187 = scmp.ne.s32.totalorder %s179, %s181
    %p188 = scmp.eq.s32.totalorder %s19, 1
    %p189 = por %p187, %p188
    %p190 = scmp.ne.s32.totalorder %s181, %s182
    %p191 = scmp.eq.s32.totalorder %s19, 0
    %p192 = por %p190, %p191
    %p193 = scmp.ne.s32.totalorder %s181, %s182
    %p194 = scmp.eq.s32.totalorder %s20, 1
    %p195 = por %p193, %p194
    %p197 = scmp.ne.s32.totalorder %s182, %s196
    %p198 = scmp.eq.s32.totalorder %s20, 0
    %p199 = por %p197, %p198
    %s200 = ssub.s32 %s14, %s21
    %p201 = scmp.eq.s32.totalorder %s200, 0
    %s203 = sadd.s32 %s202, 1
    %s204 = scalar_select %p201, %s202, %s203
    %p207 = pneg %p201
    %p208 = scmp.eq.s32.totalorder %s14, 1
    %p209 = por %p207, %p208
    %p210 = scmp.ne.s32.totalorder %s202, %s205
    %p211 = scmp.eq.s32.totalorder %s14, 0
    %p212 = por %p210, %p211
    %p213 = scmp.ne.s32.totalorder %s202, %s205
    %p214 = scmp.eq.s32.totalorder %s19, 1
    %p215 = por %p213, %p214
    %p216 = scmp.ne.s32.totalorder %s205, %s206
    %p217 = scmp.eq.s32.totalorder %s19, 0
    %p218 = por %p216, %p217
    %p219 = scmp.ne.s32.totalorder %s205, %s206
    %p220 = scmp.eq.s32.totalorder %s20, 1
    %p221 = por %p219, %p220
    %p223 = scmp.ne.s32.totalorder %s206, %s222
    %p224 = scmp.eq.s32.totalorder %s20, 0
    %p225 = por %p223, %p224
    %p226 = scmp.le.s32.totalorder 1, %s14
    %p227 = scmp.lt.s32.totalorder %s14, 3
    %p228 = pnand %p226, %p227
    %p229 = pneg %p228
    // Predicated region
    $region9: #{up_forward.1} parent=5 // pred_check
      _
    $region10: #{up_forward.1} parent=5 // pred_check_branch
      %231 = sbr.rel (%p228) target = $region12
    $region11: #{up_forward.1} parent=5 // pred_region
      %s232 = ssub.s32 %s14, 1
      // Predicated region
      $region13: #{up_forward.1} parent=11 // pred_check
        %p233 = pneg %p87
      $region14: #{up_forward.1} parent=11 // pred_check_branch
        %235 = sbr.rel (%p233) target = $region16
      $region15: #{up_forward.1} parent=11 // pred_region
        _
      $region16: #{up_forward.1} parent=11 // pred_fallthru
        _
      // Predicated region
      $region17: #{up_forward.1} parent=11 // pred_check
        %p236 = pneg %p108
      $region18: #{up_forward.1} parent=11 // pred_check_branch
        %238 = sbr.rel (%p236) target = $region20
      $region19: #{up_forward.1} parent=11 // pred_region
        _
      $region20: #{up_forward.1} parent=11 // pred_fallthru
        _
      // Predicated region
      $region21: #{up_forward.1} parent=11 // pred_check
        %p239 = pneg %p129
      $region22: #{up_forward.1} parent=11 // pred_check_branch
        %241 = sbr.rel (%p239) target = $region24
      $region23: #{up_forward.1} parent=11 // pred_region
        _
      $region24: #{up_forward.1} parent=11 // pred_fallthru
        _
      // Predicated region
      $region25: #{up_forward.1} parent=11 // pred_check
        %p242 = pneg %p150
      $region26: #{up_forward.1} parent=11 // pred_check_branch
        %244 = sbr.rel (%p242) target = $region28
      $region27: #{up_forward.1} parent=11 // pred_region
        _
      $region28: #{up_forward.1} parent=11 // pred_fallthru
        _
      // Predicated region
      $region29: #{up_forward.1} parent=11 // pred_check
        %p245 = pneg %p171
      $region30: #{up_forward.1} parent=11 // pred_check_branch
        %247 = sbr.rel (%p245) target = $region32
      $region31: #{up_forward.1} parent=11 // pred_region
        _
      $region32: #{up_forward.1} parent=11 // pred_fallthru
        _
      // Predicated region
      $region33: #{up_forward.1} parent=11 // pred_check
        %p248 = pneg %p192
      $region34: #{up_forward.1} parent=11 // pred_check_branch
        %250 = sbr.rel (%p248) target = $region36
      $region35: #{up_forward.1} parent=11 // pred_region
        _
      $region36: #{up_forward.1} parent=11 // pred_fallthru
        _
    $region12: #{up_forward.1} parent=5 // pred_fallthru
      _
    %p251 = scmp.lt.s32.totalorder %s14, 2
    // Predicated region
    $region37: #{up_forward.1} parent=5 // pred_check
      %p252 = pneg %p251
    $region38: #{up_forward.1} parent=5 // pred_check_branch
      %254 = sbr.rel (%p252) target = $region40
    $region39: #{up_forward.1} parent=5 // pred_region
      // Predicated region
      $region41: #{up_forward.1} parent=39 // pred_check
        %p255 = pneg %p34
      $region42: #{up_forward.1} parent=39 // pred_check_branch
        %257 = sbr.rel (%p255) target = $region44
      $region43: #{up_forward.1} parent=39 // pred_region
        %p258 = scmp.lt.s32.totalorder %s14, 1
        %s259 = scalar_select %p258, %s14, 1
        %s260 = smul.addr %s259, 32
        %s261 = smul.addr %s260, 4
        %s262 = scalar_lea.vmem %s0, %s261
      $region44: #{up_forward.1} parent=39 // pred_fallthru
        _
      // Predicated region
      $region45: #{up_forward.1} parent=39 // pred_check
        %p263 = pneg %p60
      $region46: #{up_forward.1} parent=39 // pred_check_branch
        %265 = sbr.rel (%p263) target = $region48
      $region47: #{up_forward.1} parent=39 // pred_region
        %p266 = scmp.lt.s32.totalorder %s14, 1
        %s267 = scalar_select %p266, %s14, 1
        %s268 = smul.addr %s267, 32
        %s269 = smul.addr %s268, 4
        %s270 = scalar_lea.vmem %s1, %s269
      $region48: #{up_forward.1} parent=39 // pred_fallthru
        _
    $region40: #{up_forward.1} parent=5 // pred_fallthru
      _
    %p271 = scmp.le.s32.totalorder 1, %s14
    %p272 = scmp.lt.s32.totalorder %s14, 3
    %p273 = pnand %p271, %p272
    %p274 = pneg %p273
    // Predicated region
    $region49: #{up_forward.1} parent=5 // pred_check
      _
    $region50: #{up_forward.1} parent=5 // pred_check_branch
      %276 = sbr.rel (%p273) target = $region52
    $region51: #{up_forward.1} parent=5 // pred_region
      %s277 = ssub.s32 %s14, 1
      %p278 = scmp.lt.s32.totalorder %s19, 1
      %s279 = scalar_select %p278, %s19, 1
      %s280 = smul.addr %s279, 32
      %s281 = smul.addr %s280, 4
      %s282 = scalar_lea.vmem %s0, %s281
      %p283 = pneg %p40
      %p284 = pneg %p37
      %p285 = scmp.lt.s32.totalorder %s19, 1
      %s286 = scalar_select %p285, %s19, 1
      %s287 = smul.addr %s286, 32
      %s288 = smul.addr %s287, 4
      %s289 = scalar_lea.vmem %s1, %s288
      %p290 = pneg %p66
      %p291 = pneg %p63
      %p292 = pneg %p87
      %p293 = pneg %p84
      %p294 = pneg %p108
      %p295 = pneg %p105
      %p296 = pneg %p129
      %p297 = pneg %p126
      %p298 = pneg %p150
      %p299 = pneg %p147
      %p300 = pneg %p171
      %p301 = pneg %p168
      %p302 = pneg %p192
      %p303 = pneg %p189
      %p304 = pneg %p218
      %p305 = pneg %p215
      %p306 = scmp.lt.s32.totalorder %s19, 1
      %s307 = scalar_select %p306, %s19, 1
      %s308 = smul.addr %s307, 32
      %s309 = smul.addr %s308, 4
      %s310 = scalar_lea.vmem %s8, %s309
      %p311 = scmp.lt.s32.totalorder %s19, 1
      %s312 = scalar_select %p311, %s19, 1
      %s313 = smul.addr %s312, 32
      %s314 = smul.addr %s313, 4
      %s315 = scalar_lea.vmem %s0, %s314
      %p316 = scmp.lt.s32.totalorder %s19, 1
      %s317 = scalar_select %p316, %s19, 1
      %s318 = smul.addr %s317, 32
      %s319 = smul.addr %s318, 4
      %s320 = scalar_lea.vmem %s1, %s319
      %p321 = scmp.lt.s32.totalorder %s19, 1
      %s322 = scalar_select %p321, %s19, 1
      %s323 = smul.addr %s322, 32
      %s324 = smul.addr %s323, 4
      %s325 = scalar_lea.vmem %s8, %s324
      %vm327 = vcmask 64515
      %vm328 = vsmask.f32 7950
      %vm329 = vmand %vm327, %vm328
      %v330 = vld [vmem:[#allocation2] sm:$0xf8]
      %v331 = vsel %vm329, 0, %v330
      %332 = vst [vmem:[#allocation2] sm:$0xf8] %v331
      %vm333 = vcmask 61440
      %vm334 = vsmask.f32 4352
      %vm335 = vmand %vm333, %vm334
      %v336 = vld [vmem:[#allocation2 + $0x8] sm:$0x1f]
      %v337 = vsel %vm335, 0, %v336
      %338 = vst [vmem:[#allocation2 + $0x8] sm:$0x1f] %v337
      %s339 = scalar_lea.vmem [#allocation2], 272
      %v340 = vld [vmem:[%s339] sm:$0xf8]
      %v341 = vsel %vm329, 0, %v340
      %342 = vst [vmem:[%s339] sm:$0xf8] %v341
      %v343 = vld [vmem:[%s339 + $0x8] sm:$0x1f]
      %v344 = vsel %vm335, 0, %v343
      %345 = vst [vmem:[%s339 + $0x8] sm:$0x1f] %v344
      %s346 = scalar_lea.vmem [#allocation2], 16
      %vm347 = vcmask 60419
      %vm348 = vmand %vm347, %vm328
      %v349 = vld [vmem:[%s346] sm:$0x8]
      %v350 = vsel %vm348, 0, %v349
      %351 = vst [vmem:[%s346] sm:$0x8] %v350
      %v352 = vld [vmem:[%s346 + $0x10] sm:$0x8]
      %v353 = vsel %vm348, 0, %v352
      %354 = vst [vmem:[%s346 + $0x10] sm:$0x8] %v353
      %v355 = vld [vmem:[%s346 + $0x20] sm:$0x8]
      %v356 = vsel %vm348, 0, %v355
      %357 = vst [vmem:[%s346 + $0x20] sm:$0x8] %v356
      %v358 = vld [vmem:[%s346 + $0x30] sm:$0x8]
      %v359 = vsel %vm348, 0, %v358
      %360 = vst [vmem:[%s346 + $0x30] sm:$0x8] %v359
      %v361 = vld [vmem:[%s346 + $0x40] sm:$0x8]
      %v362 = vsel %vm348, 0, %v361
      %363 = vst [vmem:[%s346 + $0x40] sm:$0x8] %v362
      %v364 = vld [vmem:[%s346 + $0x50] sm:$0x8]
      %v365 = vsel %vm348, 0, %v364
      %366 = vst [vmem:[%s346 + $0x50] sm:$0x8] %v365
      %v367 = vld [vmem:[%s346 + $0x60] sm:$0x8]
      %v368 = vsel %vm348, 0, %v367
      %369 = vst [vmem:[%s346 + $0x60] sm:$0x8] %v368
      %v370 = vld [vmem:[%s346 + $0x70] sm:$0x8]
      %v371 = vsel %vm348, 0, %v370
      %372 = vst [vmem:[%s346 + $0x70] sm:$0x8] %v371
      %v373 = vld [vmem:[%s346 + $0x80] sm:$0x8]
      %v374 = vsel %vm348, 0, %v373
      %375 = vst [vmem:[%s346 + $0x80] sm:$0x8] %v374
      %v376 = vld [vmem:[%s346 + $0x90] sm:$0x8]
      %v377 = vsel %vm348, 0, %v376
      %378 = vst [vmem:[%s346 + $0x90] sm:$0x8] %v377
      %v379 = vld [vmem:[%s346 + $0xa0] sm:$0x8]
      %v380 = vsel %vm348, 0, %v379
      %381 = vst [vmem:[%s346 + $0xa0] sm:$0x8] %v380
      %v382 = vld [vmem:[%s346 + $0xb0] sm:$0x8]
      %v383 = vsel %vm348, 0, %v382
      %384 = vst [vmem:[%s346 + $0xb0] sm:$0x8] %v383
      %v385 = vld [vmem:[%s346 + $0xc0] sm:$0x8]
      %v386 = vsel %vm348, 0, %v385
      %387 = vst [vmem:[%s346 + $0xc0] sm:$0x8] %v386
      %v388 = vld [vmem:[%s346 + $0xd0] sm:$0x8]
      %v389 = vsel %vm348, 0, %v388
      %390 = vst [vmem:[%s346 + $0xd0] sm:$0x8] %v389
      %v391 = vld [vmem:[%s346 + $0xe0] sm:$0x8]
      %v392 = vsel %vm348, 0, %v391
      %393 = vst [vmem:[%s346 + $0xe0] sm:$0x8] %v392
      %v394 = vld [vmem:[%s346 + $0xf0] sm:$0x8]
      %v395 = vsel %vm348, 0, %v394
      %396 = vst [vmem:[%s346 + $0xf0] sm:$0x8] %v395
      %vm397 = vcmask 61444
      %vm398 = vmand %vm397, %vm334
      %v399 = vld [vmem:[%s346 + $0x8] sm:$0x10]
      %v400 = vsel %vm398, 0, %v399
      %401 = vst [vmem:[%s346 + $0x8] sm:$0x10] %v400
      %v402 = vld [vmem:[%s346 + $0x18] sm:$0x10]
      %v403 = vsel %vm398, 0, %v402
      %404 = vst [vmem:[%s346 + $0x18] sm:$0x10] %v403
      %v405 = vld [vmem:[%s346 + $0x28] sm:$0x10]
      %v406 = vsel %vm398, 0, %v405
      %407 = vst [vmem:[%s346 + $0x28] sm:$0x10] %v406
      %v408 = vld [vmem:[%s346 + $0x38] sm:$0x10]
      %v409 = vsel %vm398, 0, %v408
      %410 = vst [vmem:[%s346 + $0x38] sm:$0x10] %v409
      %v411 = vld [vmem:[%s346 + $0x48] sm:$0x10]
      %v412 = vsel %vm398, 0, %v411
      %413 = vst [vmem:[%s346 + $0x48] sm:$0x10] %v412
      %v414 = vld [vmem:[%s346 + $0x58] sm:$0x10]
      %v415 = vsel %vm398, 0, %v414
      %416 = vst [vmem:[%s346 + $0x58] sm:$0x10] %v415
      %v417 = vld [vmem:[%s346 + $0x68] sm:$0x10]
      %v418 = vsel %vm398, 0, %v417
      %419 = vst [vmem:[%s346 + $0x68] sm:$0x10] %v418
      %v420 = vld [vmem:[%s346 + $0x78] sm:$0x10]
      %v421 = vsel %vm398, 0, %v420
      %422 = vst [vmem:[%s346 + $0x78] sm:$0x10] %v421
      %v423 = vld [vmem:[%s346 + $0x88] sm:$0x10]
      %v424 = vsel %vm398, 0, %v423
      %425 = vst [vmem:[%s346 + $0x88] sm:$0x10] %v424
      %v426 = vld [vmem:[%s346 + $0x98] sm:$0x10]
      %v427 = vsel %vm398, 0, %v426
      %428 = vst [vmem:[%s346 + $0x98] sm:$0x10] %v427
      %v429 = vld [vmem:[%s346 + $0xa8] sm:$0x10]
      %v430 = vsel %vm398, 0, %v429
      %431 = vst [vmem:[%s346 + $0xa8] sm:$0x10] %v430
      %v432 = vld [vmem:[%s346 + $0xb8] sm:$0x10]
      %v433 = vsel %vm398, 0, %v432
      %434 = vst [vmem:[%s346 + $0xb8] sm:$0x10] %v433
      %v435 = vld [vmem:[%s346 + $0xc8] sm:$0x10]
      %v436 = vsel %vm398, 0, %v435
      %437 = vst [vmem:[%s346 + $0xc8] sm:$0x10] %v436
      %v438 = vld [vmem:[%s346 + $0xd8] sm:$0x10]
      %v439 = vsel %vm398, 0, %v438
      %440 = vst [vmem:[%s346 + $0xd8] sm:$0x10] %v439
      %v441 = vld [vmem:[%s346 + $0xe8] sm:$0x10]
      %v442 = vsel %vm398, 0, %v441
      %443 = vst [vmem:[%s346 + $0xe8] sm:$0x10] %v442
      %v444 = vld [vmem:[%s346 + $0xf8] sm:$0x10]
      %v445 = vsel %vm398, 0, %v444
      %446 = vst [vmem:[%s346 + $0xf8] sm:$0x10] %v445
      %vm447 = vcmask 31747
      %vm448 = vmand %vm447, %vm328
      %v449 = vld [vmem:[#allocation3] sm:$0xf8]
      %v450 = vsel %vm448, 0, %v449
      %451 = vst [vmem:[#allocation3] sm:$0xf8] %v450
      %vm452 = vcmask 28672
      %vm453 = vmand %vm452, %vm334
      %v454 = vld [vmem:[#allocation3 + $0x8] sm:$0x1f]
      %v455 = vsel %vm453, 0, %v454
      %456 = vst [vmem:[#allocation3 + $0x8] sm:$0x1f] %v455
      %s457 = scalar_lea.vmem [#allocation3], 272
      %v458 = vld [vmem:[%s457] sm:$0xf8]
      %v459 = vsel %vm448, 0, %v458
      %460 = vst [vmem:[%s457] sm:$0xf8] %v459
      %v461 = vld [vmem:[%s457 + $0x8] sm:$0x1f]
      %v462 = vsel %vm453, 0, %v461
      %463 = vst [vmem:[%s457 + $0x8] sm:$0x1f] %v462
      %s464 = scalar_lea.vmem [#allocation3], 16
      %vm465 = vcmask 27651
      %vm466 = vmand %vm465, %vm328
      %v467 = vld [vmem:[%s464] sm:$0x8]
      %v468 = vsel %vm466, 0, %v467
      %469 = vst [vmem:[%s464] sm:$0x8] %v468
      %v470 = vld [vmem:[%s464 + $0x10] sm:$0x8]
      %v471 = vsel %vm466, 0, %v470
      %472 = vst [vmem:[%s464 + $0x10] sm:$0x8] %v471
      %v473 = vld [vmem:[%s464 + $0x20] sm:$0x8]
      %v474 = vsel %vm466, 0, %v473
      %475 = vst [vmem:[%s464 + $0x20] sm:$0x8] %v474
      %v476 = vld [vmem:[%s464 + $0x30] sm:$0x8]
      %v477 = vsel %vm466, 0, %v476
      %478 = vst [vmem:[%s464 + $0x30] sm:$0x8] %v477
      %v479 = vld [vmem:[%s464 + $0x40] sm:$0x8]
      %v480 = vsel %vm466, 0, %v479
      %481 = vst [vmem:[%s464 + $0x40] sm:$0x8] %v480
      %v482 = vld [vmem:[%s464 + $0x50] sm:$0x8]
      %v483 = vsel %vm466, 0, %v482
      %484 = vst [vmem:[%s464 + $0x50] sm:$0x8] %v483
      %v485 = vld [vmem:[%s464 + $0x60] sm:$0x8]
      %v486 = vsel %vm466, 0, %v485
      %487 = vst [vmem:[%s464 + $0x60] sm:$0x8] %v486
      %v488 = vld [vmem:[%s464 + $0x70] sm:$0x8]
      %v489 = vsel %vm466, 0, %v488
      %490 = vst [vmem:[%s464 + $0x70] sm:$0x8] %v489
      %v491 = vld [vmem:[%s464 + $0x80] sm:$0x8]
      %v492 = vsel %vm466, 0, %v491
      %493 = vst [vmem:[%s464 + $0x80] sm:$0x8] %v492
      %v494 = vld [vmem:[%s464 + $0x90] sm:$0x8]
      %v495 = vsel %vm466, 0, %v494
      %496 = vst [vmem:[%s464 + $0x90] sm:$0x8] %v495
      %v497 = vld [vmem:[%s464 + $0xa0] sm:$0x8]
      %v498 = vsel %vm466, 0, %v497
      %499 = vst [vmem:[%s464 + $0xa0] sm:$0x8] %v498
      %v500 = vld [vmem:[%s464 + $0xb0] sm:$0x8]
      %v501 = vsel %vm466, 0, %v500
      %502 = vst [vmem:[%s464 + $0xb0] sm:$0x8] %v501
      %v503 = vld [vmem:[%s464 + $0xc0] sm:$0x8]
      %v504 = vsel %vm466, 0, %v503
      %505 = vst [vmem:[%s464 + $0xc0] sm:$0x8] %v504
      %v506 = vld [vmem:[%s464 + $0xd0] sm:$0x8]
      %v507 = vsel %vm466, 0, %v506
      %508 = vst [vmem:[%s464 + $0xd0] sm:$0x8] %v507
      %v509 = vld [vmem:[%s464 + $0xe0] sm:$0x8]
      %v510 = vsel %vm466, 0, %v509
      %511 = vst [vmem:[%s464 + $0xe0] sm:$0x8] %v510
      %v512 = vld [vmem:[%s464 + $0xf0] sm:$0x8]
      %v513 = vsel %vm466, 0, %v512
      %514 = vst [vmem:[%s464 + $0xf0] sm:$0x8] %v513
      %vm515 = vcmask 28676
      %vm516 = vmand %vm515, %vm334
      %v517 = vld [vmem:[%s464 + $0x8] sm:$0x10]
      %v518 = vsel %vm516, 0, %v517
      %519 = vst [vmem:[%s464 + $0x8] sm:$0x10] %v518
      %v520 = vld [vmem:[%s464 + $0x18] sm:$0x10]
      %v521 = vsel %vm516, 0, %v520
      %522 = vst [vmem:[%s464 + $0x18] sm:$0x10] %v521
      %v523 = vld [vmem:[%s464 + $0x28] sm:$0x10]
      %v524 = vsel %vm516, 0, %v523
      %525 = vst [vmem:[%s464 + $0x28] sm:$0x10] %v524
      %v526 = vld [vmem:[%s464 + $0x38] sm:$0x10]
      %v527 = vsel %vm516, 0, %v526
      %528 = vst [vmem:[%s464 + $0x38] sm:$0x10] %v527
      %v529 = vld [vmem:[%s464 + $0x48] sm:$0x10]
      %v530 = vsel %vm516, 0, %v529
      %531 = vst [vmem:[%s464 + $0x48] sm:$0x10] %v530
      %v532 = vld [vmem:[%s464 + $0x58] sm:$0x10]
      %v533 = vsel %vm516, 0, %v532
      %534 = vst [vmem:[%s464 + $0x58] sm:$0x10] %v533
      %v535 = vld [vmem:[%s464 + $0x68] sm:$0x10]
      %v536 = vsel %vm516, 0, %v535
      %537 = vst [vmem:[%s464 + $0x68] sm:$0x10] %v536
      %v538 = vld [vmem:[%s464 + $0x78] sm:$0x10]
      %v539 = vsel %vm516, 0, %v538
      %540 = vst [vmem:[%s464 + $0x78] sm:$0x10] %v539
      %v541 = vld [vmem:[%s464 + $0x88] sm:$0x10]
      %v542 = vsel %vm516, 0, %v541
      %543 = vst [vmem:[%s464 + $0x88] sm:$0x10] %v542
      %v544 = vld [vmem:[%s464 + $0x98] sm:$0x10]
      %v545 = vsel %vm516, 0, %v544
      %546 = vst [vmem:[%s464 + $0x98] sm:$0x10] %v545
      %v547 = vld [vmem:[%s464 + $0xa8] sm:$0x10]
      %v548 = vsel %vm516, 0, %v547
      %549 = vst [vmem:[%s464 + $0xa8] sm:$0x10] %v548
      %v550 = vld [vmem:[%s464 + $0xb8] sm:$0x10]
      %v551 = vsel %vm516, 0, %v550
      %552 = vst [vmem:[%s464 + $0xb8] sm:$0x10] %v551
      %v553 = vld [vmem:[%s464 + $0xc8] sm:$0x10]
      %v554 = vsel %vm516, 0, %v553
      %555 = vst [vmem:[%s464 + $0xc8] sm:$0x10] %v554
      %v556 = vld [vmem:[%s464 + $0xd8] sm:$0x10]
      %v557 = vsel %vm516, 0, %v556
      %558 = vst [vmem:[%s464 + $0xd8] sm:$0x10] %v557
      %v559 = vld [vmem:[%s464 + $0xe8] sm:$0x10]
      %v560 = vsel %vm516, 0, %v559
      %561 = vst [vmem:[%s464 + $0xe8] sm:$0x10] %v560
      %v562 = vld [vmem:[%s464 + $0xf8] sm:$0x10]
      %v563 = vsel %vm516, 0, %v562
      %564 = vst [vmem:[%s464 + $0xf8] sm:$0x10] %v563
      %v565 = vld [vmem:[%s315] sm:$0xf]
      %v566 = vld [vmem:[%s315 + $0x4] sm:$0xf]
      %v567 = vld [vmem:[%s315 + $0x8] sm:$0xf]
      %v568 = vld [vmem:[%s315 + $0xc] sm:$0xf]
      %v569 = vld [vmem:[%s315 + $0x10] sm:$0xf]
      %v570 = vld [vmem:[%s315 + $0x14] sm:$0xf]
      %v571 = vld [vmem:[%s315 + $0x18] sm:$0xf]
      %v572 = vld [vmem:[%s315 + $0x1c] sm:$0xf]
      %v573 = vld [vmem:[%s315 + $0x20] sm:$0xf]
      %v574 = vld [vmem:[%s315 + $0x24] sm:$0xf]
      %v575 = vld [vmem:[%s315 + $0x28] sm:$0xf]
      %v576 = vld [vmem:[%s315 + $0x2c] sm:$0xf]
      %v577 = vld [vmem:[%s315 + $0x30] sm:$0xf]
      %v578 = vld [vmem:[%s315 + $0x34] sm:$0xf]
      %v579 = vld [vmem:[%s315 + $0x38] sm:$0xf]
      %v580 = vld [vmem:[%s315 + $0x3c] sm:$0xf]
      %v581 = vld [vmem:[%s315 + $0x40] sm:$0xf]
      %v582 = vld [vmem:[%s315 + $0x44] sm:$0xf]
      %v583 = vld [vmem:[%s315 + $0x48] sm:$0xf]
      %v584 = vld [vmem:[%s315 + $0x4c] sm:$0xf]
      %v585 = vld [vmem:[%s315 + $0x50] sm:$0xf]
      %v586 = vld [vmem:[%s315 + $0x54] sm:$0xf]
      %v587 = vld [vmem:[%s315 + $0x58] sm:$0xf]
      %v588 = vld [vmem:[%s315 + $0x5c] sm:$0xf]
      %v589 = vld [vmem:[%s315 + $0x60] sm:$0xf]
      %v590 = vld [vmem:[%s315 + $0x64] sm:$0xf]
      %v591 = vld [vmem:[%s315 + $0x68] sm:$0xf]
      %v592 = vld [vmem:[%s315 + $0x6c] sm:$0xf]
      %v593 = vld [vmem:[%s315 + $0x70] sm:$0xf]
      %v594 = vld [vmem:[%s315 + $0x74] sm:$0xf]
      %v595 = vld [vmem:[%s315 + $0x78] sm:$0xf]
      %v596 = vld [vmem:[%s315 + $0x7c] sm:$0xf]
      %v629 = vunpack.c.l.b16 %v565
      %v630 = vunpack.c.l.b16 %v566
      %v631 = vunpack.c.l.b16 %v567
      %v632 = vunpack.c.l.b16 %v568
      %v633 = vunpack.c.l.b16 %v569
      %v634 = vunpack.c.l.b16 %v570
      %v635 = vunpack.c.l.b16 %v571
      %v636 = vunpack.c.l.b16 %v572
      %v637 = vunpack.c.l.b16 %v573
      %v638 = vunpack.c.l.b16 %v574
      %v639 = vunpack.c.l.b16 %v575
      %v640 = vunpack.c.l.b16 %v576
      %v641 = vunpack.c.l.b16 %v577
      %v642 = vunpack.c.l.b16 %v578
      %v643 = vunpack.c.l.b16 %v579
      %v644 = vunpack.c.l.b16 %v580
      %v645 = vunpack.c.l.b16 %v581
      %v646 = vunpack.c.l.b16 %v582
      %v647 = vunpack.c.l.b16 %v583
      %v648 = vunpack.c.l.b16 %v584
      %v649 = vunpack.c.l.b16 %v585
      %v650 = vunpack.c.l.b16 %v586
      %v651 = vunpack.c.l.b16 %v587
      %v652 = vunpack.c.l.b16 %v588
      %v653 = vunpack.c.l.b16 %v589
      %v654 = vunpack.c.l.b16 %v590
      %v655 = vunpack.c.l.b16 %v591
      %v656 = vunpack.c.l.b16 %v592
      %v657 = vunpack.c.l.b16 %v593
      %v658 = vunpack.c.l.b16 %v594
      %v659 = vunpack.c.l.b16 %v595
      %v660 = vunpack.c.l.b16 %v596
      %v661 = vpack.c.b16 %v629, %v629
      %v662 = vpack.c.b16 %v630, %v630
      %v663 = vpack.c.b16 %v631, %v631
      %v664 = vpack.c.b16 %v632, %v632
      %v665 = vpack.c.b16 %v633, %v633
      %v666 = vpack.c.b16 %v634, %v634
      %v667 = vpack.c.b16 %v635, %v635
      %v668 = vpack.c.b16 %v636, %v636
      %v669 = vpack.c.b16 %v637, %v637
      %v670 = vpack.c.b16 %v638, %v638
      %v671 = vpack.c.b16 %v639, %v639
      %v672 = vpack.c.b16 %v640, %v640
      %v673 = vpack.c.b16 %v641, %v641
      %v674 = vpack.c.b16 %v642, %v642
      %v675 = vpack.c.b16 %v643, %v643
      %v676 = vpack.c.b16 %v644, %v644
      %v677 = vpack.c.b16 %v645, %v645
      %v678 = vpack.c.b16 %v646, %v646
      %v679 = vpack.c.b16 %v647, %v647
      %v680 = vpack.c.b16 %v648, %v648
      %v681 = vpack.c.b16 %v649, %v649
      %v682 = vpack.c.b16 %v650, %v650
      %v683 = vpack.c.b16 %v651, %v651
      %v684 = vpack.c.b16 %v652, %v652
      %v685 = vpack.c.b16 %v653, %v653
      %v686 = vpack.c.b16 %v654, %v654
      %v687 = vpack.c.b16 %v655, %v655
      %v688 = vpack.c.b16 %v656, %v656
      %v689 = vpack.c.b16 %v657, %v657
      %v690 = vpack.c.b16 %v658, %v658
      %v691 = vpack.c.b16 %v659, %v659
      %v692 = vpack.c.b16 %v660, %v660
      %vm725 = vcmask 31748
      %726 = vst.msk [vmem:[%s346] sm:$0xf0] %vm725, %v661
      %vm727 = vcmask 27648
      %728 = vst.msk [vmem:[%s346 + $0x8] sm:$0xf] %vm727, %v662
      %729 = vst.msk [vmem:[%s346 + $0x10] sm:$0xf0] %vm725, %v663
      %730 = vst.msk [vmem:[%s346 + $0x18] sm:$0xf] %vm727, %v664
      %731 = vst.msk [vmem:[%s346 + $0x20] sm:$0xf0] %vm725, %v665
      %732 = vst.msk [vmem:[%s346 + $0x28] sm:$0xf] %vm727, %v666
      %733 = vst.msk [vmem:[%s346 + $0x30] sm:$0xf0] %vm725, %v667
      %734 = vst.msk [vmem:[%s346 + $0x38] sm:$0xf] %vm727, %v668
      %735 = vst.msk [vmem:[%s346 + $0x40] sm:$0xf0] %vm725, %v669
      %736 = vst.msk [vmem:[%s346 + $0x48] sm:$0xf] %vm727, %v670
      %737 = vst.msk [vmem:[%s346 + $0x50] sm:$0xf0] %vm725, %v671
      %738 = vst.msk [vmem:[%s346 + $0x58] sm:$0xf] %vm727, %v672
      %739 = vst.msk [vmem:[%s346 + $0x60] sm:$0xf0] %vm725, %v673
      %740 = vst.msk [vmem:[%s346 + $0x68] sm:$0xf] %vm727, %v674
      %741 = vst.msk [vmem:[%s346 + $0x70] sm:$0xf0] %vm725, %v675
      %742 = vst.msk [vmem:[%s346 + $0x78] sm:$0xf] %vm727, %v676
      %743 = vst.msk [vmem:[%s346 + $0x80] sm:$0xf0] %vm725, %v677
      %744 = vst.msk [vmem:[%s346 + $0x88] sm:$0xf] %vm727, %v678
      %745 = vst.msk [vmem:[%s346 + $0x90] sm:$0xf0] %vm725, %v679
      %746 = vst.msk [vmem:[%s346 + $0x98] sm:$0xf] %vm727, %v680
      %747 = vst.msk [vmem:[%s346 + $0xa0] sm:$0xf0] %vm725, %v681
      %748 = vst.msk [vmem:[%s346 + $0xa8] sm:$0xf] %vm727, %v682
      %749 = vst.msk [vmem:[%s346 + $0xb0] sm:$0xf0] %vm725, %v683
      %750 = vst.msk [vmem:[%s346 + $0xb8] sm:$0xf] %vm727, %v684
      %751 = vst.msk [vmem:[%s346 + $0xc0] sm:$0xf0] %vm725, %v685
      %752 = vst.msk [vmem:[%s346 + $0xc8] sm:$0xf] %vm727, %v686
      %753 = vst.msk [vmem:[%s346 + $0xd0] sm:$0xf0] %vm725, %v687
      %754 = vst.msk [vmem:[%s346 + $0xd8] sm:$0xf] %vm727, %v688
      %755 = vst.msk [vmem:[%s346 + $0xe0] sm:$0xf0] %vm725, %v689
      %756 = vst.msk [vmem:[%s346 + $0xe8] sm:$0xf] %vm727, %v690
      %757 = vst.msk [vmem:[%s346 + $0xf0] sm:$0xf0] %vm725, %v691
      %758 = vst.msk [vmem:[%s346 + $0xf8] sm:$0xf] %vm727, %v692
      %v759 = vld [vmem:[%s320] sm:$0xf]
      %v760 = vld [vmem:[%s320 + $0x4] sm:$0xf]
      %v761 = vld [vmem:[%s320 + $0x8] sm:$0xf]
      %v762 = vld [vmem:[%s320 + $0xc] sm:$0xf]
      %v763 = vld [vmem:[%s320 + $0x10] sm:$0xf]
      %v764 = vld [vmem:[%s320 + $0x14] sm:$0xf]
      %v765 = vld [vmem:[%s320 + $0x18] sm:$0xf]
      %v766 = vld [vmem:[%s320 + $0x1c] sm:$0xf]
      %v767 = vld [vmem:[%s320 + $0x20] sm:$0xf]
      %v768 = vld [vmem:[%s320 + $0x24] sm:$0xf]
      %v769 = vld [vmem:[%s320 + $0x28] sm:$0xf]
      %v770 = vld [vmem:[%s320 + $0x2c] sm:$0xf]
      %v771 = vld [vmem:[%s320 + $0x30] sm:$0xf]
      %v772 = vld [vmem:[%s320 + $0x34] sm:$0xf]
      %v773 = vld [vmem:[%s320 + $0x38] sm:$0xf]
      %v774 = vld [vmem:[%s320 + $0x3c] sm:$0xf]
      %v775 = vld [vmem:[%s320 + $0x40] sm:$0xf]
      %v776 = vld [vmem:[%s320 + $0x44] sm:$0xf]
      %v777 = vld [vmem:[%s320 + $0x48] sm:$0xf]
      %v778 = vld [vmem:[%s320 + $0x4c] sm:$0xf]
      %v779 = vld [vmem:[%s320 + $0x50] sm:$0xf]
      %v780 = vld [vmem:[%s320 + $0x54] sm:$0xf]
      %v781 = vld [vmem:[%s320 + $0x58] sm:$0xf]
      %v782 = vld [vmem:[%s320 + $0x5c] sm:$0xf]
      %v783 = vld [vmem:[%s320 + $0x60] sm:$0xf]
      %v784 = vld [vmem:[%s320 + $0x64] sm:$0xf]
      %v785 = vld [vmem:[%s320 + $0x68] sm:$0xf]
      %v786 = vld [vmem:[%s320 + $0x6c] sm:$0xf]
      %v787 = vld [vmem:[%s320 + $0x70] sm:$0xf]
      %v788 = vld [vmem:[%s320 + $0x74] sm:$0xf]
      %v789 = vld [vmem:[%s320 + $0x78] sm:$0xf]
      %v790 = vld [vmem:[%s320 + $0x7c] sm:$0xf]
      %v823 = vunpack.c.l.b16 %v759
      %v824 = vunpack.c.l.b16 %v760
      %v825 = vunpack.c.l.b16 %v761
      %v826 = vunpack.c.l.b16 %v762
      %v827 = vunpack.c.l.b16 %v763
      %v828 = vunpack.c.l.b16 %v764
      %v829 = vunpack.c.l.b16 %v765
      %v830 = vunpack.c.l.b16 %v766
      %v831 = vunpack.c.l.b16 %v767
      %v832 = vunpack.c.l.b16 %v768
      %v833 = vunpack.c.l.b16 %v769
      %v834 = vunpack.c.l.b16 %v770
      %v835 = vunpack.c.l.b16 %v771
      %v836 = vunpack.c.l.b16 %v772
      %v837 = vunpack.c.l.b16 %v773
      %v838 = vunpack.c.l.b16 %v774
      %v839 = vunpack.c.l.b16 %v775
      %v840 = vunpack.c.l.b16 %v776
      %v841 = vunpack.c.l.b16 %v777
      %v842 = vunpack.c.l.b16 %v778
      %v843 = vunpack.c.l.b16 %v779
      %v844 = vunpack.c.l.b16 %v780
      %v845 = vunpack.c.l.b16 %v781
      %v846 = vunpack.c.l.b16 %v782
      %v847 = vunpack.c.l.b16 %v783
      %v848 = vunpack.c.l.b16 %v784
      %v849 = vunpack.c.l.b16 %v785
      %v850 = vunpack.c.l.b16 %v786
      %v851 = vunpack.c.l.b16 %v787
      %v852 = vunpack.c.l.b16 %v788
      %v853 = vunpack.c.l.b16 %v789
      %v854 = vunpack.c.l.b16 %v790
      %v855 = vpack.c.b16 %v823, %v823
      %v856 = vpack.c.b16 %v824, %v824
      %v857 = vpack.c.b16 %v825, %v825
      %v858 = vpack.c.b16 %v826, %v826
      %v859 = vpack.c.b16 %v827, %v827
      %v860 = vpack.c.b16 %v828, %v828
      %v861 = vpack.c.b16 %v829, %v829
      %v862 = vpack.c.b16 %v830, %v830
      %v863 = vpack.c.b16 %v831, %v831
      %v864 = vpack.c.b16 %v832, %v832
      %v865 = vpack.c.b16 %v833, %v833
      %v866 = vpack.c.b16 %v834, %v834
      %v867 = vpack.c.b16 %v835, %v835
      %v868 = vpack.c.b16 %v836, %v836
      %v869 = vpack.c.b16 %v837, %v837
      %v870 = vpack.c.b16 %v838, %v838
      %v871 = vpack.c.b16 %v839, %v839
      %v872 = vpack.c.b16 %v840, %v840
      %v873 = vpack.c.b16 %v841, %v841
      %v874 = vpack.c.b16 %v842, %v842
      %v875 = vpack.c.b16 %v843, %v843
      %v876 = vpack.c.b16 %v844, %v844
      %v877 = vpack.c.b16 %v845, %v845
      %v878 = vpack.c.b16 %v846, %v846
      %v879 = vpack.c.b16 %v847, %v847
      %v880 = vpack.c.b16 %v848, %v848
      %v881 = vpack.c.b16 %v849, %v849
      %v882 = vpack.c.b16 %v850, %v850
      %v883 = vpack.c.b16 %v851, %v851
      %v884 = vpack.c.b16 %v852, %v852
      %v885 = vpack.c.b16 %v853, %v853
      %v886 = vpack.c.b16 %v854, %v854
      %887 = vrot.lane.b32.xlu0 %v855, 4
      %v888 = vpop.permute.xlu0 %887
      %889 = vrot.lane.b32.xlu0 %v856, 4
      %v890 = vpop.permute.xlu0 %889
      %891 = vrot.lane.b32.xlu0 %v857, 4
      %v892 = vpop.permute.xlu0 %891
      %893 = vrot.lane.b32.xlu0 %v858, 4
      %v894 = vpop.permute.xlu0 %893
      %895 = vrot.lane.b32.xlu0 %v859, 4
      %v896 = vpop.permute.xlu0 %895
      %897 = vrot.lane.b32.xlu0 %v860, 4
      %v898 = vpop.permute.xlu0 %897
      %899 = vrot.lane.b32.xlu0 %v861, 4
      %v900 = vpop.permute.xlu0 %899
      %901 = vrot.lane.b32.xlu0 %v862, 4
      %v902 = vpop.permute.xlu0 %901
      %903 = vrot.lane.b32.xlu0 %v863, 4
      %v904 = vpop.permute.xlu0 %903
      %905 = vrot.lane.b32.xlu0 %v864, 4
      %v906 = vpop.permute.xlu0 %905
      %907 = vrot.lane.b32.xlu0 %v865, 4
      %v908 = vpop.permute.xlu0 %907
      %909 = vrot.lane.b32.xlu0 %v866, 4
      %v910 = vpop.permute.xlu0 %909
      %911 = vrot.lane.b32.xlu0 %v867, 4
      %v912 = vpop.permute.xlu0 %911
      %913 = vrot.lane.b32.xlu0 %v868, 4
      %v914 = vpop.permute.xlu0 %913
      %915 = vrot.lane.b32.xlu0 %v869, 4
      %v916 = vpop.permute.xlu0 %915
      %917 = vrot.lane.b32.xlu0 %v870, 4
      %v918 = vpop.permute.xlu0 %917
      %919 = vrot.lane.b32.xlu0 %v871, 4
      %v920 = vpop.permute.xlu0 %919
      %921 = vrot.lane.b32.xlu0 %v872, 4
      %v922 = vpop.permute.xlu0 %921
      %923 = vrot.lane.b32.xlu0 %v873, 4
      %v924 = vpop.permute.xlu0 %923
      %925 = vrot.lane.b32.xlu0 %v874, 4
      %v926 = vpop.permute.xlu0 %925
      %927 = vrot.lane.b32.xlu0 %v875, 4
      %v928 = vpop.permute.xlu0 %927
      %929 = vrot.lane.b32.xlu0 %v876, 4
      %v930 = vpop.permute.xlu0 %929
      %931 = vrot.lane.b32.xlu0 %v877, 4
      %v932 = vpop.permute.xlu0 %931
      %933 = vrot.lane.b32.xlu0 %v878, 4
      %v934 = vpop.permute.xlu0 %933
      %935 = vrot.lane.b32.xlu0 %v879, 4
      %v936 = vpop.permute.xlu0 %935
      %937 = vrot.lane.b32.xlu0 %v880, 4
      %v938 = vpop.permute.xlu0 %937
      %939 = vrot.lane.b32.xlu0 %v881, 4
      %v940 = vpop.permute.xlu0 %939
      %941 = vrot.lane.b32.xlu0 %v882, 4
      %v942 = vpop.permute.xlu0 %941
      %943 = vrot.lane.b32.xlu0 %v883, 4
      %v944 = vpop.permute.xlu0 %943
      %945 = vrot.lane.b32.xlu0 %v884, 4
      %v946 = vpop.permute.xlu0 %945
      %947 = vrot.lane.b32.xlu0 %v885, 4
      %v948 = vpop.permute.xlu0 %947
      %949 = vrot.lane.b32.xlu0 %v886, 4
      %v950 = vpop.permute.xlu0 %949
      %vm983 = vcmask 64548
      %984 = vst.msk [vmem:[%s346] sm:$0xf0] %vm983, %v888
      %vm985 = vcmask 60448
      %986 = vst.msk [vmem:[%s346 + $0x8] sm:$0xf] %vm985, %v890
      %987 = vst.msk [vmem:[%s346 + $0x10] sm:$0xf0] %vm983, %v892
      %988 = vst.msk [vmem:[%s346 + $0x18] sm:$0xf] %vm985, %v894
      %989 = vst.msk [vmem:[%s346 + $0x20] sm:$0xf0] %vm983, %v896
      %990 = vst.msk [vmem:[%s346 + $0x28] sm:$0xf] %vm985, %v898
      %991 = vst.msk [vmem:[%s346 + $0x30] sm:$0xf0] %vm983, %v900
      %992 = vst.msk [vmem:[%s346 + $0x38] sm:$0xf] %vm985, %v902
      %993 = vst.msk [vmem:[%s346 + $0x40] sm:$0xf0] %vm983, %v904
      %994 = vst.msk [vmem:[%s346 + $0x48] sm:$0xf] %vm985, %v906
      %995 = vst.msk [vmem:[%s346 + $0x50] sm:$0xf0] %vm983, %v908
      %996 = vst.msk [vmem:[%s346 + $0x58] sm:$0xf] %vm985, %v910
      %997 = vst.msk [vmem:[%s346 + $0x60] sm:$0xf0] %vm983, %v912
      %998 = vst.msk [vmem:[%s346 + $0x68] sm:$0xf] %vm985, %v914
      %999 = vst.msk [vmem:[%s346 + $0x70] sm:$0xf0] %vm983, %v916
      %1000 = vst.msk [vmem:[%s346 + $0x78] sm:$0xf] %vm985, %v918
      %1001 = vst.msk [vmem:[%s346 + $0x80] sm:$0xf0] %vm983, %v920
      %1002 = vst.msk [vmem:[%s346 + $0x88] sm:$0xf] %vm985, %v922
      %1003 = vst.msk [vmem:[%s346 + $0x90] sm:$0xf0] %vm983, %v924
      %1004 = vst.msk [vmem:[%s346 + $0x98] sm:$0xf] %vm985, %v926
      %1005 = vst.msk [vmem:[%s346 + $0xa0] sm:$0xf0] %vm983, %v928
      %1006 = vst.msk [vmem:[%s346 + $0xa8] sm:$0xf] %vm985, %v930
      %1007 = vst.msk [vmem:[%s346 + $0xb0] sm:$0xf0] %vm983, %v932
      %1008 = vst.msk [vmem:[%s346 + $0xb8] sm:$0xf] %vm985, %v934
      %1009 = vst.msk [vmem:[%s346 + $0xc0] sm:$0xf0] %vm983, %v936
      %1010 = vst.msk [vmem:[%s346 + $0xc8] sm:$0xf] %vm985, %v938
      %1011 = vst.msk [vmem:[%s346 + $0xd0] sm:$0xf0] %vm983, %v940
      %1012 = vst.msk [vmem:[%s346 + $0xd8] sm:$0xf] %vm985, %v942
      %1013 = vst.msk [vmem:[%s346 + $0xe0] sm:$0xf0] %vm983, %v944
      %1014 = vst.msk [vmem:[%s346 + $0xe8] sm:$0xf] %vm985, %v946
      %1015 = vst.msk [vmem:[%s346 + $0xf0] sm:$0xf0] %vm983, %v948
      %1016 = vst.msk [vmem:[%s346 + $0xf8] sm:$0xf] %vm985, %v950
      %v1017 = vld [vmem:[#allocation2] sm:$0xf8]
      %v1018 = vld [vmem:[#allocation2 + $0x8] sm:$0xf]
      %v1019 = vld [vmem:[#allocation2 + $0x10] sm:$0xf8]
      %v1020 = vld [vmem:[#allocation2 + $0x18] sm:$0xf]
      %v1021 = vld [vmem:[#allocation2 + $0x20] sm:$0xf8]
      %v1022 = vld [vmem:[#allocation2 + $0x28] sm:$0xf]
      %v1023 = vld [vmem:[#allocation2 + $0x30] sm:$0xf8]
      %v1024 = vld [vmem:[#allocation2 + $0x38] sm:$0xf]
      %v1025 = vld [vmem:[#allocation2 + $0x40] sm:$0xf8]
      %v1026 = vld [vmem:[#allocation2 + $0x48] sm:$0xf]
      %v1027 = vld [vmem:[#allocation2 + $0x50] sm:$0xf8]
      %v1028 = vld [vmem:[#allocation2 + $0x58] sm:$0xf]
      %v1029 = vld [vmem:[#allocation2 + $0x60] sm:$0xf8]
      %v1030 = vld [vmem:[#allocation2 + $0x68] sm:$0xf]
      %v1031 = vld [vmem:[#allocation2 + $0x70] sm:$0xf8]
      %v1032 = vld [vmem:[#allocation2 + $0x78] sm:$0xf]
      %v1033 = vld [vmem:[#allocation2 + $0x80] sm:$0xf8]
      %v1034 = vld [vmem:[#allocation2 + $0x88] sm:$0xf]
      %v1035 = vld [vmem:[#allocation2 + $0x90] sm:$0xf8]
      %v1036 = vld [vmem:[#allocation2 + $0x98] sm:$0xf]
      %v1037 = vld [vmem:[#allocation2 + $0xa0] sm:$0xf8]
      %v1038 = vld [vmem:[#allocation2 + $0xa8] sm:$0xf]
      %v1039 = vld [vmem:[#allocation2 + $0xb0] sm:$0xf8]
      %v1040 = vld [vmem:[#allocation2 + $0xb8] sm:$0xf]
      %v1041 = vld [vmem:[#allocation2 + $0xc0] sm:$0xf8]
      %v1042 = vld [vmem:[#allocation2 + $0xc8] sm:$0xf]
      %v1043 = vld [vmem:[#allocation2 + $0xd0] sm:$0xf8]
      %v1044 = vld [vmem:[#allocation2 + $0xd8] sm:$0xf]
      %v1045 = vld [vmem:[#allocation2 + $0xe0] sm:$0xf8]
      %v1046 = vld [vmem:[#allocation2 + $0xe8] sm:$0xf]
      %v1047 = vld [vmem:[#allocation2 + $0xf0] sm:$0xf8]
      %v1048 = vld [vmem:[#allocation2 + $0xf8] sm:$0xf]
      %v1049 = vld [vmem:[#allocation2 + $0x100] sm:$0xf8]
      %v1050 = vld [vmem:[#allocation2 + $0x108] sm:$0xf]
      %v1051 = vld [vmem:[#allocation2 + $0x110] sm:$0xf8]
      %v1052 = vld [vmem:[#allocation2 + $0x118] sm:$0xf]
      %v1054 = vshrl.u32 %v1017, 16
      %v1056 = vrot.slane %v1054, 3
      %v1057 = vshll.u32 %v1017, 16
      %v1059 = vrot.slane %v1057, 4
      %v1060 = vor.u32 %v1056, %v1059
      %v1062 = vshrl.u32 %v1018, 16
      %v1064 = vrot.slane %v1062, 3
      %v1065 = vshll.u32 %v1018, 16
      %v1067 = vrot.slane %v1065, 4
      %v1068 = vor.u32 %v1064, %v1067
      %v1069 = vsel %vm334, %v1060, %v1068
      %v1071 = vshrl.u32 %v1019, 16
      %v1073 = vrot.slane %v1071, 3
      %v1074 = vshll.u32 %v1019, 16
      %v1076 = vrot.slane %v1074, 4
      %v1077 = vor.u32 %v1073, %v1076
      %v1079 = vshrl.u32 %v1020, 16
      %v1081 = vrot.slane %v1079, 3
      %v1082 = vshll.u32 %v1020, 16
      %v1084 = vrot.slane %v1082, 4
      %v1085 = vor.u32 %v1081, %v1084
      %v1086 = vsel %vm334, %v1077, %v1085
      %v1088 = vshrl.u32 %v1021, 16
      %v1090 = vrot.slane %v1088, 3
      %v1091 = vshll.u32 %v1021, 16
      %v1093 = vrot.slane %v1091, 4
      %v1094 = vor.u32 %v1090, %v1093
      %v1096 = vshrl.u32 %v1022, 16
      %v1098 = vrot.slane %v1096, 3
      %v1099 = vshll.u32 %v1022, 16
      %v1101 = vrot.slane %v1099, 4
      %v1102 = vor.u32 %v1098, %v1101
      %v1103 = vsel %vm334, %v1094, %v1102
      %v1105 = vshrl.u32 %v1023, 16
      %v1107 = vrot.slane %v1105, 3
      %v1108 = vshll.u32 %v1023, 16
      %v1110 = vrot.slane %v1108, 4
      %v1111 = vor.u32 %v1107, %v1110
      %v1113 = vshrl.u32 %v1024, 16
      %v1115 = vrot.slane %v1113, 3
      %v1116 = vshll.u32 %v1024, 16
      %v1118 = vrot.slane %v1116, 4
      %v1119 = vor.u32 %v1115, %v1118
      %v1120 = vsel %vm334, %v1111, %v1119
      %v1122 = vshrl.u32 %v1025, 16
      %v1124 = vrot.slane %v1122, 3
      %v1125 = vshll.u32 %v1025, 16
      %v1127 = vrot.slane %v1125, 4
      %v1128 = vor.u32 %v1124, %v1127
      %v1130 = vshrl.u32 %v1026, 16
      %v1132 = vrot.slane %v1130, 3
      %v1133 = vshll.u32 %v1026, 16
      %v1135 = vrot.slane %v1133, 4
      %v1136 = vor.u32 %v1132, %v1135
      %v1137 = vsel %vm334, %v1128, %v1136
      %v1139 = vshrl.u32 %v1027, 16
      %v1141 = vrot.slane %v1139, 3
      %v1142 = vshll.u32 %v1027, 16
      %v1144 = vrot.slane %v1142, 4
      %v1145 = vor.u32 %v1141, %v1144
      %v1147 = vshrl.u32 %v1028, 16
      %v1149 = vrot.slane %v1147, 3
      %v1150 = vshll.u32 %v1028, 16
      %v1152 = vrot.slane %v1150, 4
      %v1153 = vor.u32 %v1149, %v1152
      %v1154 = vsel %vm334, %v1145, %v1153
      %v1156 = vshrl.u32 %v1029, 16
      %v1158 = vrot.slane %v1156, 3
      %v1159 = vshll.u32 %v1029, 16
      %v1161 = vrot.slane %v1159, 4
      %v1162 = vor.u32 %v1158, %v1161
      %v1164 = vshrl.u32 %v1030, 16
      %v1166 = vrot.slane %v1164, 3
      %v1167 = vshll.u32 %v1030, 16
      %v1169 = vrot.slane %v1167, 4
      %v1170 = vor.u32 %v1166, %v1169
      %v1171 = vsel %vm334, %v1162, %v1170
      %v1173 = vshrl.u32 %v1031, 16
      %v1175 = vrot.slane %v1173, 3
      %v1176 = vshll.u32 %v1031, 16
      %v1178 = vrot.slane %v1176, 4
      %v1179 = vor.u32 %v1175, %v1178
      %v1181 = vshrl.u32 %v1032, 16
      %v1183 = vrot.slane %v1181, 3
      %v1184 = vshll.u32 %v1032, 16
      %v1186 = vrot.slane %v1184, 4
      %v1187 = vor.u32 %v1183, %v1186
      %v1188 = vsel %vm334, %v1179, %v1187
      %v1190 = vshrl.u32 %v1033, 16
      %v1192 = vrot.slane %v1190, 3
      %v1193 = vshll.u32 %v1033, 16
      %v1195 = vrot.slane %v1193, 4
      %v1196 = vor.u32 %v1192, %v1195
      %v1198 = vshrl.u32 %v1034, 16
      %v1200 = vrot.slane %v1198, 3
      %v1201 = vshll.u32 %v1034, 16
      %v1203 = vrot.slane %v1201, 4
      %v1204 = vor.u32 %v1200, %v1203
      %v1205 = vsel %vm334, %v1196, %v1204
      %v1207 = vshrl.u32 %v1035, 16
      %v1209 = vrot.slane %v1207, 3
      %v1210 = vshll.u32 %v1035, 16
      %v1212 = vrot.slane %v1210, 4
      %v1213 = vor.u32 %v1209, %v1212
      %v1215 = vshrl.u32 %v1036, 16
      %v1217 = vrot.slane %v1215, 3
      %v1218 = vshll.u32 %v1036, 16
      %v1220 = vrot.slane %v1218, 4
      %v1221 = vor.u32 %v1217, %v1220
      %v1222 = vsel %vm334, %v1213, %v1221
      %v1224 = vshrl.u32 %v1037, 16
      %v1226 = vrot.slane %v1224, 3
      %v1227 = vshll.u32 %v1037, 16
      %v1229 = vrot.slane %v1227, 4
      %v1230 = vor.u32 %v1226, %v1229
      %v1232 = vshrl.u32 %v1038, 16
      %v1234 = vrot.slane %v1232, 3
      %v1235 = vshll.u32 %v1038, 16
      %v1237 = vrot.slane %v1235, 4
      %v1238 = vor.u32 %v1234, %v1237
      %v1239 = vsel %vm334, %v1230, %v1238
      %v1241 = vshrl.u32 %v1039, 16
      %v1243 = vrot.slane %v1241, 3
      %v1244 = vshll.u32 %v1039, 16
      %v1246 = vrot.slane %v1244, 4
      %v1247 = vor.u32 %v1243, %v1246
      %v1249 = vshrl.u32 %v1040, 16
      %v1251 = vrot.slane %v1249, 3
      %v1252 = vshll.u32 %v1040, 16
      %v1254 = vrot.slane %v1252, 4
      %v1255 = vor.u32 %v1251, %v1254
      %v1256 = vsel %vm334, %v1247, %v1255
      %v1258 = vshrl.u32 %v1041, 16
      %v1260 = vrot.slane %v1258, 3
      %v1261 = vshll.u32 %v1041, 16
      %v1263 = vrot.slane %v1261, 4
      %v1264 = vor.u32 %v1260, %v1263
      %v1266 = vshrl.u32 %v1042, 16
      %v1268 = vrot.slane %v1266, 3
      %v1269 = vshll.u32 %v1042, 16
      %v1271 = vrot.slane %v1269, 4
      %v1272 = vor.u32 %v1268, %v1271
      %v1273 = vsel %vm334, %v1264, %v1272
      %v1275 = vshrl.u32 %v1043, 16
      %v1277 = vrot.slane %v1275, 3
      %v1278 = vshll.u32 %v1043, 16
      %v1280 = vrot.slane %v1278, 4
      %v1281 = vor.u32 %v1277, %v1280
      %v1283 = vshrl.u32 %v1044, 16
      %v1285 = vrot.slane %v1283, 3
      %v1286 = vshll.u32 %v1044, 16
      %v1288 = vrot.slane %v1286, 4
      %v1289 = vor.u32 %v1285, %v1288
      %v1290 = vsel %vm334, %v1281, %v1289
      %v1292 = vshrl.u32 %v1045, 16
      %v1294 = vrot.slane %v1292, 3
      %v1295 = vshll.u32 %v1045, 16
      %v1297 = vrot.slane %v1295, 4
      %v1298 = vor.u32 %v1294, %v1297
      %v1300 = vshrl.u32 %v1046, 16
      %v1302 = vrot.slane %v1300, 3
      %v1303 = vshll.u32 %v1046, 16
      %v1305 = vrot.slane %v1303, 4
      %v1306 = vor.u32 %v1302, %v1305
      %v1307 = vsel %vm334, %v1298, %v1306
      %v1309 = vshrl.u32 %v1047, 16
      %v1311 = vrot.slane %v1309, 3
      %v1312 = vshll.u32 %v1047, 16
      %v1314 = vrot.slane %v1312, 4
      %v1315 = vor.u32 %v1311, %v1314
      %v1317 = vshrl.u32 %v1048, 16
      %v1319 = vrot.slane %v1317, 3
      %v1320 = vshll.u32 %v1048, 16
      %v1322 = vrot.slane %v1320, 4
      %v1323 = vor.u32 %v1319, %v1322
      %v1324 = vsel %vm334, %v1315, %v1323
      %v1326 = vshrl.u32 %v1049, 16
      %v1328 = vrot.slane %v1326, 3
      %v1329 = vshll.u32 %v1049, 16
      %v1331 = vrot.slane %v1329, 4
      %v1332 = vor.u32 %v1328, %v1331
      %v1334 = vshrl.u32 %v1050, 16
      %v1336 = vrot.slane %v1334, 3
      %v1337 = vshll.u32 %v1050, 16
      %v1339 = vrot.slane %v1337, 4
      %v1340 = vor.u32 %v1336, %v1339
      %v1341 = vsel %vm334, %v1332, %v1340
      %v1343 = vshrl.u32 %v1051, 16
      %v1345 = vrot.slane %v1343, 3
      %v1346 = vshll.u32 %v1051, 16
      %v1348 = vrot.slane %v1346, 4
      %v1349 = vor.u32 %v1345, %v1348
      %v1351 = vshrl.u32 %v1052, 16
      %v1353 = vrot.slane %v1351, 3
      %v1354 = vshll.u32 %v1052, 16
      %v1356 = vrot.slane %v1354, 4
      %v1357 = vor.u32 %v1353, %v1356
      %v1358 = vsel %vm334, %v1349, %v1357
      %vm1377 = vcmask 64512
      %1378 = vst.msk [vmem:[#allocation4] sm:$0xff] %vm1377, %v1069
      %1379 = vst.msk [vmem:[#allocation4 + $0x8] sm:$0xff] %vm1377, %v1086
      %1380 = vst.msk [vmem:[#allocation4 + $0x10] sm:$0xff] %vm1377, %v1103
      %1381 = vst.msk [vmem:[#allocation4 + $0x18] sm:$0xff] %vm1377, %v1120
      %1382 = vst.msk [vmem:[#allocation4 + $0x20] sm:$0xff] %vm1377, %v1137
      %1383 = vst.msk [vmem:[#allocation4 + $0x28] sm:$0xff] %vm1377, %v1154
      %1384 = vst.msk [vmem:[#allocation4 + $0x30] sm:$0xff] %vm1377, %v1171
      %1385 = vst.msk [vmem:[#allocation4 + $0x38] sm:$0xff] %vm1377, %v1188
      %1386 = vst.msk [vmem:[#allocation4 + $0x40] sm:$0xff] %vm1377, %v1205
      %1387 = vst.msk [vmem:[#allocation4 + $0x48] sm:$0xff] %vm1377, %v1222
      %1388 = vst.msk [vmem:[#allocation4 + $0x50] sm:$0xff] %vm1377, %v1239
      %1389 = vst.msk [vmem:[#allocation4 + $0x58] sm:$0xff] %vm1377, %v1256
      %1390 = vst.msk [vmem:[#allocation4 + $0x60] sm:$0xff] %vm1377, %v1273
      %1391 = vst.msk [vmem:[#allocation4 + $0x68] sm:$0xff] %vm1377, %v1290
      %1392 = vst.msk [vmem:[#allocation4 + $0x70] sm:$0xff] %vm1377, %v1307
      %1393 = vst.msk [vmem:[#allocation4 + $0x78] sm:$0xff] %vm1377, %v1324
      %1394 = vst.msk [vmem:[#allocation4 + $0x80] sm:$0xff] %vm1377, %v1341
      %1395 = vst.msk [vmem:[#allocation4 + $0x88] sm:$0xff] %vm1377, %v1358
      %v1396 = vld [vmem:[#allocation2] sm:$0xf0]
      %v1397 = vld [vmem:[#allocation2 + $0x8] sm:$0xf]
      %v1398 = vld [vmem:[#allocation2 + $0x10] sm:$0xf0]
      %v1399 = vld [vmem:[#allocation2 + $0x18] sm:$0xf]
      %v1400 = vld [vmem:[#allocation2 + $0x20] sm:$0xf0]
      %v1401 = vld [vmem:[#allocation2 + $0x28] sm:$0xf]
      %v1402 = vld [vmem:[#allocation2 + $0x30] sm:$0xf0]
      %v1403 = vld [vmem:[#allocation2 + $0x38] sm:$0xf]
      %v1404 = vld [vmem:[#allocation2 + $0x40] sm:$0xf0]
      %v1405 = vld [vmem:[#allocation2 + $0x48] sm:$0xf]
      %v1406 = vld [vmem:[#allocation2 + $0x50] sm:$0xf0]
      %v1407 = vld [vmem:[#allocation2 + $0x58] sm:$0xf]
      %v1408 = vld [vmem:[#allocation2 + $0x60] sm:$0xf0]
      %v1409 = vld [vmem:[#allocation2 + $0x68] sm:$0xf]
      %v1410 = vld [vmem:[#allocation2 + $0x70] sm:$0xf0]
      %v1411 = vld [vmem:[#allocation2 + $0x78] sm:$0xf]
      %v1412 = vld [vmem:[#allocation2 + $0x80] sm:$0xf0]
      %v1413 = vld [vmem:[#allocation2 + $0x88] sm:$0xf]
      %v1414 = vld [vmem:[#allocation2 + $0x90] sm:$0xf0]
      %v1415 = vld [vmem:[#allocation2 + $0x98] sm:$0xf]
      %v1416 = vld [vmem:[#allocation2 + $0xa0] sm:$0xf0]
      %v1417 = vld [vmem:[#allocation2 + $0xa8] sm:$0xf]
      %v1418 = vld [vmem:[#allocation2 + $0xb0] sm:$0xf0]
      %v1419 = vld [vmem:[#allocation2 + $0xb8] sm:$0xf]
      %v1420 = vld [vmem:[#allocation2 + $0xc0] sm:$0xf0]
      %v1421 = vld [vmem:[#allocation2 + $0xc8] sm:$0xf]
      %v1422 = vld [vmem:[#allocation2 + $0xd0] sm:$0xf0]
      %v1423 = vld [vmem:[#allocation2 + $0xd8] sm:$0xf]
      %v1424 = vld [vmem:[#allocation2 + $0xe0] sm:$0xf0]
      %v1425 = vld [vmem:[#allocation2 + $0xe8] sm:$0xf]
      %v1426 = vld [vmem:[#allocation2 + $0xf0] sm:$0xf0]
      %v1427 = vld [vmem:[#allocation2 + $0xf8] sm:$0xf]
      %v1428 = vld [vmem:[#allocation2 + $0x100] sm:$0xf0]
      %v1429 = vld [vmem:[#allocation2 + $0x108] sm:$0xf]
      %v1430 = vld [vmem:[#allocation2 + $0x110] sm:$0xf0]
      %v1431 = vld [vmem:[#allocation2 + $0x118] sm:$0xf]
      %vm1468 = vcmask 1043456
      %v1469 = vrot.slane %v1396, 4
      %v1470 = vrot.slane %v1397, 4
      %v1471 = vsel %vm1468, %v1469, %v1470
      %v1472 = vrot.slane %v1398, 4
      %v1473 = vrot.slane %v1399, 4
      %v1474 = vsel %vm1468, %v1472, %v1473
      %v1475 = vrot.slane %v1400, 4
      %v1476 = vrot.slane %v1401, 4
      %v1477 = vsel %vm1468, %v1475, %v1476
      %v1478 = vrot.slane %v1402, 4
      %v1479 = vrot.slane %v1403, 4
      %v1480 = vsel %vm1468, %v1478, %v1479
      %v1481 = vrot.slane %v1404, 4
      %v1482 = vrot.slane %v1405, 4
      %v1483 = vsel %vm1468, %v1481, %v1482
      %v1484 = vrot.slane %v1406, 4
      %v1485 = vrot.slane %v1407, 4
      %v1486 = vsel %vm1468, %v1484, %v1485
      %v1487 = vrot.slane %v1408, 4
      %v1488 = vrot.slane %v1409, 4
      %v1489 = vsel %vm1468, %v1487, %v1488
      %v1490 = vrot.slane %v1410, 4
      %v1491 = vrot.slane %v1411, 4
      %v1492 = vsel %vm1468, %v1490, %v1491
      %v1493 = vrot.slane %v1412, 4
      %v1494 = vrot.slane %v1413, 4
      %v1495 = vsel %vm1468, %v1493, %v1494
      %v1496 = vrot.slane %v1414, 4
      %v1497 = vrot.slane %v1415, 4
      %v1498 = vsel %vm1468, %v1496, %v1497
      %v1499 = vrot.slane %v1416, 4
      %v1500 = vrot.slane %v1417, 4
      %v1501 = vsel %vm1468, %v1499, %v1500
      %v1502 = vrot.slane %v1418, 4
      %v1503 = vrot.slane %v1419, 4
      %v1504 = vsel %vm1468, %v1502, %v1503
      %v1505 = vrot.slane %v1420, 4
      %v1506 = vrot.slane %v1421, 4
      %v1507 = vsel %vm1468, %v1505, %v1506
      %v1508 = vrot.slane %v1422, 4
      %v1509 = vrot.slane %v1423, 4
      %v1510 = vsel %vm1468, %v1508, %v1509
      %v1511 = vrot.slane %v1424, 4
      %v1512 = vrot.slane %v1425, 4
      %v1513 = vsel %vm1468, %v1511, %v1512
      %v1514 = vrot.slane %v1426, 4
      %v1515 = vrot.slane %v1427, 4
      %v1516 = vsel %vm1468, %v1514, %v1515
      %v1517 = vrot.slane %v1428, 4
      %v1518 = vrot.slane %v1429, 4
      %v1519 = vsel %vm1468, %v1517, %v1518
      %v1520 = vrot.slane %v1430, 4
      %v1521 = vrot.slane %v1431, 4
      %v1522 = vsel %vm1468, %v1520, %v1521
      %s1541 = scalar_lea.vmem [#allocation4], 144
      %1542 = vst.msk [vmem:[%s1541] sm:$0xff] %vm1377, %v1471
      %1543 = vst.msk [vmem:[%s1541 + $0x8] sm:$0xff] %vm1377, %v1474
      %1544 = vst.msk [vmem:[%s1541 + $0x10] sm:$0xff] %vm1377, %v1477
      %1545 = vst.msk [vmem:[%s1541 + $0x18] sm:$0xff] %vm1377, %v1480
      %1546 = vst.msk [vmem:[%s1541 + $0x20] sm:$0xff] %vm1377, %v1483
      %1547 = vst.msk [vmem:[%s1541 + $0x28] sm:$0xff] %vm1377, %v1486
      %1548 = vst.msk [vmem:[%s1541 + $0x30] sm:$0xff] %vm1377, %v1489
      %1549 = vst.msk [vmem:[%s1541 + $0x38] sm:$0xff] %vm1377, %v1492
      %1550 = vst.msk [vmem:[%s1541 + $0x40] sm:$0xff] %vm1377, %v1495
      %1551 = vst.msk [vmem:[%s1541 + $0x48] sm:$0xff] %vm1377, %v1498
      %1552 = vst.msk [vmem:[%s1541 + $0x50] sm:$0xff] %vm1377, %v1501
      %1553 = vst.msk [vmem:[%s1541 + $0x58] sm:$0xff] %vm1377, %v1504
      %1554 = vst.msk [vmem:[%s1541 + $0x60] sm:$0xff] %vm1377, %v1507
      %1555 = vst.msk [vmem:[%s1541 + $0x68] sm:$0xff] %vm1377, %v1510
      %1556 = vst.msk [vmem:[%s1541 + $0x70] sm:$0xff] %vm1377, %v1513
      %1557 = vst.msk [vmem:[%s1541 + $0x78] sm:$0xff] %vm1377, %v1516
      %1558 = vst.msk [vmem:[%s1541 + $0x80] sm:$0xff] %vm1377, %v1519
      %1559 = vst.msk [vmem:[%s1541 + $0x88] sm:$0xff] %vm1377, %v1522
      %v1560 = vld [vmem:[#allocation2] sm:$0xf0]
      %v1561 = vld [vmem:[#allocation2 + $0x8] sm:$0x1f]
      %v1562 = vld [vmem:[#allocation2 + $0x10] sm:$0xf0]
      %v1563 = vld [vmem:[#allocation2 + $0x18] sm:$0x1f]
      %v1564 = vld [vmem:[#allocation2 + $0x20] sm:$0xf0]
      %v1565 = vld [vmem:[#allocation2 + $0x28] sm:$0x1f]
      %v1566 = vld [vmem:[#allocation2 + $0x30] sm:$0xf0]
      %v1567 = vld [vmem:[#allocation2 + $0x38] sm:$0x1f]
      %v1568 = vld [vmem:[#allocation2 + $0x40] sm:$0xf0]
      %v1569 = vld [vmem:[#allocation2 + $0x48] sm:$0x1f]
      %v1570 = vld [vmem:[#allocation2 + $0x50] sm:$0xf0]
      %v1571 = vld [vmem:[#allocation2 + $0x58] sm:$0x1f]
      %v1572 = vld [vmem:[#allocation2 + $0x60] sm:$0xf0]
      %v1573 = vld [vmem:[#allocation2 + $0x68] sm:$0x1f]
      %v1574 = vld [vmem:[#allocation2 + $0x70] sm:$0xf0]
      %v1575 = vld [vmem:[#allocation2 + $0x78] sm:$0x1f]
      %v1576 = vld [vmem:[#allocation2 + $0x80] sm:$0xf0]
      %v1577 = vld [vmem:[#allocation2 + $0x88] sm:$0x1f]
      %v1578 = vld [vmem:[#allocation2 + $0x90] sm:$0xf0]
      %v1579 = vld [vmem:[#allocation2 + $0x98] sm:$0x1f]
      %v1580 = vld [vmem:[#allocation2 + $0xa0] sm:$0xf0]
      %v1581 = vld [vmem:[#allocation2 + $0xa8] sm:$0x1f]
      %v1582 = vld [vmem:[#allocation2 + $0xb0] sm:$0xf0]
      %v1583 = vld [vmem:[#allocation2 + $0xb8] sm:$0x1f]
      %v1584 = vld [vmem:[#allocation2 + $0xc0] sm:$0xf0]
      %v1585 = vld [vmem:[#allocation2 + $0xc8] sm:$0x1f]
      %v1586 = vld [vmem:[#allocation2 + $0xd0] sm:$0xf0]
      %v1587 = vld [vmem:[#allocation2 + $0xd8] sm:$0x1f]
      %v1588 = vld [vmem:[#allocation2 + $0xe0] sm:$0xf0]
      %v1589 = vld [vmem:[#allocation2 + $0xe8] sm:$0x1f]
      %v1590 = vld [vmem:[#allocation2 + $0xf0] sm:$0xf0]
      %v1591 = vld [vmem:[#allocation2 + $0xf8] sm:$0x1f]
      %v1592 = vld [vmem:[#allocation2 + $0x100] sm:$0xf0]
      %v1593 = vld [vmem:[#allocation2 + $0x108] sm:$0x1f]
      %v1594 = vld [vmem:[#allocation2 + $0x110] sm:$0xf0]
      %v1595 = vld [vmem:[#allocation2 + $0x118] sm:$0x1f]
      %vm1596 = vsmask.f32 3328
      %v1598 = vshrl.u32 %v1560, 16
      %v1600 = vrot.slane %v1598, 4
      %v1601 = vshll.u32 %v1560, 16
      %v1603 = vrot.slane %v1601, 5
      %v1604 = vor.u32 %v1600, %v1603
      %v1606 = vshrl.u32 %v1561, 16
      %v1608 = vrot.slane %v1606, 4
      %v1609 = vshll.u32 %v1561, 16
      %v1611 = vrot.slane %v1609, 5
      %v1612 = vor.u32 %v1608, %v1611
      %v1613 = vsel %vm1596, %v1604, %v1612
      %v1615 = vshrl.u32 %v1562, 16
      %v1617 = vrot.slane %v1615, 4
      %v1618 = vshll.u32 %v1562, 16
      %v1620 = vrot.slane %v1618, 5
      %v1621 = vor.u32 %v1617, %v1620
      %v1623 = vshrl.u32 %v1563, 16
      %v1625 = vrot.slane %v1623, 4
      %v1626 = vshll.u32 %v1563, 16
      %v1628 = vrot.slane %v1626, 5
      %v1629 = vor.u32 %v1625, %v1628
      %v1630 = vsel %vm1596, %v1621, %v1629
      %v1632 = vshrl.u32 %v1564, 16
      %v1634 = vrot.slane %v1632, 4
      %v1635 = vshll.u32 %v1564, 16
      %v1637 = vrot.slane %v1635, 5
      %v1638 = vor.u32 %v1634, %v1637
      %v1640 = vshrl.u32 %v1565, 16
      %v1642 = vrot.slane %v1640, 4
      %v1643 = vshll.u32 %v1565, 16
      %v1645 = vrot.slane %v1643, 5
      %v1646 = vor.u32 %v1642, %v1645
      %v1647 = vsel %vm1596, %v1638, %v1646
      %v1649 = vshrl.u32 %v1566, 16
      %v1651 = vrot.slane %v1649, 4
      %v1652 = vshll.u32 %v1566, 16
      %v1654 = vrot.slane %v1652, 5
      %v1655 = vor.u32 %v1651, %v1654
      %v1657 = vshrl.u32 %v1567, 16
      %v1659 = vrot.slane %v1657, 4
      %v1660 = vshll.u32 %v1567, 16
      %v1662 = vrot.slane %v1660, 5
      %v1663 = vor.u32 %v1659, %v1662
      %v1664 = vsel %vm1596, %v1655, %v1663
      %v1666 = vshrl.u32 %v1568, 16
      %v1668 = vrot.slane %v1666, 4
      %v1669 = vshll.u32 %v1568, 16
      %v1671 = vrot.slane %v1669, 5
      %v1672 = vor.u32 %v1668, %v1671
      %v1674 = vshrl.u32 %v1569, 16
      %v1676 = vrot.slane %v1674, 4
      %v1677 = vshll.u32 %v1569, 16
      %v1679 = vrot.slane %v1677, 5
      %v1680 = vor.u32 %v1676, %v1679
      %v1681 = vsel %vm1596, %v1672, %v1680
      %v1683 = vshrl.u32 %v1570, 16
      %v1685 = vrot.slane %v1683, 4
      %v1686 = vshll.u32 %v1570, 16
      %v1688 = vrot.slane %v1686, 5
      %v1689 = vor.u32 %v1685, %v1688
      %v1691 = vshrl.u32 %v1571, 16
      %v1693 = vrot.slane %v1691, 4
      %v1694 = vshll.u32 %v1571, 16
      %v1696 = vrot.slane %v1694, 5
      %v1697 = vor.u32 %v1693, %v1696
      %v1698 = vsel %vm1596, %v1689, %v1697
      %v1700 = vshrl.u32 %v1572, 16
      %v1702 = vrot.slane %v1700, 4
      %v1703 = vshll.u32 %v1572, 16
      %v1705 = vrot.slane %v1703, 5
      %v1706 = vor.u32 %v1702, %v1705
      %v1708 = vshrl.u32 %v1573, 16
      %v1710 = vrot.slane %v1708, 4
      %v1711 = vshll.u32 %v1573, 16
      %v1713 = vrot.slane %v1711, 5
      %v1714 = vor.u32 %v1710, %v1713
      %v1715 = vsel %vm1596, %v1706, %v1714
      %v1717 = vshrl.u32 %v1574, 16
      %v1719 = vrot.slane %v1717, 4
      %v1720 = vshll.u32 %v1574, 16
      %v1722 = vrot.slane %v1720, 5
      %v1723 = vor.u32 %v1719, %v1722
      %v1725 = vshrl.u32 %v1575, 16
      %v1727 = vrot.slane %v1725, 4
      %v1728 = vshll.u32 %v1575, 16
      %v1730 = vrot.slane %v1728, 5
      %v1731 = vor.u32 %v1727, %v1730
      %v1732 = vsel %vm1596, %v1723, %v1731
      %v1734 = vshrl.u32 %v1576, 16
      %v1736 = vrot.slane %v1734, 4
      %v1737 = vshll.u32 %v1576, 16
      %v1739 = vrot.slane %v1737, 5
      %v1740 = vor.u32 %v1736, %v1739
      %v1742 = vshrl.u32 %v1577, 16
      %v1744 = vrot.slane %v1742, 4
      %v1745 = vshll.u32 %v1577, 16
      %v1747 = vrot.slane %v1745, 5
      %v1748 = vor.u32 %v1744, %v1747
      %v1749 = vsel %vm1596, %v1740, %v1748
      %v1751 = vshrl.u32 %v1578, 16
      %v1753 = vrot.slane %v1751, 4
      %v1754 = vshll.u32 %v1578, 16
      %v1756 = vrot.slane %v1754, 5
      %v1757 = vor.u32 %v1753, %v1756
      %v1759 = vshrl.u32 %v1579, 16
      %v1761 = vrot.slane %v1759, 4
      %v1762 = vshll.u32 %v1579, 16
      %v1764 = vrot.slane %v1762, 5
      %v1765 = vor.u32 %v1761, %v1764
      %v1766 = vsel %vm1596, %v1757, %v1765
      %v1768 = vshrl.u32 %v1580, 16
      %v1770 = vrot.slane %v1768, 4
      %v1771 = vshll.u32 %v1580, 16
      %v1773 = vrot.slane %v1771, 5
      %v1774 = vor.u32 %v1770, %v1773
      %v1776 = vshrl.u32 %v1581, 16
      %v1778 = vrot.slane %v1776, 4
      %v1779 = vshll.u32 %v1581, 16
      %v1781 = vrot.slane %v1779, 5
      %v1782 = vor.u32 %v1778, %v1781
      %v1783 = vsel %vm1596, %v1774, %v1782
      %v1785 = vshrl.u32 %v1582, 16
      %v1787 = vrot.slane %v1785, 4
      %v1788 = vshll.u32 %v1582, 16
      %v1790 = vrot.slane %v1788, 5
      %v1791 = vor.u32 %v1787, %v1790
      %v1793 = vshrl.u32 %v1583, 16
      %v1795 = vrot.slane %v1793, 4
      %v1796 = vshll.u32 %v1583, 16
      %v1798 = vrot.slane %v1796, 5
      %v1799 = vor.u32 %v1795, %v1798
      %v1800 = vsel %vm1596, %v1791, %v1799
      %v1802 = vshrl.u32 %v1584, 16
      %v1804 = vrot.slane %v1802, 4
      %v1805 = vshll.u32 %v1584, 16
      %v1807 = vrot.slane %v1805, 5
      %v1808 = vor.u32 %v1804, %v1807
      %v1810 = vshrl.u32 %v1585, 16
      %v1812 = vrot.slane %v1810, 4
      %v1813 = vshll.u32 %v1585, 16
      %v1815 = vrot.slane %v1813, 5
      %v1816 = vor.u32 %v1812, %v1815
      %v1817 = vsel %vm1596, %v1808, %v1816
      %v1819 = vshrl.u32 %v1586, 16
      %v1821 = vrot.slane %v1819, 4
      %v1822 = vshll.u32 %v1586, 16
      %v1824 = vrot.slane %v1822, 5
      %v1825 = vor.u32 %v1821, %v1824
      %v1827 = vshrl.u32 %v1587, 16
      %v1829 = vrot.slane %v1827, 4
      %v1830 = vshll.u32 %v1587, 16
      %v1832 = vrot.slane %v1830, 5
      %v1833 = vor.u32 %v1829, %v1832
      %v1834 = vsel %vm1596, %v1825, %v1833
      %v1836 = vshrl.u32 %v1588, 16
      %v1838 = vrot.slane %v1836, 4
      %v1839 = vshll.u32 %v1588, 16
      %v1841 = vrot.slane %v1839, 5
      %v1842 = vor.u32 %v1838, %v1841
      %v1844 = vshrl.u32 %v1589, 16
      %v1846 = vrot.slane %v1844, 4
      %v1847 = vshll.u32 %v1589, 16
      %v1849 = vrot.slane %v1847, 5
      %v1850 = vor.u32 %v1846, %v1849
      %v1851 = vsel %vm1596, %v1842, %v1850
      %v1853 = vshrl.u32 %v1590, 16
      %v1855 = vrot.slane %v1853, 4
      %v1856 = vshll.u32 %v1590, 16
      %v1858 = vrot.slane %v1856, 5
      %v1859 = vor.u32 %v1855, %v1858
      %v1861 = vshrl.u32 %v1591, 16
      %v1863 = vrot.slane %v1861, 4
      %v1864 = vshll.u32 %v1591, 16
      %v1866 = vrot.slane %v1864, 5
      %v1867 = vor.u32 %v1863, %v1866
      %v1868 = vsel %vm1596, %v1859, %v1867
      %v1870 = vshrl.u32 %v1592, 16
      %v1872 = vrot.slane %v1870, 4
      %v1873 = vshll.u32 %v1592, 16
      %v1875 = vrot.slane %v1873, 5
      %v1876 = vor.u32 %v1872, %v1875
      %v1878 = vshrl.u32 %v1593, 16
      %v1880 = vrot.slane %v1878, 4
      %v1881 = vshll.u32 %v1593, 16
      %v1883 = vrot.slane %v1881, 5
      %v1884 = vor.u32 %v1880, %v1883
      %v1885 = vsel %vm1596, %v1876, %v1884
      %v1887 = vshrl.u32 %v1594, 16
      %v1889 = vrot.slane %v1887, 4
      %v1890 = vshll.u32 %v1594, 16
      %v1892 = vrot.slane %v1890, 5
      %v1893 = vor.u32 %v1889, %v1892
      %v1895 = vshrl.u32 %v1595, 16
      %v1897 = vrot.slane %v1895, 4
      %v1898 = vshll.u32 %v1595, 16
      %v1900 = vrot.slane %v1898, 5
      %v1901 = vor.u32 %v1897, %v1900
      %v1902 = vsel %vm1596, %v1893, %v1901
      %s1921 = scalar_lea.vmem [#allocation4], 288
      %1922 = vst.msk [vmem:[%s1921] sm:$0xff] %vm1377, %v1613
      %1923 = vst.msk [vmem:[%s1921 + $0x8] sm:$0xff] %vm1377, %v1630
      %1924 = vst.msk [vmem:[%s1921 + $0x10] sm:$0xff] %vm1377, %v1647
      %1925 = vst.msk [vmem:[%s1921 + $0x18] sm:$0xff] %vm1377, %v1664
      %1926 = vst.msk [vmem:[%s1921 + $0x20] sm:$0xff] %vm1377, %v1681
      %1927 = vst.msk [vmem:[%s1921 + $0x28] sm:$0xff] %vm1377, %v1698
      %1928 = vst.msk [vmem:[%s1921 + $0x30] sm:$0xff] %vm1377, %v1715
      %1929 = vst.msk [vmem:[%s1921 + $0x38] sm:$0xff] %vm1377, %v1732
      %1930 = vst.msk [vmem:[%s1921 + $0x40] sm:$0xff] %vm1377, %v1749
      %1931 = vst.msk [vmem:[%s1921 + $0x48] sm:$0xff] %vm1377, %v1766
      %1932 = vst.msk [vmem:[%s1921 + $0x50] sm:$0xff] %vm1377, %v1783
      %1933 = vst.msk [vmem:[%s1921 + $0x58] sm:$0xff] %vm1377, %v1800
      %1934 = vst.msk [vmem:[%s1921 + $0x60] sm:$0xff] %vm1377, %v1817
      %1935 = vst.msk [vmem:[%s1921 + $0x68] sm:$0xff] %vm1377, %v1834
      %1936 = vst.msk [vmem:[%s1921 + $0x70] sm:$0xff] %vm1377, %v1851
      %1937 = vst.msk [vmem:[%s1921 + $0x78] sm:$0xff] %vm1377, %v1868
      %1938 = vst.msk [vmem:[%s1921 + $0x80] sm:$0xff] %vm1377, %v1885
      %1939 = vst.msk [vmem:[%s1921 + $0x88] sm:$0xff] %vm1377, %v1902
      %v1940 = vld [vmem:[#allocation4] sm:$0xff]
      %v1941 = vld [vmem:[#allocation4 + $0x8] sm:$0xff]
      %v1942 = vld [vmem:[#allocation4 + $0x10] sm:$0xff]
      %v1943 = vld [vmem:[#allocation4 + $0x18] sm:$0xff]
      %v1944 = vld [vmem:[#allocation4 + $0x20] sm:$0xff]
      %v1945 = vld [vmem:[#allocation4 + $0x28] sm:$0xff]
      %v1946 = vld [vmem:[#allocation4 + $0x30] sm:$0xff]
      %v1947 = vld [vmem:[#allocation4 + $0x38] sm:$0xff]
      %v1948 = vld [vmem:[#allocation4 + $0x40] sm:$0xff]
      %v1949 = vld [vmem:[#allocation4 + $0x48] sm:$0xff]
      %v1950 = vld [vmem:[#allocation4 + $0x50] sm:$0xff]
      %v1951 = vld [vmem:[#allocation4 + $0x58] sm:$0xff]
      %v1952 = vld [vmem:[#allocation4 + $0x60] sm:$0xff]
      %v1953 = vld [vmem:[#allocation4 + $0x68] sm:$0xff]
      %v1954 = vld [vmem:[#allocation4 + $0x70] sm:$0xff]
      %v1955 = vld [vmem:[#allocation4 + $0x78] sm:$0xff]
      %v1956 = vld [vmem:[%s2] sm:$0xf]
      %v1957 = vld [vmem:[%s1541] sm:$0xff]
      %v1958 = vld [vmem:[%s1541 + $0x8] sm:$0xff]
      %v1959 = vld [vmem:[%s1541 + $0x10] sm:$0xff]
      %v1960 = vld [vmem:[%s1541 + $0x18] sm:$0xff]
      %v1961 = vld [vmem:[%s1541 + $0x20] sm:$0xff]
      %v1962 = vld [vmem:[%s1541 + $0x28] sm:$0xff]
      %v1963 = vld [vmem:[%s1541 + $0x30] sm:$0xff]
      %v1964 = vld [vmem:[%s1541 + $0x38] sm:$0xff]
      %v1965 = vld [vmem:[%s1541 + $0x40] sm:$0xff]
      %v1966 = vld [vmem:[%s1541 + $0x48] sm:$0xff]
      %v1967 = vld [vmem:[%s1541 + $0x50] sm:$0xff]
      %v1968 = vld [vmem:[%s1541 + $0x58] sm:$0xff]
      %v1969 = vld [vmem:[%s1541 + $0x60] sm:$0xff]
      %v1970 = vld [vmem:[%s1541 + $0x68] sm:$0xff]
      %v1971 = vld [vmem:[%s1541 + $0x70] sm:$0xff]
      %v1972 = vld [vmem:[%s1541 + $0x78] sm:$0xff]
      %s1973 = scalar_lea.vmem %s2, 4
      %v1974 = vld [vmem:[%s1973] sm:$0xf]
      %v1976 = vsel %vm1377, %v1957, 0
      %v1979 = vsel %vm1377, %v1958, 0
      %v1982 = vsel %vm1377, %v1959, 0
      %v1985 = vsel %vm1377, %v1960, 0
      %v1988 = vsel %vm1377, %v1961, 0
      %v1991 = vsel %vm1377, %v1962, 0
      %v1994 = vsel %vm1377, %v1963, 0
      %v1997 = vsel %vm1377, %v1964, 0
      %v2000 = vsel %vm1377, %v1965, 0
      %v2003 = vsel %vm1377, %v1966, 0
      %v2006 = vsel %vm1377, %v1967, 0
      %v2009 = vsel %vm1377, %v1968, 0
      %v2012 = vsel %vm1377, %v1969, 0
      %v2015 = vsel %vm1377, %v1970, 0
      %v2018 = vsel %vm1377, %v1971, 0
      %v2021 = vsel %vm1377, %v1972, 0
      %vm2023 = vcmask 1043456
      %v2025 = vsel %vm2023, %v1974, 0
      %2027 = vmatprep.subr.bf16.mxu0 0
      %2028 = vmatpush1.bf16.msra.mxu0 %v2025
      %2029 = vmatprep.subr.bf16.mxu0 0
      %2030 = vmatpush1.bf16.msra.mxu0 0
      %2031 = vmatprep.subr.bf16.mxu0 0
      %2032 = vmatpush1.bf16.msra.mxu0 0
      %2033 = vmatprep.subr.bf16.mxu0 0
      %2034 = vmatpush1.bf16.msra.mxu0 0
      %2035 = vmatprep.subr.bf16.mxu0 0
      %2036 = vmatpush1.bf16.msra.mxu0 0
      %2037 = vmatprep.subr.bf16.mxu0 0
      %2038 = vmatpush1.bf16.msra.mxu0 0
      %2039 = vmatprep.subr.bf16.mxu0 0
      %2040 = vmatpush1.bf16.msra.mxu0 0
      %2041 = vmatprep.subr.bf16.mxu0 0
      %2042 = vmatpush1.bf16.msra.mxu0 0
      %2043 = vmatprep.subr.bf16.mxu0 0
      %2044 = vmatpush1.bf16.msra.mxu0 0
      %2045 = vmatprep.subr.bf16.mxu0 0
      %2046 = vmatpush1.bf16.msra.mxu0 0
      %2047 = vmatprep.subr.bf16.mxu0 0
      %2048 = vmatpush1.bf16.msra.mxu0 0
      %2049 = vmatprep.subr.bf16.mxu0 0
      %2050 = vmatpush1.bf16.msra.mxu0 0
      %2051 = vmatprep.subr.bf16.mxu0 0
      %2052 = vmatpush1.bf16.msra.mxu0 0
      %2053 = vmatprep.subr.bf16.mxu0 0
      %2054 = vmatpush1.bf16.msra.mxu0 0
      %2055 = vmatprep.subr.bf16.mxu0 0
      %2056 = vmatpush1.bf16.msra.mxu0 0
      %2057 = vmatprep.subr.bf16.mxu0 0
      %2058 = vmatpush1.bf16.msra.mxu0 0
      %2059 = vmatprep.mubr.bf16.mxu0 0
      %2060 = vmatmul.mubr.bf16.gmra.mrb[0].mxu0 %v1976
      %v2061 = vpop.f32.mrb[0].mxu0
      %v2062 = vadd.f32 0.0, %v2061
      %v2063 = vpop.f32.mrb[0].mxu0
      %v2064 = vpop.f32.mrb[0].mxu0
      %v2065 = vadd.f32 0.0, %v2064
      %v2066 = vpop.f32.mrb[0].mxu0
      %2067 = vmatprep.mubr.bf16.mxu0 0
      %2068 = vmatmul.mubr.bf16.gmra.mrb[0].mxu0 %v1979
      %v2069 = vpop.f32.mrb[0].mxu0
      %v2070 = vadd.f32 0.0, %v2069
      %v2071 = vpop.f32.mrb[0].mxu0
      %v2072 = vpop.f32.mrb[0].mxu0
      %v2073 = vadd.f32 0.0, %v2072
      %v2074 = vpop.f32.mrb[0].mxu0
      %2075 = vmatprep.mubr.bf16.mxu0 0
      %2076 = vmatmul.mubr.bf16.gmra.mrb[0].mxu0 %v1982
      %v2077 = vpop.f32.mrb[0].mxu0
      %v2078 = vadd.f32 0.0, %v2077
      %v2079 = vpop.f32.mrb[0].mxu0
      %v2080 = vpop.f32.mrb[0].mxu0
      %v2081 = vadd.f32 0.0, %v2080
      %v2082 = vpop.f32.mrb[0].mxu0
      %2083 = vmatprep.mubr.bf16.mxu0 0
      %2084 = vmatmul.mubr.bf16.gmra.mrb[0].mxu0 %v1985
      %v2085 = vpop.f32.mrb[0].mxu0
      %v2086 = vadd.f32 0.0, %v2085
      %v2087 = vpop.f32.mrb[0].mxu0
      %v2088 = vpop.f32.mrb[0].mxu0
      %v2089 = vadd.f32 0.0, %v2088
      %v2090 = vpop.f32.mrb[0].mxu0
      %2091 = vmatprep.mubr.bf16.mxu0 0
      %2092 = vmatmul.mubr.bf16.gmra.mrb[0].mxu0 %v1988
      %v2093 = vpop.f32.mrb[0].mxu0
      %v2094 = vadd.f32 0.0, %v2093
      %v2095 = vpop.f32.mrb[0].mxu0
      %v2096 = vpop.f32.mrb[0].mxu0
      %v2097 = vadd.f32 0.0, %v2096
      %v2098 = vpop.f32.mrb[0].mxu0
      %2099 = vmatprep.mubr.bf16.mxu0 0
      %2100 = vmatmul.mubr.bf16.gmra.mrb[0].mxu0 %v1991
      %v2101 = vpop.f32.mrb[0].mxu0
      %v2102 = vadd.f32 0.0, %v2101
      %v2103 = vpop.f32.mrb[0].mxu0
      %v2104 = vpop.f32.mrb[0].mxu0
      %v2105 = vadd.f32 0.0, %v2104
      %v2106 = vpop.f32.mrb[0].mxu0
      %2107 = vmatprep.mubr.bf16.mxu0 0
      %2108 = vmatmul.mubr.bf16.gmra.mrb[0].mxu0 %v1994
      %v2109 = vpop.f32.mrb[0].mxu0
      %v2110 = vadd.f32 0.0, %v2109
      %v2111 = vpop.f32.mrb[0].mxu0
      %v2112 = vpop.f32.mrb[0].mxu0
      %v2113 = vadd.f32 0.0, %v2112
      %v2114 = vpop.f32.mrb[0].mxu0
      %2115 = vmatprep.mubr.bf16.mxu0 0
      %2116 = vmatmul.mubr.bf16.gmra.mrb[0].mxu0 %v1997
      %v2117 = vpop.f32.mrb[0].mxu0
      %v2118 = vadd.f32 0.0, %v2117
      %v2119 = vpop.f32.mrb[0].mxu0
      %v2120 = vpop.f32.mrb[0].mxu0
      %v2121 = vadd.f32 0.0, %v2120
      %v2122 = vpop.f32.mrb[0].mxu0
      %2123 = vmatprep.mubr.bf16.mxu0 0
      %2124 = vmatmul.mubr.bf16.gmra.mrb[0].mxu0 %v2000
      %v2125 = vpop.f32.mrb[0].mxu0
      %v2126 = vadd.f32 0.0, %v2125
      %v2127 = vpop.f32.mrb[0].mxu0
      %v2128 = vpop.f32.mrb[0].mxu0
      %v2129 = vadd.f32 0.0, %v2128
      %v2130 = vpop.f32.mrb[0].mxu0
      %2131 = vmatprep.mubr.bf16.mxu0 0
      %2132 = vmatmul.mubr.bf16.gmra.mrb[0].mxu0 %v2003
      %v2133 = vpop.f32.mrb[0].mxu0
      %v2134 = vadd.f32 0.0, %v2133
      %v2135 = vpop.f32.mrb[0].mxu0
      %v2136 = vpop.f32.mrb[0].mxu0
      %v2137 = vadd.f32 0.0, %v2136
      %v2138 = vpop.f32.mrb[0].mxu0
      %2139 = vmatprep.mubr.bf16.mxu0 0
      %2140 = vmatmul.mubr.bf16.gmra.mrb[0].mxu0 %v2006
      %v2141 = vpop.f32.mrb[0].mxu0
      %v2142 = vadd.f32 0.0, %v2141
      %v2143 = vpop.f32.mrb[0].mxu0
      %v2144 = vpop.f32.mrb[0].mxu0
      %v2145 = vadd.f32 0.0, %v2144
      %v2146 = vpop.f32.mrb[0].mxu0
      %2147 = vmatprep.mubr.bf16.mxu0 0
      %2148 = vmatmul.mubr.bf16.gmra.mrb[0].mxu0 %v2009
      %v2149 = vpop.f32.mrb[0].mxu0
      %v2150 = vadd.f32 0.0, %v2149
      %v2151 = vpop.f32.mrb[0].mxu0
      %v2152 = vpop.f32.mrb[0].mxu0
      %v2153 = vadd.f32 0.0, %v2152
      %v2154 = vpop.f32.mrb[0].mxu0
      %2155 = vmatprep.mubr.bf16.mxu0 0
      %2156 = vmatmul.mubr.bf16.gmra.mrb[0].mxu0 %v2012
      %v2157 = vpop.f32.mrb[0].mxu0
      %v2158 = vadd.f32 0.0, %v2157
      %v2159 = vpop.f32.mrb[0].mxu0
      %v2160 = vpop.f32.mrb[0].mxu0
      %v2161 = vadd.f32 0.0, %v2160
      %v2162 = vpop.f32.mrb[0].mxu0
      %2163 = vmatprep.mubr.bf16.mxu0 0
      %2164 = vmatmul.mubr.bf16.gmra.mrb[0].mxu0 %v2015
      %v2165 = vpop.f32.mrb[0].mxu0
      %v2166 = vadd.f32 0.0, %v2165
      %v2167 = vpop.f32.mrb[0].mxu0
      %v2168 = vpop.f32.mrb[0].mxu0
      %v2169 = vadd.f32 0.0, %v2168
      %v2170 = vpop.f32.mrb[0].mxu0
      %2171 = vmatprep.mubr.bf16.mxu0 0
      %2172 = vmatmul.mubr.bf16.gmra.mrb[0].mxu0 %v2018
      %v2173 = vpop.f32.mrb[0].mxu0
      %v2174 = vadd.f32 0.0, %v2173
      %v2175 = vpop.f32.mrb[0].mxu0
      %v2176 = vpop.f32.mrb[0].mxu0
      %v2177 = vadd.f32 0.0, %v2176
      %v2178 = vpop.f32.mrb[0].mxu0
      %2179 = vmatprep.mubr.bf16.mxu0 0
      %2180 = vmatmul.mubr.bf16.gmra.mrb[0].mxu0 %v2021
      %v2181 = vpop.f32.mrb[0].mxu0
      %v2182 = vadd.f32 0.0, %v2181
      %v2183 = vpop.f32.mrb[0].mxu0
      %v2184 = vpop.f32.mrb[0].mxu0
      %v2185 = vadd.f32 0.0, %v2184
      %v2186 = vpop.f32.mrb[0].mxu0
      %2187 = vdwg.mxu0
      %v2189 = vsel %vm1377, %v1940, 0
      %v2192 = vsel %vm1377, %v1941, 0
      %v2195 = vsel %vm1377, %v1942, 0
      %v2198 = vsel %vm1377, %v1943, 0
      %v2201 = vsel %vm1377, %v1944, 0
      %v2204 = vsel %vm1377, %v1945, 0
      %v2207 = vsel %vm1377, %v1946, 0
      %v2210 = vsel %vm1377, %v1947, 0
      %v2213 = vsel %vm1377, %v1948, 0
      %v2216 = vsel %vm1377, %v1949, 0
      %v2219 = vsel %vm1377, %v1950, 0
      %v2222 = vsel %vm1377, %v1951, 0
      %v2225 = vsel %vm1377, %v1952, 0
      %v2228 = vsel %vm1377, %v1953, 0
      %v2231 = vsel %vm1377, %v1954, 0
      %v2234 = vsel %vm1377, %v1955, 0
      %v2237 = vsel %vm2023, %v1956, 0
      %2239 = vmatprep.subr.bf16.mxu0 0
      %2240 = vmatpush1.bf16.msra.mxu0 %v2237
      %2241 = vmatprep.subr.bf16.mxu0 0
      %2242 = vmatpush1.bf16.msra.mxu0 0
      %2243 = vmatprep.subr.bf16.mxu0 0
      %2244 = vmatpush1.bf16.msra.mxu0 0
      %2245 = vmatprep.subr.bf16.mxu0 0
      %2246 = vmatpush1.bf16.msra.mxu0 0
      %2247 = vmatprep.subr.bf16.mxu0 0
      %2248 = vmatpush1.bf16.msra.mxu0 0
      %2249 = vmatprep.subr.bf16.mxu0 0
      %2250 = vmatpush1.bf16.msra.mxu0 0
      %2251 = vmatprep.subr.bf16.mxu0 0
      %2252 = vmatpush1.bf16.msra.mxu0 0
      %2253 = vmatprep.subr.bf16.mxu0 0
      %2254 = vmatpush1.bf16.msra.mxu0 0
      %2255 = vmatprep.subr.bf16.mxu0 0
      %2256 = vmatpush1.bf16.msra.mxu0 0
      %2257 = vmatprep.subr.bf16.mxu0 0
      %2258 = vmatpush1.bf16.msra.mxu0 0
      %2259 = vmatprep.subr.bf16.mxu0 0
      %2260 = vmatpush1.bf16.msra.mxu0 0
      %2261 = vmatprep.subr.bf16.mxu0 0
      %2262 = vmatpush1.bf16.msra.mxu0 0
      %2263 = vmatprep.subr.bf16.mxu0 0
      %2264 = vmatpush1.bf16.msra.mxu0 0
      %2265 = vmatprep.subr.bf16.mxu0 0
      %2266 = vmatpush1.bf16.msra.mxu0 0
      %2267 = vmatprep.subr.bf16.mxu0 0
      %2268 = vmatpush1.bf16.msra.mxu0 0
      %2269 = vmatprep.subr.bf16.mxu0 0
      %2270 = vmatpush1.bf16.msra.mxu0 0
      %2271 = vmatprep.mubr.bf16.mxu0 0
      %2272 = vmatmul.mubr.bf16.gmra.mrb[0].mxu0 %v2189
      %v2273 = vpop.f32.mrb[0].mxu0
      %v2274 = vadd.f32 %v2062, %v2273
      %v2275 = vpop.f32.mrb[0].mxu0
      %v2276 = vpop.f32.mrb[0].mxu0
      %v2277 = vadd.f32 %v2065, %v2276
      %v2278 = vpop.f32.mrb[0].mxu0
      %2279 = vmatprep.mubr.bf16.mxu0 0
      %2280 = vmatmul.mubr.bf16.gmra.mrb[0].mxu0 %v2192
      %v2281 = vpop.f32.mrb[0].mxu0
      %v2282 = vadd.f32 %v2070, %v2281
      %v2283 = vpop.f32.mrb[0].mxu0
      %v2284 = vpop.f32.mrb[0].mxu0
      %v2285 = vadd.f32 %v2073, %v2284
      %v2286 = vpop.f32.mrb[0].mxu0
      %2287 = vmatprep.mubr.bf16.mxu0 0
      %2288 = vmatmul.mubr.bf16.gmra.mrb[0].mxu0 %v2195
      %v2289 = vpop.f32.mrb[0].mxu0
      %v2290 = vadd.f32 %v2078, %v2289
      %v2291 = vpop.f32.mrb[0].mxu0
      %v2292 = vpop.f32.mrb[0].mxu0
      %v2293 = vadd.f32 %v2081, %v2292
      %v2294 = vpop.f32.mrb[0].mxu0
      %2295 = vmatprep.mubr.bf16.mxu0 0
      %2296 = vmatmul.mubr.bf16.gmra.mrb[0].mxu0 %v2198
      %v2297 = vpop.f32.mrb[0].mxu0
      %v2298 = vadd.f32 %v2086, %v2297
      %v2299 = vpop.f32.mrb[0].mxu0
      %v2300 = vpop.f32.mrb[0].mxu0
      %v2301 = vadd.f32 %v2089, %v2300
      %v2302 = vpop.f32.mrb[0].mxu0
      %2303 = vmatprep.mubr.bf16.mxu0 0
      %2304 = vmatmul.mubr.bf16.gmra.mrb[0].mxu0 %v2201
      %v2305 = vpop.f32.mrb[0].mxu0
      %v2306 = vadd.f32 %v2094, %v2305
      %v2307 = vpop.f32.mrb[0].mxu0
      %v2308 = vpop.f32.mrb[0].mxu0
      %v2309 = vadd.f32 %v2097, %v2308
      %v2310 = vpop.f32.mrb[0].mxu0
      %2311 = vmatprep.mubr.bf16.mxu0 0
      %2312 = vmatmul.mubr.bf16.gmra.mrb[0].mxu0 %v2204
      %v2313 = vpop.f32.mrb[0].mxu0
      %v2314 = vadd.f32 %v2102, %v2313
      %v2315 = vpop.f32.mrb[0].mxu0
      %v2316 = vpop.f32.mrb[0].mxu0
      %v2317 = vadd.f32 %v2105, %v2316
      %v2318 = vpop.f32.mrb[0].mxu0
      %2319 = vmatprep.mubr.bf16.mxu0 0
      %2320 = vmatmul.mubr.bf16.gmra.mrb[0].mxu0 %v2207
      %v2321 = vpop.f32.mrb[0].mxu0
      %v2322 = vadd.f32 %v2110, %v2321
      %v2323 = vpop.f32.mrb[0].mxu0
      %v2324 = vpop.f32.mrb[0].mxu0
      %v2325 = vadd.f32 %v2113, %v2324
      %v2326 = vpop.f32.mrb[0].mxu0
      %2327 = vmatprep.mubr.bf16.mxu0 0
      %2328 = vmatmul.mubr.bf16.gmra.mrb[0].mxu0 %v2210
      %v2329 = vpop.f32.mrb[0].mxu0
      %v2330 = vadd.f32 %v2118, %v2329
      %v2331 = vpop.f32.mrb[0].mxu0
      %v2332 = vpop.f32.mrb[0].mxu0
      %v2333 = vadd.f32 %v2121, %v2332
      %v2334 = vpop.f32.mrb[0].mxu0
      %2335 = vmatprep.mubr.bf16.mxu0 0
      %2336 = vmatmul.mubr.bf16.gmra.mrb[0].mxu0 %v2213
      %v2337 = vpop.f32.mrb[0].mxu0
      %v2338 = vadd.f32 %v2126, %v2337
      %v2339 = vpop.f32.mrb[0].mxu0
      %v2340 = vpop.f32.mrb[0].mxu0
      %v2341 = vadd.f32 %v2129, %v2340
      %v2342 = vpop.f32.mrb[0].mxu0
      %2343 = vmatprep.mubr.bf16.mxu0 0
      %2344 = vmatmul.mubr.bf16.gmra.mrb[0].mxu0 %v2216
      %v2345 = vpop.f32.mrb[0].mxu0
      %v2346 = vadd.f32 %v2134, %v2345
      %v2347 = vpop.f32.mrb[0].mxu0
      %v2348 = vpop.f32.mrb[0].mxu0
      %v2349 = vadd.f32 %v2137, %v2348
      %v2350 = vpop.f32.mrb[0].mxu0
      %2351 = vmatprep.mubr.bf16.mxu0 0
      %2352 = vmatmul.mubr.bf16.gmra.mrb[0].mxu0 %v2219
      %v2353 = vpop.f32.mrb[0].mxu0
      %v2354 = vadd.f32 %v2142, %v2353
      %v2355 = vpop.f32.mrb[0].mxu0
      %v2356 = vpop.f32.mrb[0].mxu0
      %v2357 = vadd.f32 %v2145, %v2356
      %v2358 = vpop.f32.mrb[0].mxu0
      %2359 = vmatprep.mubr.bf16.mxu0 0
      %2360 = vmatmul.mubr.bf16.gmra.mrb[0].mxu0 %v2222
      %v2361 = vpop.f32.mrb[0].mxu0
      %v2362 = vadd.f32 %v2150, %v2361
      %v2363 = vpop.f32.mrb[0].mxu0
      %v2364 = vpop.f32.mrb[0].mxu0
      %v2365 = vadd.f32 %v2153, %v2364
      %v2366 = vpop.f32.mrb[0].mxu0
      %2367 = vmatprep.mubr.bf16.mxu0 0
      %2368 = vmatmul.mubr.bf16.gmra.mrb[0].mxu0 %v2225
      %v2369 = vpop.f32.mrb[0].mxu0
      %v2370 = vadd.f32 %v2158, %v2369
      %v2371 = vpop.f32.mrb[0].mxu0
      %v2372 = vpop.f32.mrb[0].mxu0
      %v2373 = vadd.f32 %v2161, %v2372
      %v2374 = vpop.f32.mrb[0].mxu0
      %2375 = vmatprep.mubr.bf16.mxu0 0
      %2376 = vmatmul.mubr.bf16.gmra.mrb[0].mxu0 %v2228
      %v2377 = vpop.f32.mrb[0].mxu0
      %v2378 = vadd.f32 %v2166, %v2377
      %v2379 = vpop.f32.mrb[0].mxu0
      %v2380 = vpop.f32.mrb[0].mxu0
      %v2381 = vadd.f32 %v2169, %v2380
      %v2382 = vpop.f32.mrb[0].mxu0
      %2383 = vmatprep.mubr.bf16.mxu0 0
      %2384 = vmatmul.mubr.bf16.gmra.mrb[0].mxu0 %v2231
      %v2385 = vpop.f32.mrb[0].mxu0
      %v2386 = vadd.f32 %v2174, %v2385
      %v2387 = vpop.f32.mrb[0].mxu0
      %v2388 = vpop.f32.mrb[0].mxu0
      %v2389 = vadd.f32 %v2177, %v2388
      %v2390 = vpop.f32.mrb[0].mxu0
      %2391 = vmatprep.mubr.bf16.mxu0 0
      %2392 = vmatmul.mubr.bf16.gmra.mrb[0].mxu0 %v2234
      %v2393 = vpop.f32.mrb[0].mxu0
      %v2394 = vadd.f32 %v2182, %v2393
      %v2395 = vpop.f32.mrb[0].mxu0
      %v2396 = vpop.f32.mrb[0].mxu0
      %v2397 = vadd.f32 %v2185, %v2396
      %v2398 = vpop.f32.mrb[0].mxu0
      %2399 = vdwg.mxu0
      %v2400 = vld [vmem:[%s1921] sm:$0xff]
      %v2401 = vld [vmem:[%s1921 + $0x8] sm:$0xff]
      %v2402 = vld [vmem:[%s1921 + $0x10] sm:$0xff]
      %v2403 = vld [vmem:[%s1921 + $0x18] sm:$0xff]
      %v2404 = vld [vmem:[%s1921 + $0x20] sm:$0xff]
      %v2405 = vld [vmem:[%s1921 + $0x28] sm:$0xff]
      %v2406 = vld [vmem:[%s1921 + $0x30] sm:$0xff]
      %v2407 = vld [vmem:[%s1921 + $0x38] sm:$0xff]
      %v2408 = vld [vmem:[%s1921 + $0x40] sm:$0xff]
      %v2409 = vld [vmem:[%s1921 + $0x48] sm:$0xff]
      %v2410 = vld [vmem:[%s1921 + $0x50] sm:$0xff]
      %v2411 = vld [vmem:[%s1921 + $0x58] sm:$0xff]
      %v2412 = vld [vmem:[%s1921 + $0x60] sm:$0xff]
      %v2413 = vld [vmem:[%s1921 + $0x68] sm:$0xff]
      %v2414 = vld [vmem:[%s1921 + $0x70] sm:$0xff]
      %v2415 = vld [vmem:[%s1921 + $0x78] sm:$0xff]
      %s2416 = scalar_lea.vmem %s2, 8
      %v2417 = vld [vmem:[%s2416] sm:$0xf]
      %v2419 = vsel %vm1377, %v2400, 0
      %v2422 = vsel %vm1377, %v2401, 0
      %v2425 = vsel %vm1377, %v2402, 0
      %v2428 = vsel %vm1377, %v2403, 0
      %v2431 = vsel %vm1377, %v2404, 0
      %v2434 = vsel %vm1377, %v2405, 0
      %v2437 = vsel %vm1377, %v2406, 0
      %v2440 = vsel %vm1377, %v2407, 0
      %v2443 = vsel %vm1377, %v2408, 0
      %v2446 = vsel %vm1377, %v2409, 0
      %v2449 = vsel %vm1377, %v2410, 0
      %v2452 = vsel %vm1377, %v2411, 0
      %v2455 = vsel %vm1377, %v2412, 0
      %v2458 = vsel %vm1377, %v2413, 0
      %v2461 = vsel %vm1377, %v2414, 0
      %v2464 = vsel %vm1377, %v2415, 0
      %v2467 = vsel %vm2023, %v2417, 0
      %2469 = vmatprep.subr.bf16.mxu0 0
      %2470 = vmatpush1.bf16.msra.mxu0 %v2467
      %2471 = vmatprep.subr.bf16.mxu0 0
      %2472 = vmatpush1.bf16.msra.mxu0 0
      %2473 = vmatprep.subr.bf16.mxu0 0
      %2474 = vmatpush1.bf16.msra.mxu0 0
      %2475 = vmatprep.subr.bf16.mxu0 0
      %2476 = vmatpush1.bf16.msra.mxu0 0
      %2477 = vmatprep.subr.bf16.mxu0 0
      %2478 = vmatpush1.bf16.msra.mxu0 0
      %2479 = vmatprep.subr.bf16.mxu0 0
      %2480 = vmatpush1.bf16.msra.mxu0 0
      %2481 = vmatprep.subr.bf16.mxu0 0
      %2482 = vmatpush1.bf16.msra.mxu0 0
      %2483 = vmatprep.subr.bf16.mxu0 0
      %2484 = vmatpush1.bf16.msra.mxu0 0
      %2485 = vmatprep.subr.bf16.mxu0 0
      %2486 = vmatpush1.bf16.msra.mxu0 0
      %2487 = vmatprep.subr.bf16.mxu0 0
      %2488 = vmatpush1.bf16.msra.mxu0 0
      %2489 = vmatprep.subr.bf16.mxu0 0
      %2490 = vmatpush1.bf16.msra.mxu0 0
      %2491 = vmatprep.subr.bf16.mxu0 0
      %2492 = vmatpush1.bf16.msra.mxu0 0
      %2493 = vmatprep.subr.bf16.mxu0 0
      %2494 = vmatpush1.bf16.msra.mxu0 0
      %2495 = vmatprep.subr.bf16.mxu0 0
      %2496 = vmatpush1.bf16.msra.mxu0 0
      %2497 = vmatprep.subr.bf16.mxu0 0
      %2498 = vmatpush1.bf16.msra.mxu0 0
      %2499 = vmatprep.subr.bf16.mxu0 0
      %2500 = vmatpush1.bf16.msra.mxu0 0
      %2501 = vmatprep.mubr.bf16.mxu0 0
      %2502 = vmatmul.mubr.bf16.gmra.mrb[0].mxu0 %v2419
      %v2503 = vpop.f32.mrb[0].mxu0
      %v2504 = vadd.f32 0.0, %v2503
      %v2505 = vpop.f32.mrb[0].mxu0
      %v2506 = vpop.f32.mrb[0].mxu0
      %v2507 = vadd.f32 0.0, %v2506
      %v2508 = vpop.f32.mrb[0].mxu0
      %2509 = vmatprep.mubr.bf16.mxu0 0
      %2510 = vmatmul.mubr.bf16.gmra.mrb[0].mxu0 %v2422
      %v2511 = vpop.f32.mrb[0].mxu0
      %v2512 = vadd.f32 0.0, %v2511
      %v2513 = vpop.f32.mrb[0].mxu0
      %v2514 = vpop.f32.mrb[0].mxu0
      %v2515 = vadd.f32 0.0, %v2514
      %v2516 = vpop.f32.mrb[0].mxu0
      %2517 = vmatprep.mubr.bf16.mxu0 0
      %2518 = vmatmul.mubr.bf16.gmra.mrb[0].mxu0 %v2425
      %v2519 = vpop.f32.mrb[0].mxu0
      %v2520 = vadd.f32 0.0, %v2519
      %v2521 = vpop.f32.mrb[0].mxu0
      %v2522 = vpop.f32.mrb[0].mxu0
      %v2523 = vadd.f32 0.0, %v2522
      %v2524 = vpop.f32.mrb[0].mxu0
      %2525 = vmatprep.mubr.bf16.mxu0 0
      %2526 = vmatmul.mubr.bf16.gmra.mrb[0].mxu0 %v2428
      %v2527 = vpop.f32.mrb[0].mxu0
      %v2528 = vadd.f32 0.0, %v2527
      %v2529 = vpop.f32.mrb[0].mxu0
      %v2530 = vpop.f32.mrb[0].mxu0
      %v2531 = vadd.f32 0.0, %v2530
      %v2532 = vpop.f32.mrb[0].mxu0
      %2533 = vmatprep.mubr.bf16.mxu0 0
      %2534 = vmatmul.mubr.bf16.gmra.mrb[0].mxu0 %v2431
      %v2535 = vpop.f32.mrb[0].mxu0
      %v2536 = vadd.f32 0.0, %v2535
      %v2537 = vpop.f32.mrb[0].mxu0
      %v2538 = vpop.f32.mrb[0].mxu0
      %v2539 = vadd.f32 0.0, %v2538
      %v2540 = vpop.f32.mrb[0].mxu0
      %2541 = vmatprep.mubr.bf16.mxu0 0
      %2542 = vmatmul.mubr.bf16.gmra.mrb[0].mxu0 %v2434
      %v2543 = vpop.f32.mrb[0].mxu0
      %v2544 = vadd.f32 0.0, %v2543
      %v2545 = vpop.f32.mrb[0].mxu0
      %v2546 = vpop.f32.mrb[0].mxu0
      %v2547 = vadd.f32 0.0, %v2546
      %v2548 = vpop.f32.mrb[0].mxu0
      %2549 = vmatprep.mubr.bf16.mxu0 0
      %2550 = vmatmul.mubr.bf16.gmra.mrb[0].mxu0 %v2437
      %v2551 = vpop.f32.mrb[0].mxu0
      %v2552 = vadd.f32 0.0, %v2551
      %v2553 = vpop.f32.mrb[0].mxu0
      %v2554 = vpop.f32.mrb[0].mxu0
      %v2555 = vadd.f32 0.0, %v2554
      %v2556 = vpop.f32.mrb[0].mxu0
      %2557 = vmatprep.mubr.bf16.mxu0 0
      %2558 = vmatmul.mubr.bf16.gmra.mrb[0].mxu0 %v2440
      %v2559 = vpop.f32.mrb[0].mxu0
      %v2560 = vadd.f32 0.0, %v2559
      %v2561 = vpop.f32.mrb[0].mxu0
      %v2562 = vpop.f32.mrb[0].mxu0
      %v2563 = vadd.f32 0.0, %v2562
      %v2564 = vpop.f32.mrb[0].mxu0
      %2565 = vmatprep.mubr.bf16.mxu0 0
      %2566 = vmatmul.mubr.bf16.gmra.mrb[0].mxu0 %v2443
      %v2567 = vpop.f32.mrb[0].mxu0
      %v2568 = vadd.f32 0.0, %v2567
      %v2569 = vpop.f32.mrb[0].mxu0
      %v2570 = vpop.f32.mrb[0].mxu0
      %v2571 = vadd.f32 0.0, %v2570
      %v2572 = vpop.f32.mrb[0].mxu0
      %2573 = vmatprep.mubr.bf16.mxu0 0
      %2574 = vmatmul.mubr.bf16.gmra.mrb[0].mxu0 %v2446
      %v2575 = vpop.f32.mrb[0].mxu0
      %v2576 = vadd.f32 0.0, %v2575
      %v2577 = vpop.f32.mrb[0].mxu0
      %v2578 = vpop.f32.mrb[0].mxu0
      %v2579 = vadd.f32 0.0, %v2578
      %v2580 = vpop.f32.mrb[0].mxu0
      %2581 = vmatprep.mubr.bf16.mxu0 0
      %2582 = vmatmul.mubr.bf16.gmra.mrb[0].mxu0 %v2449
      %v2583 = vpop.f32.mrb[0].mxu0
      %v2584 = vadd.f32 0.0, %v2583
      %v2585 = vpop.f32.mrb[0].mxu0
      %v2586 = vpop.f32.mrb[0].mxu0
      %v2587 = vadd.f32 0.0, %v2586
      %v2588 = vpop.f32.mrb[0].mxu0
      %2589 = vmatprep.mubr.bf16.mxu0 0
      %2590 = vmatmul.mubr.bf16.gmra.mrb[0].mxu0 %v2452
      %v2591 = vpop.f32.mrb[0].mxu0
      %v2592 = vadd.f32 0.0, %v2591
      %v2593 = vpop.f32.mrb[0].mxu0
      %v2594 = vpop.f32.mrb[0].mxu0
      %v2595 = vadd.f32 0.0, %v2594
      %v2596 = vpop.f32.mrb[0].mxu0
      %2597 = vmatprep.mubr.bf16.mxu0 0
      %2598 = vmatmul.mubr.bf16.gmra.mrb[0].mxu0 %v2455
      %v2599 = vpop.f32.mrb[0].mxu0
      %v2600 = vadd.f32 0.0, %v2599
      %v2601 = vpop.f32.mrb[0].mxu0
      %v2602 = vpop.f32.mrb[0].mxu0
      %v2603 = vadd.f32 0.0, %v2602
      %v2604 = vpop.f32.mrb[0].mxu0
      %2605 = vmatprep.mubr.bf16.mxu0 0
      %2606 = vmatmul.mubr.bf16.gmra.mrb[0].mxu0 %v2458
      %v2607 = vpop.f32.mrb[0].mxu0
      %v2608 = vadd.f32 0.0, %v2607
      %v2609 = vpop.f32.mrb[0].mxu0
      %v2610 = vpop.f32.mrb[0].mxu0
      %v2611 = vadd.f32 0.0, %v2610
      %v2612 = vpop.f32.mrb[0].mxu0
      %2613 = vmatprep.mubr.bf16.mxu0 0
      %2614 = vmatmul.mubr.bf16.gmra.mrb[0].mxu0 %v2461
      %v2615 = vpop.f32.mrb[0].mxu0
      %v2616 = vadd.f32 0.0, %v2615
      %v2617 = vpop.f32.mrb[0].mxu0
      %v2618 = vpop.f32.mrb[0].mxu0
      %v2619 = vadd.f32 0.0, %v2618
      %v2620 = vpop.f32.mrb[0].mxu0
      %2621 = vmatprep.mubr.bf16.mxu0 0
      %2622 = vmatmul.mubr.bf16.gmra.mrb[0].mxu0 %v2464
      %v2623 = vpop.f32.mrb[0].mxu0
      %v2624 = vadd.f32 0.0, %v2623
      %v2625 = vpop.f32.mrb[0].mxu0
      %v2626 = vpop.f32.mrb[0].mxu0
      %v2627 = vadd.f32 0.0, %v2626
      %v2628 = vpop.f32.mrb[0].mxu0
      %2629 = vdwg.mxu0
      %v2630 = vadd.f32 %v2274, %v2504
      %v2631 = vadd.f32 %v2277, %v2507
      %v2632 = vadd.f32 %v2282, %v2512
      %v2633 = vadd.f32 %v2285, %v2515
      %v2634 = vadd.f32 %v2290, %v2520
      %v2635 = vadd.f32 %v2293, %v2523
      %v2636 = vadd.f32 %v2298, %v2528
      %v2637 = vadd.f32 %v2301, %v2531
      %v2638 = vadd.f32 %v2306, %v2536
      %v2639 = vadd.f32 %v2309, %v2539
      %v2640 = vadd.f32 %v2314, %v2544
      %v2641 = vadd.f32 %v2317, %v2547
      %v2642 = vadd.f32 %v2322, %v2552
      %v2643 = vadd.f32 %v2325, %v2555
      %v2644 = vadd.f32 %v2330, %v2560
      %v2645 = vadd.f32 %v2333, %v2563
      %v2646 = vadd.f32 %v2338, %v2568
      %v2647 = vadd.f32 %v2341, %v2571
      %v2648 = vadd.f32 %v2346, %v2576
      %v2649 = vadd.f32 %v2349, %v2579
      %v2650 = vadd.f32 %v2354, %v2584
      %v2651 = vadd.f32 %v2357, %v2587
      %v2652 = vadd.f32 %v2362, %v2592
      %v2653 = vadd.f32 %v2365, %v2595
      %v2654 = vadd.f32 %v2370, %v2600
      %v2655 = vadd.f32 %v2373, %v2603
      %v2656 = vadd.f32 %v2378, %v2608
      %v2657 = vadd.f32 %v2381, %v2611
      %v2658 = vadd.f32 %v2386, %v2616
      %v2659 = vadd.f32 %v2389, %v2619
      %v2660 = vadd.f32 %v2394, %v2624
      %v2661 = vadd.f32 %v2397, %v2627
      %s2662 = scalar_lea.vmem [#allocation4], 8
      %v2663 = vld [vmem:[%s2662] sm:$0xff]
      %v2664 = vld [vmem:[%s2662 + $0x8] sm:$0xff]
      %v2665 = vld [vmem:[%s2662 + $0x10] sm:$0xff]
      %v2666 = vld [vmem:[%s2662 + $0x18] sm:$0xff]
      %v2667 = vld [vmem:[%s2662 + $0x20] sm:$0xff]
      %v2668 = vld [vmem:[%s2662 + $0x28] sm:$0xff]
      %v2669 = vld [vmem:[%s2662 + $0x30] sm:$0xff]
      %v2670 = vld [vmem:[%s2662 + $0x38] sm:$0xff]
      %v2671 = vld [vmem:[%s2662 + $0x40] sm:$0xff]
      %v2672 = vld [vmem:[%s2662 + $0x48] sm:$0xff]
      %v2673 = vld [vmem:[%s2662 + $0x50] sm:$0xff]
      %v2674 = vld [vmem:[%s2662 + $0x58] sm:$0xff]
      %v2675 = vld [vmem:[%s2662 + $0x60] sm:$0xff]
      %v2676 = vld [vmem:[%s2662 + $0x68] sm:$0xff]
      %v2677 = vld [vmem:[%s2662 + $0x70] sm:$0xff]
      %v2678 = vld [vmem:[%s2662 + $0x78] sm:$0xff]
      %s2679 = scalar_lea.vmem %s2, 12
      %v2680 = vld [vmem:[%s2679] sm:$0xf]
      %v2682 = vsel %vm1377, %v2663, 0
      %v2685 = vsel %vm1377, %v2664, 0
      %v2688 = vsel %vm1377, %v2665, 0
      %v2691 = vsel %vm1377, %v2666, 0
      %v2694 = vsel %vm1377, %v2667, 0
      %v2697 = vsel %vm1377, %v2668, 0
      %v2700 = vsel %vm1377, %v2669, 0
      %v2703 = vsel %vm1377, %v2670, 0
      %v2706 = vsel %vm1377, %v2671, 0
      %v2709 = vsel %vm1377, %v2672, 0
      %v2712 = vsel %vm1377, %v2673, 0
      %v2715 = vsel %vm1377, %v2674, 0
      %v2718 = vsel %vm1377, %v2675, 0
      %v2721 = vsel %vm1377, %v2676, 0
      %v2724 = vsel %vm1377, %v2677, 0
      %v2727 = vsel %vm1377, %v2678, 0
      %v2730 = vsel %vm2023, %v2680, 0
      %2732 = vmatprep.subr.bf16.mxu0 0
      %2733 = vmatpush1.bf16.msra.mxu0 %v2730
      %2734 = vmatprep.subr.bf16.mxu0 0
      %2735 = vmatpush1.bf16.msra.mxu0 0
      %2736 = vmatprep.subr.bf16.mxu0 0
      %2737 = vmatpush1.bf16.msra.mxu0 0
      %2738 = vmatprep.subr.bf16.mxu0 0
      %2739 = vmatpush1.bf16.msra.mxu0 0
      %2740 = vmatprep.subr.bf16.mxu0 0
      %2741 = vmatpush1.bf16.msra.mxu0 0
      %2742 = vmatprep.subr.bf16.mxu0 0
      %2743 = vmatpush1.bf16.msra.mxu0 0
      %2744 = vmatprep.subr.bf16.mxu0 0
      %2745 = vmatpush1.bf16.msra.mxu0 0
      %2746 = vmatprep.subr.bf16.mxu0 0
      %2747 = vmatpush1.bf16.msra.mxu0 0
      %2748 = vmatprep.subr.bf16.mxu0 0
      %2749 = vmatpush1.bf16.msra.mxu0 0
      %2750 = vmatprep.subr.bf16.mxu0 0
      %2751 = vmatpush1.bf16.msra.mxu0 0
      %2752 = vmatprep.subr.bf16.mxu0 0
      %2753 = vmatpush1.bf16.msra.mxu0 0
      %2754 = vmatprep.subr.bf16.mxu0 0
      %2755 = vmatpush1.bf16.msra.mxu0 0
      %2756 = vmatprep.subr.bf16.mxu0 0
      %2757 = vmatpush1.bf16.msra.mxu0 0
      %2758 = vmatprep.subr.bf16.mxu0 0
      %2759 = vmatpush1.bf16.msra.mxu0 0
      %2760 = vmatprep.subr.bf16.mxu0 0
      %2761 = vmatpush1.bf16.msra.mxu0 0
      %2762 = vmatprep.subr.bf16.mxu0 0
      %2763 = vmatpush1.bf16.msra.mxu0 0
      %2764 = vmatprep.mubr.bf16.mxu0 0
      %2765 = vmatmul.mubr.bf16.gmra.mrb[0].mxu0 %v2682
      %v2766 = vpop.f32.mrb[0].mxu0
      %v2767 = vadd.f32 0.0, %v2766
      %v2768 = vpop.f32.mrb[0].mxu0
      %v2769 = vpop.f32.mrb[0].mxu0
      %v2770 = vadd.f32 0.0, %v2769
      %v2771 = vpop.f32.mrb[0].mxu0
      %2772 = vmatprep.mubr.bf16.mxu0 0
      %2773 = vmatmul.mubr.bf16.gmra.mrb[0].mxu0 %v2685
      %v2774 = vpop.f32.mrb[0].mxu0
      %v2775 = vadd.f32 0.0, %v2774
      %v2776 = vpop.f32.mrb[0].mxu0
      %v2777 = vpop.f32.mrb[0].mxu0
      %v2778 = vadd.f32 0.0, %v2777
      %v2779 = vpop.f32.mrb[0].mxu0
      %2780 = vmatprep.mubr.bf16.mxu0 0
      %2781 = vmatmul.mubr.bf16.gmra.mrb[0].mxu0 %v2688
      %v2782 = vpop.f32.mrb[0].mxu0
      %v2783 = vadd.f32 0.0, %v2782
      %v2784 = vpop.f32.mrb[0].mxu0
      %v2785 = vpop.f32.mrb[0].mxu0
      %v2786 = vadd.f32 0.0, %v2785
      %v2787 = vpop.f32.mrb[0].mxu0
      %2788 = vmatprep.mubr.bf16.mxu0 0
      %2789 = vmatmul.mubr.bf16.gmra.mrb[0].mxu0 %v2691
      %v2790 = vpop.f32.mrb[0].mxu0
      %v2791 = vadd.f32 0.0, %v2790
      %v2792 = vpop.f32.mrb[0].mxu0
      %v2793 = vpop.f32.mrb[0].mxu0
      %v2794 = vadd.f32 0.0, %v2793
      %v2795 = vpop.f32.mrb[0].mxu0
      %2796 = vmatprep.mubr.bf16.mxu0 0
      %2797 = vmatmul.mubr.bf16.gmra.mrb[0].mxu0 %v2694
      %v2798 = vpop.f32.mrb[0].mxu0
      %v2799 = vadd.f32 0.0, %v2798
      %v2800 = vpop.f32.mrb[0].mxu0
      %v2801 = vpop.f32.mrb[0].mxu0
      %v2802 = vadd.f32 0.0, %v2801
      %v2803 = vpop.f32.mrb[0].mxu0
      %2804 = vmatprep.mubr.bf16.mxu0 0
      %2805 = vmatmul.mubr.bf16.gmra.mrb[0].mxu0 %v2697
      %v2806 = vpop.f32.mrb[0].mxu0
      %v2807 = vadd.f32 0.0, %v2806
      %v2808 = vpop.f32.mrb[0].mxu0
      %v2809 = vpop.f32.mrb[0].mxu0
      %v2810 = vadd.f32 0.0, %v2809
      %v2811 = vpop.f32.mrb[0].mxu0
      %2812 = vmatprep.mubr.bf16.mxu0 0
      %2813 = vmatmul.mubr.bf16.gmra.mrb[0].mxu0 %v2700
      %v2814 = vpop.f32.mrb[0].mxu0
      %v2815 = vadd.f32 0.0, %v2814
      %v2816 = vpop.f32.mrb[0].mxu0
      %v2817 = vpop.f32.mrb[0].mxu0
      %v2818 = vadd.f32 0.0, %v2817
      %v2819 = vpop.f32.mrb[0].mxu0
      %2820 = vmatprep.mubr.bf16.mxu0 0
      %2821 = vmatmul.mubr.bf16.gmra.mrb[0].mxu0 %v2703
      %v2822 = vpop.f32.mrb[0].mxu0
      %v2823 = vadd.f32 0.0, %v2822
      %v2824 = vpop.f32.mrb[0].mxu0
      %v2825 = vpop.f32.mrb[0].mxu0
      %v2826 = vadd.f32 0.0, %v2825
      %v2827 = vpop.f32.mrb[0].mxu0
      %2828 = vmatprep.mubr.bf16.mxu0 0
      %2829 = vmatmul.mubr.bf16.gmra.mrb[0].mxu0 %v2706
      %v2830 = vpop.f32.mrb[0].mxu0
      %v2831 = vadd.f32 0.0, %v2830
      %v2832 = vpop.f32.mrb[0].mxu0
      %v2833 = vpop.f32.mrb[0].mxu0
      %v2834 = vadd.f32 0.0, %v2833
      %v2835 = vpop.f32.mrb[0].mxu0
      %2836 = vmatprep.mubr.bf16.mxu0 0
      %2837 = vmatmul.mubr.bf16.gmra.mrb[0].mxu0 %v2709
      %v2838 = vpop.f32.mrb[0].mxu0
      %v2839 = vadd.f32 0.0, %v2838
      %v2840 = vpop.f32.mrb[0].mxu0
      %v2841 = vpop.f32.mrb[0].mxu0
      %v2842 = vadd.f32 0.0, %v2841
      %v2843 = vpop.f32.mrb[0].mxu0
      %2844 = vmatprep.mubr.bf16.mxu0 0
      %2845 = vmatmul.mubr.bf16.gmra.mrb[0].mxu0 %v2712
      %v2846 = vpop.f32.mrb[0].mxu0
      %v2847 = vadd.f32 0.0, %v2846
      %v2848 = vpop.f32.mrb[0].mxu0
      %v2849 = vpop.f32.mrb[0].mxu0
      %v2850 = vadd.f32 0.0, %v2849
      %v2851 = vpop.f32.mrb[0].mxu0
      %2852 = vmatprep.mubr.bf16.mxu0 0
      %2853 = vmatmul.mubr.bf16.gmra.mrb[0].mxu0 %v2715
      %v2854 = vpop.f32.mrb[0].mxu0
      %v2855 = vadd.f32 0.0, %v2854
      %v2856 = vpop.f32.mrb[0].mxu0
      %v2857 = vpop.f32.mrb[0].mxu0
      %v2858 = vadd.f32 0.0, %v2857
      %v2859 = vpop.f32.mrb[0].mxu0
      %2860 = vmatprep.mubr.bf16.mxu0 0
      %2861 = vmatmul.mubr.bf16.gmra.mrb[0].mxu0 %v2718
      %v2862 = vpop.f32.mrb[0].mxu0
      %v2863 = vadd.f32 0.0, %v2862
      %v2864 = vpop.f32.mrb[0].mxu0
      %v2865 = vpop.f32.mrb[0].mxu0
      %v2866 = vadd.f32 0.0, %v2865
      %v2867 = vpop.f32.mrb[0].mxu0
      %2868 = vmatprep.mubr.bf16.mxu0 0
      %2869 = vmatmul.mubr.bf16.gmra.mrb[0].mxu0 %v2721
      %v2870 = vpop.f32.mrb[0].mxu0
      %v2871 = vadd.f32 0.0, %v2870
      %v2872 = vpop.f32.mrb[0].mxu0
      %v2873 = vpop.f32.mrb[0].mxu0
      %v2874 = vadd.f32 0.0, %v2873
      %v2875 = vpop.f32.mrb[0].mxu0
      %2876 = vmatprep.mubr.bf16.mxu0 0
      %2877 = vmatmul.mubr.bf16.gmra.mrb[0].mxu0 %v2724
      %v2878 = vpop.f32.mrb[0].mxu0
      %v2879 = vadd.f32 0.0, %v2878
      %v2880 = vpop.f32.mrb[0].mxu0
      %v2881 = vpop.f32.mrb[0].mxu0
      %v2882 = vadd.f32 0.0, %v2881
      %v2883 = vpop.f32.mrb[0].mxu0
      %2884 = vmatprep.mubr.bf16.mxu0 0
      %2885 = vmatmul.mubr.bf16.gmra.mrb[0].mxu0 %v2727
      %v2886 = vpop.f32.mrb[0].mxu0
      %v2887 = vadd.f32 0.0, %v2886
      %v2888 = vpop.f32.mrb[0].mxu0
      %v2889 = vpop.f32.mrb[0].mxu0
      %v2890 = vadd.f32 0.0, %v2889
      %v2891 = vpop.f32.mrb[0].mxu0
      %2892 = vdwg.mxu0
      %v2893 = vadd.f32 %v2630, %v2767
      %v2894 = vadd.f32 %v2631, %v2770
      %v2895 = vadd.f32 %v2632, %v2775
      %v2896 = vadd.f32 %v2633, %v2778
      %v2897 = vadd.f32 %v2634, %v2783
      %v2898 = vadd.f32 %v2635, %v2786
      %v2899 = vadd.f32 %v2636, %v2791
      %v2900 = vadd.f32 %v2637, %v2794
      %v2901 = vadd.f32 %v2638, %v2799
      %v2902 = vadd.f32 %v2639, %v2802
      %v2903 = vadd.f32 %v2640, %v2807
      %v2904 = vadd.f32 %v2641, %v2810
      %v2905 = vadd.f32 %v2642, %v2815
      %v2906 = vadd.f32 %v2643, %v2818
      %v2907 = vadd.f32 %v2644, %v2823
      %v2908 = vadd.f32 %v2645, %v2826
      %v2909 = vadd.f32 %v2646, %v2831
      %v2910 = vadd.f32 %v2647, %v2834
      %v2911 = vadd.f32 %v2648, %v2839
      %v2912 = vadd.f32 %v2649, %v2842
      %v2913 = vadd.f32 %v2650, %v2847
      %v2914 = vadd.f32 %v2651, %v2850
      %v2915 = vadd.f32 %v2652, %v2855
      %v2916 = vadd.f32 %v2653, %v2858
      %v2917 = vadd.f32 %v2654, %v2863
      %v2918 = vadd.f32 %v2655, %v2866
      %v2919 = vadd.f32 %v2656, %v2871
      %v2920 = vadd.f32 %v2657, %v2874
      %v2921 = vadd.f32 %v2658, %v2879
      %v2922 = vadd.f32 %v2659, %v2882
      %v2923 = vadd.f32 %v2660, %v2887
      %v2924 = vadd.f32 %v2661, %v2890
      %s2925 = scalar_lea.vmem [#allocation4], 152
      %v2926 = vld [vmem:[%s2925] sm:$0xff]
      %v2927 = vld [vmem:[%s2925 + $0x8] sm:$0xff]
      %v2928 = vld [vmem:[%s2925 + $0x10] sm:$0xff]
      %v2929 = vld [vmem:[%s2925 + $0x18] sm:$0xff]
      %v2930 = vld [vmem:[%s2925 + $0x20] sm:$0xff]
      %v2931 = vld [vmem:[%s2925 + $0x28] sm:$0xff]
      %v2932 = vld [vmem:[%s2925 + $0x30] sm:$0xff]
      %v2933 = vld [vmem:[%s2925 + $0x38] sm:$0xff]
      %v2934 = vld [vmem:[%s2925 + $0x40] sm:$0xff]
      %v2935 = vld [vmem:[%s2925 + $0x48] sm:$0xff]
      %v2936 = vld [vmem:[%s2925 + $0x50] sm:$0xff]
      %v2937 = vld [vmem:[%s2925 + $0x58] sm:$0xff]
      %v2938 = vld [vmem:[%s2925 + $0x60] sm:$0xff]
      %v2939 = vld [vmem:[%s2925 + $0x68] sm:$0xff]
      %v2940 = vld [vmem:[%s2925 + $0x70] sm:$0xff]
      %v2941 = vld [vmem:[%s2925 + $0x78] sm:$0xff]
      %s2942 = scalar_lea.vmem %s2, 16
      %v2943 = vld [vmem:[%s2942] sm:$0xf]
      %v2945 = vsel %vm1377, %v2926, 0
      %v2948 = vsel %vm1377, %v2927, 0
      %v2951 = vsel %vm1377, %v2928, 0
      %v2954 = vsel %vm1377, %v2929, 0
      %v2957 = vsel %vm1377, %v2930, 0
      %v2960 = vsel %vm1377, %v2931, 0
      %v2963 = vsel %vm1377, %v2932, 0
      %v2966 = vsel %vm1377, %v2933, 0
      %v2969 = vsel %vm1377, %v2934, 0
      %v2972 = vsel %vm1377, %v2935, 0
      %v2975 = vsel %vm1377, %v2936, 0
      %v2978 = vsel %vm1377, %v2937, 0
      %v2981 = vsel %vm1377, %v2938, 0
      %v2984 = vsel %vm1377, %v2939, 0
      %v2987 = vsel %vm1377, %v2940, 0
      %v2990 = vsel %vm1377, %v2941, 0
      %v2993 = vsel %vm2023, %v2943, 0
      %2995 = vmatprep.subr.bf16.mxu0 0
      %2996 = vmatpush1.bf16.msra.mxu0 %v2993
      %2997 = vmatprep.subr.bf16.mxu0 0
      %2998 = vmatpush1.bf16.msra.mxu0 0
      %2999 = vmatprep.subr.bf16.mxu0 0
      %3000 = vmatpush1.bf16.msra.mxu0 0
      %3001 = vmatprep.subr.bf16.mxu0 0
      %3002 = vmatpush1.bf16.msra.mxu0 0
      %3003 = vmatprep.subr.bf16.mxu0 0
      %3004 = vmatpush1.bf16.msra.mxu0 0
      %3005 = vmatprep.subr.bf16.mxu0 0
      %3006 = vmatpush1.bf16.msra.mxu0 0
      %3007 = vmatprep.subr.bf16.mxu0 0
      %3008 = vmatpush1.bf16.msra.mxu0 0
      %3009 = vmatprep.subr.bf16.mxu0 0
      %3010 = vmatpush1.bf16.msra.mxu0 0
      %3011 = vmatprep.subr.bf16.mxu0 0
      %3012 = vmatpush1.bf16.msra.mxu0 0
      %3013 = vmatprep.subr.bf16.mxu0 0
      %3014 = vmatpush1.bf16.msra.mxu0 0
      %3015 = vmatprep.subr.bf16.mxu0 0
      %3016 = vmatpush1.bf16.msra.mxu0 0
      %3017 = vmatprep.subr.bf16.mxu0 0
      %3018 = vmatpush1.bf16.msra.mxu0 0
      %3019 = vmatprep.subr.bf16.mxu0 0
      %3020 = vmatpush1.bf16.msra.mxu0 0
      %3021 = vmatprep.subr.bf16.mxu0 0
      %3022 = vmatpush1.bf16.msra.mxu0 0
      %3023 = vmatprep.subr.bf16.mxu0 0
      %3024 = vmatpush1.bf16.msra.mxu0 0
      %3025 = vmatprep.subr.bf16.mxu0 0
      %3026 = vmatpush1.bf16.msra.mxu0 0
      %3027 = vmatprep.mubr.bf16.mxu0 0
      %3028 = vmatmul.mubr.bf16.gmra.mrb[0].mxu0 %v2945
      %v3029 = vpop.f32.mrb[0].mxu0
      %v3030 = vadd.f32 0.0, %v3029
      %v3031 = vpop.f32.mrb[0].mxu0
      %v3032 = vpop.f32.mrb[0].mxu0
      %v3033 = vadd.f32 0.0, %v3032
      %v3034 = vpop.f32.mrb[0].mxu0
      %3035 = vmatprep.mubr.bf16.mxu0 0
      %3036 = vmatmul.mubr.bf16.gmra.mrb[0].mxu0 %v2948
      %v3037 = vpop.f32.mrb[0].mxu0
      %v3038 = vadd.f32 0.0, %v3037
      %v3039 = vpop.f32.mrb[0].mxu0
      %v3040 = vpop.f32.mrb[0].mxu0
      %v3041 = vadd.f32 0.0, %v3040
      %v3042 = vpop.f32.mrb[0].mxu0
      %3043 = vmatprep.mubr.bf16.mxu0 0
      %3044 = vmatmul.mubr.bf16.gmra.mrb[0].mxu0 %v2951
      %v3045 = vpop.f32.mrb[0].mxu0
      %v3046 = vadd.f32 0.0, %v3045
      %v3047 = vpop.f32.mrb[0].mxu0
      %v3048 = vpop.f32.mrb[0].mxu0
      %v3049 = vadd.f32 0.0, %v3048
      %v3050 = vpop.f32.mrb[0].mxu0
      %3051 = vmatprep.mubr.bf16.mxu0 0
      %3052 = vmatmul.mubr.bf16.gmra.mrb[0].mxu0 %v2954
      %v3053 = vpop.f32.mrb[0].mxu0
      %v3054 = vadd.f32 0.0, %v3053
      %v3055 = vpop.f32.mrb[0].mxu0
      %v3056 = vpop.f32.mrb[0].mxu0
      %v3057 = vadd.f32 0.0, %v3056
      %v3058 = vpop.f32.mrb[0].mxu0
      %3059 = vmatprep.mubr.bf16.mxu0 0
      %3060 = vmatmul.mubr.bf16.gmra.mrb[0].mxu0 %v2957
      %v3061 = vpop.f32.mrb[0].mxu0
      %v3062 = vadd.f32 0.0, %v3061
      %v3063 = vpop.f32.mrb[0].mxu0
      %v3064 = vpop.f32.mrb[0].mxu0
      %v3065 = vadd.f32 0.0, %v3064
      %v3066 = vpop.f32.mrb[0].mxu0
      %3067 = vmatprep.mubr.bf16.mxu0 0
      %3068 = vmatmul.mubr.bf16.gmra.mrb[0].mxu0 %v2960
      %v3069 = vpop.f32.mrb[0].mxu0
      %v3070 = vadd.f32 0.0, %v3069
      %v3071 = vpop.f32.mrb[0].mxu0
      %v3072 = vpop.f32.mrb[0].mxu0
      %v3073 = vadd.f32 0.0, %v3072
      %v3074 = vpop.f32.mrb[0].mxu0
      %3075 = vmatprep.mubr.bf16.mxu0 0
      %3076 = vmatmul.mubr.bf16.gmra.mrb[0].mxu0 %v2963
      %v3077 = vpop.f32.mrb[0].mxu0
      %v3078 = vadd.f32 0.0, %v3077
      %v3079 = vpop.f32.mrb[0].mxu0
      %v3080 = vpop.f32.mrb[0].mxu0
      %v3081 = vadd.f32 0.0, %v3080
      %v3082 = vpop.f32.mrb[0].mxu0
      %3083 = vmatprep.mubr.bf16.mxu0 0
      %3084 = vmatmul.mubr.bf16.gmra.mrb[0].mxu0 %v2966
      %v3085 = vpop.f32.mrb[0].mxu0
      %v3086 = vadd.f32 0.0, %v3085
      %v3087 = vpop.f32.mrb[0].mxu0
      %v3088 = vpop.f32.mrb[0].mxu0
      %v3089 = vadd.f32 0.0, %v3088
      %v3090 = vpop.f32.mrb[0].mxu0
      %3091 = vmatprep.mubr.bf16.mxu0 0
      %3092 = vmatmul.mubr.bf16.gmra.mrb[0].mxu0 %v2969
      %v3093 = vpop.f32.mrb[0].mxu0
      %v3094 = vadd.f32 0.0, %v3093
      %v3095 = vpop.f32.mrb[0].mxu0
      %v3096 = vpop.f32.mrb[0].mxu0
      %v3097 = vadd.f32 0.0, %v3096
      %v3098 = vpop.f32.mrb[0].mxu0
      %3099 = vmatprep.mubr.bf16.mxu0 0
      %3100 = vmatmul.mubr.bf16.gmra.mrb[0].mxu0 %v2972
      %v3101 = vpop.f32.mrb[0].mxu0
      %v3102 = vadd.f32 0.0, %v3101
      %v3103 = vpop.f32.mrb[0].mxu0
      %v3104 = vpop.f32.mrb[0].mxu0
      %v3105 = vadd.f32 0.0, %v3104
      %v3106 = vpop.f32.mrb[0].mxu0
      %3107 = vmatprep.mubr.bf16.mxu0 0
      %3108 = vmatmul.mubr.bf16.gmra.mrb[0].mxu0 %v2975
      %v3109 = vpop.f32.mrb[0].mxu0
      %v3110 = vadd.f32 0.0, %v3109
      %v3111 = vpop.f32.mrb[0].mxu0
      %v3112 = vpop.f32.mrb[0].mxu0
      %v3113 = vadd.f32 0.0, %v3112
      %v3114 = vpop.f32.mrb[0].mxu0
      %3115 = vmatprep.mubr.bf16.mxu0 0
      %3116 = vmatmul.mubr.bf16.gmra.mrb[0].mxu0 %v2978
      %v3117 = vpop.f32.mrb[0].mxu0
      %v3118 = vadd.f32 0.0, %v3117
      %v3119 = vpop.f32.mrb[0].mxu0
      %v3120 = vpop.f32.mrb[0].mxu0
      %v3121 = vadd.f32 0.0, %v3120
      %v3122 = vpop.f32.mrb[0].mxu0
      %3123 = vmatprep.mubr.bf16.mxu0 0
      %3124 = vmatmul.mubr.bf16.gmra.mrb[0].mxu0 %v2981
      %v3125 = vpop.f32.mrb[0].mxu0
      %v3126 = vadd.f32 0.0, %v3125
      %v3127 = vpop.f32.mrb[0].mxu0
      %v3128 = vpop.f32.mrb[0].mxu0
      %v3129 = vadd.f32 0.0, %v3128
      %v3130 = vpop.f32.mrb[0].mxu0
      %3131 = vmatprep.mubr.bf16.mxu0 0
      %3132 = vmatmul.mubr.bf16.gmra.mrb[0].mxu0 %v2984
      %v3133 = vpop.f32.mrb[0].mxu0
      %v3134 = vadd.f32 0.0, %v3133
      %v3135 = vpop.f32.mrb[0].mxu0
      %v3136 = vpop.f32.mrb[0].mxu0
      %v3137 = vadd.f32 0.0, %v3136
      %v3138 = vpop.f32.mrb[0].mxu0
      %3139 = vmatprep.mubr.bf16.mxu0 0
      %3140 = vmatmul.mubr.bf16.gmra.mrb[0].mxu0 %v2987
      %v3141 = vpop.f32.mrb[0].mxu0
      %v3142 = vadd.f32 0.0, %v3141
      %v3143 = vpop.f32.mrb[0].mxu0
      %v3144 = vpop.f32.mrb[0].mxu0
      %v3145 = vadd.f32 0.0, %v3144
      %v3146 = vpop.f32.mrb[0].mxu0
      %3147 = vmatprep.mubr.bf16.mxu0 0
      %3148 = vmatmul.mubr.bf16.gmra.mrb[0].mxu0 %v2990
      %v3149 = vpop.f32.mrb[0].mxu0
      %v3150 = vadd.f32 0.0, %v3149
      %v3151 = vpop.f32.mrb[0].mxu0
      %v3152 = vpop.f32.mrb[0].mxu0
      %v3153 = vadd.f32 0.0, %v3152
      %v3154 = vpop.f32.mrb[0].mxu0
      %3155 = vdwg.mxu0
      %v3156 = vadd.f32 %v2893, %v3030
      %v3157 = vadd.f32 %v2894, %v3033
      %v3158 = vadd.f32 %v2895, %v3038
      %v3159 = vadd.f32 %v2896, %v3041
      %v3160 = vadd.f32 %v2897, %v3046
      %v3161 = vadd.f32 %v2898, %v3049
      %v3162 = vadd.f32 %v2899, %v3054
      %v3163 = vadd.f32 %v2900, %v3057
      %v3164 = vadd.f32 %v2901, %v3062
      %v3165 = vadd.f32 %v2902, %v3065
      %v3166 = vadd.f32 %v2903, %v3070
      %v3167 = vadd.f32 %v2904, %v3073
      %v3168 = vadd.f32 %v2905, %v3078
      %v3169 = vadd.f32 %v2906, %v3081
      %v3170 = vadd.f32 %v2907, %v3086
      %v3171 = vadd.f32 %v2908, %v3089
      %v3172 = vadd.f32 %v2909, %v3094
      %v3173 = vadd.f32 %v2910, %v3097
      %v3174 = vadd.f32 %v2911, %v3102
      %v3175 = vadd.f32 %v2912, %v3105
      %v3176 = vadd.f32 %v2913, %v3110
      %v3177 = vadd.f32 %v2914, %v3113
      %v3178 = vadd.f32 %v2915, %v3118
      %v3179 = vadd.f32 %v2916, %v3121
      %v3180 = vadd.f32 %v2917, %v3126
      %v3181 = vadd.f32 %v2918, %v3129
      %v3182 = vadd.f32 %v2919, %v3134
      %v3183 = vadd.f32 %v2920, %v3137
      %v3184 = vadd.f32 %v2921, %v3142
      %v3185 = vadd.f32 %v2922, %v3145
      %v3186 = vadd.f32 %v2923, %v3150
      %v3187 = vadd.f32 %v2924, %v3153
      %s3188 = scalar_lea.vmem [#allocation4], 296
      %v3189 = vld [vmem:[%s3188] sm:$0xff]
      %v3190 = vld [vmem:[%s3188 + $0x8] sm:$0xff]
      %v3191 = vld [vmem:[%s3188 + $0x10] sm:$0xff]
      %v3192 = vld [vmem:[%s3188 + $0x18] sm:$0xff]
      %v3193 = vld [vmem:[%s3188 + $0x20] sm:$0xff]
      %v3194 = vld [vmem:[%s3188 + $0x28] sm:$0xff]
      %v3195 = vld [vmem:[%s3188 + $0x30] sm:$0xff]
      %v3196 = vld [vmem:[%s3188 + $0x38] sm:$0xff]
      %v3197 = vld [vmem:[%s3188 + $0x40] sm:$0xff]
      %v3198 = vld [vmem:[%s3188 + $0x48] sm:$0xff]
      %v3199 = vld [vmem:[%s3188 + $0x50] sm:$0xff]
      %v3200 = vld [vmem:[%s3188 + $0x58] sm:$0xff]
      %v3201 = vld [vmem:[%s3188 + $0x60] sm:$0xff]
      %v3202 = vld [vmem:[%s3188 + $0x68] sm:$0xff]
      %v3203 = vld [vmem:[%s3188 + $0x70] sm:$0xff]
      %v3204 = vld [vmem:[%s3188 + $0x78] sm:$0xff]
      %s3205 = scalar_lea.vmem %s2, 20
      %v3206 = vld [vmem:[%s3205] sm:$0xf]
      %v3208 = vsel %vm1377, %v3189, 0
      %v3211 = vsel %vm1377, %v3190, 0
      %v3214 = vsel %vm1377, %v3191, 0
      %v3217 = vsel %vm1377, %v3192, 0
      %v3220 = vsel %vm1377, %v3193, 0
      %v3223 = vsel %vm1377, %v3194, 0
      %v3226 = vsel %vm1377, %v3195, 0
      %v3229 = vsel %vm1377, %v3196, 0
      %v3232 = vsel %vm1377, %v3197, 0
      %v3235 = vsel %vm1377, %v3198, 0
      %v3238 = vsel %vm1377, %v3199, 0
      %v3241 = vsel %vm1377, %v3200, 0
      %v3244 = vsel %vm1377, %v3201, 0
      %v3247 = vsel %vm1377, %v3202, 0
      %v3250 = vsel %vm1377, %v3203, 0
      %v3253 = vsel %vm1377, %v3204, 0
      %v3256 = vsel %vm2023, %v3206, 0
      %3258 = vmatprep.subr.bf16.mxu0 0
      %3259 = vmatpush1.bf16.msra.mxu0 %v3256
      %3260 = vmatprep.subr.bf16.mxu0 0
      %3261 = vmatpush1.bf16.msra.mxu0 0
      %3262 = vmatprep.subr.bf16.mxu0 0
      %3263 = vmatpush1.bf16.msra.mxu0 0
      %3264 = vmatprep.subr.bf16.mxu0 0
      %3265 = vmatpush1.bf16.msra.mxu0 0
      %3266 = vmatprep.subr.bf16.mxu0 0
      %3267 = vmatpush1.bf16.msra.mxu0 0
      %3268 = vmatprep.subr.bf16.mxu0 0
      %3269 = vmatpush1.bf16.msra.mxu0 0
      %3270 = vmatprep.subr.bf16.mxu0 0
      %3271 = vmatpush1.bf16.msra.mxu0 0
      %3272 = vmatprep.subr.bf16.mxu0 0
      %3273 = vmatpush1.bf16.msra.mxu0 0
      %3274 = vmatprep.subr.bf16.mxu0 0
      %3275 = vmatpush1.bf16.msra.mxu0 0
      %3276 = vmatprep.subr.bf16.mxu0 0
      %3277 = vmatpush1.bf16.msra.mxu0 0
      %3278 = vmatprep.subr.bf16.mxu0 0
      %3279 = vmatpush1.bf16.msra.mxu0 0
      %3280 = vmatprep.subr.bf16.mxu0 0
      %3281 = vmatpush1.bf16.msra.mxu0 0
      %3282 = vmatprep.subr.bf16.mxu0 0
      %3283 = vmatpush1.bf16.msra.mxu0 0
      %3284 = vmatprep.subr.bf16.mxu0 0
      %3285 = vmatpush1.bf16.msra.mxu0 0
      %3286 = vmatprep.subr.bf16.mxu0 0
      %3287 = vmatpush1.bf16.msra.mxu0 0
      %3288 = vmatprep.subr.bf16.mxu0 0
      %3289 = vmatpush1.bf16.msra.mxu0 0
      %3290 = vmatprep.mubr.bf16.mxu0 0
      %3291 = vmatmul.mubr.bf16.gmra.mrb[0].mxu0 %v3208
      %v3292 = vpop.f32.mrb[0].mxu0
      %v3293 = vadd.f32 0.0, %v3292
      %v3294 = vpop.f32.mrb[0].mxu0
      %v3295 = vpop.f32.mrb[0].mxu0
      %v3296 = vadd.f32 0.0, %v3295
      %v3297 = vpop.f32.mrb[0].mxu0
      %3298 = vmatprep.mubr.bf16.mxu0 0
      %3299 = vmatmul.mubr.bf16.gmra.mrb[0].mxu0 %v3211
      %v3300 = vpop.f32.mrb[0].mxu0
      %v3301 = vadd.f32 0.0, %v3300
      %v3302 = vpop.f32.mrb[0].mxu0
      %v3303 = vpop.f32.mrb[0].mxu0
      %v3304 = vadd.f32 0.0, %v3303
      %v3305 = vpop.f32.mrb[0].mxu0
      %3306 = vmatprep.mubr.bf16.mxu0 0
      %3307 = vmatmul.mubr.bf16.gmra.mrb[0].mxu0 %v3214
      %v3308 = vpop.f32.mrb[0].mxu0
      %v3309 = vadd.f32 0.0, %v3308
      %v3310 = vpop.f32.mrb[0].mxu0
      %v3311 = vpop.f32.mrb[0].mxu0
      %v3312 = vadd.f32 0.0, %v3311
      %v3313 = vpop.f32.mrb[0].mxu0
      %3314 = vmatprep.mubr.bf16.mxu0 0
      %3315 = vmatmul.mubr.bf16.gmra.mrb[0].mxu0 %v3217
      %v3316 = vpop.f32.mrb[0].mxu0
      %v3317 = vadd.f32 0.0, %v3316
      %v3318 = vpop.f32.mrb[0].mxu0
      %v3319 = vpop.f32.mrb[0].mxu0
      %v3320 = vadd.f32 0.0, %v3319
      %v3321 = vpop.f32.mrb[0].mxu0
      %3322 = vmatprep.mubr.bf16.mxu0 0
      %3323 = vmatmul.mubr.bf16.gmra.mrb[0].mxu0 %v3220
      %v3324 = vpop.f32.mrb[0].mxu0
      %v3325 = vadd.f32 0.0, %v3324
      %v3326 = vpop.f32.mrb[0].mxu0
      %v3327 = vpop.f32.mrb[0].mxu0
      %v3328 = vadd.f32 0.0, %v3327
      %v3329 = vpop.f32.mrb[0].mxu0
      %3330 = vmatprep.mubr.bf16.mxu0 0
      %3331 = vmatmul.mubr.bf16.gmra.mrb[0].mxu0 %v3223
      %v3332 = vpop.f32.mrb[0].mxu0
      %v3333 = vadd.f32 0.0, %v3332
      %v3334 = vpop.f32.mrb[0].mxu0
      %v3335 = vpop.f32.mrb[0].mxu0
      %v3336 = vadd.f32 0.0, %v3335
      %v3337 = vpop.f32.mrb[0].mxu0
      %3338 = vmatprep.mubr.bf16.mxu0 0
      %3339 = vmatmul.mubr.bf16.gmra.mrb[0].mxu0 %v3226
      %v3340 = vpop.f32.mrb[0].mxu0
      %v3341 = vadd.f32 0.0, %v3340
      %v3342 = vpop.f32.mrb[0].mxu0
      %v3343 = vpop.f32.mrb[0].mxu0
      %v3344 = vadd.f32 0.0, %v3343
      %v3345 = vpop.f32.mrb[0].mxu0
      %3346 = vmatprep.mubr.bf16.mxu0 0
      %3347 = vmatmul.mubr.bf16.gmra.mrb[0].mxu0 %v3229
      %v3348 = vpop.f32.mrb[0].mxu0
      %v3349 = vadd.f32 0.0, %v3348
      %v3350 = vpop.f32.mrb[0].mxu0
      %v3351 = vpop.f32.mrb[0].mxu0
      %v3352 = vadd.f32 0.0, %v3351
      %v3353 = vpop.f32.mrb[0].mxu0
      %3354 = vmatprep.mubr.bf16.mxu0 0
      %3355 = vmatmul.mubr.bf16.gmra.mrb[0].mxu0 %v3232
      %v3356 = vpop.f32.mrb[0].mxu0
      %v3357 = vadd.f32 0.0, %v3356
      %v3358 = vpop.f32.mrb[0].mxu0
      %v3359 = vpop.f32.mrb[0].mxu0
      %v3360 = vadd.f32 0.0, %v3359
      %v3361 = vpop.f32.mrb[0].mxu0
      %3362 = vmatprep.mubr.bf16.mxu0 0
      %3363 = vmatmul.mubr.bf16.gmra.mrb[0].mxu0 %v3235
      %v3364 = vpop.f32.mrb[0].mxu0
      %v3365 = vadd.f32 0.0, %v3364
      %v3366 = vpop.f32.mrb[0].mxu0
      %v3367 = vpop.f32.mrb[0].mxu0
      %v3368 = vadd.f32 0.0, %v3367
      %v3369 = vpop.f32.mrb[0].mxu0
      %3370 = vmatprep.mubr.bf16.mxu0 0
      %3371 = vmatmul.mubr.bf16.gmra.mrb[0].mxu0 %v3238
      %v3372 = vpop.f32.mrb[0].mxu0
      %v3373 = vadd.f32 0.0, %v3372
      %v3374 = vpop.f32.mrb[0].mxu0
      %v3375 = vpop.f32.mrb[0].mxu0
      %v3376 = vadd.f32 0.0, %v3375
      %v3377 = vpop.f32.mrb[0].mxu0
      %3378 = vmatprep.mubr.bf16.mxu0 0
      %3379 = vmatmul.mubr.bf16.gmra.mrb[0].mxu0 %v3241
      %v3380 = vpop.f32.mrb[0].mxu0
      %v3381 = vadd.f32 0.0, %v3380
      %v3382 = vpop.f32.mrb[0].mxu0
      %v3383 = vpop.f32.mrb[0].mxu0
      %v3384 = vadd.f32 0.0, %v3383
      %v3385 = vpop.f32.mrb[0].mxu0
      %3386 = vmatprep.mubr.bf16.mxu0 0
      %3387 = vmatmul.mubr.bf16.gmra.mrb[0].mxu0 %v3244
      %v3388 = vpop.f32.mrb[0].mxu0
      %v3389 = vadd.f32 0.0, %v3388
      %v3390 = vpop.f32.mrb[0].mxu0
      %v3391 = vpop.f32.mrb[0].mxu0
      %v3392 = vadd.f32 0.0, %v3391
      %v3393 = vpop.f32.mrb[0].mxu0
      %3394 = vmatprep.mubr.bf16.mxu0 0
      %3395 = vmatmul.mubr.bf16.gmra.mrb[0].mxu0 %v3247
      %v3396 = vpop.f32.mrb[0].mxu0
      %v3397 = vadd.f32 0.0, %v3396
      %v3398 = vpop.f32.mrb[0].mxu0
      %v3399 = vpop.f32.mrb[0].mxu0
      %v3400 = vadd.f32 0.0, %v3399
      %v3401 = vpop.f32.mrb[0].mxu0
      %3402 = vmatprep.mubr.bf16.mxu0 0
      %3403 = vmatmul.mubr.bf16.gmra.mrb[0].mxu0 %v3250
      %v3404 = vpop.f32.mrb[0].mxu0
      %v3405 = vadd.f32 0.0, %v3404
      %v3406 = vpop.f32.mrb[0].mxu0
      %v3407 = vpop.f32.mrb[0].mxu0
      %v3408 = vadd.f32 0.0, %v3407
      %v3409 = vpop.f32.mrb[0].mxu0
      %3410 = vmatprep.mubr.bf16.mxu0 0
      %3411 = vmatmul.mubr.bf16.gmra.mrb[0].mxu0 %v3253
      %v3412 = vpop.f32.mrb[0].mxu0
      %v3413 = vadd.f32 0.0, %v3412
      %v3414 = vpop.f32.mrb[0].mxu0
      %v3415 = vpop.f32.mrb[0].mxu0
      %v3416 = vadd.f32 0.0, %v3415
      %v3417 = vpop.f32.mrb[0].mxu0
      %3418 = vdwg.mxu0
      %v3419 = vadd.f32 %v3156, %v3293
      %v3420 = vadd.f32 %v3157, %v3296
      %v3421 = vadd.f32 %v3158, %v3301
      %v3422 = vadd.f32 %v3159, %v3304
      %v3423 = vadd.f32 %v3160, %v3309
      %v3424 = vadd.f32 %v3161, %v3312
      %v3425 = vadd.f32 %v3162, %v3317
      %v3426 = vadd.f32 %v3163, %v3320
      %v3427 = vadd.f32 %v3164, %v3325
      %v3428 = vadd.f32 %v3165, %v3328
      %v3429 = vadd.f32 %v3166, %v3333
      %v3430 = vadd.f32 %v3167, %v3336
      %v3431 = vadd.f32 %v3168, %v3341
      %v3432 = vadd.f32 %v3169, %v3344
      %v3433 = vadd.f32 %v3170, %v3349
      %v3434 = vadd.f32 %v3171, %v3352
      %v3435 = vadd.f32 %v3172, %v3357
      %v3436 = vadd.f32 %v3173, %v3360
      %v3437 = vadd.f32 %v3174, %v3365
      %v3438 = vadd.f32 %v3175, %v3368
      %v3439 = vadd.f32 %v3176, %v3373
      %v3440 = vadd.f32 %v3177, %v3376
      %v3441 = vadd.f32 %v3178, %v3381
      %v3442 = vadd.f32 %v3179, %v3384
      %v3443 = vadd.f32 %v3180, %v3389
      %v3444 = vadd.f32 %v3181, %v3392
      %v3445 = vadd.f32 %v3182, %v3397
      %v3446 = vadd.f32 %v3183, %v3400
      %v3447 = vadd.f32 %v3184, %v3405
      %v3448 = vadd.f32 %v3185, %v3408
      %v3449 = vadd.f32 %v3186, %v3413
      %v3450 = vadd.f32 %v3187, %v3416
      %s3451 = scalar_lea.vmem [#allocation4], 16
      %v3452 = vld [vmem:[%s3451] sm:$0xff]
      %v3453 = vld [vmem:[%s3451 + $0x8] sm:$0xff]
      %v3454 = vld [vmem:[%s3451 + $0x10] sm:$0xff]
      %v3455 = vld [vmem:[%s3451 + $0x18] sm:$0xff]
      %v3456 = vld [vmem:[%s3451 + $0x20] sm:$0xff]
      %v3457 = vld [vmem:[%s3451 + $0x28] sm:$0xff]
      %v3458 = vld [vmem:[%s3451 + $0x30] sm:$0xff]
      %v3459 = vld [vmem:[%s3451 + $0x38] sm:$0xff]
      %v3460 = vld [vmem:[%s3451 + $0x40] sm:$0xff]
      %v3461 = vld [vmem:[%s3451 + $0x48] sm:$0xff]
      %v3462 = vld [vmem:[%s3451 + $0x50] sm:$0xff]
      %v3463 = vld [vmem:[%s3451 + $0x58] sm:$0xff]
      %v3464 = vld [vmem:[%s3451 + $0x60] sm:$0xff]
      %v3465 = vld [vmem:[%s3451 + $0x68] sm:$0xff]
      %v3466 = vld [vmem:[%s3451 + $0x70] sm:$0xff]
      %v3467 = vld [vmem:[%s3451 + $0x78] sm:$0xff]
      %s3468 = scalar_lea.vmem %s2, 24
      %v3469 = vld [vmem:[%s3468] sm:$0xf]
      %v3471 = vsel %vm1377, %v3452, 0
      %v3474 = vsel %vm1377, %v3453, 0
      %v3477 = vsel %vm1377, %v3454, 0
      %v3480 = vsel %vm1377, %v3455, 0
      %v3483 = vsel %vm1377, %v3456, 0
      %v3486 = vsel %vm1377, %v3457, 0
      %v3489 = vsel %vm1377, %v3458, 0
      %v3492 = vsel %vm1377, %v3459, 0
      %v3495 = vsel %vm1377, %v3460, 0
      %v3498 = vsel %vm1377, %v3461, 0
      %v3501 = vsel %vm1377, %v3462, 0
      %v3504 = vsel %vm1377, %v3463, 0
      %v3507 = vsel %vm1377, %v3464, 0
      %v3510 = vsel %vm1377, %v3465, 0
      %v3513 = vsel %vm1377, %v3466, 0
      %v3516 = vsel %vm1377, %v3467, 0
      %v3519 = vsel %vm2023, %v3469, 0
      %3521 = vmatprep.subr.bf16.mxu0 0
      %3522 = vmatpush1.bf16.msra.mxu0 %v3519
      %3523 = vmatprep.subr.bf16.mxu0 0
      %3524 = vmatpush1.bf16.msra.mxu0 0
      %3525 = vmatprep.subr.bf16.mxu0 0
      %3526 = vmatpush1.bf16.msra.mxu0 0
      %3527 = vmatprep.subr.bf16.mxu0 0
      %3528 = vmatpush1.bf16.msra.mxu0 0
      %3529 = vmatprep.subr.bf16.mxu0 0
      %3530 = vmatpush1.bf16.msra.mxu0 0
      %3531 = vmatprep.subr.bf16.mxu0 0
      %3532 = vmatpush1.bf16.msra.mxu0 0
      %3533 = vmatprep.subr.bf16.mxu0 0
      %3534 = vmatpush1.bf16.msra.mxu0 0
      %3535 = vmatprep.subr.bf16.mxu0 0
      %3536 = vmatpush1.bf16.msra.mxu0 0
      %3537 = vmatprep.subr.bf16.mxu0 0
      %3538 = vmatpush1.bf16.msra.mxu0 0
      %3539 = vmatprep.subr.bf16.mxu0 0
      %3540 = vmatpush1.bf16.msra.mxu0 0
      %3541 = vmatprep.subr.bf16.mxu0 0
      %3542 = vmatpush1.bf16.msra.mxu0 0
      %3543 = vmatprep.subr.bf16.mxu0 0
      %3544 = vmatpush1.bf16.msra.mxu0 0
      %3545 = vmatprep.subr.bf16.mxu0 0
      %3546 = vmatpush1.bf16.msra.mxu0 0
      %3547 = vmatprep.subr.bf16.mxu0 0
      %3548 = vmatpush1.bf16.msra.mxu0 0
      %3549 = vmatprep.subr.bf16.mxu0 0
      %3550 = vmatpush1.bf16.msra.mxu0 0
      %3551 = vmatprep.subr.bf16.mxu0 0
      %3552 = vmatpush1.bf16.msra.mxu0 0
      %3553 = vmatprep.mubr.bf16.mxu0 0
      %3554 = vmatmul.mubr.bf16.gmra.mrb[0].mxu0 %v3471
      %v3555 = vpop.f32.mrb[0].mxu0
      %v3556 = vadd.f32 0.0, %v3555
      %v3557 = vpop.f32.mrb[0].mxu0
      %v3558 = vpop.f32.mrb[0].mxu0
      %v3559 = vadd.f32 0.0, %v3558
      %v3560 = vpop.f32.mrb[0].mxu0
      %3561 = vmatprep.mubr.bf16.mxu0 0
      %3562 = vmatmul.mubr.bf16.gmra.mrb[0].mxu0 %v3474
      %v3563 = vpop.f32.mrb[0].mxu0
      %v3564 = vadd.f32 0.0, %v3563
      %v3565 = vpop.f32.mrb[0].mxu0
      %v3566 = vpop.f32.mrb[0].mxu0
      %v3567 = vadd.f32 0.0, %v3566
      %v3568 = vpop.f32.mrb[0].mxu0
      %3569 = vmatprep.mubr.bf16.mxu0 0
      %3570 = vmatmul.mubr.bf16.gmra.mrb[0].mxu0 %v3477
      %v3571 = vpop.f32.mrb[0].mxu0
      %v3572 = vadd.f32 0.0, %v3571
      %v3573 = vpop.f32.mrb[0].mxu0
      %v3574 = vpop.f32.mrb[0].mxu0
      %v3575 = vadd.f32 0.0, %v3574
      %v3576 = vpop.f32.mrb[0].mxu0
      %3577 = vmatprep.mubr.bf16.mxu0 0
      %3578 = vmatmul.mubr.bf16.gmra.mrb[0].mxu0 %v3480
      %v3579 = vpop.f32.mrb[0].mxu0
      %v3580 = vadd.f32 0.0, %v3579
      %v3581 = vpop.f32.mrb[0].mxu0
      %v3582 = vpop.f32.mrb[0].mxu0
      %v3583 = vadd.f32 0.0, %v3582
      %v3584 = vpop.f32.mrb[0].mxu0
      %3585 = vmatprep.mubr.bf16.mxu0 0
      %3586 = vmatmul.mubr.bf16.gmra.mrb[0].mxu0 %v3483
      %v3587 = vpop.f32.mrb[0].mxu0
      %v3588 = vadd.f32 0.0, %v3587
      %v3589 = vpop.f32.mrb[0].mxu0
      %v3590 = vpop.f32.mrb[0].mxu0
      %v3591 = vadd.f32 0.0, %v3590
      %v3592 = vpop.f32.mrb[0].mxu0
      %3593 = vmatprep.mubr.bf16.mxu0 0
      %3594 = vmatmul.mubr.bf16.gmra.mrb[0].mxu0 %v3486
      %v3595 = vpop.f32.mrb[0].mxu0
      %v3596 = vadd.f32 0.0, %v3595
      %v3597 = vpop.f32.mrb[0].mxu0
      %v3598 = vpop.f32.mrb[0].mxu0
      %v3599 = vadd.f32 0.0, %v3598
      %v3600 = vpop.f32.mrb[0].mxu0
      %3601 = vmatprep.mubr.bf16.mxu0 0
      %3602 = vmatmul.mubr.bf16.gmra.mrb[0].mxu0 %v3489
      %v3603 = vpop.f32.mrb[0].mxu0
      %v3604 = vadd.f32 0.0, %v3603
      %v3605 = vpop.f32.mrb[0].mxu0
      %v3606 = vpop.f32.mrb[0].mxu0
      %v3607 = vadd.f32 0.0, %v3606
      %v3608 = vpop.f32.mrb[0].mxu0
      %3609 = vmatprep.mubr.bf16.mxu0 0
      %3610 = vmatmul.mubr.bf16.gmra.mrb[0].mxu0 %v3492
      %v3611 = vpop.f32.mrb[0].mxu0
      %v3612 = vadd.f32 0.0, %v3611
      %v3613 = vpop.f32.mrb[0].mxu0
      %v3614 = vpop.f32.mrb[0].mxu0
      %v3615 = vadd.f32 0.0, %v3614
      %v3616 = vpop.f32.mrb[0].mxu0
      %3617 = vmatprep.mubr.bf16.mxu0 0
      %3618 = vmatmul.mubr.bf16.gmra.mrb[0].mxu0 %v3495
      %v3619 = vpop.f32.mrb[0].mxu0
      %v3620 = vadd.f32 0.0, %v3619
      %v3621 = vpop.f32.mrb[0].mxu0
      %v3622 = vpop.f32.mrb[0].mxu0
      %v3623 = vadd.f32 0.0, %v3622
      %v3624 = vpop.f32.mrb[0].mxu0
      %3625 = vmatprep.mubr.bf16.mxu0 0
      %3626 = vmatmul.mubr.bf16.gmra.mrb[0].mxu0 %v3498
      %v3627 = vpop.f32.mrb[0].mxu0
      %v3628 = vadd.f32 0.0, %v3627
      %v3629 = vpop.f32.mrb[0].mxu0
      %v3630 = vpop.f32.mrb[0].mxu0
      %v3631 = vadd.f32 0.0, %v3630
      %v3632 = vpop.f32.mrb[0].mxu0
      %3633 = vmatprep.mubr.bf16.mxu0 0
      %3634 = vmatmul.mubr.bf16.gmra.mrb[0].mxu0 %v3501
      %v3635 = vpop.f32.mrb[0].mxu0
      %v3636 = vadd.f32 0.0, %v3635
      %v3637 = vpop.f32.mrb[0].mxu0
      %v3638 = vpop.f32.mrb[0].mxu0
      %v3639 = vadd.f32 0.0, %v3638
      %v3640 = vpop.f32.mrb[0].mxu0
      %3641 = vmatprep.mubr.bf16.mxu0 0
      %3642 = vmatmul.mubr.bf16.gmra.mrb[0].mxu0 %v3504
      %v3643 = vpop.f32.mrb[0].mxu0
      %v3644 = vadd.f32 0.0, %v3643
      %v3645 = vpop.f32.mrb[0].mxu0
      %v3646 = vpop.f32.mrb[0].mxu0
      %v3647 = vadd.f32 0.0, %v3646
      %v3648 = vpop.f32.mrb[0].mxu0
      %3649 = vmatprep.mubr.bf16.mxu0 0
      %3650 = vmatmul.mubr.bf16.gmra.mrb[0].mxu0 %v3507
      %v3651 = vpop.f32.mrb[0].mxu0
      %v3652 = vadd.f32 0.0, %v3651
      %v3653 = vpop.f32.mrb[0].mxu0
      %v3654 = vpop.f32.mrb[0].mxu0
      %v3655 = vadd.f32 0.0, %v3654
      %v3656 = vpop.f32.mrb[0].mxu0
      %3657 = vmatprep.mubr.bf16.mxu0 0
      %3658 = vmatmul.mubr.bf16.gmra.mrb[0].mxu0 %v3510
      %v3659 = vpop.f32.mrb[0].mxu0
      %v3660 = vadd.f32 0.0, %v3659
      %v3661 = vpop.f32.mrb[0].mxu0
      %v3662 = vpop.f32.mrb[0].mxu0
      %v3663 = vadd.f32 0.0, %v3662
      %v3664 = vpop.f32.mrb[0].mxu0
      %3665 = vmatprep.mubr.bf16.mxu0 0
      %3666 = vmatmul.mubr.bf16.gmra.mrb[0].mxu0 %v3513
      %v3667 = vpop.f32.mrb[0].mxu0
      %v3668 = vadd.f32 0.0, %v3667
      %v3669 = vpop.f32.mrb[0].mxu0
      %v3670 = vpop.f32.mrb[0].mxu0
      %v3671 = vadd.f32 0.0, %v3670
      %v3672 = vpop.f32.mrb[0].mxu0
      %3673 = vmatprep.mubr.bf16.mxu0 0
      %3674 = vmatmul.mubr.bf16.gmra.mrb[0].mxu0 %v3516
      %v3675 = vpop.f32.mrb[0].mxu0
      %v3676 = vadd.f32 0.0, %v3675
      %v3677 = vpop.f32.mrb[0].mxu0
      %v3678 = vpop.f32.mrb[0].mxu0
      %v3679 = vadd.f32 0.0, %v3678
      %v3680 = vpop.f32.mrb[0].mxu0
      %3681 = vdwg.mxu0
      %v3682 = vadd.f32 %v3419, %v3556
      %v3683 = vadd.f32 %v3420, %v3559
      %v3684 = vadd.f32 %v3421, %v3564
      %v3685 = vadd.f32 %v3422, %v3567
      %v3686 = vadd.f32 %v3423, %v3572
      %v3687 = vadd.f32 %v3424, %v3575
      %v3688 = vadd.f32 %v3425, %v3580
      %v3689 = vadd.f32 %v3426, %v3583
      %v3690 = vadd.f32 %v3427, %v3588
      %v3691 = vadd.f32 %v3428, %v3591
      %v3692 = vadd.f32 %v3429, %v3596
      %v3693 = vadd.f32 %v3430, %v3599
      %v3694 = vadd.f32 %v3431, %v3604
      %v3695 = vadd.f32 %v3432, %v3607
      %v3696 = vadd.f32 %v3433, %v3612
      %v3697 = vadd.f32 %v3434, %v3615
      %v3698 = vadd.f32 %v3435, %v3620
      %v3699 = vadd.f32 %v3436, %v3623
      %v3700 = vadd.f32 %v3437, %v3628
      %v3701 = vadd.f32 %v3438, %v3631
      %v3702 = vadd.f32 %v3439, %v3636
      %v3703 = vadd.f32 %v3440, %v3639
      %v3704 = vadd.f32 %v3441, %v3644
      %v3705 = vadd.f32 %v3442, %v3647
      %v3706 = vadd.f32 %v3443, %v3652
      %v3707 = vadd.f32 %v3444, %v3655
      %v3708 = vadd.f32 %v3445, %v3660
      %v3709 = vadd.f32 %v3446, %v3663
      %v3710 = vadd.f32 %v3447, %v3668
      %v3711 = vadd.f32 %v3448, %v3671
      %v3712 = vadd.f32 %v3449, %v3676
      %v3713 = vadd.f32 %v3450, %v3679
      %s3714 = scalar_lea.vmem [#allocation4], 160
      %v3715 = vld [vmem:[%s3714] sm:$0xff]
      %v3716 = vld [vmem:[%s3714 + $0x8] sm:$0xff]
      %v3717 = vld [vmem:[%s3714 + $0x10] sm:$0xff]
      %v3718 = vld [vmem:[%s3714 + $0x18] sm:$0xff]
      %v3719 = vld [vmem:[%s3714 + $0x20] sm:$0xff]
      %v3720 = vld [vmem:[%s3714 + $0x28] sm:$0xff]
      %v3721 = vld [vmem:[%s3714 + $0x30] sm:$0xff]
      %v3722 = vld [vmem:[%s3714 + $0x38] sm:$0xff]
      %v3723 = vld [vmem:[%s3714 + $0x40] sm:$0xff]
      %v3724 = vld [vmem:[%s3714 + $0x48] sm:$0xff]
      %v3725 = vld [vmem:[%s3714 + $0x50] sm:$0xff]
      %v3726 = vld [vmem:[%s3714 + $0x58] sm:$0xff]
      %v3727 = vld [vmem:[%s3714 + $0x60] sm:$0xff]
      %v3728 = vld [vmem:[%s3714 + $0x68] sm:$0xff]
      %v3729 = vld [vmem:[%s3714 + $0x70] sm:$0xff]
      %v3730 = vld [vmem:[%s3714 + $0x78] sm:$0xff]
      %s3731 = scalar_lea.vmem %s2, 28
      %v3732 = vld [vmem:[%s3731] sm:$0xf]
      %v3734 = vsel %vm1377, %v3715, 0
      %v3737 = vsel %vm1377, %v3716, 0
      %v3740 = vsel %vm1377, %v3717, 0
      %v3743 = vsel %vm1377, %v3718, 0
      %v3746 = vsel %vm1377, %v3719, 0
      %v3749 = vsel %vm1377, %v3720, 0
      %v3752 = vsel %vm1377, %v3721, 0
      %v3755 = vsel %vm1377, %v3722, 0
      %v3758 = vsel %vm1377, %v3723, 0
      %v3761 = vsel %vm1377, %v3724, 0
      %v3764 = vsel %vm1377, %v3725, 0
      %v3767 = vsel %vm1377, %v3726, 0
      %v3770 = vsel %vm1377, %v3727, 0
      %v3773 = vsel %vm1377, %v3728, 0
      %v3776 = vsel %vm1377, %v3729, 0
      %v3779 = vsel %vm1377, %v3730, 0
      %v3782 = vsel %vm2023, %v3732, 0
      %3784 = vmatprep.subr.bf16.mxu0 0
      %3785 = vmatpush1.bf16.msra.mxu0 %v3782
      %3786 = vmatprep.subr.bf16.mxu0 0
      %3787 = vmatpush1.bf16.msra.mxu0 0
      %3788 = vmatprep.subr.bf16.mxu0 0
      %3789 = vmatpush1.bf16.msra.mxu0 0
      %3790 = vmatprep.subr.bf16.mxu0 0
      %3791 = vmatpush1.bf16.msra.mxu0 0
      %3792 = vmatprep.subr.bf16.mxu0 0
      %3793 = vmatpush1.bf16.msra.mxu0 0
      %3794 = vmatprep.subr.bf16.mxu0 0
      %3795 = vmatpush1.bf16.msra.mxu0 0
      %3796 = vmatprep.subr.bf16.mxu0 0
      %3797 = vmatpush1.bf16.msra.mxu0 0
      %3798 = vmatprep.subr.bf16.mxu0 0
      %3799 = vmatpush1.bf16.msra.mxu0 0
      %3800 = vmatprep.subr.bf16.mxu0 0
      %3801 = vmatpush1.bf16.msra.mxu0 0
      %3802 = vmatprep.subr.bf16.mxu0 0
      %3803 = vmatpush1.bf16.msra.mxu0 0
      %3804 = vmatprep.subr.bf16.mxu0 0
      %3805 = vmatpush1.bf16.msra.mxu0 0
      %3806 = vmatprep.subr.bf16.mxu0 0
      %3807 = vmatpush1.bf16.msra.mxu0 0
      %3808 = vmatprep.subr.bf16.mxu0 0
      %3809 = vmatpush1.bf16.msra.mxu0 0
      %3810 = vmatprep.subr.bf16.mxu0 0
      %3811 = vmatpush1.bf16.msra.mxu0 0
      %3812 = vmatprep.subr.bf16.mxu0 0
      %3813 = vmatpush1.bf16.msra.mxu0 0
      %3814 = vmatprep.subr.bf16.mxu0 0
      %3815 = vmatpush1.bf16.msra.mxu0 0
      %3816 = vmatprep.mubr.bf16.mxu0 0
      %3817 = vmatmul.mubr.bf16.gmra.mrb[0].mxu0 %v3734
      %v3818 = vpop.f32.mrb[0].mxu0
      %v3819 = vadd.f32 0.0, %v3818
      %v3820 = vpop.f32.mrb[0].mxu0
      %v3821 = vpop.f32.mrb[0].mxu0
      %v3822 = vadd.f32 0.0, %v3821
      %v3823 = vpop.f32.mrb[0].mxu0
      %3824 = vmatprep.mubr.bf16.mxu0 0
      %3825 = vmatmul.mubr.bf16.gmra.mrb[0].mxu0 %v3737
      %v3826 = vpop.f32.mrb[0].mxu0
      %v3827 = vadd.f32 0.0, %v3826
      %v3828 = vpop.f32.mrb[0].mxu0
      %v3829 = vpop.f32.mrb[0].mxu0
      %v3830 = vadd.f32 0.0, %v3829
      %v3831 = vpop.f32.mrb[0].mxu0
      %3832 = vmatprep.mubr.bf16.mxu0 0
      %3833 = vmatmul.mubr.bf16.gmra.mrb[0].mxu0 %v3740
      %v3834 = vpop.f32.mrb[0].mxu0
      %v3835 = vadd.f32 0.0, %v3834
      %v3836 = vpop.f32.mrb[0].mxu0
      %v3837 = vpop.f32.mrb[0].mxu0
      %v3838 = vadd.f32 0.0, %v3837
      %v3839 = vpop.f32.mrb[0].mxu0
      %3840 = vmatprep.mubr.bf16.mxu0 0
      %3841 = vmatmul.mubr.bf16.gmra.mrb[0].mxu0 %v3743
      %v3842 = vpop.f32.mrb[0].mxu0
      %v3843 = vadd.f32 0.0, %v3842
      %v3844 = vpop.f32.mrb[0].mxu0
      %v3845 = vpop.f32.mrb[0].mxu0
      %v3846 = vadd.f32 0.0, %v3845
      %v3847 = vpop.f32.mrb[0].mxu0
      %3848 = vmatprep.mubr.bf16.mxu0 0
      %3849 = vmatmul.mubr.bf16.gmra.mrb[0].mxu0 %v3746
      %v3850 = vpop.f32.mrb[0].mxu0
      %v3851 = vadd.f32 0.0, %v3850
      %v3852 = vpop.f32.mrb[0].mxu0
      %v3853 = vpop.f32.mrb[0].mxu0
      %v3854 = vadd.f32 0.0, %v3853
      %v3855 = vpop.f32.mrb[0].mxu0
      %3856 = vmatprep.mubr.bf16.mxu0 0
      %3857 = vmatmul.mubr.bf16.gmra.mrb[0].mxu0 %v3749
      %v3858 = vpop.f32.mrb[0].mxu0
      %v3859 = vadd.f32 0.0, %v3858
      %v3860 = vpop.f32.mrb[0].mxu0
      %v3861 = vpop.f32.mrb[0].mxu0
      %v3862 = vadd.f32 0.0, %v3861
      %v3863 = vpop.f32.mrb[0].mxu0
      %3864 = vmatprep.mubr.bf16.mxu0 0
      %3865 = vmatmul.mubr.bf16.gmra.mrb[0].mxu0 %v3752
      %v3866 = vpop.f32.mrb[0].mxu0
      %v3867 = vadd.f32 0.0, %v3866
      %v3868 = vpop.f32.mrb[0].mxu0
      %v3869 = vpop.f32.mrb[0].mxu0
      %v3870 = vadd.f32 0.0, %v3869
      %v3871 = vpop.f32.mrb[0].mxu0
      %3872 = vmatprep.mubr.bf16.mxu0 0
      %3873 = vmatmul.mubr.bf16.gmra.mrb[0].mxu0 %v3755
      %v3874 = vpop.f32.mrb[0].mxu0
      %v3875 = vadd.f32 0.0, %v3874
      %v3876 = vpop.f32.mrb[0].mxu0
      %v3877 = vpop.f32.mrb[0].mxu0
      %v3878 = vadd.f32 0.0, %v3877
      %v3879 = vpop.f32.mrb[0].mxu0
      %3880 = vmatprep.mubr.bf16.mxu0 0
      %3881 = vmatmul.mubr.bf16.gmra.mrb[0].mxu0 %v3758
      %v3882 = vpop.f32.mrb[0].mxu0
      %v3883 = vadd.f32 0.0, %v3882
      %v3884 = vpop.f32.mrb[0].mxu0
      %v3885 = vpop.f32.mrb[0].mxu0
      %v3886 = vadd.f32 0.0, %v3885
      %v3887 = vpop.f32.mrb[0].mxu0
      %3888 = vmatprep.mubr.bf16.mxu0 0
      %3889 = vmatmul.mubr.bf16.gmra.mrb[0].mxu0 %v3761
      %v3890 = vpop.f32.mrb[0].mxu0
      %v3891 = vadd.f32 0.0, %v3890
      %v3892 = vpop.f32.mrb[0].mxu0
      %v3893 = vpop.f32.mrb[0].mxu0
      %v3894 = vadd.f32 0.0, %v3893
      %v3895 = vpop.f32.mrb[0].mxu0
      %3896 = vmatprep.mubr.bf16.mxu0 0
      %3897 = vmatmul.mubr.bf16.gmra.mrb[0].mxu0 %v3764
      %v3898 = vpop.f32.mrb[0].mxu0
      %v3899 = vadd.f32 0.0, %v3898
      %v3900 = vpop.f32.mrb[0].mxu0
      %v3901 = vpop.f32.mrb[0].mxu0
      %v3902 = vadd.f32 0.0, %v3901
      %v3903 = vpop.f32.mrb[0].mxu0
      %3904 = vmatprep.mubr.bf16.mxu0 0
      %3905 = vmatmul.mubr.bf16.gmra.mrb[0].mxu0 %v3767
      %v3906 = vpop.f32.mrb[0].mxu0
      %v3907 = vadd.f32 0.0, %v3906
      %v3908 = vpop.f32.mrb[0].mxu0
      %v3909 = vpop.f32.mrb[0].mxu0
      %v3910 = vadd.f32 0.0, %v3909
      %v3911 = vpop.f32.mrb[0].mxu0
      %3912 = vmatprep.mubr.bf16.mxu0 0
      %3913 = vmatmul.mubr.bf16.gmra.mrb[0].mxu0 %v3770
      %v3914 = vpop.f32.mrb[0].mxu0
      %v3915 = vadd.f32 0.0, %v3914
      %v3916 = vpop.f32.mrb[0].mxu0
      %v3917 = vpop.f32.mrb[0].mxu0
      %v3918 = vadd.f32 0.0, %v3917
      %v3919 = vpop.f32.mrb[0].mxu0
      %3920 = vmatprep.mubr.bf16.mxu0 0
      %3921 = vmatmul.mubr.bf16.gmra.mrb[0].mxu0 %v3773
      %v3922 = vpop.f32.mrb[0].mxu0
      %v3923 = vadd.f32 0.0, %v3922
      %v3924 = vpop.f32.mrb[0].mxu0
      %v3925 = vpop.f32.mrb[0].mxu0
      %v3926 = vadd.f32 0.0, %v3925
      %v3927 = vpop.f32.mrb[0].mxu0
      %3928 = vmatprep.mubr.bf16.mxu0 0
      %3929 = vmatmul.mubr.bf16.gmra.mrb[0].mxu0 %v3776
      %v3930 = vpop.f32.mrb[0].mxu0
      %v3931 = vadd.f32 0.0, %v3930
      %v3932 = vpop.f32.mrb[0].mxu0
      %v3933 = vpop.f32.mrb[0].mxu0
      %v3934 = vadd.f32 0.0, %v3933
      %v3935 = vpop.f32.mrb[0].mxu0
      %3936 = vmatprep.mubr.bf16.mxu0 0
      %3937 = vmatmul.mubr.bf16.gmra.mrb[0].mxu0 %v3779
      %v3938 = vpop.f32.mrb[0].mxu0
      %v3939 = vadd.f32 0.0, %v3938
      %v3940 = vpop.f32.mrb[0].mxu0
      %v3941 = vpop.f32.mrb[0].mxu0
      %v3942 = vadd.f32 0.0, %v3941
      %v3943 = vpop.f32.mrb[0].mxu0
      %3944 = vdwg.mxu0
      %v3945 = vadd.f32 %v3682, %v3819
      %v3946 = vadd.f32 %v3683, %v3822
      %v3947 = vadd.f32 %v3684, %v3827
      %v3948 = vadd.f32 %v3685, %v3830
      %v3949 = vadd.f32 %v3686, %v3835
      %v3950 = vadd.f32 %v3687, %v3838
      %v3951 = vadd.f32 %v3688, %v3843
      %v3952 = vadd.f32 %v3689, %v3846
      %v3953 = vadd.f32 %v3690, %v3851
      %v3954 = vadd.f32 %v3691, %v3854
      %v3955 = vadd.f32 %v3692, %v3859
      %v3956 = vadd.f32 %v3693, %v3862
      %v3957 = vadd.f32 %v3694, %v3867
      %v3958 = vadd.f32 %v3695, %v3870
      %v3959 = vadd.f32 %v3696, %v3875
      %v3960 = vadd.f32 %v3697, %v3878
      %v3961 = vadd.f32 %v3698, %v3883
      %v3962 = vadd.f32 %v3699, %v3886
      %v3963 = vadd.f32 %v3700, %v3891
      %v3964 = vadd.f32 %v3701, %v3894
      %v3965 = vadd.f32 %v3702, %v3899
      %v3966 = vadd.f32 %v3703, %v3902
      %v3967 = vadd.f32 %v3704, %v3907
      %v3968 = vadd.f32 %v3705, %v3910
      %v3969 = vadd.f32 %v3706, %v3915
      %v3970 = vadd.f32 %v3707, %v3918
      %v3971 = vadd.f32 %v3708, %v3923
      %v3972 = vadd.f32 %v3709, %v3926
      %v3973 = vadd.f32 %v3710, %v3931
      %v3974 = vadd.f32 %v3711, %v3934
      %v3975 = vadd.f32 %v3712, %v3939
      %v3976 = vadd.f32 %v3713, %v3942
      %s3977 = scalar_lea.vmem [#allocation4], 304
      %v3978 = vld [vmem:[%s3977] sm:$0xff]
      %v3979 = vld [vmem:[%s3977 + $0x8] sm:$0xff]
      %v3980 = vld [vmem:[%s3977 + $0x10] sm:$0xff]
      %v3981 = vld [vmem:[%s3977 + $0x18] sm:$0xff]
      %v3982 = vld [vmem:[%s3977 + $0x20] sm:$0xff]
      %v3983 = vld [vmem:[%s3977 + $0x28] sm:$0xff]
      %v3984 = vld [vmem:[%s3977 + $0x30] sm:$0xff]
      %v3985 = vld [vmem:[%s3977 + $0x38] sm:$0xff]
      %v3986 = vld [vmem:[%s3977 + $0x40] sm:$0xff]
      %v3987 = vld [vmem:[%s3977 + $0x48] sm:$0xff]
      %v3988 = vld [vmem:[%s3977 + $0x50] sm:$0xff]
      %v3989 = vld [vmem:[%s3977 + $0x58] sm:$0xff]
      %v3990 = vld [vmem:[%s3977 + $0x60] sm:$0xff]
      %v3991 = vld [vmem:[%s3977 + $0x68] sm:$0xff]
      %v3992 = vld [vmem:[%s3977 + $0x70] sm:$0xff]
      %v3993 = vld [vmem:[%s3977 + $0x78] sm:$0xff]
      %s3994 = scalar_lea.vmem %s2, 32
      %v3995 = vld [vmem:[%s3994] sm:$0xf]
      %v3997 = vsel %vm1377, %v3978, 0
      %v4000 = vsel %vm1377, %v3979, 0
      %v4003 = vsel %vm1377, %v3980, 0
      %v4006 = vsel %vm1377, %v3981, 0
      %v4009 = vsel %vm1377, %v3982, 0
      %v4012 = vsel %vm1377, %v3983, 0
      %v4015 = vsel %vm1377, %v3984, 0
      %v4018 = vsel %vm1377, %v3985, 0
      %v4021 = vsel %vm1377, %v3986, 0
      %v4024 = vsel %vm1377, %v3987, 0
      %v4027 = vsel %vm1377, %v3988, 0
      %v4030 = vsel %vm1377, %v3989, 0
      %v4033 = vsel %vm1377, %v3990, 0
      %v4036 = vsel %vm1377, %v3991, 0
      %v4039 = vsel %vm1377, %v3992, 0
      %v4042 = vsel %vm1377, %v3993, 0
      %v4045 = vsel %vm2023, %v3995, 0
      %4047 = vmatprep.subr.bf16.mxu0 0
      %4048 = vmatpush1.bf16.msra.mxu0 %v4045
      %4049 = vmatprep.subr.bf16.mxu0 0
      %4050 = vmatpush1.bf16.msra.mxu0 0
      %4051 = vmatprep.subr.bf16.mxu0 0
      %4052 = vmatpush1.bf16.msra.mxu0 0
      %4053 = vmatprep.subr.bf16.mxu0 0
      %4054 = vmatpush1.bf16.msra.mxu0 0
      %4055 = vmatprep.subr.bf16.mxu0 0
      %4056 = vmatpush1.bf16.msra.mxu0 0
      %4057 = vmatprep.subr.bf16.mxu0 0
      %4058 = vmatpush1.bf16.msra.mxu0 0
      %4059 = vmatprep.subr.bf16.mxu0 0
      %4060 = vmatpush1.bf16.msra.mxu0 0
      %4061 = vmatprep.subr.bf16.mxu0 0
      %4062 = vmatpush1.bf16.msra.mxu0 0
      %4063 = vmatprep.subr.bf16.mxu0 0
      %4064 = vmatpush1.bf16.msra.mxu0 0
      %4065 = vmatprep.subr.bf16.mxu0 0
      %4066 = vmatpush1.bf16.msra.mxu0 0
      %4067 = vmatprep.subr.bf16.mxu0 0
      %4068 = vmatpush1.bf16.msra.mxu0 0
      %4069 = vmatprep.subr.bf16.mxu0 0
      %4070 = vmatpush1.bf16.msra.mxu0 0
      %4071 = vmatprep.subr.bf16.mxu0 0
      %4072 = vmatpush1.bf16.msra.mxu0 0
      %4073 = vmatprep.subr.bf16.mxu0 0
      %4074 = vmatpush1.bf16.msra.mxu0 0
      %4075 = vmatprep.subr.bf16.mxu0 0
      %4076 = vmatpush1.bf16.msra.mxu0 0
      %4077 = vmatprep.subr.bf16.mxu0 0
      %4078 = vmatpush1.bf16.msra.mxu0 0
      %4079 = vmatprep.mubr.bf16.mxu0 0
      %4080 = vmatmul.mubr.bf16.gmra.mrb[0].mxu0 %v3997
      %v4081 = vpop.f32.mrb[0].mxu0
      %v4082 = vadd.f32 0.0, %v4081
      %v4083 = vpop.f32.mrb[0].mxu0
      %v4084 = vpop.f32.mrb[0].mxu0
      %v4085 = vadd.f32 0.0, %v4084
      %v4086 = vpop.f32.mrb[0].mxu0
      %4087 = vmatprep.mubr.bf16.mxu0 0
      %4088 = vmatmul.mubr.bf16.gmra.mrb[0].mxu0 %v4000
      %v4089 = vpop.f32.mrb[0].mxu0
      %v4090 = vadd.f32 0.0, %v4089
      %v4091 = vpop.f32.mrb[0].mxu0
      %v4092 = vpop.f32.mrb[0].mxu0
      %v4093 = vadd.f32 0.0, %v4092
      %v4094 = vpop.f32.mrb[0].mxu0
      %4095 = vmatprep.mubr.bf16.mxu0 0
      %4096 = vmatmul.mubr.bf16.gmra.mrb[0].mxu0 %v4003
      %v4097 = vpop.f32.mrb[0].mxu0
      %v4098 = vadd.f32 0.0, %v4097
      %v4099 = vpop.f32.mrb[0].mxu0
      %v4100 = vpop.f32.mrb[0].mxu0
      %v4101 = vadd.f32 0.0, %v4100
      %v4102 = vpop.f32.mrb[0].mxu0
      %4103 = vmatprep.mubr.bf16.mxu0 0
      %4104 = vmatmul.mubr.bf16.gmra.mrb[0].mxu0 %v4006
      %v4105 = vpop.f32.mrb[0].mxu0
      %v4106 = vadd.f32 0.0, %v4105
      %v4107 = vpop.f32.mrb[0].mxu0
      %v4108 = vpop.f32.mrb[0].mxu0
      %v4109 = vadd.f32 0.0, %v4108
      %v4110 = vpop.f32.mrb[0].mxu0
      %4111 = vmatprep.mubr.bf16.mxu0 0
      %4112 = vmatmul.mubr.bf16.gmra.mrb[0].mxu0 %v4009
      %v4113 = vpop.f32.mrb[0].mxu0
      %v4114 = vadd.f32 0.0, %v4113
      %v4115 = vpop.f32.mrb[0].mxu0
      %v4116 = vpop.f32.mrb[0].mxu0
      %v4117 = vadd.f32 0.0, %v4116
      %v4118 = vpop.f32.mrb[0].mxu0
      %4119 = vmatprep.mubr.bf16.mxu0 0
      %4120 = vmatmul.mubr.bf16.gmra.mrb[0].mxu0 %v4012
      %v4121 = vpop.f32.mrb[0].mxu0
      %v4122 = vadd.f32 0.0, %v4121
      %v4123 = vpop.f32.mrb[0].mxu0
      %v4124 = vpop.f32.mrb[0].mxu0
      %v4125 = vadd.f32 0.0, %v4124
      %v4126 = vpop.f32.mrb[0].mxu0
      %4127 = vmatprep.mubr.bf16.mxu0 0
      %4128 = vmatmul.mubr.bf16.gmra.mrb[0].mxu0 %v4015
      %v4129 = vpop.f32.mrb[0].mxu0
      %v4130 = vadd.f32 0.0, %v4129
      %v4131 = vpop.f32.mrb[0].mxu0
      %v4132 = vpop.f32.mrb[0].mxu0
      %v4133 = vadd.f32 0.0, %v4132
      %v4134 = vpop.f32.mrb[0].mxu0
      %4135 = vmatprep.mubr.bf16.mxu0 0
      %4136 = vmatmul.mubr.bf16.gmra.mrb[0].mxu0 %v4018
      %v4137 = vpop.f32.mrb[0].mxu0
      %v4138 = vadd.f32 0.0, %v4137
      %v4139 = vpop.f32.mrb[0].mxu0
      %v4140 = vpop.f32.mrb[0].mxu0
      %v4141 = vadd.f32 0.0, %v4140
      %v4142 = vpop.f32.mrb[0].mxu0
      %4143 = vmatprep.mubr.bf16.mxu0 0
      %4144 = vmatmul.mubr.bf16.gmra.mrb[0].mxu0 %v4021
      %v4145 = vpop.f32.mrb[0].mxu0
      %v4146 = vadd.f32 0.0, %v4145
      %v4147 = vpop.f32.mrb[0].mxu0
      %v4148 = vpop.f32.mrb[0].mxu0
      %v4149 = vadd.f32 0.0, %v4148
      %v4150 = vpop.f32.mrb[0].mxu0
      %4151 = vmatprep.mubr.bf16.mxu0 0
      %4152 = vmatmul.mubr.bf16.gmra.mrb[0].mxu0 %v4024
      %v4153 = vpop.f32.mrb[0].mxu0
      %v4154 = vadd.f32 0.0, %v4153
      %v4155 = vpop.f32.mrb[0].mxu0
      %v4156 = vpop.f32.mrb[0].mxu0
      %v4157 = vadd.f32 0.0, %v4156
      %v4158 = vpop.f32.mrb[0].mxu0
      %4159 = vmatprep.mubr.bf16.mxu0 0
      %4160 = vmatmul.mubr.bf16.gmra.mrb[0].mxu0 %v4027
      %v4161 = vpop.f32.mrb[0].mxu0
      %v4162 = vadd.f32 0.0, %v4161
      %v4163 = vpop.f32.mrb[0].mxu0
      %v4164 = vpop.f32.mrb[0].mxu0
      %v4165 = vadd.f32 0.0, %v4164
      %v4166 = vpop.f32.mrb[0].mxu0
      %4167 = vmatprep.mubr.bf16.mxu0 0
      %4168 = vmatmul.mubr.bf16.gmra.mrb[0].mxu0 %v4030
      %v4169 = vpop.f32.mrb[0].mxu0
      %v4170 = vadd.f32 0.0, %v4169
      %v4171 = vpop.f32.mrb[0].mxu0
      %v4172 = vpop.f32.mrb[0].mxu0
      %v4173 = vadd.f32 0.0, %v4172
      %v4174 = vpop.f32.mrb[0].mxu0
      %4175 = vmatprep.mubr.bf16.mxu0 0
      %4176 = vmatmul.mubr.bf16.gmra.mrb[0].mxu0 %v4033
      %v4177 = vpop.f32.mrb[0].mxu0
      %v4178 = vadd.f32 0.0, %v4177
      %v4179 = vpop.f32.mrb[0].mxu0
      %v4180 = vpop.f32.mrb[0].mxu0
      %v4181 = vadd.f32 0.0, %v4180
      %v4182 = vpop.f32.mrb[0].mxu0
      %4183 = vmatprep.mubr.bf16.mxu0 0
      %4184 = vmatmul.mubr.bf16.gmra.mrb[0].mxu0 %v4036
      %v4185 = vpop.f32.mrb[0].mxu0
      %v4186 = vadd.f32 0.0, %v4185
      %v4187 = vpop.f32.mrb[0].mxu0
      %v4188 = vpop.f32.mrb[0].mxu0
      %v4189 = vadd.f32 0.0, %v4188
      %v4190 = vpop.f32.mrb[0].mxu0
      %4191 = vmatprep.mubr.bf16.mxu0 0
      %4192 = vmatmul.mubr.bf16.gmra.mrb[0].mxu0 %v4039
      %v4193 = vpop.f32.mrb[0].mxu0
      %v4194 = vadd.f32 0.0, %v4193
      %v4195 = vpop.f32.mrb[0].mxu0
      %v4196 = vpop.f32.mrb[0].mxu0
      %v4197 = vadd.f32 0.0, %v4196
      %v4198 = vpop.f32.mrb[0].mxu0
      %4199 = vmatprep.mubr.bf16.mxu0 0
      %4200 = vmatmul.mubr.bf16.gmra.mrb[0].mxu0 %v4042
      %v4201 = vpop.f32.mrb[0].mxu0
      %v4202 = vadd.f32 0.0, %v4201
      %v4203 = vpop.f32.mrb[0].mxu0
      %v4204 = vpop.f32.mrb[0].mxu0
      %v4205 = vadd.f32 0.0, %v4204
      %v4206 = vpop.f32.mrb[0].mxu0
      %4207 = vdwg.mxu0
      %v4208 = vadd.f32 %v3945, %v4082
      %v4209 = vadd.f32 %v3946, %v4085
      %v4210 = vadd.f32 %v3947, %v4090
      %v4211 = vadd.f32 %v3948, %v4093
      %v4212 = vadd.f32 %v3949, %v4098
      %v4213 = vadd.f32 %v3950, %v4101
      %v4214 = vadd.f32 %v3951, %v4106
      %v4215 = vadd.f32 %v3952, %v4109
      %v4216 = vadd.f32 %v3953, %v4114
      %v4217 = vadd.f32 %v3954, %v4117
      %v4218 = vadd.f32 %v3955, %v4122
      %v4219 = vadd.f32 %v3956, %v4125
      %v4220 = vadd.f32 %v3957, %v4130
      %v4221 = vadd.f32 %v3958, %v4133
      %v4222 = vadd.f32 %v3959, %v4138
      %v4223 = vadd.f32 %v3960, %v4141
      %v4224 = vadd.f32 %v3961, %v4146
      %v4225 = vadd.f32 %v3962, %v4149
      %v4226 = vadd.f32 %v3963, %v4154
      %v4227 = vadd.f32 %v3964, %v4157
      %v4228 = vadd.f32 %v3965, %v4162
      %v4229 = vadd.f32 %v3966, %v4165
      %v4230 = vadd.f32 %v3967, %v4170
      %v4231 = vadd.f32 %v3968, %v4173
      %v4232 = vadd.f32 %v3969, %v4178
      %v4233 = vadd.f32 %v3970, %v4181
      %v4234 = vadd.f32 %v3971, %v4186
      %v4235 = vadd.f32 %v3972, %v4189
      %v4236 = vadd.f32 %v3973, %v4194
      %v4237 = vadd.f32 %v3974, %v4197
      %v4238 = vadd.f32 %v3975, %v4202
      %v4239 = vadd.f32 %v3976, %v4205
      %v4240 = vld [vmem:[%s4] sm:$0x1]
      %v4242 = vlaneseq
      %v4243 = vshrl.u32 %v4242, 7
      %v4244 = vsub.s32 0, %v4243
      %v4245 = vrot.slane %v4240, %v4244
      %v4247 = vmul.f32 %v4208, %v4245
      %v4248 = vmul.f32 %v4209, %v4245
      %v4249 = vmul.f32 %v4210, %v4245
      %v4250 = vmul.f32 %v4211, %v4245
      %v4251 = vmul.f32 %v4212, %v4245
      %v4252 = vmul.f32 %v4213, %v4245
      %v4253 = vmul.f32 %v4214, %v4245
      %v4254 = vmul.f32 %v4215, %v4245
      %v4255 = vmul.f32 %v4216, %v4245
      %v4256 = vmul.f32 %v4217, %v4245
      %v4257 = vmul.f32 %v4218, %v4245
      %v4258 = vmul.f32 %v4219, %v4245
      %v4259 = vmul.f32 %v4220, %v4245
      %v4260 = vmul.f32 %v4221, %v4245
      %v4261 = vmul.f32 %v4222, %v4245
      %v4262 = vmul.f32 %v4223, %v4245
      %v4263 = vmul.f32 %v4224, %v4245
      %v4264 = vmul.f32 %v4225, %v4245
      %v4265 = vmul.f32 %v4226, %v4245
      %v4266 = vmul.f32 %v4227, %v4245
      %v4267 = vmul.f32 %v4228, %v4245
      %v4268 = vmul.f32 %v4229, %v4245
      %v4269 = vmul.f32 %v4230, %v4245
      %v4270 = vmul.f32 %v4231, %v4245
      %v4271 = vmul.f32 %v4232, %v4245
      %v4272 = vmul.f32 %v4233, %v4245
      %v4273 = vmul.f32 %v4234, %v4245
      %v4274 = vmul.f32 %v4235, %v4245
      %v4275 = vmul.f32 %v4236, %v4245
      %v4276 = vmul.f32 %v4237, %v4245
      %v4277 = vmul.f32 %v4238, %v4245
      %v4278 = vmul.f32 %v4239, %v4245
      %v4279 = vld [vmem:[%s5] sm:$0x1]
      %v4281 = vlaneseq
      %v4282 = vshrl.u32 %v4281, 7
      %v4283 = vsub.s32 0, %v4282
      %v4284 = vrot.slane %v4279, %v4283
      %v4286 = vadd.f32 %v4247, %v4284
      %v4287 = vadd.f32 %v4248, %v4284
      %v4288 = vadd.f32 %v4249, %v4284
      %v4289 = vadd.f32 %v4250, %v4284
      %v4290 = vadd.f32 %v4251, %v4284
      %v4291 = vadd.f32 %v4252, %v4284
      %v4292 = vadd.f32 %v4253, %v4284
      %v4293 = vadd.f32 %v4254, %v4284
      %v4294 = vadd.f32 %v4255, %v4284
      %v4295 = vadd.f32 %v4256, %v4284
      %v4296 = vadd.f32 %v4257, %v4284
      %v4297 = vadd.f32 %v4258, %v4284
      %v4298 = vadd.f32 %v4259, %v4284
      %v4299 = vadd.f32 %v4260, %v4284
      %v4300 = vadd.f32 %v4261, %v4284
      %v4301 = vadd.f32 %v4262, %v4284
      %v4302 = vadd.f32 %v4263, %v4284
      %v4303 = vadd.f32 %v4264, %v4284
      %v4304 = vadd.f32 %v4265, %v4284
      %v4305 = vadd.f32 %v4266, %v4284
      %v4306 = vadd.f32 %v4267, %v4284
      %v4307 = vadd.f32 %v4268, %v4284
      %v4308 = vadd.f32 %v4269, %v4284
      %v4309 = vadd.f32 %v4270, %v4284
      %v4310 = vadd.f32 %v4271, %v4284
      %v4311 = vadd.f32 %v4272, %v4284
      %v4312 = vadd.f32 %v4273, %v4284
      %v4313 = vadd.f32 %v4274, %v4284
      %v4314 = vadd.f32 %v4275, %v4284
      %v4315 = vadd.f32 %v4276, %v4284
      %v4316 = vadd.f32 %v4277, %v4284
      %v4317 = vadd.f32 %v4278, %v4284
      %v4318 = vmax.f32 %v4286, 0.0
      %v4319 = vmax.f32 %v4287, 0.0
      %v4320 = vmax.f32 %v4288, 0.0
      %v4321 = vmax.f32 %v4289, 0.0
      %v4322 = vmax.f32 %v4290, 0.0
      %v4323 = vmax.f32 %v4291, 0.0
      %v4324 = vmax.f32 %v4292, 0.0
      %v4325 = vmax.f32 %v4293, 0.0
      %v4326 = vmax.f32 %v4294, 0.0
      %v4327 = vmax.f32 %v4295, 0.0
      %v4328 = vmax.f32 %v4296, 0.0
      %v4329 = vmax.f32 %v4297, 0.0
      %v4330 = vmax.f32 %v4298, 0.0
      %v4331 = vmax.f32 %v4299, 0.0
      %v4332 = vmax.f32 %v4300, 0.0
      %v4333 = vmax.f32 %v4301, 0.0
      %v4334 = vmax.f32 %v4302, 0.0
      %v4335 = vmax.f32 %v4303, 0.0
      %v4336 = vmax.f32 %v4304, 0.0
      %v4337 = vmax.f32 %v4305, 0.0
      %v4338 = vmax.f32 %v4306, 0.0
      %v4339 = vmax.f32 %v4307, 0.0
      %v4340 = vmax.f32 %v4308, 0.0
      %v4341 = vmax.f32 %v4309, 0.0
      %v4342 = vmax.f32 %v4310, 0.0
      %v4343 = vmax.f32 %v4311, 0.0
      %v4344 = vmax.f32 %v4312, 0.0
      %v4345 = vmax.f32 %v4313, 0.0
      %v4346 = vmax.f32 %v4314, 0.0
      %v4347 = vmax.f32 %v4315, 0.0
      %v4348 = vmax.f32 %v4316, 0.0
      %v4349 = vmax.f32 %v4317, 0.0
      %v4350 = vpack.c.bf16 %v4319, %v4318
      %v4351 = vpack.c.bf16 %v4321, %v4320
      %v4352 = vpack.c.bf16 %v4323, %v4322
      %v4353 = vpack.c.bf16 %v4325, %v4324
      %v4354 = vpack.c.bf16 %v4327, %v4326
      %v4355 = vpack.c.bf16 %v4329, %v4328
      %v4356 = vpack.c.bf16 %v4331, %v4330
      %v4357 = vpack.c.bf16 %v4333, %v4332
      %v4358 = vpack.c.bf16 %v4335, %v4334
      %v4359 = vpack.c.bf16 %v4337, %v4336
      %v4360 = vpack.c.bf16 %v4339, %v4338
      %v4361 = vpack.c.bf16 %v4341, %v4340
      %v4362 = vpack.c.bf16 %v4343, %v4342
      %v4363 = vpack.c.bf16 %v4345, %v4344
      %v4364 = vpack.c.bf16 %v4347, %v4346
      %v4365 = vpack.c.bf16 %v4349, %v4348
      %v4382 = vrot.slane %v4350, 4
      %v4383 = vrot.slane %v4351, 4
      %v4384 = vrot.slane %v4352, 4
      %v4385 = vrot.slane %v4353, 4
      %v4386 = vrot.slane %v4354, 4
      %v4387 = vrot.slane %v4355, 4
      %v4388 = vrot.slane %v4356, 4
      %v4389 = vrot.slane %v4357, 4
      %v4390 = vrot.slane %v4358, 4
      %v4391 = vrot.slane %v4359, 4
      %v4392 = vrot.slane %v4360, 4
      %v4393 = vrot.slane %v4361, 4
      %v4394 = vrot.slane %v4362, 4
      %v4395 = vrot.slane %v4363, 4
      %v4396 = vrot.slane %v4364, 4
      %v4397 = vrot.slane %v4365, 4
      %4414 = vst.msk [vmem:[%s464] sm:$0xf0] %vm725, %v4382
      %4415 = vst.msk [vmem:[%s464 + $0x8] sm:$0xf] %vm727, %v4382
      %4416 = vst.msk [vmem:[%s464 + $0x10] sm:$0xf0] %vm725, %v4383
      %4417 = vst.msk [vmem:[%s464 + $0x18] sm:$0xf] %vm727, %v4383
      %4418 = vst.msk [vmem:[%s464 + $0x20] sm:$0xf0] %vm725, %v4384
      %4419 = vst.msk [vmem:[%s464 + $0x28] sm:$0xf] %vm727, %v4384
      %4420 = vst.msk [vmem:[%s464 + $0x30] sm:$0xf0] %vm725, %v4385
      %4421 = vst.msk [vmem:[%s464 + $0x38] sm:$0xf] %vm727, %v4385
      %4422 = vst.msk [vmem:[%s464 + $0x40] sm:$0xf0] %vm725, %v4386
      %4423 = vst.msk [vmem:[%s464 + $0x48] sm:$0xf] %vm727, %v4386
      %4424 = vst.msk [vmem:[%s464 + $0x50] sm:$0xf0] %vm725, %v4387
      %4425 = vst.msk [vmem:[%s464 + $0x58] sm:$0xf] %vm727, %v4387
      %4426 = vst.msk [vmem:[%s464 + $0x60] sm:$0xf0] %vm725, %v4388
      %4427 = vst.msk [vmem:[%s464 + $0x68] sm:$0xf] %vm727, %v4388
      %4428 = vst.msk [vmem:[%s464 + $0x70] sm:$0xf0] %vm725, %v4389
      %4429 = vst.msk [vmem:[%s464 + $0x78] sm:$0xf] %vm727, %v4389
      %4430 = vst.msk [vmem:[%s464 + $0x80] sm:$0xf0] %vm725, %v4390
      %4431 = vst.msk [vmem:[%s464 + $0x88] sm:$0xf] %vm727, %v4390
      %4432 = vst.msk [vmem:[%s464 + $0x90] sm:$0xf0] %vm725, %v4391
      %4433 = vst.msk [vmem:[%s464 + $0x98] sm:$0xf] %vm727, %v4391
      %4434 = vst.msk [vmem:[%s464 + $0xa0] sm:$0xf0] %vm725, %v4392
      %4435 = vst.msk [vmem:[%s464 + $0xa8] sm:$0xf] %vm727, %v4392
      %4436 = vst.msk [vmem:[%s464 + $0xb0] sm:$0xf0] %vm725, %v4393
      %4437 = vst.msk [vmem:[%s464 + $0xb8] sm:$0xf] %vm727, %v4393
      %4438 = vst.msk [vmem:[%s464 + $0xc0] sm:$0xf0] %vm725, %v4394
      %4439 = vst.msk [vmem:[%s464 + $0xc8] sm:$0xf] %vm727, %v4394
      %4440 = vst.msk [vmem:[%s464 + $0xd0] sm:$0xf0] %vm725, %v4395
      %4441 = vst.msk [vmem:[%s464 + $0xd8] sm:$0xf] %vm727, %v4395
      %4442 = vst.msk [vmem:[%s464 + $0xe0] sm:$0xf0] %vm725, %v4396
      %4443 = vst.msk [vmem:[%s464 + $0xe8] sm:$0xf] %vm727, %v4396
      %4444 = vst.msk [vmem:[%s464 + $0xf0] sm:$0xf0] %vm725, %v4397
      %4445 = vst.msk [vmem:[%s464 + $0xf8] sm:$0xf] %vm727, %v4397
      %v4446 = vld [vmem:[#allocation3] sm:$0xf8]
      %v4447 = vld [vmem:[#allocation3 + $0x8] sm:$0xf]
      %v4448 = vld [vmem:[#allocation3 + $0x10] sm:$0xf8]
      %v4449 = vld [vmem:[#allocation3 + $0x18] sm:$0xf]
      %v4450 = vld [vmem:[#allocation3 + $0x20] sm:$0xf8]
      %v4451 = vld [vmem:[#allocation3 + $0x28] sm:$0xf]
      %v4452 = vld [vmem:[#allocation3 + $0x30] sm:$0xf8]
      %v4453 = vld [vmem:[#allocation3 + $0x38] sm:$0xf]
      %v4454 = vld [vmem:[#allocation3 + $0x40] sm:$0xf8]
      %v4455 = vld [vmem:[#allocation3 + $0x48] sm:$0xf]
      %v4456 = vld [vmem:[#allocation3 + $0x50] sm:$0xf8]
      %v4457 = vld [vmem:[#allocation3 + $0x58] sm:$0xf]
      %v4458 = vld [vmem:[#allocation3 + $0x60] sm:$0xf8]
      %v4459 = vld [vmem:[#allocation3 + $0x68] sm:$0xf]
      %v4460 = vld [vmem:[#allocation3 + $0x70] sm:$0xf8]
      %v4461 = vld [vmem:[#allocation3 + $0x78] sm:$0xf]
      %v4462 = vld [vmem:[#allocation3 + $0x80] sm:$0xf8]
      %v4463 = vld [vmem:[#allocation3 + $0x88] sm:$0xf]
      %v4464 = vld [vmem:[#allocation3 + $0x90] sm:$0xf8]
      %v4465 = vld [vmem:[#allocation3 + $0x98] sm:$0xf]
      %v4466 = vld [vmem:[#allocation3 + $0xa0] sm:$0xf8]
      %v4467 = vld [vmem:[#allocation3 + $0xa8] sm:$0xf]
      %v4468 = vld [vmem:[#allocation3 + $0xb0] sm:$0xf8]
      %v4469 = vld [vmem:[#allocation3 + $0xb8] sm:$0xf]
      %v4470 = vld [vmem:[#allocation3 + $0xc0] sm:$0xf8]
      %v4471 = vld [vmem:[#allocation3 + $0xc8] sm:$0xf]
      %v4472 = vld [vmem:[#allocation3 + $0xd0] sm:$0xf8]
      %v4473 = vld [vmem:[#allocation3 + $0xd8] sm:$0xf]
      %v4474 = vld [vmem:[#allocation3 + $0xe0] sm:$0xf8]
      %v4475 = vld [vmem:[#allocation3 + $0xe8] sm:$0xf]
      %v4476 = vld [vmem:[#allocation3 + $0xf0] sm:$0xf8]
      %v4477 = vld [vmem:[#allocation3 + $0xf8] sm:$0xf]
      %v4478 = vld [vmem:[#allocation3 + $0x100] sm:$0xf8]
      %v4479 = vld [vmem:[#allocation3 + $0x108] sm:$0xf]
      %v4480 = vld [vmem:[#allocation3 + $0x110] sm:$0xf8]
      %v4481 = vld [vmem:[#allocation3 + $0x118] sm:$0xf]
      %v4483 = vshrl.u32 %v4446, 16
      %v4485 = vrot.slane %v4483, 3
      %v4486 = vshll.u32 %v4446, 16
      %v4488 = vrot.slane %v4486, 4
      %v4489 = vor.u32 %v4485, %v4488
      %v4491 = vshrl.u32 %v4447, 16
      %v4493 = vrot.slane %v4491, 3
      %v4494 = vshll.u32 %v4447, 16
      %v4496 = vrot.slane %v4494, 4
      %v4497 = vor.u32 %v4493, %v4496
      %v4498 = vsel %vm334, %v4489, %v4497
      %v4500 = vshrl.u32 %v4448, 16
      %v4502 = vrot.slane %v4500, 3
      %v4503 = vshll.u32 %v4448, 16
      %v4505 = vrot.slane %v4503, 4
      %v4506 = vor.u32 %v4502, %v4505
      %v4508 = vshrl.u32 %v4449, 16
      %v4510 = vrot.slane %v4508, 3
      %v4511 = vshll.u32 %v4449, 16
      %v4513 = vrot.slane %v4511, 4
      %v4514 = vor.u32 %v4510, %v4513
      %v4515 = vsel %vm334, %v4506, %v4514
      %v4517 = vshrl.u32 %v4450, 16
      %v4519 = vrot.slane %v4517, 3
      %v4520 = vshll.u32 %v4450, 16
      %v4522 = vrot.slane %v4520, 4
      %v4523 = vor.u32 %v4519, %v4522
      %v4525 = vshrl.u32 %v4451, 16
      %v4527 = vrot.slane %v4525, 3
      %v4528 = vshll.u32 %v4451, 16
      %v4530 = vrot.slane %v4528, 4
      %v4531 = vor.u32 %v4527, %v4530
      %v4532 = vsel %vm334, %v4523, %v4531
      %v4534 = vshrl.u32 %v4452, 16
      %v4536 = vrot.slane %v4534, 3
      %v4537 = vshll.u32 %v4452, 16
      %v4539 = vrot.slane %v4537, 4
      %v4540 = vor.u32 %v4536, %v4539
      %v4542 = vshrl.u32 %v4453, 16
      %v4544 = vrot.slane %v4542, 3
      %v4545 = vshll.u32 %v4453, 16
      %v4547 = vrot.slane %v4545, 4
      %v4548 = vor.u32 %v4544, %v4547
      %v4549 = vsel %vm334, %v4540, %v4548
      %v4551 = vshrl.u32 %v4454, 16
      %v4553 = vrot.slane %v4551, 3
      %v4554 = vshll.u32 %v4454, 16
      %v4556 = vrot.slane %v4554, 4
      %v4557 = vor.u32 %v4553, %v4556
      %v4559 = vshrl.u32 %v4455, 16
      %v4561 = vrot.slane %v4559, 3
      %v4562 = vshll.u32 %v4455, 16
      %v4564 = vrot.slane %v4562, 4
      %v4565 = vor.u32 %v4561, %v4564
      %v4566 = vsel %vm334, %v4557, %v4565
      %v4568 = vshrl.u32 %v4456, 16
      %v4570 = vrot.slane %v4568, 3
      %v4571 = vshll.u32 %v4456, 16
      %v4573 = vrot.slane %v4571, 4
      %v4574 = vor.u32 %v4570, %v4573
      %v4576 = vshrl.u32 %v4457, 16
      %v4578 = vrot.slane %v4576, 3
      %v4579 = vshll.u32 %v4457, 16
      %v4581 = vrot.slane %v4579, 4
      %v4582 = vor.u32 %v4578, %v4581
      %v4583 = vsel %vm334, %v4574, %v4582
      %v4585 = vshrl.u32 %v4458, 16
      %v4587 = vrot.slane %v4585, 3
      %v4588 = vshll.u32 %v4458, 16
      %v4590 = vrot.slane %v4588, 4
      %v4591 = vor.u32 %v4587, %v4590
      %v4593 = vshrl.u32 %v4459, 16
      %v4595 = vrot.slane %v4593, 3
      %v4596 = vshll.u32 %v4459, 16
      %v4598 = vrot.slane %v4596, 4
      %v4599 = vor.u32 %v4595, %v4598
      %v4600 = vsel %vm334, %v4591, %v4599
      %v4602 = vshrl.u32 %v4460, 16
      %v4604 = vrot.slane %v4602, 3
      %v4605 = vshll.u32 %v4460, 16
      %v4607 = vrot.slane %v4605, 4
      %v4608 = vor.u32 %v4604, %v4607
      %v4610 = vshrl.u32 %v4461, 16
      %v4612 = vrot.slane %v4610, 3
      %v4613 = vshll.u32 %v4461, 16
      %v4615 = vrot.slane %v4613, 4
      %v4616 = vor.u32 %v4612, %v4615
      %v4617 = vsel %vm334, %v4608, %v4616
      %v4619 = vshrl.u32 %v4462, 16
      %v4621 = vrot.slane %v4619, 3
      %v4622 = vshll.u32 %v4462, 16
      %v4624 = vrot.slane %v4622, 4
      %v4625 = vor.u32 %v4621, %v4624
      %v4627 = vshrl.u32 %v4463, 16
      %v4629 = vrot.slane %v4627, 3
      %v4630 = vshll.u32 %v4463, 16
      %v4632 = vrot.slane %v4630, 4
      %v4633 = vor.u32 %v4629, %v4632
      %v4634 = vsel %vm334, %v4625, %v4633
      %v4636 = vshrl.u32 %v4464, 16
      %v4638 = vrot.slane %v4636, 3
      %v4639 = vshll.u32 %v4464, 16
      %v4641 = vrot.slane %v4639, 4
      %v4642 = vor.u32 %v4638, %v4641
      %v4644 = vshrl.u32 %v4465, 16
      %v4646 = vrot.slane %v4644, 3
      %v4647 = vshll.u32 %v4465, 16
      %v4649 = vrot.slane %v4647, 4
      %v4650 = vor.u32 %v4646, %v4649
      %v4651 = vsel %vm334, %v4642, %v4650
      %v4653 = vshrl.u32 %v4466, 16
      %v4655 = vrot.slane %v4653, 3
      %v4656 = vshll.u32 %v4466, 16
      %v4658 = vrot.slane %v4656, 4
      %v4659 = vor.u32 %v4655, %v4658
      %v4661 = vshrl.u32 %v4467, 16
      %v4663 = vrot.slane %v4661, 3
      %v4664 = vshll.u32 %v4467, 16
      %v4666 = vrot.slane %v4664, 4
      %v4667 = vor.u32 %v4663, %v4666
      %v4668 = vsel %vm334, %v4659, %v4667
      %v4670 = vshrl.u32 %v4468, 16
      %v4672 = vrot.slane %v4670, 3
      %v4673 = vshll.u32 %v4468, 16
      %v4675 = vrot.slane %v4673, 4
      %v4676 = vor.u32 %v4672, %v4675
      %v4678 = vshrl.u32 %v4469, 16
      %v4680 = vrot.slane %v4678, 3
      %v4681 = vshll.u32 %v4469, 16
      %v4683 = vrot.slane %v4681, 4
      %v4684 = vor.u32 %v4680, %v4683
      %v4685 = vsel %vm334, %v4676, %v4684
      %v4687 = vshrl.u32 %v4470, 16
      %v4689 = vrot.slane %v4687, 3
      %v4690 = vshll.u32 %v4470, 16
      %v4692 = vrot.slane %v4690, 4
      %v4693 = vor.u32 %v4689, %v4692
      %v4695 = vshrl.u32 %v4471, 16
      %v4697 = vrot.slane %v4695, 3
      %v4698 = vshll.u32 %v4471, 16
      %v4700 = vrot.slane %v4698, 4
      %v4701 = vor.u32 %v4697, %v4700
      %v4702 = vsel %vm334, %v4693, %v4701
      %v4704 = vshrl.u32 %v4472, 16
      %v4706 = vrot.slane %v4704, 3
      %v4707 = vshll.u32 %v4472, 16
      %v4709 = vrot.slane %v4707, 4
      %v4710 = vor.u32 %v4706, %v4709
      %v4712 = vshrl.u32 %v4473, 16
      %v4714 = vrot.slane %v4712, 3
      %v4715 = vshll.u32 %v4473, 16
      %v4717 = vrot.slane %v4715, 4
      %v4718 = vor.u32 %v4714, %v4717
      %v4719 = vsel %vm334, %v4710, %v4718
      %v4721 = vshrl.u32 %v4474, 16
      %v4723 = vrot.slane %v4721, 3
      %v4724 = vshll.u32 %v4474, 16
      %v4726 = vrot.slane %v4724, 4
      %v4727 = vor.u32 %v4723, %v4726
      %v4729 = vshrl.u32 %v4475, 16
      %v4731 = vrot.slane %v4729, 3
      %v4732 = vshll.u32 %v4475, 16
      %v4734 = vrot.slane %v4732, 4
      %v4735 = vor.u32 %v4731, %v4734
      %v4736 = vsel %vm334, %v4727, %v4735
      %v4738 = vshrl.u32 %v4476, 16
      %v4740 = vrot.slane %v4738, 3
      %v4741 = vshll.u32 %v4476, 16
      %v4743 = vrot.slane %v4741, 4
      %v4744 = vor.u32 %v4740, %v4743
      %v4746 = vshrl.u32 %v4477, 16
      %v4748 = vrot.slane %v4746, 3
      %v4749 = vshll.u32 %v4477, 16
      %v4751 = vrot.slane %v4749, 4
      %v4752 = vor.u32 %v4748, %v4751
      %v4753 = vsel %vm334, %v4744, %v4752
      %v4755 = vshrl.u32 %v4478, 16
      %v4757 = vrot.slane %v4755, 3
      %v4758 = vshll.u32 %v4478, 16
      %v4760 = vrot.slane %v4758, 4
      %v4761 = vor.u32 %v4757, %v4760
      %v4763 = vshrl.u32 %v4479, 16
      %v4765 = vrot.slane %v4763, 3
      %v4766 = vshll.u32 %v4479, 16
      %v4768 = vrot.slane %v4766, 4
      %v4769 = vor.u32 %v4765, %v4768
      %v4770 = vsel %vm334, %v4761, %v4769
      %v4772 = vshrl.u32 %v4480, 16
      %v4774 = vrot.slane %v4772, 3
      %v4775 = vshll.u32 %v4480, 16
      %v4777 = vrot.slane %v4775, 4
      %v4778 = vor.u32 %v4774, %v4777
      %v4780 = vshrl.u32 %v4481, 16
      %v4782 = vrot.slane %v4780, 3
      %v4783 = vshll.u32 %v4481, 16
      %v4785 = vrot.slane %v4783, 4
      %v4786 = vor.u32 %v4782, %v4785
      %v4787 = vsel %vm334, %v4778, %v4786
      %vm4806 = vcmask 31744
      %4807 = vst.msk [vmem:[#allocation5] sm:$0xff] %vm4806, %v4498
      %4808 = vst.msk [vmem:[#allocation5 + $0x8] sm:$0xff] %vm4806, %v4515
      %4809 = vst.msk [vmem:[#allocation5 + $0x10] sm:$0xff] %vm4806, %v4532
      %4810 = vst.msk [vmem:[#allocation5 + $0x18] sm:$0xff] %vm4806, %v4549
      %4811 = vst.msk [vmem:[#allocation5 + $0x20] sm:$0xff] %vm4806, %v4566
      %4812 = vst.msk [vmem:[#allocation5 + $0x28] sm:$0xff] %vm4806, %v4583
      %4813 = vst.msk [vmem:[#allocation5 + $0x30] sm:$0xff] %vm4806, %v4600
      %4814 = vst.msk [vmem:[#allocation5 + $0x38] sm:$0xff] %vm4806, %v4617
      %4815 = vst.msk [vmem:[#allocation5 + $0x40] sm:$0xff] %vm4806, %v4634
      %4816 = vst.msk [vmem:[#allocation5 + $0x48] sm:$0xff] %vm4806, %v4651
      %4817 = vst.msk [vmem:[#allocation5 + $0x50] sm:$0xff] %vm4806, %v4668
      %4818 = vst.msk [vmem:[#allocation5 + $0x58] sm:$0xff] %vm4806, %v4685
      %4819 = vst.msk [vmem:[#allocation5 + $0x60] sm:$0xff] %vm4806, %v4702
      %4820 = vst.msk [vmem:[#allocation5 + $0x68] sm:$0xff] %vm4806, %v4719
      %4821 = vst.msk [vmem:[#allocation5 + $0x70] sm:$0xff] %vm4806, %v4736
      %4822 = vst.msk [vmem:[#allocation5 + $0x78] sm:$0xff] %vm4806, %v4753
      %4823 = vst.msk [vmem:[#allocation5 + $0x80] sm:$0xff] %vm4806, %v4770
      %4824 = vst.msk [vmem:[#allocation5 + $0x88] sm:$0xff] %vm4806, %v4787
      %v4825 = vld [vmem:[#allocation3] sm:$0xf0]
      %v4826 = vld [vmem:[#allocation3 + $0x8] sm:$0xf]
      %v4827 = vld [vmem:[#allocation3 + $0x10] sm:$0xf0]
      %v4828 = vld [vmem:[#allocation3 + $0x18] sm:$0xf]
      %v4829 = vld [vmem:[#allocation3 + $0x20] sm:$0xf0]
      %v4830 = vld [vmem:[#allocation3 + $0x28] sm:$0xf]
      %v4831 = vld [vmem:[#allocation3 + $0x30] sm:$0xf0]
      %v4832 = vld [vmem:[#allocation3 + $0x38] sm:$0xf]
      %v4833 = vld [vmem:[#allocation3 + $0x40] sm:$0xf0]
      %v4834 = vld [vmem:[#allocation3 + $0x48] sm:$0xf]
      %v4835 = vld [vmem:[#allocation3 + $0x50] sm:$0xf0]
      %v4836 = vld [vmem:[#allocation3 + $0x58] sm:$0xf]
      %v4837 = vld [vmem:[#allocation3 + $0x60] sm:$0xf0]
      %v4838 = vld [vmem:[#allocation3 + $0x68] sm:$0xf]
      %v4839 = vld [vmem:[#allocation3 + $0x70] sm:$0xf0]
      %v4840 = vld [vmem:[#allocation3 + $0x78] sm:$0xf]
      %v4841 = vld [vmem:[#allocation3 + $0x80] sm:$0xf0]
      %v4842 = vld [vmem:[#allocation3 + $0x88] sm:$0xf]
      %v4843 = vld [vmem:[#allocation3 + $0x90] sm:$0xf0]
      %v4844 = vld [vmem:[#allocation3 + $0x98] sm:$0xf]
      %v4845 = vld [vmem:[#allocation3 + $0xa0] sm:$0xf0]
      %v4846 = vld [vmem:[#allocation3 + $0xa8] sm:$0xf]
      %v4847 = vld [vmem:[#allocation3 + $0xb0] sm:$0xf0]
      %v4848 = vld [vmem:[#allocation3 + $0xb8] sm:$0xf]
      %v4849 = vld [vmem:[#allocation3 + $0xc0] sm:$0xf0]
      %v4850 = vld [vmem:[#allocation3 + $0xc8] sm:$0xf]
      %v4851 = vld [vmem:[#allocation3 + $0xd0] sm:$0xf0]
      %v4852 = vld [vmem:[#allocation3 + $0xd8] sm:$0xf]
      %v4853 = vld [vmem:[#allocation3 + $0xe0] sm:$0xf0]
      %v4854 = vld [vmem:[#allocation3 + $0xe8] sm:$0xf]
      %v4855 = vld [vmem:[#allocation3 + $0xf0] sm:$0xf0]
      %v4856 = vld [vmem:[#allocation3 + $0xf8] sm:$0xf]
      %v4857 = vld [vmem:[#allocation3 + $0x100] sm:$0xf0]
      %v4858 = vld [vmem:[#allocation3 + $0x108] sm:$0xf]
      %v4859 = vld [vmem:[#allocation3 + $0x110] sm:$0xf0]
      %v4860 = vld [vmem:[#allocation3 + $0x118] sm:$0xf]
      %v4897 = vrot.slane %v4825, 4
      %v4898 = vrot.slane %v4826, 4
      %v4899 = vsel %vm1468, %v4897, %v4898
      %v4900 = vrot.slane %v4827, 4
      %v4901 = vrot.slane %v4828, 4
      %v4902 = vsel %vm1468, %v4900, %v4901
      %v4903 = vrot.slane %v4829, 4
      %v4904 = vrot.slane %v4830, 4
      %v4905 = vsel %vm1468, %v4903, %v4904
      %v4906 = vrot.slane %v4831, 4
      %v4907 = vrot.slane %v4832, 4
      %v4908 = vsel %vm1468, %v4906, %v4907
      %v4909 = vrot.slane %v4833, 4
      %v4910 = vrot.slane %v4834, 4
      %v4911 = vsel %vm1468, %v4909, %v4910
      %v4912 = vrot.slane %v4835, 4
      %v4913 = vrot.slane %v4836, 4
      %v4914 = vsel %vm1468, %v4912, %v4913
      %v4915 = vrot.slane %v4837, 4
      %v4916 = vrot.slane %v4838, 4
      %v4917 = vsel %vm1468, %v4915, %v4916
      %v4918 = vrot.slane %v4839, 4
      %v4919 = vrot.slane %v4840, 4
      %v4920 = vsel %vm1468, %v4918, %v4919
      %v4921 = vrot.slane %v4841, 4
      %v4922 = vrot.slane %v4842, 4
      %v4923 = vsel %vm1468, %v4921, %v4922
      %v4924 = vrot.slane %v4843, 4
      %v4925 = vrot.slane %v4844, 4
      %v4926 = vsel %vm1468, %v4924, %v4925
      %v4927 = vrot.slane %v4845, 4
      %v4928 = vrot.slane %v4846, 4
      %v4929 = vsel %vm1468, %v4927, %v4928
      %v4930 = vrot.slane %v4847, 4
      %v4931 = vrot.slane %v4848, 4
      %v4932 = vsel %vm1468, %v4930, %v4931
      %v4933 = vrot.slane %v4849, 4
      %v4934 = vrot.slane %v4850, 4
      %v4935 = vsel %vm1468, %v4933, %v4934
      %v4936 = vrot.slane %v4851, 4
      %v4937 = vrot.slane %v4852, 4
      %v4938 = vsel %vm1468, %v4936, %v4937
      %v4939 = vrot.slane %v4853, 4
      %v4940 = vrot.slane %v4854, 4
      %v4941 = vsel %vm1468, %v4939, %v4940
      %v4942 = vrot.slane %v4855, 4
      %v4943 = vrot.slane %v4856, 4
      %v4944 = vsel %vm1468, %v4942, %v4943
      %v4945 = vrot.slane %v4857, 4
      %v4946 = vrot.slane %v4858, 4
      %v4947 = vsel %vm1468, %v4945, %v4946
      %v4948 = vrot.slane %v4859, 4
      %v4949 = vrot.slane %v4860, 4
      %v4950 = vsel %vm1468, %v4948, %v4949
      %s4969 = scalar_lea.vmem [#allocation5], 144
      %4970 = vst.msk [vmem:[%s4969] sm:$0xff] %vm4806, %v4899
      %4971 = vst.msk [vmem:[%s4969 + $0x8] sm:$0xff] %vm4806, %v4902
      %4972 = vst.msk [vmem:[%s4969 + $0x10] sm:$0xff] %vm4806, %v4905
      %4973 = vst.msk [vmem:[%s4969 + $0x18] sm:$0xff] %vm4806, %v4908
      %4974 = vst.msk [vmem:[%s4969 + $0x20] sm:$0xff] %vm4806, %v4911
      %4975 = vst.msk [vmem:[%s4969 + $0x28] sm:$0xff] %vm4806, %v4914
      %4976 = vst.msk [vmem:[%s4969 + $0x30] sm:$0xff] %vm4806, %v4917
      %4977 = vst.msk [vmem:[%s4969 + $0x38] sm:$0xff] %vm4806, %v4920
      %4978 = vst.msk [vmem:[%s4969 + $0x40] sm:$0xff] %vm4806, %v4923
      %4979 = vst.msk [vmem:[%s4969 + $0x48] sm:$0xff] %vm4806, %v4926
      %4980 = vst.msk [vmem:[%s4969 + $0x50] sm:$0xff] %vm4806, %v4929
      %4981 = vst.msk [vmem:[%s4969 + $0x58] sm:$0xff] %vm4806, %v4932
      %4982 = vst.msk [vmem:[%s4969 + $0x60] sm:$0xff] %vm4806, %v4935
      %4983 = vst.msk [vmem:[%s4969 + $0x68] sm:$0xff] %vm4806, %v4938
      %4984 = vst.msk [vmem:[%s4969 + $0x70] sm:$0xff] %vm4806, %v4941
      %4985 = vst.msk [vmem:[%s4969 + $0x78] sm:$0xff] %vm4806, %v4944
      %4986 = vst.msk [vmem:[%s4969 + $0x80] sm:$0xff] %vm4806, %v4947
      %4987 = vst.msk [vmem:[%s4969 + $0x88] sm:$0xff] %vm4806, %v4950
      %v4988 = vld [vmem:[#allocation3] sm:$0xf0]
      %v4989 = vld [vmem:[#allocation3 + $0x8] sm:$0x1f]
      %v4990 = vld [vmem:[#allocation3 + $0x10] sm:$0xf0]
      %v4991 = vld [vmem:[#allocation3 + $0x18] sm:$0x1f]
      %v4992 = vld [vmem:[#allocation3 + $0x20] sm:$0xf0]
      %v4993 = vld [vmem:[#allocation3 + $0x28] sm:$0x1f]
      %v4994 = vld [vmem:[#allocation3 + $0x30] sm:$0xf0]
      %v4995 = vld [vmem:[#allocation3 + $0x38] sm:$0x1f]
      %v4996 = vld [vmem:[#allocation3 + $0x40] sm:$0xf0]
      %v4997 = vld [vmem:[#allocation3 + $0x48] sm:$0x1f]
      %v4998 = vld [vmem:[#allocation3 + $0x50] sm:$0xf0]
      %v4999 = vld [vmem:[#allocation3 + $0x58] sm:$0x1f]
      %v5000 = vld [vmem:[#allocation3 + $0x60] sm:$0xf0]
      %v5001 = vld [vmem:[#allocation3 + $0x68] sm:$0x1f]
      %v5002 = vld [vmem:[#allocation3 + $0x70] sm:$0xf0]
      %v5003 = vld [vmem:[#allocation3 + $0x78] sm:$0x1f]
      %v5004 = vld [vmem:[#allocation3 + $0x80] sm:$0xf0]
      %v5005 = vld [vmem:[#allocation3 + $0x88] sm:$0x1f]
      %v5006 = vld [vmem:[#allocation3 + $0x90] sm:$0xf0]
      %v5007 = vld [vmem:[#allocation3 + $0x98] sm:$0x1f]
      %v5008 = vld [vmem:[#allocation3 + $0xa0] sm:$0xf0]
      %v5009 = vld [vmem:[#allocation3 + $0xa8] sm:$0x1f]
      %v5010 = vld [vmem:[#allocation3 + $0xb0] sm:$0xf0]
      %v5011 = vld [vmem:[#allocation3 + $0xb8] sm:$0x1f]
      %v5012 = vld [vmem:[#allocation3 + $0xc0] sm:$0xf0]
      %v5013 = vld [vmem:[#allocation3 + $0xc8] sm:$0x1f]
      %v5014 = vld [vmem:[#allocation3 + $0xd0] sm:$0xf0]
      %v5015 = vld [vmem:[#allocation3 + $0xd8] sm:$0x1f]
      %v5016 = vld [vmem:[#allocation3 + $0xe0] sm:$0xf0]
      %v5017 = vld [vmem:[#allocation3 + $0xe8] sm:$0x1f]
      %v5018 = vld [vmem:[#allocation3 + $0xf0] sm:$0xf0]
      %v5019 = vld [vmem:[#allocation3 + $0xf8] sm:$0x1f]
      %v5020 = vld [vmem:[#allocation3 + $0x100] sm:$0xf0]
      %v5021 = vld [vmem:[#allocation3 + $0x108] sm:$0x1f]
      %v5022 = vld [vmem:[#allocation3 + $0x110] sm:$0xf0]
      %v5023 = vld [vmem:[#allocation3 + $0x118] sm:$0x1f]
      %v5025 = vshrl.u32 %v4988, 16
      %v5027 = vrot.slane %v5025, 4
      %v5028 = vshll.u32 %v4988, 16
      %v5030 = vrot.slane %v5028, 5
      %v5031 = vor.u32 %v5027, %v5030
      %v5033 = vshrl.u32 %v4989, 16
      %v5035 = vrot.slane %v5033, 4
      %v5036 = vshll.u32 %v4989, 16
      %v5038 = vrot.slane %v5036, 5
      %v5039 = vor.u32 %v5035, %v5038
      %v5040 = vsel %vm1596, %v5031, %v5039
      %v5042 = vshrl.u32 %v4990, 16
      %v5044 = vrot.slane %v5042, 4
      %v5045 = vshll.u32 %v4990, 16
      %v5047 = vrot.slane %v5045, 5
      %v5048 = vor.u32 %v5044, %v5047
      %v5050 = vshrl.u32 %v4991, 16
      %v5052 = vrot.slane %v5050, 4
      %v5053 = vshll.u32 %v4991, 16
      %v5055 = vrot.slane %v5053, 5
      %v5056 = vor.u32 %v5052, %v5055
      %v5057 = vsel %vm1596, %v5048, %v5056
      %v5059 = vshrl.u32 %v4992, 16
      %v5061 = vrot.slane %v5059, 4
      %v5062 = vshll.u32 %v4992, 16
      %v5064 = vrot.slane %v5062, 5
      %v5065 = vor.u32 %v5061, %v5064
      %v5067 = vshrl.u32 %v4993, 16
      %v5069 = vrot.slane %v5067, 4
      %v5070 = vshll.u32 %v4993, 16
      %v5072 = vrot.slane %v5070, 5
      %v5073 = vor.u32 %v5069, %v5072
      %v5074 = vsel %vm1596, %v5065, %v5073
      %v5076 = vshrl.u32 %v4994, 16
      %v5078 = vrot.slane %v5076, 4
      %v5079 = vshll.u32 %v4994, 16
      %v5081 = vrot.slane %v5079, 5
      %v5082 = vor.u32 %v5078, %v5081
      %v5084 = vshrl.u32 %v4995, 16
      %v5086 = vrot.slane %v5084, 4
      %v5087 = vshll.u32 %v4995, 16
      %v5089 = vrot.slane %v5087, 5
      %v5090 = vor.u32 %v5086, %v5089
      %v5091 = vsel %vm1596, %v5082, %v5090
      %v5093 = vshrl.u32 %v4996, 16
      %v5095 = vrot.slane %v5093, 4
      %v5096 = vshll.u32 %v4996, 16
      %v5098 = vrot.slane %v5096, 5
      %v5099 = vor.u32 %v5095, %v5098
      %v5101 = vshrl.u32 %v4997, 16
      %v5103 = vrot.slane %v5101, 4
      %v5104 = vshll.u32 %v4997, 16
      %v5106 = vrot.slane %v5104, 5
      %v5107 = vor.u32 %v5103, %v5106
      %v5108 = vsel %vm1596, %v5099, %v5107
      %v5110 = vshrl.u32 %v4998, 16
      %v5112 = vrot.slane %v5110, 4
      %v5113 = vshll.u32 %v4998, 16
      %v5115 = vrot.slane %v5113, 5
      %v5116 = vor.u32 %v5112, %v5115
      %v5118 = vshrl.u32 %v4999, 16
      %v5120 = vrot.slane %v5118, 4
      %v5121 = vshll.u32 %v4999, 16
      %v5123 = vrot.slane %v5121, 5
      %v5124 = vor.u32 %v5120, %v5123
      %v5125 = vsel %vm1596, %v5116, %v5124
      %v5127 = vshrl.u32 %v5000, 16
      %v5129 = vrot.slane %v5127, 4
      %v5130 = vshll.u32 %v5000, 16
      %v5132 = vrot.slane %v5130, 5
      %v5133 = vor.u32 %v5129, %v5132
      %v5135 = vshrl.u32 %v5001, 16
      %v5137 = vrot.slane %v5135, 4
      %v5138 = vshll.u32 %v5001, 16
      %v5140 = vrot.slane %v5138, 5
      %v5141 = vor.u32 %v5137, %v5140
      %v5142 = vsel %vm1596, %v5133, %v5141
      %v5144 = vshrl.u32 %v5002, 16
      %v5146 = vrot.slane %v5144, 4
      %v5147 = vshll.u32 %v5002, 16
      %v5149 = vrot.slane %v5147, 5
      %v5150 = vor.u32 %v5146, %v5149
      %v5152 = vshrl.u32 %v5003, 16
      %v5154 = vrot.slane %v5152, 4
      %v5155 = vshll.u32 %v5003, 16
      %v5157 = vrot.slane %v5155, 5
      %v5158 = vor.u32 %v5154, %v5157
      %v5159 = vsel %vm1596, %v5150, %v5158
      %v5161 = vshrl.u32 %v5004, 16
      %v5163 = vrot.slane %v5161, 4
      %v5164 = vshll.u32 %v5004, 16
      %v5166 = vrot.slane %v5164, 5
      %v5167 = vor.u32 %v5163, %v5166
      %v5169 = vshrl.u32 %v5005, 16
      %v5171 = vrot.slane %v5169, 4
      %v5172 = vshll.u32 %v5005, 16
      %v5174 = vrot.slane %v5172, 5
      %v5175 = vor.u32 %v5171, %v5174
      %v5176 = vsel %vm1596, %v5167, %v5175
      %v5178 = vshrl.u32 %v5006, 16
      %v5180 = vrot.slane %v5178, 4
      %v5181 = vshll.u32 %v5006, 16
      %v5183 = vrot.slane %v5181, 5
      %v5184 = vor.u32 %v5180, %v5183
      %v5186 = vshrl.u32 %v5007, 16
      %v5188 = vrot.slane %v5186, 4
      %v5189 = vshll.u32 %v5007, 16
      %v5191 = vrot.slane %v5189, 5
      %v5192 = vor.u32 %v5188, %v5191
      %v5193 = vsel %vm1596, %v5184, %v5192
      %v5195 = vshrl.u32 %v5008, 16
      %v5197 = vrot.slane %v5195, 4
      %v5198 = vshll.u32 %v5008, 16
      %v5200 = vrot.slane %v5198, 5
      %v5201 = vor.u32 %v5197, %v5200
      %v5203 = vshrl.u32 %v5009, 16
      %v5205 = vrot.slane %v5203, 4
      %v5206 = vshll.u32 %v5009, 16
      %v5208 = vrot.slane %v5206, 5
      %v5209 = vor.u32 %v5205, %v5208
      %v5210 = vsel %vm1596, %v5201, %v5209
      %v5212 = vshrl.u32 %v5010, 16
      %v5214 = vrot.slane %v5212, 4
      %v5215 = vshll.u32 %v5010, 16
      %v5217 = vrot.slane %v5215, 5
      %v5218 = vor.u32 %v5214, %v5217
      %v5220 = vshrl.u32 %v5011, 16
      %v5222 = vrot.slane %v5220, 4
      %v5223 = vshll.u32 %v5011, 16
      %v5225 = vrot.slane %v5223, 5
      %v5226 = vor.u32 %v5222, %v5225
      %v5227 = vsel %vm1596, %v5218, %v5226
      %v5229 = vshrl.u32 %v5012, 16
      %v5231 = vrot.slane %v5229, 4
      %v5232 = vshll.u32 %v5012, 16
      %v5234 = vrot.slane %v5232, 5
      %v5235 = vor.u32 %v5231, %v5234
      %v5237 = vshrl.u32 %v5013, 16
      %v5239 = vrot.slane %v5237, 4
      %v5240 = vshll.u32 %v5013, 16
      %v5242 = vrot.slane %v5240, 5
      %v5243 = vor.u32 %v5239, %v5242
      %v5244 = vsel %vm1596, %v5235, %v5243
      %v5246 = vshrl.u32 %v5014, 16
      %v5248 = vrot.slane %v5246, 4
      %v5249 = vshll.u32 %v5014, 16
      %v5251 = vrot.slane %v5249, 5
      %v5252 = vor.u32 %v5248, %v5251
      %v5254 = vshrl.u32 %v5015, 16
      %v5256 = vrot.slane %v5254, 4
      %v5257 = vshll.u32 %v5015, 16
      %v5259 = vrot.slane %v5257, 5
      %v5260 = vor.u32 %v5256, %v5259
      %v5261 = vsel %vm1596, %v5252, %v5260
      %v5263 = vshrl.u32 %v5016, 16
      %v5265 = vrot.slane %v5263, 4
      %v5266 = vshll.u32 %v5016, 16
      %v5268 = vrot.slane %v5266, 5
      %v5269 = vor.u32 %v5265, %v5268
      %v5271 = vshrl.u32 %v5017, 16
      %v5273 = vrot.slane %v5271, 4
      %v5274 = vshll.u32 %v5017, 16
      %v5276 = vrot.slane %v5274, 5
      %v5277 = vor.u32 %v5273, %v5276
      %v5278 = vsel %vm1596, %v5269, %v5277
      %v5280 = vshrl.u32 %v5018, 16
      %v5282 = vrot.slane %v5280, 4
      %v5283 = vshll.u32 %v5018, 16
      %v5285 = vrot.slane %v5283, 5
      %v5286 = vor.u32 %v5282, %v5285
      %v5288 = vshrl.u32 %v5019, 16
      %v5290 = vrot.slane %v5288, 4
      %v5291 = vshll.u32 %v5019, 16
      %v5293 = vrot.slane %v5291, 5
      %v5294 = vor.u32 %v5290, %v5293
      %v5295 = vsel %vm1596, %v5286, %v5294
      %v5297 = vshrl.u32 %v5020, 16
      %v5299 = vrot.slane %v5297, 4
      %v5300 = vshll.u32 %v5020, 16
      %v5302 = vrot.slane %v5300, 5
      %v5303 = vor.u32 %v5299, %v5302
      %v5305 = vshrl.u32 %v5021, 16
      %v5307 = vrot.slane %v5305, 4
      %v5308 = vshll.u32 %v5021, 16
      %v5310 = vrot.slane %v5308, 5
      %v5311 = vor.u32 %v5307, %v5310
      %v5312 = vsel %vm1596, %v5303, %v5311
      %v5314 = vshrl.u32 %v5022, 16
      %v5316 = vrot.slane %v5314, 4
      %v5317 = vshll.u32 %v5022, 16
      %v5319 = vrot.slane %v5317, 5
      %v5320 = vor.u32 %v5316, %v5319
      %v5322 = vshrl.u32 %v5023, 16
      %v5324 = vrot.slane %v5322, 4
      %v5325 = vshll.u32 %v5023, 16
      %v5327 = vrot.slane %v5325, 5
      %v5328 = vor.u32 %v5324, %v5327
      %v5329 = vsel %vm1596, %v5320, %v5328
      %s5348 = scalar_lea.vmem [#allocation5], 288
      %5349 = vst.msk [vmem:[%s5348] sm:$0xff] %vm4806, %v5040
      %5350 = vst.msk [vmem:[%s5348 + $0x8] sm:$0xff] %vm4806, %v5057
      %5351 = vst.msk [vmem:[%s5348 + $0x10] sm:$0xff] %vm4806, %v5074
      %5352 = vst.msk [vmem:[%s5348 + $0x18] sm:$0xff] %vm4806, %v5091
      %5353 = vst.msk [vmem:[%s5348 + $0x20] sm:$0xff] %vm4806, %v5108
      %5354 = vst.msk [vmem:[%s5348 + $0x28] sm:$0xff] %vm4806, %v5125
      %5355 = vst.msk [vmem:[%s5348 + $0x30] sm:$0xff] %vm4806, %v5142
      %5356 = vst.msk [vmem:[%s5348 + $0x38] sm:$0xff] %vm4806, %v5159
      %5357 = vst.msk [vmem:[%s5348 + $0x40] sm:$0xff] %vm4806, %v5176
      %5358 = vst.msk [vmem:[%s5348 + $0x48] sm:$0xff] %vm4806, %v5193
      %5359 = vst.msk [vmem:[%s5348 + $0x50] sm:$0xff] %vm4806, %v5210
      %5360 = vst.msk [vmem:[%s5348 + $0x58] sm:$0xff] %vm4806, %v5227
      %5361 = vst.msk [vmem:[%s5348 + $0x60] sm:$0xff] %vm4806, %v5244
      %5362 = vst.msk [vmem:[%s5348 + $0x68] sm:$0xff] %vm4806, %v5261
      %5363 = vst.msk [vmem:[%s5348 + $0x70] sm:$0xff] %vm4806, %v5278
      %5364 = vst.msk [vmem:[%s5348 + $0x78] sm:$0xff] %vm4806, %v5295
      %5365 = vst.msk [vmem:[%s5348 + $0x80] sm:$0xff] %vm4806, %v5312
      %5366 = vst.msk [vmem:[%s5348 + $0x88] sm:$0xff] %vm4806, %v5329
      %v5367 = vld [vmem:[#allocation5] sm:$0xff]
      %v5368 = vld [vmem:[#allocation5 + $0x8] sm:$0xff]
      %v5369 = vld [vmem:[#allocation5 + $0x10] sm:$0xff]
      %v5370 = vld [vmem:[#allocation5 + $0x18] sm:$0xff]
      %v5371 = vld [vmem:[#allocation5 + $0x20] sm:$0xff]
      %v5372 = vld [vmem:[#allocation5 + $0x28] sm:$0xff]
      %v5373 = vld [vmem:[#allocation5 + $0x30] sm:$0xff]
      %v5374 = vld [vmem:[#allocation5 + $0x38] sm:$0xff]
      %v5375 = vld [vmem:[#allocation5 + $0x40] sm:$0xff]
      %v5376 = vld [vmem:[#allocation5 + $0x48] sm:$0xff]
      %v5377 = vld [vmem:[#allocation5 + $0x50] sm:$0xff]
      %v5378 = vld [vmem:[#allocation5 + $0x58] sm:$0xff]
      %v5379 = vld [vmem:[#allocation5 + $0x60] sm:$0xff]
      %v5380 = vld [vmem:[#allocation5 + $0x68] sm:$0xff]
      %v5381 = vld [vmem:[#allocation5 + $0x70] sm:$0xff]
      %v5382 = vld [vmem:[#allocation5 + $0x78] sm:$0xff]
      %v5383 = vld [vmem:[%s3] sm:$0x3]
      %v5384 = vld [vmem:[%s4969] sm:$0xff]
      %v5385 = vld [vmem:[%s4969 + $0x8] sm:$0xff]
      %v5386 = vld [vmem:[%s4969 + $0x10] sm:$0xff]
      %v5387 = vld [vmem:[%s4969 + $0x18] sm:$0xff]
      %v5388 = vld [vmem:[%s4969 + $0x20] sm:$0xff]
      %v5389 = vld [vmem:[%s4969 + $0x28] sm:$0xff]
      %v5390 = vld [vmem:[%s4969 + $0x30] sm:$0xff]
      %v5391 = vld [vmem:[%s4969 + $0x38] sm:$0xff]
      %v5392 = vld [vmem:[%s4969 + $0x40] sm:$0xff]
      %v5393 = vld [vmem:[%s4969 + $0x48] sm:$0xff]
      %v5394 = vld [vmem:[%s4969 + $0x50] sm:$0xff]
      %v5395 = vld [vmem:[%s4969 + $0x58] sm:$0xff]
      %v5396 = vld [vmem:[%s4969 + $0x60] sm:$0xff]
      %v5397 = vld [vmem:[%s4969 + $0x68] sm:$0xff]
      %v5398 = vld [vmem:[%s4969 + $0x70] sm:$0xff]
      %v5399 = vld [vmem:[%s4969 + $0x78] sm:$0xff]
      %s5400 = scalar_lea.vmem %s3, 2
      %v5401 = vld [vmem:[%s5400] sm:$0x3]
      %v5403 = vsel %vm4806, %v5384, 0
      %v5406 = vsel %vm4806, %v5385, 0
      %v5409 = vsel %vm4806, %v5386, 0
      %v5412 = vsel %vm4806, %v5387, 0
      %v5415 = vsel %vm4806, %v5388, 0
      %v5418 = vsel %vm4806, %v5389, 0
      %v5421 = vsel %vm4806, %v5390, 0
      %v5424 = vsel %vm4806, %v5391, 0
      %v5427 = vsel %vm4806, %v5392, 0
      %v5430 = vsel %vm4806, %v5393, 0
      %v5433 = vsel %vm4806, %v5394, 0
      %v5436 = vsel %vm4806, %v5395, 0
      %v5439 = vsel %vm4806, %v5396, 0
      %v5442 = vsel %vm4806, %v5397, 0
      %v5445 = vsel %vm4806, %v5398, 0
      %v5448 = vsel %vm4806, %v5399, 0
      %vm5450 = vcmask 1041408
      %v5452 = vsel %vm5450, %v5401, 0
      %5454 = vmatprep.subr.bf16.mxu0 0
      %5455 = vmatpush1.bf16.msra.mxu0 %v5452
      %5456 = vmatprep.subr.bf16.mxu0 0
      %5457 = vmatpush1.bf16.msra.mxu0 0
      %5458 = vmatprep.subr.bf16.mxu0 0
      %5459 = vmatpush1.bf16.msra.mxu0 0
      %5460 = vmatprep.subr.bf16.mxu0 0
      %5461 = vmatpush1.bf16.msra.mxu0 0
      %5462 = vmatprep.subr.bf16.mxu0 0
      %5463 = vmatpush1.bf16.msra.mxu0 0
      %5464 = vmatprep.subr.bf16.mxu0 0
      %5465 = vmatpush1.bf16.msra.mxu0 0
      %5466 = vmatprep.subr.bf16.mxu0 0
      %5467 = vmatpush1.bf16.msra.mxu0 0
      %5468 = vmatprep.subr.bf16.mxu0 0
      %5469 = vmatpush1.bf16.msra.mxu0 0
      %5470 = vmatprep.subr.bf16.mxu0 0
      %5471 = vmatpush1.bf16.msra.mxu0 0
      %5472 = vmatprep.subr.bf16.mxu0 0
      %5473 = vmatpush1.bf16.msra.mxu0 0
      %5474 = vmatprep.subr.bf16.mxu0 0
      %5475 = vmatpush1.bf16.msra.mxu0 0
      %5476 = vmatprep.subr.bf16.mxu0 0
      %5477 = vmatpush1.bf16.msra.mxu0 0
      %5478 = vmatprep.subr.bf16.mxu0 0
      %5479 = vmatpush1.bf16.msra.mxu0 0
      %5480 = vmatprep.subr.bf16.mxu0 0
      %5481 = vmatpush1.bf16.msra.mxu0 0
      %5482 = vmatprep.subr.bf16.mxu0 0
      %5483 = vmatpush1.bf16.msra.mxu0 0
      %5484 = vmatprep.subr.bf16.mxu0 0
      %5485 = vmatpush1.bf16.msra.mxu0 0
      %5486 = vmatprep.mubr.bf16.mxu0 0
      %5487 = vmatmul.mubr.bf16.gmra.mrb[0].mxu0 %v5403
      %v5488 = vpop.f32.mrb[0].mxu0
      %v5489 = vadd.f32 0.0, %v5488
      %v5490 = vpop.f32.mrb[0].mxu0
      %v5491 = vpop.f32.mrb[0].mxu0
      %v5492 = vadd.f32 0.0, %v5491
      %v5493 = vpop.f32.mrb[0].mxu0
      %5494 = vmatprep.mubr.bf16.mxu0 0
      %5495 = vmatmul.mubr.bf16.gmra.mrb[0].mxu0 %v5406
      %v5496 = vpop.f32.mrb[0].mxu0
      %v5497 = vadd.f32 0.0, %v5496
      %v5498 = vpop.f32.mrb[0].mxu0
      %v5499 = vpop.f32.mrb[0].mxu0
      %v5500 = vadd.f32 0.0, %v5499
      %v5501 = vpop.f32.mrb[0].mxu0
      %5502 = vmatprep.mubr.bf16.mxu0 0
      %5503 = vmatmul.mubr.bf16.gmra.mrb[0].mxu0 %v5409
      %v5504 = vpop.f32.mrb[0].mxu0
      %v5505 = vadd.f32 0.0, %v5504
      %v5506 = vpop.f32.mrb[0].mxu0
      %v5507 = vpop.f32.mrb[0].mxu0
      %v5508 = vadd.f32 0.0, %v5507
      %v5509 = vpop.f32.mrb[0].mxu0
      %5510 = vmatprep.mubr.bf16.mxu0 0
      %5511 = vmatmul.mubr.bf16.gmra.mrb[0].mxu0 %v5412
      %v5512 = vpop.f32.mrb[0].mxu0
      %v5513 = vadd.f32 0.0, %v5512
      %v5514 = vpop.f32.mrb[0].mxu0
      %v5515 = vpop.f32.mrb[0].mxu0
      %v5516 = vadd.f32 0.0, %v5515
      %v5517 = vpop.f32.mrb[0].mxu0
      %5518 = vmatprep.mubr.bf16.mxu0 0
      %5519 = vmatmul.mubr.bf16.gmra.mrb[0].mxu0 %v5415
      %v5520 = vpop.f32.mrb[0].mxu0
      %v5521 = vadd.f32 0.0, %v5520
      %v5522 = vpop.f32.mrb[0].mxu0
      %v5523 = vpop.f32.mrb[0].mxu0
      %v5524 = vadd.f32 0.0, %v5523
      %v5525 = vpop.f32.mrb[0].mxu0
      %5526 = vmatprep.mubr.bf16.mxu0 0
      %5527 = vmatmul.mubr.bf16.gmra.mrb[0].mxu0 %v5418
      %v5528 = vpop.f32.mrb[0].mxu0
      %v5529 = vadd.f32 0.0, %v5528
      %v5530 = vpop.f32.mrb[0].mxu0
      %v5531 = vpop.f32.mrb[0].mxu0
      %v5532 = vadd.f32 0.0, %v5531
      %v5533 = vpop.f32.mrb[0].mxu0
      %5534 = vmatprep.mubr.bf16.mxu0 0
      %5535 = vmatmul.mubr.bf16.gmra.mrb[0].mxu0 %v5421
      %v5536 = vpop.f32.mrb[0].mxu0
      %v5537 = vadd.f32 0.0, %v5536
      %v5538 = vpop.f32.mrb[0].mxu0
      %v5539 = vpop.f32.mrb[0].mxu0
      %v5540 = vadd.f32 0.0, %v5539
      %v5541 = vpop.f32.mrb[0].mxu0
      %5542 = vmatprep.mubr.bf16.mxu0 0
      %5543 = vmatmul.mubr.bf16.gmra.mrb[0].mxu0 %v5424
      %v5544 = vpop.f32.mrb[0].mxu0
      %v5545 = vadd.f32 0.0, %v5544
      %v5546 = vpop.f32.mrb[0].mxu0
      %v5547 = vpop.f32.mrb[0].mxu0
      %v5548 = vadd.f32 0.0, %v5547
      %v5549 = vpop.f32.mrb[0].mxu0
      %5550 = vmatprep.mubr.bf16.mxu0 0
      %5551 = vmatmul.mubr.bf16.gmra.mrb[0].mxu0 %v5427
      %v5552 = vpop.f32.mrb[0].mxu0
      %v5553 = vadd.f32 0.0, %v5552
      %v5554 = vpop.f32.mrb[0].mxu0
      %v5555 = vpop.f32.mrb[0].mxu0
      %v5556 = vadd.f32 0.0, %v5555
      %v5557 = vpop.f32.mrb[0].mxu0
      %5558 = vmatprep.mubr.bf16.mxu0 0
      %5559 = vmatmul.mubr.bf16.gmra.mrb[0].mxu0 %v5430
      %v5560 = vpop.f32.mrb[0].mxu0
      %v5561 = vadd.f32 0.0, %v5560
      %v5562 = vpop.f32.mrb[0].mxu0
      %v5563 = vpop.f32.mrb[0].mxu0
      %v5564 = vadd.f32 0.0, %v5563
      %v5565 = vpop.f32.mrb[0].mxu0
      %5566 = vmatprep.mubr.bf16.mxu0 0
      %5567 = vmatmul.mubr.bf16.gmra.mrb[0].mxu0 %v5433
      %v5568 = vpop.f32.mrb[0].mxu0
      %v5569 = vadd.f32 0.0, %v5568
      %v5570 = vpop.f32.mrb[0].mxu0
      %v5571 = vpop.f32.mrb[0].mxu0
      %v5572 = vadd.f32 0.0, %v5571
      %v5573 = vpop.f32.mrb[0].mxu0
      %5574 = vmatprep.mubr.bf16.mxu0 0
      %5575 = vmatmul.mubr.bf16.gmra.mrb[0].mxu0 %v5436
      %v5576 = vpop.f32.mrb[0].mxu0
      %v5577 = vadd.f32 0.0, %v5576
      %v5578 = vpop.f32.mrb[0].mxu0
      %v5579 = vpop.f32.mrb[0].mxu0
      %v5580 = vadd.f32 0.0, %v5579
      %v5581 = vpop.f32.mrb[0].mxu0
      %5582 = vmatprep.mubr.bf16.mxu0 0
      %5583 = vmatmul.mubr.bf16.gmra.mrb[0].mxu0 %v5439
      %v5584 = vpop.f32.mrb[0].mxu0
      %v5585 = vadd.f32 0.0, %v5584
      %v5586 = vpop.f32.mrb[0].mxu0
      %v5587 = vpop.f32.mrb[0].mxu0
      %v5588 = vadd.f32 0.0, %v5587
      %v5589 = vpop.f32.mrb[0].mxu0
      %5590 = vmatprep.mubr.bf16.mxu0 0
      %5591 = vmatmul.mubr.bf16.gmra.mrb[0].mxu0 %v5442
      %v5592 = vpop.f32.mrb[0].mxu0
      %v5593 = vadd.f32 0.0, %v5592
      %v5594 = vpop.f32.mrb[0].mxu0
      %v5595 = vpop.f32.mrb[0].mxu0
      %v5596 = vadd.f32 0.0, %v5595
      %v5597 = vpop.f32.mrb[0].mxu0
      %5598 = vmatprep.mubr.bf16.mxu0 0
      %5599 = vmatmul.mubr.bf16.gmra.mrb[0].mxu0 %v5445
      %v5600 = vpop.f32.mrb[0].mxu0
      %v5601 = vadd.f32 0.0, %v5600
      %v5602 = vpop.f32.mrb[0].mxu0
      %v5603 = vpop.f32.mrb[0].mxu0
      %v5604 = vadd.f32 0.0, %v5603
      %v5605 = vpop.f32.mrb[0].mxu0
      %5606 = vmatprep.mubr.bf16.mxu0 0
      %5607 = vmatmul.mubr.bf16.gmra.mrb[0].mxu0 %v5448
      %v5608 = vpop.f32.mrb[0].mxu0
      %v5609 = vadd.f32 0.0, %v5608
      %v5610 = vpop.f32.mrb[0].mxu0
      %v5611 = vpop.f32.mrb[0].mxu0
      %v5612 = vadd.f32 0.0, %v5611
      %v5613 = vpop.f32.mrb[0].mxu0
      %5614 = vdwg.mxu0
      %v5616 = vsel %vm4806, %v5367, 0
      %v5619 = vsel %vm4806, %v5368, 0
      %v5622 = vsel %vm4806, %v5369, 0
      %v5625 = vsel %vm4806, %v5370, 0
      %v5628 = vsel %vm4806, %v5371, 0
      %v5631 = vsel %vm4806, %v5372, 0
      %v5634 = vsel %vm4806, %v5373, 0
      %v5637 = vsel %vm4806, %v5374, 0
      %v5640 = vsel %vm4806, %v5375, 0
      %v5643 = vsel %vm4806, %v5376, 0
      %v5646 = vsel %vm4806, %v5377, 0
      %v5649 = vsel %vm4806, %v5378, 0
      %v5652 = vsel %vm4806, %v5379, 0
      %v5655 = vsel %vm4806, %v5380, 0
      %v5658 = vsel %vm4806, %v5381, 0
      %v5661 = vsel %vm4806, %v5382, 0
      %v5664 = vsel %vm5450, %v5383, 0
      %5666 = vmatprep.subr.bf16.mxu0 0
      %5667 = vmatpush1.bf16.msra.mxu0 %v5664
      %5668 = vmatprep.subr.bf16.mxu0 0
      %5669 = vmatpush1.bf16.msra.mxu0 0
      %5670 = vmatprep.subr.bf16.mxu0 0
      %5671 = vmatpush1.bf16.msra.mxu0 0
      %5672 = vmatprep.subr.bf16.mxu0 0
      %5673 = vmatpush1.bf16.msra.mxu0 0
      %5674 = vmatprep.subr.bf16.mxu0 0
      %5675 = vmatpush1.bf16.msra.mxu0 0
      %5676 = vmatprep.subr.bf16.mxu0 0
      %5677 = vmatpush1.bf16.msra.mxu0 0
      %5678 = vmatprep.subr.bf16.mxu0 0
      %5679 = vmatpush1.bf16.msra.mxu0 0
      %5680 = vmatprep.subr.bf16.mxu0 0
      %5681 = vmatpush1.bf16.msra.mxu0 0
      %5682 = vmatprep.subr.bf16.mxu0 0
      %5683 = vmatpush1.bf16.msra.mxu0 0
      %5684 = vmatprep.subr.bf16.mxu0 0
      %5685 = vmatpush1.bf16.msra.mxu0 0
      %5686 = vmatprep.subr.bf16.mxu0 0
      %5687 = vmatpush1.bf16.msra.mxu0 0
      %5688 = vmatprep.subr.bf16.mxu0 0
      %5689 = vmatpush1.bf16.msra.mxu0 0
      %5690 = vmatprep.subr.bf16.mxu0 0
      %5691 = vmatpush1.bf16.msra.mxu0 0
      %5692 = vmatprep.subr.bf16.mxu0 0
      %5693 = vmatpush1.bf16.msra.mxu0 0
      %5694 = vmatprep.subr.bf16.mxu0 0
      %5695 = vmatpush1.bf16.msra.mxu0 0
      %5696 = vmatprep.subr.bf16.mxu0 0
      %5697 = vmatpush1.bf16.msra.mxu0 0
      %5698 = vmatprep.mubr.bf16.mxu0 0
      %5699 = vmatmul.mubr.bf16.gmra.mrb[0].mxu0 %v5616
      %v5700 = vpop.f32.mrb[0].mxu0
      %v5701 = vadd.f32 %v5489, %v5700
      %v5702 = vpop.f32.mrb[0].mxu0
      %v5703 = vpop.f32.mrb[0].mxu0
      %v5704 = vadd.f32 %v5492, %v5703
      %v5705 = vpop.f32.mrb[0].mxu0
      %5706 = vmatprep.mubr.bf16.mxu0 0
      %5707 = vmatmul.mubr.bf16.gmra.mrb[0].mxu0 %v5619
      %v5708 = vpop.f32.mrb[0].mxu0
      %v5709 = vadd.f32 %v5497, %v5708
      %v5710 = vpop.f32.mrb[0].mxu0
      %v5711 = vpop.f32.mrb[0].mxu0
      %v5712 = vadd.f32 %v5500, %v5711
      %v5713 = vpop.f32.mrb[0].mxu0
      %5714 = vmatprep.mubr.bf16.mxu0 0
      %5715 = vmatmul.mubr.bf16.gmra.mrb[0].mxu0 %v5622
      %v5716 = vpop.f32.mrb[0].mxu0
      %v5717 = vadd.f32 %v5505, %v5716
      %v5718 = vpop.f32.mrb[0].mxu0
      %v5719 = vpop.f32.mrb[0].mxu0
      %v5720 = vadd.f32 %v5508, %v5719
      %v5721 = vpop.f32.mrb[0].mxu0
      %5722 = vmatprep.mubr.bf16.mxu0 0
      %5723 = vmatmul.mubr.bf16.gmra.mrb[0].mxu0 %v5625
      %v5724 = vpop.f32.mrb[0].mxu0
      %v5725 = vadd.f32 %v5513, %v5724
      %v5726 = vpop.f32.mrb[0].mxu0
      %v5727 = vpop.f32.mrb[0].mxu0
      %v5728 = vadd.f32 %v5516, %v5727
      %v5729 = vpop.f32.mrb[0].mxu0
      %5730 = vmatprep.mubr.bf16.mxu0 0
      %5731 = vmatmul.mubr.bf16.gmra.mrb[0].mxu0 %v5628
      %v5732 = vpop.f32.mrb[0].mxu0
      %v5733 = vadd.f32 %v5521, %v5732
      %v5734 = vpop.f32.mrb[0].mxu0
      %v5735 = vpop.f32.mrb[0].mxu0
      %v5736 = vadd.f32 %v5524, %v5735
      %v5737 = vpop.f32.mrb[0].mxu0
      %5738 = vmatprep.mubr.bf16.mxu0 0
      %5739 = vmatmul.mubr.bf16.gmra.mrb[0].mxu0 %v5631
      %v5740 = vpop.f32.mrb[0].mxu0
      %v5741 = vadd.f32 %v5529, %v5740
      %v5742 = vpop.f32.mrb[0].mxu0
      %v5743 = vpop.f32.mrb[0].mxu0
      %v5744 = vadd.f32 %v5532, %v5743
      %v5745 = vpop.f32.mrb[0].mxu0
      %5746 = vmatprep.mubr.bf16.mxu0 0
      %5747 = vmatmul.mubr.bf16.gmra.mrb[0].mxu0 %v5634
      %v5748 = vpop.f32.mrb[0].mxu0
      %v5749 = vadd.f32 %v5537, %v5748
      %v5750 = vpop.f32.mrb[0].mxu0
      %v5751 = vpop.f32.mrb[0].mxu0
      %v5752 = vadd.f32 %v5540, %v5751
      %v5753 = vpop.f32.mrb[0].mxu0
      %5754 = vmatprep.mubr.bf16.mxu0 0
      %5755 = vmatmul.mubr.bf16.gmra.mrb[0].mxu0 %v5637
      %v5756 = vpop.f32.mrb[0].mxu0
      %v5757 = vadd.f32 %v5545, %v5756
      %v5758 = vpop.f32.mrb[0].mxu0
      %v5759 = vpop.f32.mrb[0].mxu0
      %v5760 = vadd.f32 %v5548, %v5759
      %v5761 = vpop.f32.mrb[0].mxu0
      %5762 = vmatprep.mubr.bf16.mxu0 0
      %5763 = vmatmul.mubr.bf16.gmra.mrb[0].mxu0 %v5640
      %v5764 = vpop.f32.mrb[0].mxu0
      %v5765 = vadd.f32 %v5553, %v5764
      %v5766 = vpop.f32.mrb[0].mxu0
      %v5767 = vpop.f32.mrb[0].mxu0
      %v5768 = vadd.f32 %v5556, %v5767
      %v5769 = vpop.f32.mrb[0].mxu0
      %5770 = vmatprep.mubr.bf16.mxu0 0
      %5771 = vmatmul.mubr.bf16.gmra.mrb[0].mxu0 %v5643
      %v5772 = vpop.f32.mrb[0].mxu0
      %v5773 = vadd.f32 %v5561, %v5772
      %v5774 = vpop.f32.mrb[0].mxu0
      %v5775 = vpop.f32.mrb[0].mxu0
      %v5776 = vadd.f32 %v5564, %v5775
      %v5777 = vpop.f32.mrb[0].mxu0
      %5778 = vmatprep.mubr.bf16.mxu0 0
      %5779 = vmatmul.mubr.bf16.gmra.mrb[0].mxu0 %v5646
      %v5780 = vpop.f32.mrb[0].mxu0
      %v5781 = vadd.f32 %v5569, %v5780
      %v5782 = vpop.f32.mrb[0].mxu0
      %v5783 = vpop.f32.mrb[0].mxu0
      %v5784 = vadd.f32 %v5572, %v5783
      %v5785 = vpop.f32.mrb[0].mxu0
      %5786 = vmatprep.mubr.bf16.mxu0 0
      %5787 = vmatmul.mubr.bf16.gmra.mrb[0].mxu0 %v5649
      %v5788 = vpop.f32.mrb[0].mxu0
      %v5789 = vadd.f32 %v5577, %v5788
      %v5790 = vpop.f32.mrb[0].mxu0
      %v5791 = vpop.f32.mrb[0].mxu0
      %v5792 = vadd.f32 %v5580, %v5791
      %v5793 = vpop.f32.mrb[0].mxu0
      %5794 = vmatprep.mubr.bf16.mxu0 0
      %5795 = vmatmul.mubr.bf16.gmra.mrb[0].mxu0 %v5652
      %v5796 = vpop.f32.mrb[0].mxu0
      %v5797 = vadd.f32 %v5585, %v5796
      %v5798 = vpop.f32.mrb[0].mxu0
      %v5799 = vpop.f32.mrb[0].mxu0
      %v5800 = vadd.f32 %v5588, %v5799
      %v5801 = vpop.f32.mrb[0].mxu0
      %5802 = vmatprep.mubr.bf16.mxu0 0
      %5803 = vmatmul.mubr.bf16.gmra.mrb[0].mxu0 %v5655
      %v5804 = vpop.f32.mrb[0].mxu0
      %v5805 = vadd.f32 %v5593, %v5804
      %v5806 = vpop.f32.mrb[0].mxu0
      %v5807 = vpop.f32.mrb[0].mxu0
      %v5808 = vadd.f32 %v5596, %v5807
      %v5809 = vpop.f32.mrb[0].mxu0
      %5810 = vmatprep.mubr.bf16.mxu0 0
      %5811 = vmatmul.mubr.bf16.gmra.mrb[0].mxu0 %v5658
      %v5812 = vpop.f32.mrb[0].mxu0
      %v5813 = vadd.f32 %v5601, %v5812
      %v5814 = vpop.f32.mrb[0].mxu0
      %v5815 = vpop.f32.mrb[0].mxu0
      %v5816 = vadd.f32 %v5604, %v5815
      %v5817 = vpop.f32.mrb[0].mxu0
      %5818 = vmatprep.mubr.bf16.mxu0 0
      %5819 = vmatmul.mubr.bf16.gmra.mrb[0].mxu0 %v5661
      %v5820 = vpop.f32.mrb[0].mxu0
      %v5821 = vadd.f32 %v5609, %v5820
      %v5822 = vpop.f32.mrb[0].mxu0
      %v5823 = vpop.f32.mrb[0].mxu0
      %v5824 = vadd.f32 %v5612, %v5823
      %v5825 = vpop.f32.mrb[0].mxu0
      %5826 = vdwg.mxu0
      %v5827 = vld [vmem:[%s5348] sm:$0xff]
      %v5828 = vld [vmem:[%s5348 + $0x8] sm:$0xff]
      %v5829 = vld [vmem:[%s5348 + $0x10] sm:$0xff]
      %v5830 = vld [vmem:[%s5348 + $0x18] sm:$0xff]
      %v5831 = vld [vmem:[%s5348 + $0x20] sm:$0xff]
      %v5832 = vld [vmem:[%s5348 + $0x28] sm:$0xff]
      %v5833 = vld [vmem:[%s5348 + $0x30] sm:$0xff]
      %v5834 = vld [vmem:[%s5348 + $0x38] sm:$0xff]
      %v5835 = vld [vmem:[%s5348 + $0x40] sm:$0xff]
      %v5836 = vld [vmem:[%s5348 + $0x48] sm:$0xff]
      %v5837 = vld [vmem:[%s5348 + $0x50] sm:$0xff]
      %v5838 = vld [vmem:[%s5348 + $0x58] sm:$0xff]
      %v5839 = vld [vmem:[%s5348 + $0x60] sm:$0xff]
      %v5840 = vld [vmem:[%s5348 + $0x68] sm:$0xff]
      %v5841 = vld [vmem:[%s5348 + $0x70] sm:$0xff]
      %v5842 = vld [vmem:[%s5348 + $0x78] sm:$0xff]
      %s5843 = scalar_lea.vmem %s3, 4
      %v5844 = vld [vmem:[%s5843] sm:$0x3]
      %v5846 = vsel %vm4806, %v5827, 0
      %v5849 = vsel %vm4806, %v5828, 0
      %v5852 = vsel %vm4806, %v5829, 0
      %v5855 = vsel %vm4806, %v5830, 0
      %v5858 = vsel %vm4806, %v5831, 0
      %v5861 = vsel %vm4806, %v5832, 0
      %v5864 = vsel %vm4806, %v5833, 0
      %v5867 = vsel %vm4806, %v5834, 0
      %v5870 = vsel %vm4806, %v5835, 0
      %v5873 = vsel %vm4806, %v5836, 0
      %v5876 = vsel %vm4806, %v5837, 0
      %v5879 = vsel %vm4806, %v5838, 0
      %v5882 = vsel %vm4806, %v5839, 0
      %v5885 = vsel %vm4806, %v5840, 0
      %v5888 = vsel %vm4806, %v5841, 0
      %v5891 = vsel %vm4806, %v5842, 0
      %v5894 = vsel %vm5450, %v5844, 0
      %5896 = vmatprep.subr.bf16.mxu0 0
      %5897 = vmatpush1.bf16.msra.mxu0 %v5894
      %5898 = vmatprep.subr.bf16.mxu0 0
      %5899 = vmatpush1.bf16.msra.mxu0 0
      %5900 = vmatprep.subr.bf16.mxu0 0
      %5901 = vmatpush1.bf16.msra.mxu0 0
      %5902 = vmatprep.subr.bf16.mxu0 0
      %5903 = vmatpush1.bf16.msra.mxu0 0
      %5904 = vmatprep.subr.bf16.mxu0 0
      %5905 = vmatpush1.bf16.msra.mxu0 0
      %5906 = vmatprep.subr.bf16.mxu0 0
      %5907 = vmatpush1.bf16.msra.mxu0 0
      %5908 = vmatprep.subr.bf16.mxu0 0
      %5909 = vmatpush1.bf16.msra.mxu0 0
      %5910 = vmatprep.subr.bf16.mxu0 0
      %5911 = vmatpush1.bf16.msra.mxu0 0
      %5912 = vmatprep.subr.bf16.mxu0 0
      %5913 = vmatpush1.bf16.msra.mxu0 0
      %5914 = vmatprep.subr.bf16.mxu0 0
      %5915 = vmatpush1.bf16.msra.mxu0 0
      %5916 = vmatprep.subr.bf16.mxu0 0
      %5917 = vmatpush1.bf16.msra.mxu0 0
      %5918 = vmatprep.subr.bf16.mxu0 0
      %5919 = vmatpush1.bf16.msra.mxu0 0
      %5920 = vmatprep.subr.bf16.mxu0 0
      %5921 = vmatpush1.bf16.msra.mxu0 0
      %5922 = vmatprep.subr.bf16.mxu0 0
      %5923 = vmatpush1.bf16.msra.mxu0 0
      %5924 = vmatprep.subr.bf16.mxu0 0
      %5925 = vmatpush1.bf16.msra.mxu0 0
      %5926 = vmatprep.subr.bf16.mxu0 0
      %5927 = vmatpush1.bf16.msra.mxu0 0
      %5928 = vmatprep.mubr.bf16.mxu0 0
      %5929 = vmatmul.mubr.bf16.gmra.mrb[0].mxu0 %v5846
      %v5930 = vpop.f32.mrb[0].mxu0
      %v5931 = vadd.f32 0.0, %v5930
      %v5932 = vpop.f32.mrb[0].mxu0
      %v5933 = vpop.f32.mrb[0].mxu0
      %v5934 = vadd.f32 0.0, %v5933
      %v5935 = vpop.f32.mrb[0].mxu0
      %5936 = vmatprep.mubr.bf16.mxu0 0
      %5937 = vmatmul.mubr.bf16.gmra.mrb[0].mxu0 %v5849
      %v5938 = vpop.f32.mrb[0].mxu0
      %v5939 = vadd.f32 0.0, %v5938
      %v5940 = vpop.f32.mrb[0].mxu0
      %v5941 = vpop.f32.mrb[0].mxu0
      %v5942 = vadd.f32 0.0, %v5941
      %v5943 = vpop.f32.mrb[0].mxu0
      %5944 = vmatprep.mubr.bf16.mxu0 0
      %5945 = vmatmul.mubr.bf16.gmra.mrb[0].mxu0 %v5852
      %v5946 = vpop.f32.mrb[0].mxu0
      %v5947 = vadd.f32 0.0, %v5946
      %v5948 = vpop.f32.mrb[0].mxu0
      %v5949 = vpop.f32.mrb[0].mxu0
      %v5950 = vadd.f32 0.0, %v5949
      %v5951 = vpop.f32.mrb[0].mxu0
      %5952 = vmatprep.mubr.bf16.mxu0 0
      %5953 = vmatmul.mubr.bf16.gmra.mrb[0].mxu0 %v5855
      %v5954 = vpop.f32.mrb[0].mxu0
      %v5955 = vadd.f32 0.0, %v5954
      %v5956 = vpop.f32.mrb[0].mxu0
      %v5957 = vpop.f32.mrb[0].mxu0
      %v5958 = vadd.f32 0.0, %v5957
      %v5959 = vpop.f32.mrb[0].mxu0
      %5960 = vmatprep.mubr.bf16.mxu0 0
      %5961 = vmatmul.mubr.bf16.gmra.mrb[0].mxu0 %v5858
      %v5962 = vpop.f32.mrb[0].mxu0
      %v5963 = vadd.f32 0.0, %v5962
      %v5964 = vpop.f32.mrb[0].mxu0
      %v5965 = vpop.f32.mrb[0].mxu0
      %v5966 = vadd.f32 0.0, %v5965
      %v5967 = vpop.f32.mrb[0].mxu0
      %5968 = vmatprep.mubr.bf16.mxu0 0
      %5969 = vmatmul.mubr.bf16.gmra.mrb[0].mxu0 %v5861
      %v5970 = vpop.f32.mrb[0].mxu0
      %v5971 = vadd.f32 0.0, %v5970
      %v5972 = vpop.f32.mrb[0].mxu0
      %v5973 = vpop.f32.mrb[0].mxu0
      %v5974 = vadd.f32 0.0, %v5973
      %v5975 = vpop.f32.mrb[0].mxu0
      %5976 = vmatprep.mubr.bf16.mxu0 0
      %5977 = vmatmul.mubr.bf16.gmra.mrb[0].mxu0 %v5864
      %v5978 = vpop.f32.mrb[0].mxu0
      %v5979 = vadd.f32 0.0, %v5978
      %v5980 = vpop.f32.mrb[0].mxu0
      %v5981 = vpop.f32.mrb[0].mxu0
      %v5982 = vadd.f32 0.0, %v5981
      %v5983 = vpop.f32.mrb[0].mxu0
      %5984 = vmatprep.mubr.bf16.mxu0 0
      %5985 = vmatmul.mubr.bf16.gmra.mrb[0].mxu0 %v5867
      %v5986 = vpop.f32.mrb[0].mxu0
      %v5987 = vadd.f32 0.0, %v5986
      %v5988 = vpop.f32.mrb[0].mxu0
      %v5989 = vpop.f32.mrb[0].mxu0
      %v5990 = vadd.f32 0.0, %v5989
      %v5991 = vpop.f32.mrb[0].mxu0
      %5992 = vmatprep.mubr.bf16.mxu0 0
      %5993 = vmatmul.mubr.bf16.gmra.mrb[0].mxu0 %v5870
      %v5994 = vpop.f32.mrb[0].mxu0
      %v5995 = vadd.f32 0.0, %v5994
      %v5996 = vpop.f32.mrb[0].mxu0
      %v5997 = vpop.f32.mrb[0].mxu0
      %v5998 = vadd.f32 0.0, %v5997
      %v5999 = vpop.f32.mrb[0].mxu0
      %6000 = vmatprep.mubr.bf16.mxu0 0
      %6001 = vmatmul.mubr.bf16.gmra.mrb[0].mxu0 %v5873
      %v6002 = vpop.f32.mrb[0].mxu0
      %v6003 = vadd.f32 0.0, %v6002
      %v6004 = vpop.f32.mrb[0].mxu0
      %v6005 = vpop.f32.mrb[0].mxu0
      %v6006 = vadd.f32 0.0, %v6005
      %v6007 = vpop.f32.mrb[0].mxu0
      %6008 = vmatprep.mubr.bf16.mxu0 0
      %6009 = vmatmul.mubr.bf16.gmra.mrb[0].mxu0 %v5876
      %v6010 = vpop.f32.mrb[0].mxu0
      %v6011 = vadd.f32 0.0, %v6010
      %v6012 = vpop.f32.mrb[0].mxu0
      %v6013 = vpop.f32.mrb[0].mxu0
      %v6014 = vadd.f32 0.0, %v6013
      %v6015 = vpop.f32.mrb[0].mxu0
      %6016 = vmatprep.mubr.bf16.mxu0 0
      %6017 = vmatmul.mubr.bf16.gmra.mrb[0].mxu0 %v5879
      %v6018 = vpop.f32.mrb[0].mxu0
      %v6019 = vadd.f32 0.0, %v6018
      %v6020 = vpop.f32.mrb[0].mxu0
      %v6021 = vpop.f32.mrb[0].mxu0
      %v6022 = vadd.f32 0.0, %v6021
      %v6023 = vpop.f32.mrb[0].mxu0
      %6024 = vmatprep.mubr.bf16.mxu0 0
      %6025 = vmatmul.mubr.bf16.gmra.mrb[0].mxu0 %v5882
      %v6026 = vpop.f32.mrb[0].mxu0
      %v6027 = vadd.f32 0.0, %v6026
      %v6028 = vpop.f32.mrb[0].mxu0
      %v6029 = vpop.f32.mrb[0].mxu0
      %v6030 = vadd.f32 0.0, %v6029
      %v6031 = vpop.f32.mrb[0].mxu0
      %6032 = vmatprep.mubr.bf16.mxu0 0
      %6033 = vmatmul.mubr.bf16.gmra.mrb[0].mxu0 %v5885
      %v6034 = vpop.f32.mrb[0].mxu0
      %v6035 = vadd.f32 0.0, %v6034
      %v6036 = vpop.f32.mrb[0].mxu0
      %v6037 = vpop.f32.mrb[0].mxu0
      %v6038 = vadd.f32 0.0, %v6037
      %v6039 = vpop.f32.mrb[0].mxu0
      %6040 = vmatprep.mubr.bf16.mxu0 0
      %6041 = vmatmul.mubr.bf16.gmra.mrb[0].mxu0 %v5888
      %v6042 = vpop.f32.mrb[0].mxu0
      %v6043 = vadd.f32 0.0, %v6042
      %v6044 = vpop.f32.mrb[0].mxu0
      %v6045 = vpop.f32.mrb[0].mxu0
      %v6046 = vadd.f32 0.0, %v6045
      %v6047 = vpop.f32.mrb[0].mxu0
      %6048 = vmatprep.mubr.bf16.mxu0 0
      %6049 = vmatmul.mubr.bf16.gmra.mrb[0].mxu0 %v5891
      %v6050 = vpop.f32.mrb[0].mxu0
      %v6051 = vadd.f32 0.0, %v6050
      %v6052 = vpop.f32.mrb[0].mxu0
      %v6053 = vpop.f32.mrb[0].mxu0
      %v6054 = vadd.f32 0.0, %v6053
      %v6055 = vpop.f32.mrb[0].mxu0
      %6056 = vdwg.mxu0
      %v6057 = vadd.f32 %v5701, %v5931
      %v6058 = vadd.f32 %v5704, %v5934
      %v6059 = vadd.f32 %v5709, %v5939
      %v6060 = vadd.f32 %v5712, %v5942
      %v6061 = vadd.f32 %v5717, %v5947
      %v6062 = vadd.f32 %v5720, %v5950
      %v6063 = vadd.f32 %v5725, %v5955
      %v6064 = vadd.f32 %v5728, %v5958
      %v6065 = vadd.f32 %v5733, %v5963
      %v6066 = vadd.f32 %v5736, %v5966
      %v6067 = vadd.f32 %v5741, %v5971
      %v6068 = vadd.f32 %v5744, %v5974
      %v6069 = vadd.f32 %v5749, %v5979
      %v6070 = vadd.f32 %v5752, %v5982
      %v6071 = vadd.f32 %v5757, %v5987
      %v6072 = vadd.f32 %v5760, %v5990
      %v6073 = vadd.f32 %v5765, %v5995
      %v6074 = vadd.f32 %v5768, %v5998
      %v6075 = vadd.f32 %v5773, %v6003
      %v6076 = vadd.f32 %v5776, %v6006
      %v6077 = vadd.f32 %v5781, %v6011
      %v6078 = vadd.f32 %v5784, %v6014
      %v6079 = vadd.f32 %v5789, %v6019
      %v6080 = vadd.f32 %v5792, %v6022
      %v6081 = vadd.f32 %v5797, %v6027
      %v6082 = vadd.f32 %v5800, %v6030
      %v6083 = vadd.f32 %v5805, %v6035
      %v6084 = vadd.f32 %v5808, %v6038
      %v6085 = vadd.f32 %v5813, %v6043
      %v6086 = vadd.f32 %v5816, %v6046
      %v6087 = vadd.f32 %v5821, %v6051
      %v6088 = vadd.f32 %v5824, %v6054
      %s6089 = scalar_lea.vmem [#allocation5], 8
      %v6090 = vld [vmem:[%s6089] sm:$0xff]
      %v6091 = vld [vmem:[%s6089 + $0x8] sm:$0xff]
      %v6092 = vld [vmem:[%s6089 + $0x10] sm:$0xff]
      %v6093 = vld [vmem:[%s6089 + $0x18] sm:$0xff]
      %v6094 = vld [vmem:[%s6089 + $0x20] sm:$0xff]
      %v6095 = vld [vmem:[%s6089 + $0x28] sm:$0xff]
      %v6096 = vld [vmem:[%s6089 + $0x30] sm:$0xff]
      %v6097 = vld [vmem:[%s6089 + $0x38] sm:$0xff]
      %v6098 = vld [vmem:[%s6089 + $0x40] sm:$0xff]
      %v6099 = vld [vmem:[%s6089 + $0x48] sm:$0xff]
      %v6100 = vld [vmem:[%s6089 + $0x50] sm:$0xff]
      %v6101 = vld [vmem:[%s6089 + $0x58] sm:$0xff]
      %v6102 = vld [vmem:[%s6089 + $0x60] sm:$0xff]
      %v6103 = vld [vmem:[%s6089 + $0x68] sm:$0xff]
      %v6104 = vld [vmem:[%s6089 + $0x70] sm:$0xff]
      %v6105 = vld [vmem:[%s6089 + $0x78] sm:$0xff]
      %s6106 = scalar_lea.vmem %s3, 6
      %v6107 = vld [vmem:[%s6106] sm:$0x3]
      %v6109 = vsel %vm4806, %v6090, 0
      %v6112 = vsel %vm4806, %v6091, 0
      %v6115 = vsel %vm4806, %v6092, 0
      %v6118 = vsel %vm4806, %v6093, 0
      %v6121 = vsel %vm4806, %v6094, 0
      %v6124 = vsel %vm4806, %v6095, 0
      %v6127 = vsel %vm4806, %v6096, 0
      %v6130 = vsel %vm4806, %v6097, 0
      %v6133 = vsel %vm4806, %v6098, 0
      %v6136 = vsel %vm4806, %v6099, 0
      %v6139 = vsel %vm4806, %v6100, 0
      %v6142 = vsel %vm4806, %v6101, 0
      %v6145 = vsel %vm4806, %v6102, 0
      %v6148 = vsel %vm4806, %v6103, 0
      %v6151 = vsel %vm4806, %v6104, 0
      %v6154 = vsel %vm4806, %v6105, 0
      %v6157 = vsel %vm5450, %v6107, 0
      %6159 = vmatprep.subr.bf16.mxu0 0
      %6160 = vmatpush1.bf16.msra.mxu0 %v6157
      %6161 = vmatprep.subr.bf16.mxu0 0
      %6162 = vmatpush1.bf16.msra.mxu0 0
      %6163 = vmatprep.subr.bf16.mxu0 0
      %6164 = vmatpush1.bf16.msra.mxu0 0
      %6165 = vmatprep.subr.bf16.mxu0 0
      %6166 = vmatpush1.bf16.msra.mxu0 0
      %6167 = vmatprep.subr.bf16.mxu0 0
      %6168 = vmatpush1.bf16.msra.mxu0 0
      %6169 = vmatprep.subr.bf16.mxu0 0
      %6170 = vmatpush1.bf16.msra.mxu0 0
      %6171 = vmatprep.subr.bf16.mxu0 0
      %6172 = vmatpush1.bf16.msra.mxu0 0
      %6173 = vmatprep.subr.bf16.mxu0 0
      %6174 = vmatpush1.bf16.msra.mxu0 0
      %6175 = vmatprep.subr.bf16.mxu0 0
      %6176 = vmatpush1.bf16.msra.mxu0 0
      %6177 = vmatprep.subr.bf16.mxu0 0
      %6178 = vmatpush1.bf16.msra.mxu0 0
      %6179 = vmatprep.subr.bf16.mxu0 0
      %6180 = vmatpush1.bf16.msra.mxu0 0
      %6181 = vmatprep.subr.bf16.mxu0 0
      %6182 = vmatpush1.bf16.msra.mxu0 0
      %6183 = vmatprep.subr.bf16.mxu0 0
      %6184 = vmatpush1.bf16.msra.mxu0 0
      %6185 = vmatprep.subr.bf16.mxu0 0
      %6186 = vmatpush1.bf16.msra.mxu0 0
      %6187 = vmatprep.subr.bf16.mxu0 0
      %6188 = vmatpush1.bf16.msra.mxu0 0
      %6189 = vmatprep.subr.bf16.mxu0 0
      %6190 = vmatpush1.bf16.msra.mxu0 0
      %6191 = vmatprep.mubr.bf16.mxu0 0
      %6192 = vmatmul.mubr.bf16.gmra.mrb[0].mxu0 %v6109
      %v6193 = vpop.f32.mrb[0].mxu0
      %v6194 = vadd.f32 0.0, %v6193
      %v6195 = vpop.f32.mrb[0].mxu0
      %v6196 = vpop.f32.mrb[0].mxu0
      %v6197 = vadd.f32 0.0, %v6196
      %v6198 = vpop.f32.mrb[0].mxu0
      %6199 = vmatprep.mubr.bf16.mxu0 0
      %6200 = vmatmul.mubr.bf16.gmra.mrb[0].mxu0 %v6112
      %v6201 = vpop.f32.mrb[0].mxu0
      %v6202 = vadd.f32 0.0, %v6201
      %v6203 = vpop.f32.mrb[0].mxu0
      %v6204 = vpop.f32.mrb[0].mxu0
      %v6205 = vadd.f32 0.0, %v6204
      %v6206 = vpop.f32.mrb[0].mxu0
      %6207 = vmatprep.mubr.bf16.mxu0 0
      %6208 = vmatmul.mubr.bf16.gmra.mrb[0].mxu0 %v6115
      %v6209 = vpop.f32.mrb[0].mxu0
      %v6210 = vadd.f32 0.0, %v6209
      %v6211 = vpop.f32.mrb[0].mxu0
      %v6212 = vpop.f32.mrb[0].mxu0
      %v6213 = vadd.f32 0.0, %v6212
      %v6214 = vpop.f32.mrb[0].mxu0
      %6215 = vmatprep.mubr.bf16.mxu0 0
      %6216 = vmatmul.mubr.bf16.gmra.mrb[0].mxu0 %v6118
      %v6217 = vpop.f32.mrb[0].mxu0
      %v6218 = vadd.f32 0.0, %v6217
      %v6219 = vpop.f32.mrb[0].mxu0
      %v6220 = vpop.f32.mrb[0].mxu0
      %v6221 = vadd.f32 0.0, %v6220
      %v6222 = vpop.f32.mrb[0].mxu0
      %6223 = vmatprep.mubr.bf16.mxu0 0
      %6224 = vmatmul.mubr.bf16.gmra.mrb[0].mxu0 %v6121
      %v6225 = vpop.f32.mrb[0].mxu0
      %v6226 = vadd.f32 0.0, %v6225
      %v6227 = vpop.f32.mrb[0].mxu0
      %v6228 = vpop.f32.mrb[0].mxu0
      %v6229 = vadd.f32 0.0, %v6228
      %v6230 = vpop.f32.mrb[0].mxu0
      %6231 = vmatprep.mubr.bf16.mxu0 0
      %6232 = vmatmul.mubr.bf16.gmra.mrb[0].mxu0 %v6124
      %v6233 = vpop.f32.mrb[0].mxu0
      %v6234 = vadd.f32 0.0, %v6233
      %v6235 = vpop.f32.mrb[0].mxu0
      %v6236 = vpop.f32.mrb[0].mxu0
      %v6237 = vadd.f32 0.0, %v6236
      %v6238 = vpop.f32.mrb[0].mxu0
      %6239 = vmatprep.mubr.bf16.mxu0 0
      %6240 = vmatmul.mubr.bf16.gmra.mrb[0].mxu0 %v6127
      %v6241 = vpop.f32.mrb[0].mxu0
      %v6242 = vadd.f32 0.0, %v6241
      %v6243 = vpop.f32.mrb[0].mxu0
      %v6244 = vpop.f32.mrb[0].mxu0
      %v6245 = vadd.f32 0.0, %v6244
      %v6246 = vpop.f32.mrb[0].mxu0
      %6247 = vmatprep.mubr.bf16.mxu0 0
      %6248 = vmatmul.mubr.bf16.gmra.mrb[0].mxu0 %v6130
      %v6249 = vpop.f32.mrb[0].mxu0
      %v6250 = vadd.f32 0.0, %v6249
      %v6251 = vpop.f32.mrb[0].mxu0
      %v6252 = vpop.f32.mrb[0].mxu0
      %v6253 = vadd.f32 0.0, %v6252
      %v6254 = vpop.f32.mrb[0].mxu0
      %6255 = vmatprep.mubr.bf16.mxu0 0
      %6256 = vmatmul.mubr.bf16.gmra.mrb[0].mxu0 %v6133
      %v6257 = vpop.f32.mrb[0].mxu0
      %v6258 = vadd.f32 0.0, %v6257
      %v6259 = vpop.f32.mrb[0].mxu0
      %v6260 = vpop.f32.mrb[0].mxu0
      %v6261 = vadd.f32 0.0, %v6260
      %v6262 = vpop.f32.mrb[0].mxu0
      %6263 = vmatprep.mubr.bf16.mxu0 0
      %6264 = vmatmul.mubr.bf16.gmra.mrb[0].mxu0 %v6136
      %v6265 = vpop.f32.mrb[0].mxu0
      %v6266 = vadd.f32 0.0, %v6265
      %v6267 = vpop.f32.mrb[0].mxu0
      %v6268 = vpop.f32.mrb[0].mxu0
      %v6269 = vadd.f32 0.0, %v6268
      %v6270 = vpop.f32.mrb[0].mxu0
      %6271 = vmatprep.mubr.bf16.mxu0 0
      %6272 = vmatmul.mubr.bf16.gmra.mrb[0].mxu0 %v6139
      %v6273 = vpop.f32.mrb[0].mxu0
      %v6274 = vadd.f32 0.0, %v6273
      %v6275 = vpop.f32.mrb[0].mxu0
      %v6276 = vpop.f32.mrb[0].mxu0
      %v6277 = vadd.f32 0.0, %v6276
      %v6278 = vpop.f32.mrb[0].mxu0
      %6279 = vmatprep.mubr.bf16.mxu0 0
      %6280 = vmatmul.mubr.bf16.gmra.mrb[0].mxu0 %v6142
      %v6281 = vpop.f32.mrb[0].mxu0
      %v6282 = vadd.f32 0.0, %v6281
      %v6283 = vpop.f32.mrb[0].mxu0
      %v6284 = vpop.f32.mrb[0].mxu0
      %v6285 = vadd.f32 0.0, %v6284
      %v6286 = vpop.f32.mrb[0].mxu0
      %6287 = vmatprep.mubr.bf16.mxu0 0
      %6288 = vmatmul.mubr.bf16.gmra.mrb[0].mxu0 %v6145
      %v6289 = vpop.f32.mrb[0].mxu0
      %v6290 = vadd.f32 0.0, %v6289
      %v6291 = vpop.f32.mrb[0].mxu0
      %v6292 = vpop.f32.mrb[0].mxu0
      %v6293 = vadd.f32 0.0, %v6292
      %v6294 = vpop.f32.mrb[0].mxu0
      %6295 = vmatprep.mubr.bf16.mxu0 0
      %6296 = vmatmul.mubr.bf16.gmra.mrb[0].mxu0 %v6148
      %v6297 = vpop.f32.mrb[0].mxu0
      %v6298 = vadd.f32 0.0, %v6297
      %v6299 = vpop.f32.mrb[0].mxu0
      %v6300 = vpop.f32.mrb[0].mxu0
      %v6301 = vadd.f32 0.0, %v6300
      %v6302 = vpop.f32.mrb[0].mxu0
      %6303 = vmatprep.mubr.bf16.mxu0 0
      %6304 = vmatmul.mubr.bf16.gmra.mrb[0].mxu0 %v6151
      %v6305 = vpop.f32.mrb[0].mxu0
      %v6306 = vadd.f32 0.0, %v6305
      %v6307 = vpop.f32.mrb[0].mxu0
      %v6308 = vpop.f32.mrb[0].mxu0
      %v6309 = vadd.f32 0.0, %v6308
      %v6310 = vpop.f32.mrb[0].mxu0
      %6311 = vmatprep.mubr.bf16.mxu0 0
      %6312 = vmatmul.mubr.bf16.gmra.mrb[0].mxu0 %v6154
      %v6313 = vpop.f32.mrb[0].mxu0
      %v6314 = vadd.f32 0.0, %v6313
      %v6315 = vpop.f32.mrb[0].mxu0
      %v6316 = vpop.f32.mrb[0].mxu0
      %v6317 = vadd.f32 0.0, %v6316
      %v6318 = vpop.f32.mrb[0].mxu0
      %6319 = vdwg.mxu0
      %v6320 = vadd.f32 %v6057, %v6194
      %v6321 = vadd.f32 %v6058, %v6197
      %v6322 = vadd.f32 %v6059, %v6202
      %v6323 = vadd.f32 %v6060, %v6205
      %v6324 = vadd.f32 %v6061, %v6210
      %v6325 = vadd.f32 %v6062, %v6213
      %v6326 = vadd.f32 %v6063, %v6218
      %v6327 = vadd.f32 %v6064, %v6221
      %v6328 = vadd.f32 %v6065, %v6226
      %v6329 = vadd.f32 %v6066, %v6229
      %v6330 = vadd.f32 %v6067, %v6234
      %v6331 = vadd.f32 %v6068, %v6237
      %v6332 = vadd.f32 %v6069, %v6242
      %v6333 = vadd.f32 %v6070, %v6245
      %v6334 = vadd.f32 %v6071, %v6250
      %v6335 = vadd.f32 %v6072, %v6253
      %v6336 = vadd.f32 %v6073, %v6258
      %v6337 = vadd.f32 %v6074, %v6261
      %v6338 = vadd.f32 %v6075, %v6266
      %v6339 = vadd.f32 %v6076, %v6269
      %v6340 = vadd.f32 %v6077, %v6274
      %v6341 = vadd.f32 %v6078, %v6277
      %v6342 = vadd.f32 %v6079, %v6282
      %v6343 = vadd.f32 %v6080, %v6285
      %v6344 = vadd.f32 %v6081, %v6290
      %v6345 = vadd.f32 %v6082, %v6293
      %v6346 = vadd.f32 %v6083, %v6298
      %v6347 = vadd.f32 %v6084, %v6301
      %v6348 = vadd.f32 %v6085, %v6306
      %v6349 = vadd.f32 %v6086, %v6309
      %v6350 = vadd.f32 %v6087, %v6314
      %v6351 = vadd.f32 %v6088, %v6317
      %s6352 = scalar_lea.vmem [#allocation5], 152
      %v6353 = vld [vmem:[%s6352] sm:$0xff]
      %v6354 = vld [vmem:[%s6352 + $0x8] sm:$0xff]
      %v6355 = vld [vmem:[%s6352 + $0x10] sm:$0xff]
      %v6356 = vld [vmem:[%s6352 + $0x18] sm:$0xff]
      %v6357 = vld [vmem:[%s6352 + $0x20] sm:$0xff]
      %v6358 = vld [vmem:[%s6352 + $0x28] sm:$0xff]
      %v6359 = vld [vmem:[%s6352 + $0x30] sm:$0xff]
      %v6360 = vld [vmem:[%s6352 + $0x38] sm:$0xff]
      %v6361 = vld [vmem:[%s6352 + $0x40] sm:$0xff]
      %v6362 = vld [vmem:[%s6352 + $0x48] sm:$0xff]
      %v6363 = vld [vmem:[%s6352 + $0x50] sm:$0xff]
      %v6364 = vld [vmem:[%s6352 + $0x58] sm:$0xff]
      %v6365 = vld [vmem:[%s6352 + $0x60] sm:$0xff]
      %v6366 = vld [vmem:[%s6352 + $0x68] sm:$0xff]
      %v6367 = vld [vmem:[%s6352 + $0x70] sm:$0xff]
      %v6368 = vld [vmem:[%s6352 + $0x78] sm:$0xff]
      %s6369 = scalar_lea.vmem %s3, 8
      %v6370 = vld [vmem:[%s6369] sm:$0x3]
      %v6372 = vsel %vm4806, %v6353, 0
      %v6375 = vsel %vm4806, %v6354, 0
      %v6378 = vsel %vm4806, %v6355, 0
      %v6381 = vsel %vm4806, %v6356, 0
      %v6384 = vsel %vm4806, %v6357, 0
      %v6387 = vsel %vm4806, %v6358, 0
      %v6390 = vsel %vm4806, %v6359, 0
      %v6393 = vsel %vm4806, %v6360, 0
      %v6396 = vsel %vm4806, %v6361, 0
      %v6399 = vsel %vm4806, %v6362, 0
      %v6402 = vsel %vm4806, %v6363, 0
      %v6405 = vsel %vm4806, %v6364, 0
      %v6408 = vsel %vm4806, %v6365, 0
      %v6411 = vsel %vm4806, %v6366, 0
      %v6414 = vsel %vm4806, %v6367, 0
      %v6417 = vsel %vm4806, %v6368, 0
      %v6420 = vsel %vm5450, %v6370, 0
      %6422 = vmatprep.subr.bf16.mxu0 0
      %6423 = vmatpush1.bf16.msra.mxu0 %v6420
      %6424 = vmatprep.subr.bf16.mxu0 0
      %6425 = vmatpush1.bf16.msra.mxu0 0
      %6426 = vmatprep.subr.bf16.mxu0 0
      %6427 = vmatpush1.bf16.msra.mxu0 0
      %6428 = vmatprep.subr.bf16.mxu0 0
      %6429 = vmatpush1.bf16.msra.mxu0 0
      %6430 = vmatprep.subr.bf16.mxu0 0
      %6431 = vmatpush1.bf16.msra.mxu0 0
      %6432 = vmatprep.subr.bf16.mxu0 0
      %6433 = vmatpush1.bf16.msra.mxu0 0
      %6434 = vmatprep.subr.bf16.mxu0 0
      %6435 = vmatpush1.bf16.msra.mxu0 0
      %6436 = vmatprep.subr.bf16.mxu0 0
      %6437 = vmatpush1.bf16.msra.mxu0 0
      %6438 = vmatprep.subr.bf16.mxu0 0
      %6439 = vmatpush1.bf16.msra.mxu0 0
      %6440 = vmatprep.subr.bf16.mxu0 0
      %6441 = vmatpush1.bf16.msra.mxu0 0
      %6442 = vmatprep.subr.bf16.mxu0 0
      %6443 = vmatpush1.bf16.msra.mxu0 0
      %6444 = vmatprep.subr.bf16.mxu0 0
      %6445 = vmatpush1.bf16.msra.mxu0 0
      %6446 = vmatprep.subr.bf16.mxu0 0
      %6447 = vmatpush1.bf16.msra.mxu0 0
      %6448 = vmatprep.subr.bf16.mxu0 0
      %6449 = vmatpush1.bf16.msra.mxu0 0
      %6450 = vmatprep.subr.bf16.mxu0 0
      %6451 = vmatpush1.bf16.msra.mxu0 0
      %6452 = vmatprep.subr.bf16.mxu0 0
      %6453 = vmatpush1.bf16.msra.mxu0 0
      %6454 = vmatprep.mubr.bf16.mxu0 0
      %6455 = vmatmul.mubr.bf16.gmra.mrb[0].mxu0 %v6372
      %v6456 = vpop.f32.mrb[0].mxu0
      %v6457 = vadd.f32 0.0, %v6456
      %v6458 = vpop.f32.mrb[0].mxu0
      %v6459 = vpop.f32.mrb[0].mxu0
      %v6460 = vadd.f32 0.0, %v6459
      %v6461 = vpop.f32.mrb[0].mxu0
      %6462 = vmatprep.mubr.bf16.mxu0 0
      %6463 = vmatmul.mubr.bf16.gmra.mrb[0].mxu0 %v6375
      %v6464 = vpop.f32.mrb[0].mxu0
      %v6465 = vadd.f32 0.0, %v6464
      %v6466 = vpop.f32.mrb[0].mxu0
      %v6467 = vpop.f32.mrb[0].mxu0
      %v6468 = vadd.f32 0.0, %v6467
      %v6469 = vpop.f32.mrb[0].mxu0
      %6470 = vmatprep.mubr.bf16.mxu0 0
      %6471 = vmatmul.mubr.bf16.gmra.mrb[0].mxu0 %v6378
      %v6472 = vpop.f32.mrb[0].mxu0
      %v6473 = vadd.f32 0.0, %v6472
      %v6474 = vpop.f32.mrb[0].mxu0
      %v6475 = vpop.f32.mrb[0].mxu0
      %v6476 = vadd.f32 0.0, %v6475
      %v6477 = vpop.f32.mrb[0].mxu0
      %6478 = vmatprep.mubr.bf16.mxu0 0
      %6479 = vmatmul.mubr.bf16.gmra.mrb[0].mxu0 %v6381
      %v6480 = vpop.f32.mrb[0].mxu0
      %v6481 = vadd.f32 0.0, %v6480
      %v6482 = vpop.f32.mrb[0].mxu0
      %v6483 = vpop.f32.mrb[0].mxu0
      %v6484 = vadd.f32 0.0, %v6483
      %v6485 = vpop.f32.mrb[0].mxu0
      %6486 = vmatprep.mubr.bf16.mxu0 0
      %6487 = vmatmul.mubr.bf16.gmra.mrb[0].mxu0 %v6384
      %v6488 = vpop.f32.mrb[0].mxu0
      %v6489 = vadd.f32 0.0, %v6488
      %v6490 = vpop.f32.mrb[0].mxu0
      %v6491 = vpop.f32.mrb[0].mxu0
      %v6492 = vadd.f32 0.0, %v6491
      %v6493 = vpop.f32.mrb[0].mxu0
      %6494 = vmatprep.mubr.bf16.mxu0 0
      %6495 = vmatmul.mubr.bf16.gmra.mrb[0].mxu0 %v6387
      %v6496 = vpop.f32.mrb[0].mxu0
      %v6497 = vadd.f32 0.0, %v6496
      %v6498 = vpop.f32.mrb[0].mxu0
      %v6499 = vpop.f32.mrb[0].mxu0
      %v6500 = vadd.f32 0.0, %v6499
      %v6501 = vpop.f32.mrb[0].mxu0
      %6502 = vmatprep.mubr.bf16.mxu0 0
      %6503 = vmatmul.mubr.bf16.gmra.mrb[0].mxu0 %v6390
      %v6504 = vpop.f32.mrb[0].mxu0
      %v6505 = vadd.f32 0.0, %v6504
      %v6506 = vpop.f32.mrb[0].mxu0
      %v6507 = vpop.f32.mrb[0].mxu0
      %v6508 = vadd.f32 0.0, %v6507
      %v6509 = vpop.f32.mrb[0].mxu0
      %6510 = vmatprep.mubr.bf16.mxu0 0
      %6511 = vmatmul.mubr.bf16.gmra.mrb[0].mxu0 %v6393
      %v6512 = vpop.f32.mrb[0].mxu0
      %v6513 = vadd.f32 0.0, %v6512
      %v6514 = vpop.f32.mrb[0].mxu0
      %v6515 = vpop.f32.mrb[0].mxu0
      %v6516 = vadd.f32 0.0, %v6515
      %v6517 = vpop.f32.mrb[0].mxu0
      %6518 = vmatprep.mubr.bf16.mxu0 0
      %6519 = vmatmul.mubr.bf16.gmra.mrb[0].mxu0 %v6396
      %v6520 = vpop.f32.mrb[0].mxu0
      %v6521 = vadd.f32 0.0, %v6520
      %v6522 = vpop.f32.mrb[0].mxu0
      %v6523 = vpop.f32.mrb[0].mxu0
      %v6524 = vadd.f32 0.0, %v6523
      %v6525 = vpop.f32.mrb[0].mxu0
      %6526 = vmatprep.mubr.bf16.mxu0 0
      %6527 = vmatmul.mubr.bf16.gmra.mrb[0].mxu0 %v6399
      %v6528 = vpop.f32.mrb[0].mxu0
      %v6529 = vadd.f32 0.0, %v6528
      %v6530 = vpop.f32.mrb[0].mxu0
      %v6531 = vpop.f32.mrb[0].mxu0
      %v6532 = vadd.f32 0.0, %v6531
      %v6533 = vpop.f32.mrb[0].mxu0
      %6534 = vmatprep.mubr.bf16.mxu0 0
      %6535 = vmatmul.mubr.bf16.gmra.mrb[0].mxu0 %v6402
      %v6536 = vpop.f32.mrb[0].mxu0
      %v6537 = vadd.f32 0.0, %v6536
      %v6538 = vpop.f32.mrb[0].mxu0
      %v6539 = vpop.f32.mrb[0].mxu0
      %v6540 = vadd.f32 0.0, %v6539
      %v6541 = vpop.f32.mrb[0].mxu0
      %6542 = vmatprep.mubr.bf16.mxu0 0
      %6543 = vmatmul.mubr.bf16.gmra.mrb[0].mxu0 %v6405
      %v6544 = vpop.f32.mrb[0].mxu0
      %v6545 = vadd.f32 0.0, %v6544
      %v6546 = vpop.f32.mrb[0].mxu0
      %v6547 = vpop.f32.mrb[0].mxu0
      %v6548 = vadd.f32 0.0, %v6547
      %v6549 = vpop.f32.mrb[0].mxu0
      %6550 = vmatprep.mubr.bf16.mxu0 0
      %6551 = vmatmul.mubr.bf16.gmra.mrb[0].mxu0 %v6408
      %v6552 = vpop.f32.mrb[0].mxu0
      %v6553 = vadd.f32 0.0, %v6552
      %v6554 = vpop.f32.mrb[0].mxu0
      %v6555 = vpop.f32.mrb[0].mxu0
      %v6556 = vadd.f32 0.0, %v6555
      %v6557 = vpop.f32.mrb[0].mxu0
      %6558 = vmatprep.mubr.bf16.mxu0 0
      %6559 = vmatmul.mubr.bf16.gmra.mrb[0].mxu0 %v6411
      %v6560 = vpop.f32.mrb[0].mxu0
      %v6561 = vadd.f32 0.0, %v6560
      %v6562 = vpop.f32.mrb[0].mxu0
      %v6563 = vpop.f32.mrb[0].mxu0
      %v6564 = vadd.f32 0.0, %v6563
      %v6565 = vpop.f32.mrb[0].mxu0
      %6566 = vmatprep.mubr.bf16.mxu0 0
      %6567 = vmatmul.mubr.bf16.gmra.mrb[0].mxu0 %v6414
      %v6568 = vpop.f32.mrb[0].mxu0
      %v6569 = vadd.f32 0.0, %v6568
      %v6570 = vpop.f32.mrb[0].mxu0
      %v6571 = vpop.f32.mrb[0].mxu0
      %v6572 = vadd.f32 0.0, %v6571
      %v6573 = vpop.f32.mrb[0].mxu0
      %6574 = vmatprep.mubr.bf16.mxu0 0
      %6575 = vmatmul.mubr.bf16.gmra.mrb[0].mxu0 %v6417
      %v6576 = vpop.f32.mrb[0].mxu0
      %v6577 = vadd.f32 0.0, %v6576
      %v6578 = vpop.f32.mrb[0].mxu0
      %v6579 = vpop.f32.mrb[0].mxu0
      %v6580 = vadd.f32 0.0, %v6579
      %v6581 = vpop.f32.mrb[0].mxu0
      %6582 = vdwg.mxu0
      %v6583 = vadd.f32 %v6320, %v6457
      %v6584 = vadd.f32 %v6321, %v6460
      %v6585 = vadd.f32 %v6322, %v6465
      %v6586 = vadd.f32 %v6323, %v6468
      %v6587 = vadd.f32 %v6324, %v6473
      %v6588 = vadd.f32 %v6325, %v6476
      %v6589 = vadd.f32 %v6326, %v6481
      %v6590 = vadd.f32 %v6327, %v6484
      %v6591 = vadd.f32 %v6328, %v6489
      %v6592 = vadd.f32 %v6329, %v6492
      %v6593 = vadd.f32 %v6330, %v6497
      %v6594 = vadd.f32 %v6331, %v6500
      %v6595 = vadd.f32 %v6332, %v6505
      %v6596 = vadd.f32 %v6333, %v6508
      %v6597 = vadd.f32 %v6334, %v6513
      %v6598 = vadd.f32 %v6335, %v6516
      %v6599 = vadd.f32 %v6336, %v6521
      %v6600 = vadd.f32 %v6337, %v6524
      %v6601 = vadd.f32 %v6338, %v6529
      %v6602 = vadd.f32 %v6339, %v6532
      %v6603 = vadd.f32 %v6340, %v6537
      %v6604 = vadd.f32 %v6341, %v6540
      %v6605 = vadd.f32 %v6342, %v6545
      %v6606 = vadd.f32 %v6343, %v6548
      %v6607 = vadd.f32 %v6344, %v6553
      %v6608 = vadd.f32 %v6345, %v6556
      %v6609 = vadd.f32 %v6346, %v6561
      %v6610 = vadd.f32 %v6347, %v6564
      %v6611 = vadd.f32 %v6348, %v6569
      %v6612 = vadd.f32 %v6349, %v6572
      %v6613 = vadd.f32 %v6350, %v6577
      %v6614 = vadd.f32 %v6351, %v6580
      %s6615 = scalar_lea.vmem [#allocation5], 296
      %v6616 = vld [vmem:[%s6615] sm:$0xff]
      %v6617 = vld [vmem:[%s6615 + $0x8] sm:$0xff]
      %v6618 = vld [vmem:[%s6615 + $0x10] sm:$0xff]
      %v6619 = vld [vmem:[%s6615 + $0x18] sm:$0xff]
      %v6620 = vld [vmem:[%s6615 + $0x20] sm:$0xff]
      %v6621 = vld [vmem:[%s6615 + $0x28] sm:$0xff]
      %v6622 = vld [vmem:[%s6615 + $0x30] sm:$0xff]
      %v6623 = vld [vmem:[%s6615 + $0x38] sm:$0xff]
      %v6624 = vld [vmem:[%s6615 + $0x40] sm:$0xff]
      %v6625 = vld [vmem:[%s6615 + $0x48] sm:$0xff]
      %v6626 = vld [vmem:[%s6615 + $0x50] sm:$0xff]
      %v6627 = vld [vmem:[%s6615 + $0x58] sm:$0xff]
      %v6628 = vld [vmem:[%s6615 + $0x60] sm:$0xff]
      %v6629 = vld [vmem:[%s6615 + $0x68] sm:$0xff]
      %v6630 = vld [vmem:[%s6615 + $0x70] sm:$0xff]
      %v6631 = vld [vmem:[%s6615 + $0x78] sm:$0xff]
      %s6632 = scalar_lea.vmem %s3, 10
      %v6633 = vld [vmem:[%s6632] sm:$0x3]
      %v6635 = vsel %vm4806, %v6616, 0
      %v6638 = vsel %vm4806, %v6617, 0
      %v6641 = vsel %vm4806, %v6618, 0
      %v6644 = vsel %vm4806, %v6619, 0
      %v6647 = vsel %vm4806, %v6620, 0
      %v6650 = vsel %vm4806, %v6621, 0
      %v6653 = vsel %vm4806, %v6622, 0
      %v6656 = vsel %vm4806, %v6623, 0
      %v6659 = vsel %vm4806, %v6624, 0
      %v6662 = vsel %vm4806, %v6625, 0
      %v6665 = vsel %vm4806, %v6626, 0
      %v6668 = vsel %vm4806, %v6627, 0
      %v6671 = vsel %vm4806, %v6628, 0
      %v6674 = vsel %vm4806, %v6629, 0
      %v6677 = vsel %vm4806, %v6630, 0
      %v6680 = vsel %vm4806, %v6631, 0
      %v6683 = vsel %vm5450, %v6633, 0
      %6685 = vmatprep.subr.bf16.mxu0 0
      %6686 = vmatpush1.bf16.msra.mxu0 %v6683
      %6687 = vmatprep.subr.bf16.mxu0 0
      %6688 = vmatpush1.bf16.msra.mxu0 0
      %6689 = vmatprep.subr.bf16.mxu0 0
      %6690 = vmatpush1.bf16.msra.mxu0 0
      %6691 = vmatprep.subr.bf16.mxu0 0
      %6692 = vmatpush1.bf16.msra.mxu0 0
      %6693 = vmatprep.subr.bf16.mxu0 0
      %6694 = vmatpush1.bf16.msra.mxu0 0
      %6695 = vmatprep.subr.bf16.mxu0 0
      %6696 = vmatpush1.bf16.msra.mxu0 0
      %6697 = vmatprep.subr.bf16.mxu0 0
      %6698 = vmatpush1.bf16.msra.mxu0 0
      %6699 = vmatprep.subr.bf16.mxu0 0
      %6700 = vmatpush1.bf16.msra.mxu0 0
      %6701 = vmatprep.subr.bf16.mxu0 0
      %6702 = vmatpush1.bf16.msra.mxu0 0
      %6703 = vmatprep.subr.bf16.mxu0 0
      %6704 = vmatpush1.bf16.msra.mxu0 0
      %6705 = vmatprep.subr.bf16.mxu0 0
      %6706 = vmatpush1.bf16.msra.mxu0 0
      %6707 = vmatprep.subr.bf16.mxu0 0
      %6708 = vmatpush1.bf16.msra.mxu0 0
      %6709 = vmatprep.subr.bf16.mxu0 0
      %6710 = vmatpush1.bf16.msra.mxu0 0
      %6711 = vmatprep.subr.bf16.mxu0 0
      %6712 = vmatpush1.bf16.msra.mxu0 0
      %6713 = vmatprep.subr.bf16.mxu0 0
      %6714 = vmatpush1.bf16.msra.mxu0 0
      %6715 = vmatprep.subr.bf16.mxu0 0
      %6716 = vmatpush1.bf16.msra.mxu0 0
      %6717 = vmatprep.mubr.bf16.mxu0 0
      %6718 = vmatmul.mubr.bf16.gmra.mrb[0].mxu0 %v6635
      %v6719 = vpop.f32.mrb[0].mxu0
      %v6720 = vadd.f32 0.0, %v6719
      %v6721 = vpop.f32.mrb[0].mxu0
      %v6722 = vpop.f32.mrb[0].mxu0
      %v6723 = vadd.f32 0.0, %v6722
      %v6724 = vpop.f32.mrb[0].mxu0
      %6725 = vmatprep.mubr.bf16.mxu0 0
      %6726 = vmatmul.mubr.bf16.gmra.mrb[0].mxu0 %v6638
      %v6727 = vpop.f32.mrb[0].mxu0
      %v6728 = vadd.f32 0.0, %v6727
      %v6729 = vpop.f32.mrb[0].mxu0
      %v6730 = vpop.f32.mrb[0].mxu0
      %v6731 = vadd.f32 0.0, %v6730
      %v6732 = vpop.f32.mrb[0].mxu0
      %6733 = vmatprep.mubr.bf16.mxu0 0
      %6734 = vmatmul.mubr.bf16.gmra.mrb[0].mxu0 %v6641
      %v6735 = vpop.f32.mrb[0].mxu0
      %v6736 = vadd.f32 0.0, %v6735
      %v6737 = vpop.f32.mrb[0].mxu0
      %v6738 = vpop.f32.mrb[0].mxu0
      %v6739 = vadd.f32 0.0, %v6738
      %v6740 = vpop.f32.mrb[0].mxu0
      %6741 = vmatprep.mubr.bf16.mxu0 0
      %6742 = vmatmul.mubr.bf16.gmra.mrb[0].mxu0 %v6644
      %v6743 = vpop.f32.mrb[0].mxu0
      %v6744 = vadd.f32 0.0, %v6743
      %v6745 = vpop.f32.mrb[0].mxu0
      %v6746 = vpop.f32.mrb[0].mxu0
      %v6747 = vadd.f32 0.0, %v6746
      %v6748 = vpop.f32.mrb[0].mxu0
      %6749 = vmatprep.mubr.bf16.mxu0 0
      %6750 = vmatmul.mubr.bf16.gmra.mrb[0].mxu0 %v6647
      %v6751 = vpop.f32.mrb[0].mxu0
      %v6752 = vadd.f32 0.0, %v6751
      %v6753 = vpop.f32.mrb[0].mxu0
      %v6754 = vpop.f32.mrb[0].mxu0
      %v6755 = vadd.f32 0.0, %v6754
      %v6756 = vpop.f32.mrb[0].mxu0
      %6757 = vmatprep.mubr.bf16.mxu0 0
      %6758 = vmatmul.mubr.bf16.gmra.mrb[0].mxu0 %v6650
      %v6759 = vpop.f32.mrb[0].mxu0
      %v6760 = vadd.f32 0.0, %v6759
      %v6761 = vpop.f32.mrb[0].mxu0
      %v6762 = vpop.f32.mrb[0].mxu0
      %v6763 = vadd.f32 0.0, %v6762
      %v6764 = vpop.f32.mrb[0].mxu0
      %6765 = vmatprep.mubr.bf16.mxu0 0
      %6766 = vmatmul.mubr.bf16.gmra.mrb[0].mxu0 %v6653
      %v6767 = vpop.f32.mrb[0].mxu0
      %v6768 = vadd.f32 0.0, %v6767
      %v6769 = vpop.f32.mrb[0].mxu0
      %v6770 = vpop.f32.mrb[0].mxu0
      %v6771 = vadd.f32 0.0, %v6770
      %v6772 = vpop.f32.mrb[0].mxu0
      %6773 = vmatprep.mubr.bf16.mxu0 0
      %6774 = vmatmul.mubr.bf16.gmra.mrb[0].mxu0 %v6656
      %v6775 = vpop.f32.mrb[0].mxu0
      %v6776 = vadd.f32 0.0, %v6775
      %v6777 = vpop.f32.mrb[0].mxu0
      %v6778 = vpop.f32.mrb[0].mxu0
      %v6779 = vadd.f32 0.0, %v6778
      %v6780 = vpop.f32.mrb[0].mxu0
      %6781 = vmatprep.mubr.bf16.mxu0 0
      %6782 = vmatmul.mubr.bf16.gmra.mrb[0].mxu0 %v6659
      %v6783 = vpop.f32.mrb[0].mxu0
      %v6784 = vadd.f32 0.0, %v6783
      %v6785 = vpop.f32.mrb[0].mxu0
      %v6786 = vpop.f32.mrb[0].mxu0
      %v6787 = vadd.f32 0.0, %v6786
      %v6788 = vpop.f32.mrb[0].mxu0
      %6789 = vmatprep.mubr.bf16.mxu0 0
      %6790 = vmatmul.mubr.bf16.gmra.mrb[0].mxu0 %v6662
      %v6791 = vpop.f32.mrb[0].mxu0
      %v6792 = vadd.f32 0.0, %v6791
      %v6793 = vpop.f32.mrb[0].mxu0
      %v6794 = vpop.f32.mrb[0].mxu0
      %v6795 = vadd.f32 0.0, %v6794
      %v6796 = vpop.f32.mrb[0].mxu0
      %6797 = vmatprep.mubr.bf16.mxu0 0
      %6798 = vmatmul.mubr.bf16.gmra.mrb[0].mxu0 %v6665
      %v6799 = vpop.f32.mrb[0].mxu0
      %v6800 = vadd.f32 0.0, %v6799
      %v6801 = vpop.f32.mrb[0].mxu0
      %v6802 = vpop.f32.mrb[0].mxu0
      %v6803 = vadd.f32 0.0, %v6802
      %v6804 = vpop.f32.mrb[0].mxu0
      %6805 = vmatprep.mubr.bf16.mxu0 0
      %6806 = vmatmul.mubr.bf16.gmra.mrb[0].mxu0 %v6668
      %v6807 = vpop.f32.mrb[0].mxu0
      %v6808 = vadd.f32 0.0, %v6807
      %v6809 = vpop.f32.mrb[0].mxu0
      %v6810 = vpop.f32.mrb[0].mxu0
      %v6811 = vadd.f32 0.0, %v6810
      %v6812 = vpop.f32.mrb[0].mxu0
      %6813 = vmatprep.mubr.bf16.mxu0 0
      %6814 = vmatmul.mubr.bf16.gmra.mrb[0].mxu0 %v6671
      %v6815 = vpop.f32.mrb[0].mxu0
      %v6816 = vadd.f32 0.0, %v6815
      %v6817 = vpop.f32.mrb[0].mxu0
      %v6818 = vpop.f32.mrb[0].mxu0
      %v6819 = vadd.f32 0.0, %v6818
      %v6820 = vpop.f32.mrb[0].mxu0
      %6821 = vmatprep.mubr.bf16.mxu0 0
      %6822 = vmatmul.mubr.bf16.gmra.mrb[0].mxu0 %v6674
      %v6823 = vpop.f32.mrb[0].mxu0
      %v6824 = vadd.f32 0.0, %v6823
      %v6825 = vpop.f32.mrb[0].mxu0
      %v6826 = vpop.f32.mrb[0].mxu0
      %v6827 = vadd.f32 0.0, %v6826
      %v6828 = vpop.f32.mrb[0].mxu0
      %6829 = vmatprep.mubr.bf16.mxu0 0
      %6830 = vmatmul.mubr.bf16.gmra.mrb[0].mxu0 %v6677
      %v6831 = vpop.f32.mrb[0].mxu0
      %v6832 = vadd.f32 0.0, %v6831
      %v6833 = vpop.f32.mrb[0].mxu0
      %v6834 = vpop.f32.mrb[0].mxu0
      %v6835 = vadd.f32 0.0, %v6834
      %v6836 = vpop.f32.mrb[0].mxu0
      %6837 = vmatprep.mubr.bf16.mxu0 0
      %6838 = vmatmul.mubr.bf16.gmra.mrb[0].mxu0 %v6680
      %v6839 = vpop.f32.mrb[0].mxu0
      %v6840 = vadd.f32 0.0, %v6839
      %v6841 = vpop.f32.mrb[0].mxu0
      %v6842 = vpop.f32.mrb[0].mxu0
      %v6843 = vadd.f32 0.0, %v6842
      %v6844 = vpop.f32.mrb[0].mxu0
      %6845 = vdwg.mxu0
      %v6846 = vadd.f32 %v6583, %v6720
      %v6847 = vadd.f32 %v6584, %v6723
      %v6848 = vadd.f32 %v6585, %v6728
      %v6849 = vadd.f32 %v6586, %v6731
      %v6850 = vadd.f32 %v6587, %v6736
      %v6851 = vadd.f32 %v6588, %v6739
      %v6852 = vadd.f32 %v6589, %v6744
      %v6853 = vadd.f32 %v6590, %v6747
      %v6854 = vadd.f32 %v6591, %v6752
      %v6855 = vadd.f32 %v6592, %v6755
      %v6856 = vadd.f32 %v6593, %v6760
      %v6857 = vadd.f32 %v6594, %v6763
      %v6858 = vadd.f32 %v6595, %v6768
      %v6859 = vadd.f32 %v6596, %v6771
      %v6860 = vadd.f32 %v6597, %v6776
      %v6861 = vadd.f32 %v6598, %v6779
      %v6862 = vadd.f32 %v6599, %v6784
      %v6863 = vadd.f32 %v6600, %v6787
      %v6864 = vadd.f32 %v6601, %v6792
      %v6865 = vadd.f32 %v6602, %v6795
      %v6866 = vadd.f32 %v6603, %v6800
      %v6867 = vadd.f32 %v6604, %v6803
      %v6868 = vadd.f32 %v6605, %v6808
      %v6869 = vadd.f32 %v6606, %v6811
      %v6870 = vadd.f32 %v6607, %v6816
      %v6871 = vadd.f32 %v6608, %v6819
      %v6872 = vadd.f32 %v6609, %v6824
      %v6873 = vadd.f32 %v6610, %v6827
      %v6874 = vadd.f32 %v6611, %v6832
      %v6875 = vadd.f32 %v6612, %v6835
      %v6876 = vadd.f32 %v6613, %v6840
      %v6877 = vadd.f32 %v6614, %v6843
      %s6878 = scalar_lea.vmem [#allocation5], 16
      %v6879 = vld [vmem:[%s6878] sm:$0xff]
      %v6880 = vld [vmem:[%s6878 + $0x8] sm:$0xff]
      %v6881 = vld [vmem:[%s6878 + $0x10] sm:$0xff]
      %v6882 = vld [vmem:[%s6878 + $0x18] sm:$0xff]
      %v6883 = vld [vmem:[%s6878 + $0x20] sm:$0xff]
      %v6884 = vld [vmem:[%s6878 + $0x28] sm:$0xff]
      %v6885 = vld [vmem:[%s6878 + $0x30] sm:$0xff]
      %v6886 = vld [vmem:[%s6878 + $0x38] sm:$0xff]
      %v6887 = vld [vmem:[%s6878 + $0x40] sm:$0xff]
      %v6888 = vld [vmem:[%s6878 + $0x48] sm:$0xff]
      %v6889 = vld [vmem:[%s6878 + $0x50] sm:$0xff]
      %v6890 = vld [vmem:[%s6878 + $0x58] sm:$0xff]
      %v6891 = vld [vmem:[%s6878 + $0x60] sm:$0xff]
      %v6892 = vld [vmem:[%s6878 + $0x68] sm:$0xff]
      %v6893 = vld [vmem:[%s6878 + $0x70] sm:$0xff]
      %v6894 = vld [vmem:[%s6878 + $0x78] sm:$0xff]
      %s6895 = scalar_lea.vmem %s3, 12
      %v6896 = vld [vmem:[%s6895] sm:$0x3]
      %v6898 = vsel %vm4806, %v6879, 0
      %v6901 = vsel %vm4806, %v6880, 0
      %v6904 = vsel %vm4806, %v6881, 0
      %v6907 = vsel %vm4806, %v6882, 0
      %v6910 = vsel %vm4806, %v6883, 0
      %v6913 = vsel %vm4806, %v6884, 0
      %v6916 = vsel %vm4806, %v6885, 0
      %v6919 = vsel %vm4806, %v6886, 0
      %v6922 = vsel %vm4806, %v6887, 0
      %v6925 = vsel %vm4806, %v6888, 0
      %v6928 = vsel %vm4806, %v6889, 0
      %v6931 = vsel %vm4806, %v6890, 0
      %v6934 = vsel %vm4806, %v6891, 0
      %v6937 = vsel %vm4806, %v6892, 0
      %v6940 = vsel %vm4806, %v6893, 0
      %v6943 = vsel %vm4806, %v6894, 0
      %v6946 = vsel %vm5450, %v6896, 0
      %6948 = vmatprep.subr.bf16.mxu0 0
      %6949 = vmatpush1.bf16.msra.mxu0 %v6946
      %6950 = vmatprep.subr.bf16.mxu0 0
      %6951 = vmatpush1.bf16.msra.mxu0 0
      %6952 = vmatprep.subr.bf16.mxu0 0
      %6953 = vmatpush1.bf16.msra.mxu0 0
      %6954 = vmatprep.subr.bf16.mxu0 0
      %6955 = vmatpush1.bf16.msra.mxu0 0
      %6956 = vmatprep.subr.bf16.mxu0 0
      %6957 = vmatpush1.bf16.msra.mxu0 0
      %6958 = vmatprep.subr.bf16.mxu0 0
      %6959 = vmatpush1.bf16.msra.mxu0 0
      %6960 = vmatprep.subr.bf16.mxu0 0
      %6961 = vmatpush1.bf16.msra.mxu0 0
      %6962 = vmatprep.subr.bf16.mxu0 0
      %6963 = vmatpush1.bf16.msra.mxu0 0
      %6964 = vmatprep.subr.bf16.mxu0 0
      %6965 = vmatpush1.bf16.msra.mxu0 0
      %6966 = vmatprep.subr.bf16.mxu0 0
      %6967 = vmatpush1.bf16.msra.mxu0 0
      %6968 = vmatprep.subr.bf16.mxu0 0
      %6969 = vmatpush1.bf16.msra.mxu0 0
      %6970 = vmatprep.subr.bf16.mxu0 0
      %6971 = vmatpush1.bf16.msra.mxu0 0
      %6972 = vmatprep.subr.bf16.mxu0 0
      %6973 = vmatpush1.bf16.msra.mxu0 0
      %6974 = vmatprep.subr.bf16.mxu0 0
      %6975 = vmatpush1.bf16.msra.mxu0 0
      %6976 = vmatprep.subr.bf16.mxu0 0
      %6977 = vmatpush1.bf16.msra.mxu0 0
      %6978 = vmatprep.subr.bf16.mxu0 0
      %6979 = vmatpush1.bf16.msra.mxu0 0
      %6980 = vmatprep.mubr.bf16.mxu0 0
      %6981 = vmatmul.mubr.bf16.gmra.mrb[0].mxu0 %v6898
      %v6982 = vpop.f32.mrb[0].mxu0
      %v6983 = vadd.f32 0.0, %v6982
      %v6984 = vpop.f32.mrb[0].mxu0
      %v6985 = vpop.f32.mrb[0].mxu0
      %v6986 = vadd.f32 0.0, %v6985
      %v6987 = vpop.f32.mrb[0].mxu0
      %6988 = vmatprep.mubr.bf16.mxu0 0
      %6989 = vmatmul.mubr.bf16.gmra.mrb[0].mxu0 %v6901
      %v6990 = vpop.f32.mrb[0].mxu0
      %v6991 = vadd.f32 0.0, %v6990
      %v6992 = vpop.f32.mrb[0].mxu0
      %v6993 = vpop.f32.mrb[0].mxu0
      %v6994 = vadd.f32 0.0, %v6993
      %v6995 = vpop.f32.mrb[0].mxu0
      %6996 = vmatprep.mubr.bf16.mxu0 0
      %6997 = vmatmul.mubr.bf16.gmra.mrb[0].mxu0 %v6904
      %v6998 = vpop.f32.mrb[0].mxu0
      %v6999 = vadd.f32 0.0, %v6998
      %v7000 = vpop.f32.mrb[0].mxu0
      %v7001 = vpop.f32.mrb[0].mxu0
      %v7002 = vadd.f32 0.0, %v7001
      %v7003 = vpop.f32.mrb[0].mxu0
      %7004 = vmatprep.mubr.bf16.mxu0 0
      %7005 = vmatmul.mubr.bf16.gmra.mrb[0].mxu0 %v6907
      %v7006 = vpop.f32.mrb[0].mxu0
      %v7007 = vadd.f32 0.0, %v7006
      %v7008 = vpop.f32.mrb[0].mxu0
      %v7009 = vpop.f32.mrb[0].mxu0
      %v7010 = vadd.f32 0.0, %v7009
      %v7011 = vpop.f32.mrb[0].mxu0
      %7012 = vmatprep.mubr.bf16.mxu0 0
      %7013 = vmatmul.mubr.bf16.gmra.mrb[0].mxu0 %v6910
      %v7014 = vpop.f32.mrb[0].mxu0
      %v7015 = vadd.f32 0.0, %v7014
      %v7016 = vpop.f32.mrb[0].mxu0
      %v7017 = vpop.f32.mrb[0].mxu0
      %v7018 = vadd.f32 0.0, %v7017
      %v7019 = vpop.f32.mrb[0].mxu0
      %7020 = vmatprep.mubr.bf16.mxu0 0
      %7021 = vmatmul.mubr.bf16.gmra.mrb[0].mxu0 %v6913
      %v7022 = vpop.f32.mrb[0].mxu0
      %v7023 = vadd.f32 0.0, %v7022
      %v7024 = vpop.f32.mrb[0].mxu0
      %v7025 = vpop.f32.mrb[0].mxu0
      %v7026 = vadd.f32 0.0, %v7025
      %v7027 = vpop.f32.mrb[0].mxu0
      %7028 = vmatprep.mubr.bf16.mxu0 0
      %7029 = vmatmul.mubr.bf16.gmra.mrb[0].mxu0 %v6916
      %v7030 = vpop.f32.mrb[0].mxu0
      %v7031 = vadd.f32 0.0, %v7030
      %v7032 = vpop.f32.mrb[0].mxu0
      %v7033 = vpop.f32.mrb[0].mxu0
      %v7034 = vadd.f32 0.0, %v7033
      %v7035 = vpop.f32.mrb[0].mxu0
      %7036 = vmatprep.mubr.bf16.mxu0 0
      %7037 = vmatmul.mubr.bf16.gmra.mrb[0].mxu0 %v6919
      %v7038 = vpop.f32.mrb[0].mxu0
      %v7039 = vadd.f32 0.0, %v7038
      %v7040 = vpop.f32.mrb[0].mxu0
      %v7041 = vpop.f32.mrb[0].mxu0
      %v7042 = vadd.f32 0.0, %v7041
      %v7043 = vpop.f32.mrb[0].mxu0
      %7044 = vmatprep.mubr.bf16.mxu0 0
      %7045 = vmatmul.mubr.bf16.gmra.mrb[0].mxu0 %v6922
      %v7046 = vpop.f32.mrb[0].mxu0
      %v7047 = vadd.f32 0.0, %v7046
      %v7048 = vpop.f32.mrb[0].mxu0
      %v7049 = vpop.f32.mrb[0].mxu0
      %v7050 = vadd.f32 0.0, %v7049
      %v7051 = vpop.f32.mrb[0].mxu0
      %7052 = vmatprep.mubr.bf16.mxu0 0
      %7053 = vmatmul.mubr.bf16.gmra.mrb[0].mxu0 %v6925
      %v7054 = vpop.f32.mrb[0].mxu0
      %v7055 = vadd.f32 0.0, %v7054
      %v7056 = vpop.f32.mrb[0].mxu0
      %v7057 = vpop.f32.mrb[0].mxu0
      %v7058 = vadd.f32 0.0, %v7057
      %v7059 = vpop.f32.mrb[0].mxu0
      %7060 = vmatprep.mubr.bf16.mxu0 0
      %7061 = vmatmul.mubr.bf16.gmra.mrb[0].mxu0 %v6928
      %v7062 = vpop.f32.mrb[0].mxu0
      %v7063 = vadd.f32 0.0, %v7062
      %v7064 = vpop.f32.mrb[0].mxu0
      %v7065 = vpop.f32.mrb[0].mxu0
      %v7066 = vadd.f32 0.0, %v7065
      %v7067 = vpop.f32.mrb[0].mxu0
      %7068 = vmatprep.mubr.bf16.mxu0 0
      %7069 = vmatmul.mubr.bf16.gmra.mrb[0].mxu0 %v6931
      %v7070 = vpop.f32.mrb[0].mxu0
      %v7071 = vadd.f32 0.0, %v7070
      %v7072 = vpop.f32.mrb[0].mxu0
      %v7073 = vpop.f32.mrb[0].mxu0
      %v7074 = vadd.f32 0.0, %v7073
      %v7075 = vpop.f32.mrb[0].mxu0
      %7076 = vmatprep.mubr.bf16.mxu0 0
      %7077 = vmatmul.mubr.bf16.gmra.mrb[0].mxu0 %v6934
      %v7078 = vpop.f32.mrb[0].mxu0
      %v7079 = vadd.f32 0.0, %v7078
      %v7080 = vpop.f32.mrb[0].mxu0
      %v7081 = vpop.f32.mrb[0].mxu0
      %v7082 = vadd.f32 0.0, %v7081
      %v7083 = vpop.f32.mrb[0].mxu0
      %7084 = vmatprep.mubr.bf16.mxu0 0
      %7085 = vmatmul.mubr.bf16.gmra.mrb[0].mxu0 %v6937
      %v7086 = vpop.f32.mrb[0].mxu0
      %v7087 = vadd.f32 0.0, %v7086
      %v7088 = vpop.f32.mrb[0].mxu0
      %v7089 = vpop.f32.mrb[0].mxu0
      %v7090 = vadd.f32 0.0, %v7089
      %v7091 = vpop.f32.mrb[0].mxu0
      %7092 = vmatprep.mubr.bf16.mxu0 0
      %7093 = vmatmul.mubr.bf16.gmra.mrb[0].mxu0 %v6940
      %v7094 = vpop.f32.mrb[0].mxu0
      %v7095 = vadd.f32 0.0, %v7094
      %v7096 = vpop.f32.mrb[0].mxu0
      %v7097 = vpop.f32.mrb[0].mxu0
      %v7098 = vadd.f32 0.0, %v7097
      %v7099 = vpop.f32.mrb[0].mxu0
      %7100 = vmatprep.mubr.bf16.mxu0 0
      %7101 = vmatmul.mubr.bf16.gmra.mrb[0].mxu0 %v6943
      %v7102 = vpop.f32.mrb[0].mxu0
      %v7103 = vadd.f32 0.0, %v7102
      %v7104 = vpop.f32.mrb[0].mxu0
      %v7105 = vpop.f32.mrb[0].mxu0
      %v7106 = vadd.f32 0.0, %v7105
      %v7107 = vpop.f32.mrb[0].mxu0
      %7108 = vdwg.mxu0
      %v7109 = vadd.f32 %v6846, %v6983
      %v7110 = vadd.f32 %v6847, %v6986
      %v7111 = vadd.f32 %v6848, %v6991
      %v7112 = vadd.f32 %v6849, %v6994
      %v7113 = vadd.f32 %v6850, %v6999
      %v7114 = vadd.f32 %v6851, %v7002
      %v7115 = vadd.f32 %v6852, %v7007
      %v7116 = vadd.f32 %v6853, %v7010
      %v7117 = vadd.f32 %v6854, %v7015
      %v7118 = vadd.f32 %v6855, %v7018
      %v7119 = vadd.f32 %v6856, %v7023
      %v7120 = vadd.f32 %v6857, %v7026
      %v7121 = vadd.f32 %v6858, %v7031
      %v7122 = vadd.f32 %v6859, %v7034
      %v7123 = vadd.f32 %v6860, %v7039
      %v7124 = vadd.f32 %v6861, %v7042
      %v7125 = vadd.f32 %v6862, %v7047
      %v7126 = vadd.f32 %v6863, %v7050
      %v7127 = vadd.f32 %v6864, %v7055
      %v7128 = vadd.f32 %v6865, %v7058
      %v7129 = vadd.f32 %v6866, %v7063
      %v7130 = vadd.f32 %v6867, %v7066
      %v7131 = vadd.f32 %v6868, %v7071
      %v7132 = vadd.f32 %v6869, %v7074
      %v7133 = vadd.f32 %v6870, %v7079
      %v7134 = vadd.f32 %v6871, %v7082
      %v7135 = vadd.f32 %v6872, %v7087
      %v7136 = vadd.f32 %v6873, %v7090
      %v7137 = vadd.f32 %v6874, %v7095
      %v7138 = vadd.f32 %v6875, %v7098
      %v7139 = vadd.f32 %v6876, %v7103
      %v7140 = vadd.f32 %v6877, %v7106
      %s7141 = scalar_lea.vmem [#allocation5], 160
      %v7142 = vld [vmem:[%s7141] sm:$0xff]
      %v7143 = vld [vmem:[%s7141 + $0x8] sm:$0xff]
      %v7144 = vld [vmem:[%s7141 + $0x10] sm:$0xff]
      %v7145 = vld [vmem:[%s7141 + $0x18] sm:$0xff]
      %v7146 = vld [vmem:[%s7141 + $0x20] sm:$0xff]
      %v7147 = vld [vmem:[%s7141 + $0x28] sm:$0xff]
      %v7148 = vld [vmem:[%s7141 + $0x30] sm:$0xff]
      %v7149 = vld [vmem:[%s7141 + $0x38] sm:$0xff]
      %v7150 = vld [vmem:[%s7141 + $0x40] sm:$0xff]
      %v7151 = vld [vmem:[%s7141 + $0x48] sm:$0xff]
      %v7152 = vld [vmem:[%s7141 + $0x50] sm:$0xff]
      %v7153 = vld [vmem:[%s7141 + $0x58] sm:$0xff]
      %v7154 = vld [vmem:[%s7141 + $0x60] sm:$0xff]
      %v7155 = vld [vmem:[%s7141 + $0x68] sm:$0xff]
      %v7156 = vld [vmem:[%s7141 + $0x70] sm:$0xff]
      %v7157 = vld [vmem:[%s7141 + $0x78] sm:$0xff]
      %s7158 = scalar_lea.vmem %s3, 14
      %v7159 = vld [vmem:[%s7158] sm:$0x3]
      %v7161 = vsel %vm4806, %v7142, 0
      %v7164 = vsel %vm4806, %v7143, 0
      %v7167 = vsel %vm4806, %v7144, 0
      %v7170 = vsel %vm4806, %v7145, 0
      %v7173 = vsel %vm4806, %v7146, 0
      %v7176 = vsel %vm4806, %v7147, 0
      %v7179 = vsel %vm4806, %v7148, 0
      %v7182 = vsel %vm4806, %v7149, 0
      %v7185 = vsel %vm4806, %v7150, 0
      %v7188 = vsel %vm4806, %v7151, 0
      %v7191 = vsel %vm4806, %v7152, 0
      %v7194 = vsel %vm4806, %v7153, 0
      %v7197 = vsel %vm4806, %v7154, 0
      %v7200 = vsel %vm4806, %v7155, 0
      %v7203 = vsel %vm4806, %v7156, 0
      %v7206 = vsel %vm4806, %v7157, 0
      %v7209 = vsel %vm5450, %v7159, 0
      %7211 = vmatprep.subr.bf16.mxu0 0
      %7212 = vmatpush1.bf16.msra.mxu0 %v7209
      %7213 = vmatprep.subr.bf16.mxu0 0
      %7214 = vmatpush1.bf16.msra.mxu0 0
      %7215 = vmatprep.subr.bf16.mxu0 0
      %7216 = vmatpush1.bf16.msra.mxu0 0
      %7217 = vmatprep.subr.bf16.mxu0 0
      %7218 = vmatpush1.bf16.msra.mxu0 0
      %7219 = vmatprep.subr.bf16.mxu0 0
      %7220 = vmatpush1.bf16.msra.mxu0 0
      %7221 = vmatprep.subr.bf16.mxu0 0
      %7222 = vmatpush1.bf16.msra.mxu0 0
      %7223 = vmatprep.subr.bf16.mxu0 0
      %7224 = vmatpush1.bf16.msra.mxu0 0
      %7225 = vmatprep.subr.bf16.mxu0 0
      %7226 = vmatpush1.bf16.msra.mxu0 0
      %7227 = vmatprep.subr.bf16.mxu0 0
      %7228 = vmatpush1.bf16.msra.mxu0 0
      %7229 = vmatprep.subr.bf16.mxu0 0
      %7230 = vmatpush1.bf16.msra.mxu0 0
      %7231 = vmatprep.subr.bf16.mxu0 0
      %7232 = vmatpush1.bf16.msra.mxu0 0
      %7233 = vmatprep.subr.bf16.mxu0 0
      %7234 = vmatpush1.bf16.msra.mxu0 0
      %7235 = vmatprep.subr.bf16.mxu0 0
      %7236 = vmatpush1.bf16.msra.mxu0 0
      %7237 = vmatprep.subr.bf16.mxu0 0
      %7238 = vmatpush1.bf16.msra.mxu0 0
      %7239 = vmatprep.subr.bf16.mxu0 0
      %7240 = vmatpush1.bf16.msra.mxu0 0
      %7241 = vmatprep.subr.bf16.mxu0 0
      %7242 = vmatpush1.bf16.msra.mxu0 0
      %7243 = vmatprep.mubr.bf16.mxu0 0
      %7244 = vmatmul.mubr.bf16.gmra.mrb[0].mxu0 %v7161
      %v7245 = vpop.f32.mrb[0].mxu0
      %v7246 = vadd.f32 0.0, %v7245
      %v7247 = vpop.f32.mrb[0].mxu0
      %v7248 = vpop.f32.mrb[0].mxu0
      %v7249 = vadd.f32 0.0, %v7248
      %v7250 = vpop.f32.mrb[0].mxu0
      %7251 = vmatprep.mubr.bf16.mxu0 0
      %7252 = vmatmul.mubr.bf16.gmra.mrb[0].mxu0 %v7164
      %v7253 = vpop.f32.mrb[0].mxu0
      %v7254 = vadd.f32 0.0, %v7253
      %v7255 = vpop.f32.mrb[0].mxu0
      %v7256 = vpop.f32.mrb[0].mxu0
      %v7257 = vadd.f32 0.0, %v7256
      %v7258 = vpop.f32.mrb[0].mxu0
      %7259 = vmatprep.mubr.bf16.mxu0 0
      %7260 = vmatmul.mubr.bf16.gmra.mrb[0].mxu0 %v7167
      %v7261 = vpop.f32.mrb[0].mxu0
      %v7262 = vadd.f32 0.0, %v7261
      %v7263 = vpop.f32.mrb[0].mxu0
      %v7264 = vpop.f32.mrb[0].mxu0
      %v7265 = vadd.f32 0.0, %v7264
      %v7266 = vpop.f32.mrb[0].mxu0
      %7267 = vmatprep.mubr.bf16.mxu0 0
      %7268 = vmatmul.mubr.bf16.gmra.mrb[0].mxu0 %v7170
      %v7269 = vpop.f32.mrb[0].mxu0
      %v7270 = vadd.f32 0.0, %v7269
      %v7271 = vpop.f32.mrb[0].mxu0
      %v7272 = vpop.f32.mrb[0].mxu0
      %v7273 = vadd.f32 0.0, %v7272
      %v7274 = vpop.f32.mrb[0].mxu0
      %7275 = vmatprep.mubr.bf16.mxu0 0
      %7276 = vmatmul.mubr.bf16.gmra.mrb[0].mxu0 %v7173
      %v7277 = vpop.f32.mrb[0].mxu0
      %v7278 = vadd.f32 0.0, %v7277
      %v7279 = vpop.f32.mrb[0].mxu0
      %v7280 = vpop.f32.mrb[0].mxu0
      %v7281 = vadd.f32 0.0, %v7280
      %v7282 = vpop.f32.mrb[0].mxu0
      %7283 = vmatprep.mubr.bf16.mxu0 0
      %7284 = vmatmul.mubr.bf16.gmra.mrb[0].mxu0 %v7176
      %v7285 = vpop.f32.mrb[0].mxu0
      %v7286 = vadd.f32 0.0, %v7285
      %v7287 = vpop.f32.mrb[0].mxu0
      %v7288 = vpop.f32.mrb[0].mxu0
      %v7289 = vadd.f32 0.0, %v7288
      %v7290 = vpop.f32.mrb[0].mxu0
      %7291 = vmatprep.mubr.bf16.mxu0 0
      %7292 = vmatmul.mubr.bf16.gmra.mrb[0].mxu0 %v7179
      %v7293 = vpop.f32.mrb[0].mxu0
      %v7294 = vadd.f32 0.0, %v7293
      %v7295 = vpop.f32.mrb[0].mxu0
      %v7296 = vpop.f32.mrb[0].mxu0
      %v7297 = vadd.f32 0.0, %v7296
      %v7298 = vpop.f32.mrb[0].mxu0
      %7299 = vmatprep.mubr.bf16.mxu0 0
      %7300 = vmatmul.mubr.bf16.gmra.mrb[0].mxu0 %v7182
      %v7301 = vpop.f32.mrb[0].mxu0
      %v7302 = vadd.f32 0.0, %v7301
      %v7303 = vpop.f32.mrb[0].mxu0
      %v7304 = vpop.f32.mrb[0].mxu0
      %v7305 = vadd.f32 0.0, %v7304
      %v7306 = vpop.f32.mrb[0].mxu0
      %7307 = vmatprep.mubr.bf16.mxu0 0
      %7308 = vmatmul.mubr.bf16.gmra.mrb[0].mxu0 %v7185
      %v7309 = vpop.f32.mrb[0].mxu0
      %v7310 = vadd.f32 0.0, %v7309
      %v7311 = vpop.f32.mrb[0].mxu0
      %v7312 = vpop.f32.mrb[0].mxu0
      %v7313 = vadd.f32 0.0, %v7312
      %v7314 = vpop.f32.mrb[0].mxu0
      %7315 = vmatprep.mubr.bf16.mxu0 0
      %7316 = vmatmul.mubr.bf16.gmra.mrb[0].mxu0 %v7188
      %v7317 = vpop.f32.mrb[0].mxu0
      %v7318 = vadd.f32 0.0, %v7317
      %v7319 = vpop.f32.mrb[0].mxu0
      %v7320 = vpop.f32.mrb[0].mxu0
      %v7321 = vadd.f32 0.0, %v7320
      %v7322 = vpop.f32.mrb[0].mxu0
      %7323 = vmatprep.mubr.bf16.mxu0 0
      %7324 = vmatmul.mubr.bf16.gmra.mrb[0].mxu0 %v7191
      %v7325 = vpop.f32.mrb[0].mxu0
      %v7326 = vadd.f32 0.0, %v7325
      %v7327 = vpop.f32.mrb[0].mxu0
      %v7328 = vpop.f32.mrb[0].mxu0
      %v7329 = vadd.f32 0.0, %v7328
      %v7330 = vpop.f32.mrb[0].mxu0
      %7331 = vmatprep.mubr.bf16.mxu0 0
      %7332 = vmatmul.mubr.bf16.gmra.mrb[0].mxu0 %v7194
      %v7333 = vpop.f32.mrb[0].mxu0
      %v7334 = vadd.f32 0.0, %v7333
      %v7335 = vpop.f32.mrb[0].mxu0
      %v7336 = vpop.f32.mrb[0].mxu0
      %v7337 = vadd.f32 0.0, %v7336
      %v7338 = vpop.f32.mrb[0].mxu0
      %7339 = vmatprep.mubr.bf16.mxu0 0
      %7340 = vmatmul.mubr.bf16.gmra.mrb[0].mxu0 %v7197
      %v7341 = vpop.f32.mrb[0].mxu0
      %v7342 = vadd.f32 0.0, %v7341
      %v7343 = vpop.f32.mrb[0].mxu0
      %v7344 = vpop.f32.mrb[0].mxu0
      %v7345 = vadd.f32 0.0, %v7344
      %v7346 = vpop.f32.mrb[0].mxu0
      %7347 = vmatprep.mubr.bf16.mxu0 0
      %7348 = vmatmul.mubr.bf16.gmra.mrb[0].mxu0 %v7200
      %v7349 = vpop.f32.mrb[0].mxu0
      %v7350 = vadd.f32 0.0, %v7349
      %v7351 = vpop.f32.mrb[0].mxu0
      %v7352 = vpop.f32.mrb[0].mxu0
      %v7353 = vadd.f32 0.0, %v7352
      %v7354 = vpop.f32.mrb[0].mxu0
      %7355 = vmatprep.mubr.bf16.mxu0 0
      %7356 = vmatmul.mubr.bf16.gmra.mrb[0].mxu0 %v7203
      %v7357 = vpop.f32.mrb[0].mxu0
      %v7358 = vadd.f32 0.0, %v7357
      %v7359 = vpop.f32.mrb[0].mxu0
      %v7360 = vpop.f32.mrb[0].mxu0
      %v7361 = vadd.f32 0.0, %v7360
      %v7362 = vpop.f32.mrb[0].mxu0
      %7363 = vmatprep.mubr.bf16.mxu0 0
      %7364 = vmatmul.mubr.bf16.gmra.mrb[0].mxu0 %v7206
      %v7365 = vpop.f32.mrb[0].mxu0
      %v7366 = vadd.f32 0.0, %v7365
      %v7367 = vpop.f32.mrb[0].mxu0
      %v7368 = vpop.f32.mrb[0].mxu0
      %v7369 = vadd.f32 0.0, %v7368
      %v7370 = vpop.f32.mrb[0].mxu0
      %7371 = vdwg.mxu0
      %v7372 = vadd.f32 %v7109, %v7246
      %v7373 = vadd.f32 %v7110, %v7249
      %v7374 = vadd.f32 %v7111, %v7254
      %v7375 = vadd.f32 %v7112, %v7257
      %v7376 = vadd.f32 %v7113, %v7262
      %v7377 = vadd.f32 %v7114, %v7265
      %v7378 = vadd.f32 %v7115, %v7270
      %v7379 = vadd.f32 %v7116, %v7273
      %v7380 = vadd.f32 %v7117, %v7278
      %v7381 = vadd.f32 %v7118, %v7281
      %v7382 = vadd.f32 %v7119, %v7286
      %v7383 = vadd.f32 %v7120, %v7289
      %v7384 = vadd.f32 %v7121, %v7294
      %v7385 = vadd.f32 %v7122, %v7297
      %v7386 = vadd.f32 %v7123, %v7302
      %v7387 = vadd.f32 %v7124, %v7305
      %v7388 = vadd.f32 %v7125, %v7310
      %v7389 = vadd.f32 %v7126, %v7313
      %v7390 = vadd.f32 %v7127, %v7318
      %v7391 = vadd.f32 %v7128, %v7321
      %v7392 = vadd.f32 %v7129, %v7326
      %v7393 = vadd.f32 %v7130, %v7329
      %v7394 = vadd.f32 %v7131, %v7334
      %v7395 = vadd.f32 %v7132, %v7337
      %v7396 = vadd.f32 %v7133, %v7342
      %v7397 = vadd.f32 %v7134, %v7345
      %v7398 = vadd.f32 %v7135, %v7350
      %v7399 = vadd.f32 %v7136, %v7353
      %v7400 = vadd.f32 %v7137, %v7358
      %v7401 = vadd.f32 %v7138, %v7361
      %v7402 = vadd.f32 %v7139, %v7366
      %v7403 = vadd.f32 %v7140, %v7369
      %s7404 = scalar_lea.vmem [#allocation5], 304
      %v7405 = vld [vmem:[%s7404] sm:$0xff]
      %v7406 = vld [vmem:[%s7404 + $0x8] sm:$0xff]
      %v7407 = vld [vmem:[%s7404 + $0x10] sm:$0xff]
      %v7408 = vld [vmem:[%s7404 + $0x18] sm:$0xff]
      %v7409 = vld [vmem:[%s7404 + $0x20] sm:$0xff]
      %v7410 = vld [vmem:[%s7404 + $0x28] sm:$0xff]
      %v7411 = vld [vmem:[%s7404 + $0x30] sm:$0xff]
      %v7412 = vld [vmem:[%s7404 + $0x38] sm:$0xff]
      %v7413 = vld [vmem:[%s7404 + $0x40] sm:$0xff]
      %v7414 = vld [vmem:[%s7404 + $0x48] sm:$0xff]
      %v7415 = vld [vmem:[%s7404 + $0x50] sm:$0xff]
      %v7416 = vld [vmem:[%s7404 + $0x58] sm:$0xff]
      %v7417 = vld [vmem:[%s7404 + $0x60] sm:$0xff]
      %v7418 = vld [vmem:[%s7404 + $0x68] sm:$0xff]
      %v7419 = vld [vmem:[%s7404 + $0x70] sm:$0xff]
      %v7420 = vld [vmem:[%s7404 + $0x78] sm:$0xff]
      %s7421 = scalar_lea.vmem %s3, 16
      %v7422 = vld [vmem:[%s7421] sm:$0x3]
      %v7424 = vsel %vm4806, %v7405, 0
      %v7427 = vsel %vm4806, %v7406, 0
      %v7430 = vsel %vm4806, %v7407, 0
      %v7433 = vsel %vm4806, %v7408, 0
      %v7436 = vsel %vm4806, %v7409, 0
      %v7439 = vsel %vm4806, %v7410, 0
      %v7442 = vsel %vm4806, %v7411, 0
      %v7445 = vsel %vm4806, %v7412, 0
      %v7448 = vsel %vm4806, %v7413, 0
      %v7451 = vsel %vm4806, %v7414, 0
      %v7454 = vsel %vm4806, %v7415, 0
      %v7457 = vsel %vm4806, %v7416, 0
      %v7460 = vsel %vm4806, %v7417, 0
      %v7463 = vsel %vm4806, %v7418, 0
      %v7466 = vsel %vm4806, %v7419, 0
      %v7469 = vsel %vm4806, %v7420, 0
      %v7472 = vsel %vm5450, %v7422, 0
      %7474 = vmatprep.subr.bf16.mxu0 0
      %7475 = vmatpush1.bf16.msra.mxu0 %v7472
      %7476 = vmatprep.subr.bf16.mxu0 0
      %7477 = vmatpush1.bf16.msra.mxu0 0
      %7478 = vmatprep.subr.bf16.mxu0 0
      %7479 = vmatpush1.bf16.msra.mxu0 0
      %7480 = vmatprep.subr.bf16.mxu0 0
      %7481 = vmatpush1.bf16.msra.mxu0 0
      %7482 = vmatprep.subr.bf16.mxu0 0
      %7483 = vmatpush1.bf16.msra.mxu0 0
      %7484 = vmatprep.subr.bf16.mxu0 0
      %7485 = vmatpush1.bf16.msra.mxu0 0
      %7486 = vmatprep.subr.bf16.mxu0 0
      %7487 = vmatpush1.bf16.msra.mxu0 0
      %7488 = vmatprep.subr.bf16.mxu0 0
      %7489 = vmatpush1.bf16.msra.mxu0 0
      %7490 = vmatprep.subr.bf16.mxu0 0
      %7491 = vmatpush1.bf16.msra.mxu0 0
      %7492 = vmatprep.subr.bf16.mxu0 0
      %7493 = vmatpush1.bf16.msra.mxu0 0
      %7494 = vmatprep.subr.bf16.mxu0 0
      %7495 = vmatpush1.bf16.msra.mxu0 0
      %7496 = vmatprep.subr.bf16.mxu0 0
      %7497 = vmatpush1.bf16.msra.mxu0 0
      %7498 = vmatprep.subr.bf16.mxu0 0
      %7499 = vmatpush1.bf16.msra.mxu0 0
      %7500 = vmatprep.subr.bf16.mxu0 0
      %7501 = vmatpush1.bf16.msra.mxu0 0
      %7502 = vmatprep.subr.bf16.mxu0 0
      %7503 = vmatpush1.bf16.msra.mxu0 0
      %7504 = vmatprep.subr.bf16.mxu0 0
      %7505 = vmatpush1.bf16.msra.mxu0 0
      %7506 = vmatprep.mubr.bf16.mxu0 0
      %7507 = vmatmul.mubr.bf16.gmra.mrb[0].mxu0 %v7424
      %v7508 = vpop.f32.mrb[0].mxu0
      %v7509 = vadd.f32 0.0, %v7508
      %v7510 = vpop.f32.mrb[0].mxu0
      %v7511 = vpop.f32.mrb[0].mxu0
      %v7512 = vadd.f32 0.0, %v7511
      %v7513 = vpop.f32.mrb[0].mxu0
      %7514 = vmatprep.mubr.bf16.mxu0 0
      %7515 = vmatmul.mubr.bf16.gmra.mrb[0].mxu0 %v7427
      %v7516 = vpop.f32.mrb[0].mxu0
      %v7517 = vadd.f32 0.0, %v7516
      %v7518 = vpop.f32.mrb[0].mxu0
      %v7519 = vpop.f32.mrb[0].mxu0
      %v7520 = vadd.f32 0.0, %v7519
      %v7521 = vpop.f32.mrb[0].mxu0
      %7522 = vmatprep.mubr.bf16.mxu0 0
      %7523 = vmatmul.mubr.bf16.gmra.mrb[0].mxu0 %v7430
      %v7524 = vpop.f32.mrb[0].mxu0
      %v7525 = vadd.f32 0.0, %v7524
      %v7526 = vpop.f32.mrb[0].mxu0
      %v7527 = vpop.f32.mrb[0].mxu0
      %v7528 = vadd.f32 0.0, %v7527
      %v7529 = vpop.f32.mrb[0].mxu0
      %7530 = vmatprep.mubr.bf16.mxu0 0
      %7531 = vmatmul.mubr.bf16.gmra.mrb[0].mxu0 %v7433
      %v7532 = vpop.f32.mrb[0].mxu0
      %v7533 = vadd.f32 0.0, %v7532
      %v7534 = vpop.f32.mrb[0].mxu0
      %v7535 = vpop.f32.mrb[0].mxu0
      %v7536 = vadd.f32 0.0, %v7535
      %v7537 = vpop.f32.mrb[0].mxu0
      %7538 = vmatprep.mubr.bf16.mxu0 0
      %7539 = vmatmul.mubr.bf16.gmra.mrb[0].mxu0 %v7436
      %v7540 = vpop.f32.mrb[0].mxu0
      %v7541 = vadd.f32 0.0, %v7540
      %v7542 = vpop.f32.mrb[0].mxu0
      %v7543 = vpop.f32.mrb[0].mxu0
      %v7544 = vadd.f32 0.0, %v7543
      %v7545 = vpop.f32.mrb[0].mxu0
      %7546 = vmatprep.mubr.bf16.mxu0 0
      %7547 = vmatmul.mubr.bf16.gmra.mrb[0].mxu0 %v7439
      %v7548 = vpop.f32.mrb[0].mxu0
      %v7549 = vadd.f32 0.0, %v7548
      %v7550 = vpop.f32.mrb[0].mxu0
      %v7551 = vpop.f32.mrb[0].mxu0
      %v7552 = vadd.f32 0.0, %v7551
      %v7553 = vpop.f32.mrb[0].mxu0
      %7554 = vmatprep.mubr.bf16.mxu0 0
      %7555 = vmatmul.mubr.bf16.gmra.mrb[0].mxu0 %v7442
      %v7556 = vpop.f32.mrb[0].mxu0
      %v7557 = vadd.f32 0.0, %v7556
      %v7558 = vpop.f32.mrb[0].mxu0
      %v7559 = vpop.f32.mrb[0].mxu0
      %v7560 = vadd.f32 0.0, %v7559
      %v7561 = vpop.f32.mrb[0].mxu0
      %7562 = vmatprep.mubr.bf16.mxu0 0
      %7563 = vmatmul.mubr.bf16.gmra.mrb[0].mxu0 %v7445
      %v7564 = vpop.f32.mrb[0].mxu0
      %v7565 = vadd.f32 0.0, %v7564
      %v7566 = vpop.f32.mrb[0].mxu0
      %v7567 = vpop.f32.mrb[0].mxu0
      %v7568 = vadd.f32 0.0, %v7567
      %v7569 = vpop.f32.mrb[0].mxu0
      %7570 = vmatprep.mubr.bf16.mxu0 0
      %7571 = vmatmul.mubr.bf16.gmra.mrb[0].mxu0 %v7448
      %v7572 = vpop.f32.mrb[0].mxu0
      %v7573 = vadd.f32 0.0, %v7572
      %v7574 = vpop.f32.mrb[0].mxu0
      %v7575 = vpop.f32.mrb[0].mxu0
      %v7576 = vadd.f32 0.0, %v7575
      %v7577 = vpop.f32.mrb[0].mxu0
      %7578 = vmatprep.mubr.bf16.mxu0 0
      %7579 = vmatmul.mubr.bf16.gmra.mrb[0].mxu0 %v7451
      %v7580 = vpop.f32.mrb[0].mxu0
      %v7581 = vadd.f32 0.0, %v7580
      %v7582 = vpop.f32.mrb[0].mxu0
      %v7583 = vpop.f32.mrb[0].mxu0
      %v7584 = vadd.f32 0.0, %v7583
      %v7585 = vpop.f32.mrb[0].mxu0
      %7586 = vmatprep.mubr.bf16.mxu0 0
      %7587 = vmatmul.mubr.bf16.gmra.mrb[0].mxu0 %v7454
      %v7588 = vpop.f32.mrb[0].mxu0
      %v7589 = vadd.f32 0.0, %v7588
      %v7590 = vpop.f32.mrb[0].mxu0
      %v7591 = vpop.f32.mrb[0].mxu0
      %v7592 = vadd.f32 0.0, %v7591
      %v7593 = vpop.f32.mrb[0].mxu0
      %7594 = vmatprep.mubr.bf16.mxu0 0
      %7595 = vmatmul.mubr.bf16.gmra.mrb[0].mxu0 %v7457
      %v7596 = vpop.f32.mrb[0].mxu0
      %v7597 = vadd.f32 0.0, %v7596
      %v7598 = vpop.f32.mrb[0].mxu0
      %v7599 = vpop.f32.mrb[0].mxu0
      %v7600 = vadd.f32 0.0, %v7599
      %v7601 = vpop.f32.mrb[0].mxu0
      %7602 = vmatprep.mubr.bf16.mxu0 0
      %7603 = vmatmul.mubr.bf16.gmra.mrb[0].mxu0 %v7460
      %v7604 = vpop.f32.mrb[0].mxu0
      %v7605 = vadd.f32 0.0, %v7604
      %v7606 = vpop.f32.mrb[0].mxu0
      %v7607 = vpop.f32.mrb[0].mxu0
      %v7608 = vadd.f32 0.0, %v7607
      %v7609 = vpop.f32.mrb[0].mxu0
      %7610 = vmatprep.mubr.bf16.mxu0 0
      %7611 = vmatmul.mubr.bf16.gmra.mrb[0].mxu0 %v7463
      %v7612 = vpop.f32.mrb[0].mxu0
      %v7613 = vadd.f32 0.0, %v7612
      %v7614 = vpop.f32.mrb[0].mxu0
      %v7615 = vpop.f32.mrb[0].mxu0
      %v7616 = vadd.f32 0.0, %v7615
      %v7617 = vpop.f32.mrb[0].mxu0
      %7618 = vmatprep.mubr.bf16.mxu0 0
      %7619 = vmatmul.mubr.bf16.gmra.mrb[0].mxu0 %v7466
      %v7620 = vpop.f32.mrb[0].mxu0
      %v7621 = vadd.f32 0.0, %v7620
      %v7622 = vpop.f32.mrb[0].mxu0
      %v7623 = vpop.f32.mrb[0].mxu0
      %v7624 = vadd.f32 0.0, %v7623
      %v7625 = vpop.f32.mrb[0].mxu0
      %7626 = vmatprep.mubr.bf16.mxu0 0
      %7627 = vmatmul.mubr.bf16.gmra.mrb[0].mxu0 %v7469
      %v7628 = vpop.f32.mrb[0].mxu0
      %v7629 = vadd.f32 0.0, %v7628
      %v7630 = vpop.f32.mrb[0].mxu0
      %v7631 = vpop.f32.mrb[0].mxu0
      %v7632 = vadd.f32 0.0, %v7631
      %v7633 = vpop.f32.mrb[0].mxu0
      %7634 = vdwg.mxu0
      %v7635 = vadd.f32 %v7372, %v7509
      %v7636 = vadd.f32 %v7373, %v7512
      %v7637 = vadd.f32 %v7374, %v7517
      %v7638 = vadd.f32 %v7375, %v7520
      %v7639 = vadd.f32 %v7376, %v7525
      %v7640 = vadd.f32 %v7377, %v7528
      %v7641 = vadd.f32 %v7378, %v7533
      %v7642 = vadd.f32 %v7379, %v7536
      %v7643 = vadd.f32 %v7380, %v7541
      %v7644 = vadd.f32 %v7381, %v7544
      %v7645 = vadd.f32 %v7382, %v7549
      %v7646 = vadd.f32 %v7383, %v7552
      %v7647 = vadd.f32 %v7384, %v7557
      %v7648 = vadd.f32 %v7385, %v7560
      %v7649 = vadd.f32 %v7386, %v7565
      %v7650 = vadd.f32 %v7387, %v7568
      %v7651 = vadd.f32 %v7388, %v7573
      %v7652 = vadd.f32 %v7389, %v7576
      %v7653 = vadd.f32 %v7390, %v7581
      %v7654 = vadd.f32 %v7391, %v7584
      %v7655 = vadd.f32 %v7392, %v7589
      %v7656 = vadd.f32 %v7393, %v7592
      %v7657 = vadd.f32 %v7394, %v7597
      %v7658 = vadd.f32 %v7395, %v7600
      %v7659 = vadd.f32 %v7396, %v7605
      %v7660 = vadd.f32 %v7397, %v7608
      %v7661 = vadd.f32 %v7398, %v7613
      %v7662 = vadd.f32 %v7399, %v7616
      %v7663 = vadd.f32 %v7400, %v7621
      %v7664 = vadd.f32 %v7401, %v7624
      %v7665 = vadd.f32 %v7402, %v7629
      %v7666 = vadd.f32 %v7403, %v7632
      %v7667 = vld [vmem:[%s6] sm:$0x1]
      %v7669 = vlaneseq
      %v7670 = vshrl.u32 %v7669, 7
      %v7671 = vsub.s32 0, %v7670
      %v7672 = vrot.slane %v7667, %v7671
      %v7674 = vmul.f32 %v7635, %v7672
      %v7675 = vmul.f32 %v7636, %v7672
      %v7676 = vmul.f32 %v7637, %v7672
      %v7677 = vmul.f32 %v7638, %v7672
      %v7678 = vmul.f32 %v7639, %v7672
      %v7679 = vmul.f32 %v7640, %v7672
      %v7680 = vmul.f32 %v7641, %v7672
      %v7681 = vmul.f32 %v7642, %v7672
      %v7682 = vmul.f32 %v7643, %v7672
      %v7683 = vmul.f32 %v7644, %v7672
      %v7684 = vmul.f32 %v7645, %v7672
      %v7685 = vmul.f32 %v7646, %v7672
      %v7686 = vmul.f32 %v7647, %v7672
      %v7687 = vmul.f32 %v7648, %v7672
      %v7688 = vmul.f32 %v7649, %v7672
      %v7689 = vmul.f32 %v7650, %v7672
      %v7690 = vmul.f32 %v7651, %v7672
      %v7691 = vmul.f32 %v7652, %v7672
      %v7692 = vmul.f32 %v7653, %v7672
      %v7693 = vmul.f32 %v7654, %v7672
      %v7694 = vmul.f32 %v7655, %v7672
      %v7695 = vmul.f32 %v7656, %v7672
      %v7696 = vmul.f32 %v7657, %v7672
      %v7697 = vmul.f32 %v7658, %v7672
      %v7698 = vmul.f32 %v7659, %v7672
      %v7699 = vmul.f32 %v7660, %v7672
      %v7700 = vmul.f32 %v7661, %v7672
      %v7701 = vmul.f32 %v7662, %v7672
      %v7702 = vmul.f32 %v7663, %v7672
      %v7703 = vmul.f32 %v7664, %v7672
      %v7704 = vmul.f32 %v7665, %v7672
      %v7705 = vmul.f32 %v7666, %v7672
      %v7706 = vld [vmem:[%s7] sm:$0x1]
      %v7708 = vlaneseq
      %v7709 = vshrl.u32 %v7708, 7
      %v7710 = vsub.s32 0, %v7709
      %v7711 = vrot.slane %v7706, %v7710
      %v7713 = vadd.f32 %v7674, %v7711
      %v7714 = vadd.f32 %v7675, %v7711
      %v7715 = vadd.f32 %v7676, %v7711
      %v7716 = vadd.f32 %v7677, %v7711
      %v7717 = vadd.f32 %v7678, %v7711
      %v7718 = vadd.f32 %v7679, %v7711
      %v7719 = vadd.f32 %v7680, %v7711
      %v7720 = vadd.f32 %v7681, %v7711
      %v7721 = vadd.f32 %v7682, %v7711
      %v7722 = vadd.f32 %v7683, %v7711
      %v7723 = vadd.f32 %v7684, %v7711
      %v7724 = vadd.f32 %v7685, %v7711
      %v7725 = vadd.f32 %v7686, %v7711
      %v7726 = vadd.f32 %v7687, %v7711
      %v7727 = vadd.f32 %v7688, %v7711
      %v7728 = vadd.f32 %v7689, %v7711
      %v7729 = vadd.f32 %v7690, %v7711
      %v7730 = vadd.f32 %v7691, %v7711
      %v7731 = vadd.f32 %v7692, %v7711
      %v7732 = vadd.f32 %v7693, %v7711
      %v7733 = vadd.f32 %v7694, %v7711
      %v7734 = vadd.f32 %v7695, %v7711
      %v7735 = vadd.f32 %v7696, %v7711
      %v7736 = vadd.f32 %v7697, %v7711
      %v7737 = vadd.f32 %v7698, %v7711
      %v7738 = vadd.f32 %v7699, %v7711
      %v7739 = vadd.f32 %v7700, %v7711
      %v7740 = vadd.f32 %v7701, %v7711
      %v7741 = vadd.f32 %v7702, %v7711
      %v7742 = vadd.f32 %v7703, %v7711
      %v7743 = vadd.f32 %v7704, %v7711
      %v7744 = vadd.f32 %v7705, %v7711
      %v7745 = vmax.f32 %v7713, 0.0
      %v7746 = vmax.f32 %v7714, 0.0
      %v7747 = vmax.f32 %v7715, 0.0
      %v7748 = vmax.f32 %v7716, 0.0
      %v7749 = vmax.f32 %v7717, 0.0
      %v7750 = vmax.f32 %v7718, 0.0
      %v7751 = vmax.f32 %v7719, 0.0
      %v7752 = vmax.f32 %v7720, 0.0
      %v7753 = vmax.f32 %v7721, 0.0
      %v7754 = vmax.f32 %v7722, 0.0
      %v7755 = vmax.f32 %v7723, 0.0
      %v7756 = vmax.f32 %v7724, 0.0
      %v7757 = vmax.f32 %v7725, 0.0
      %v7758 = vmax.f32 %v7726, 0.0
      %v7759 = vmax.f32 %v7727, 0.0
      %v7760 = vmax.f32 %v7728, 0.0
      %v7761 = vmax.f32 %v7729, 0.0
      %v7762 = vmax.f32 %v7730, 0.0
      %v7763 = vmax.f32 %v7731, 0.0
      %v7764 = vmax.f32 %v7732, 0.0
      %v7765 = vmax.f32 %v7733, 0.0
      %v7766 = vmax.f32 %v7734, 0.0
      %v7767 = vmax.f32 %v7735, 0.0
      %v7768 = vmax.f32 %v7736, 0.0
      %v7769 = vmax.f32 %v7737, 0.0
      %v7770 = vmax.f32 %v7738, 0.0
      %v7771 = vmax.f32 %v7739, 0.0
      %v7772 = vmax.f32 %v7740, 0.0
      %v7773 = vmax.f32 %v7741, 0.0
      %v7774 = vmax.f32 %v7742, 0.0
      %v7775 = vmax.f32 %v7743, 0.0
      %v7776 = vmax.f32 %v7744, 0.0
      %v7777 = vpack.c.bf16 %v7746, %v7745
      %v7778 = vpack.c.bf16 %v7748, %v7747
      %v7779 = vpack.c.bf16 %v7750, %v7749
      %v7780 = vpack.c.bf16 %v7752, %v7751
      %v7781 = vpack.c.bf16 %v7754, %v7753
      %v7782 = vpack.c.bf16 %v7756, %v7755
      %v7783 = vpack.c.bf16 %v7758, %v7757
      %v7784 = vpack.c.bf16 %v7760, %v7759
      %v7785 = vpack.c.bf16 %v7762, %v7761
      %v7786 = vpack.c.bf16 %v7764, %v7763
      %v7787 = vpack.c.bf16 %v7766, %v7765
      %v7788 = vpack.c.bf16 %v7768, %v7767
      %v7789 = vpack.c.bf16 %v7770, %v7769
      %v7790 = vpack.c.bf16 %v7772, %v7771
      %v7791 = vpack.c.bf16 %v7774, %v7773
      %v7792 = vpack.c.bf16 %v7776, %v7775
      %v7809 = vunpack.c.l.b16 %v7777
      %v7810 = vunpack.c.h.b16 %v7777
      %v7811 = vunpack.c.l.b16 %v7778
      %v7812 = vunpack.c.h.b16 %v7778
      %v7813 = vunpack.c.l.b16 %v7779
      %v7814 = vunpack.c.h.b16 %v7779
      %v7815 = vunpack.c.l.b16 %v7780
      %v7816 = vunpack.c.h.b16 %v7780
      %v7817 = vunpack.c.l.b16 %v7781
      %v7818 = vunpack.c.h.b16 %v7781
      %v7819 = vunpack.c.l.b16 %v7782
      %v7820 = vunpack.c.h.b16 %v7782
      %v7821 = vunpack.c.l.b16 %v7783
      %v7822 = vunpack.c.h.b16 %v7783
      %v7823 = vunpack.c.l.b16 %v7784
      %v7824 = vunpack.c.h.b16 %v7784
      %v7825 = vunpack.c.l.b16 %v7785
      %v7826 = vunpack.c.h.b16 %v7785
      %v7827 = vunpack.c.l.b16 %v7786
      %v7828 = vunpack.c.h.b16 %v7786
      %v7829 = vunpack.c.l.b16 %v7787
      %v7830 = vunpack.c.h.b16 %v7787
      %v7831 = vunpack.c.l.b16 %v7788
      %v7832 = vunpack.c.h.b16 %v7788
      %v7833 = vunpack.c.l.b16 %v7789
      %v7834 = vunpack.c.h.b16 %v7789
      %v7835 = vunpack.c.l.b16 %v7790
      %v7836 = vunpack.c.h.b16 %v7790
      %v7837 = vunpack.c.l.b16 %v7791
      %v7838 = vunpack.c.h.b16 %v7791
      %v7839 = vunpack.c.l.b16 %v7792
      %v7840 = vunpack.c.h.b16 %v7792
      %v7841 = vpack.c.b16 %v7809, %v7809
      %v7842 = vpack.c.b16 %v7810, %v7810
      %v7843 = vpack.c.b16 %v7811, %v7811
      %v7844 = vpack.c.b16 %v7812, %v7812
      %v7845 = vpack.c.b16 %v7813, %v7813
      %v7846 = vpack.c.b16 %v7814, %v7814
      %v7847 = vpack.c.b16 %v7815, %v7815
      %v7848 = vpack.c.b16 %v7816, %v7816
      %v7849 = vpack.c.b16 %v7817, %v7817
      %v7850 = vpack.c.b16 %v7818, %v7818
      %v7851 = vpack.c.b16 %v7819, %v7819
      %v7852 = vpack.c.b16 %v7820, %v7820
      %v7853 = vpack.c.b16 %v7821, %v7821
      %v7854 = vpack.c.b16 %v7822, %v7822
      %v7855 = vpack.c.b16 %v7823, %v7823
      %v7856 = vpack.c.b16 %v7824, %v7824
      %v7857 = vpack.c.b16 %v7825, %v7825
      %v7858 = vpack.c.b16 %v7826, %v7826
      %v7859 = vpack.c.b16 %v7827, %v7827
      %v7860 = vpack.c.b16 %v7828, %v7828
      %v7861 = vpack.c.b16 %v7829, %v7829
      %v7862 = vpack.c.b16 %v7830, %v7830
      %v7863 = vpack.c.b16 %v7831, %v7831
      %v7864 = vpack.c.b16 %v7832, %v7832
      %v7865 = vpack.c.b16 %v7833, %v7833
      %v7866 = vpack.c.b16 %v7834, %v7834
      %v7867 = vpack.c.b16 %v7835, %v7835
      %v7868 = vpack.c.b16 %v7836, %v7836
      %v7869 = vpack.c.b16 %v7837, %v7837
      %v7870 = vpack.c.b16 %v7838, %v7838
      %v7871 = vpack.c.b16 %v7839, %v7839
      %v7872 = vpack.c.b16 %v7840, %v7840
      %7905 = vst.msk [vmem:[%s325] sm:$0xf] %vm727, %v7841
      %7906 = vst.msk [vmem:[%s325 + $0x4] sm:$0xf] %vm727, %v7842
      %7907 = vst.msk [vmem:[%s325 + $0x8] sm:$0xf] %vm727, %v7843
      %7908 = vst.msk [vmem:[%s325 + $0xc] sm:$0xf] %vm727, %v7844
      %7909 = vst.msk [vmem:[%s325 + $0x10] sm:$0xf] %vm727, %v7845
      %7910 = vst.msk [vmem:[%s325 + $0x14] sm:$0xf] %vm727, %v7846
      %7911 = vst.msk [vmem:[%s325 + $0x18] sm:$0xf] %vm727, %v7847
      %7912 = vst.msk [vmem:[%s325 + $0x1c] sm:$0xf] %vm727, %v7848
      %7913 = vst.msk [vmem:[%s325 + $0x20] sm:$0xf] %vm727, %v7849
      %7914 = vst.msk [vmem:[%s325 + $0x24] sm:$0xf] %vm727, %v7850
      %7915 = vst.msk [vmem:[%s325 + $0x28] sm:$0xf] %vm727, %v7851
      %7916 = vst.msk [vmem:[%s325 + $0x2c] sm:$0xf] %vm727, %v7852
      %7917 = vst.msk [vmem:[%s325 + $0x30] sm:$0xf] %vm727, %v7853
      %7918 = vst.msk [vmem:[%s325 + $0x34] sm:$0xf] %vm727, %v7854
      %7919 = vst.msk [vmem:[%s325 + $0x38] sm:$0xf] %vm727, %v7855
      %7920 = vst.msk [vmem:[%s325 + $0x3c] sm:$0xf] %vm727, %v7856
      %7921 = vst.msk [vmem:[%s325 + $0x40] sm:$0xf] %vm727, %v7857
      %7922 = vst.msk [vmem:[%s325 + $0x44] sm:$0xf] %vm727, %v7858
      %7923 = vst.msk [vmem:[%s325 + $0x48] sm:$0xf] %vm727, %v7859
      %7924 = vst.msk [vmem:[%s325 + $0x4c] sm:$0xf] %vm727, %v7860
      %7925 = vst.msk [vmem:[%s325 + $0x50] sm:$0xf] %vm727, %v7861
      %7926 = vst.msk [vmem:[%s325 + $0x54] sm:$0xf] %vm727, %v7862
      %7927 = vst.msk [vmem:[%s325 + $0x58] sm:$0xf] %vm727, %v7863
      %7928 = vst.msk [vmem:[%s325 + $0x5c] sm:$0xf] %vm727, %v7864
      %7929 = vst.msk [vmem:[%s325 + $0x60] sm:$0xf] %vm727, %v7865
      %7930 = vst.msk [vmem:[%s325 + $0x64] sm:$0xf] %vm727, %v7866
      %7931 = vst.msk [vmem:[%s325 + $0x68] sm:$0xf] %vm727, %v7867
      %7932 = vst.msk [vmem:[%s325 + $0x6c] sm:$0xf] %vm727, %v7868
      %7933 = vst.msk [vmem:[%s325 + $0x70] sm:$0xf] %vm727, %v7869
      %7934 = vst.msk [vmem:[%s325 + $0x74] sm:$0xf] %vm727, %v7870
      %7935 = vst.msk [vmem:[%s325 + $0x78] sm:$0xf] %vm727, %v7871
      %7936 = vst.msk [vmem:[%s325 + $0x7c] sm:$0xf] %vm727, %v7872
      %p7937 = scmp.lt.s32.totalorder %s19, 1
      %s7938 = scalar_select %p7937, %s19, 1
      %s7939 = smul.addr %s7938, 32
      %s7940 = smul.addr %s7939, 4
      %s7941 = scalar_lea.vmem %s8, %s7940
      // Predicated region
      $region53: #{up_forward.1} parent=51 // pred_check
        %p7942 = pneg %p215
      $region54: #{up_forward.1} parent=51 // pred_check_branch
        %7944 = sbr.rel (%p7942) target = $region56
      $region55: #{up_forward.1} parent=51 // pred_region
        _
      $region56: #{up_forward.1} parent=51 // pred_fallthru
        _
    $region52: #{up_forward.1} parent=5 // pred_fallthru
      _
    %p7945 = scmp.le.s32.totalorder 2, %s14
    // Predicated region
    $region57: #{up_forward.1} parent=5 // pred_check
      %p7946 = pneg %p7945
    $region58: #{up_forward.1} parent=5 // pred_check_branch
      %7948 = sbr.rel (%p7946) target = $region60
    $region59: #{up_forward.1} parent=5 // pred_region
      %s7949 = ssub.s32 %s14, 2
      // Predicated region
      $region61: #{up_forward.1} parent=59 // pred_check
        %p7950 = pneg %p221
      $region62: #{up_forward.1} parent=59 // pred_check_branch
        %7952 = sbr.rel (%p7950) target = $region64
      $region63: #{up_forward.1} parent=59 // pred_region
        %p7953 = scmp.lt.s32.totalorder %s20, 1
        %s7954 = scalar_select %p7953, %s20, 1
        %s7955 = smul.addr %s7954, 32
        %s7956 = smul.addr %s7955, 4
        %s7957 = scalar_lea.vmem %s8, %s7956
      $region64: #{up_forward.1} parent=59 // pred_fallthru
        _
    $region60: #{up_forward.1} parent=5 // pred_fallthru
      _
  $region6: #{up_forward.1} parent=0 // loop_footer
    %s18 = sadd.s32 1, %s14
  $region7: #{up_forward.1} parent=0 // loop_footer_branch
    %13 = sbr.rel target = $region3
  $region8: #{up_forward.1} parent=0 // loop_exit
    _

</llo_original>
